<compile_context>
chip_gen: v7x
topology: tpu7x:2x2x1
jax: 0.10.0
libtpu: 0.0.40
codegen_flags: <defaults>
</compile_context>

<pallas_src>
import jax
import jax.numpy as jnp
import numpy as np
from jax import lax
from jax.experimental import pallas as pl
from jax.experimental.pallas import tpu as pltpu


def residual_block_kernel(x_ref, g1_ref, bt1_ref, g2_ref, bt2_ref,
                          w1_hbm, w2_hbm,
                          o_ref,
                          w1_vmem, w2_vmem, pad_ref, sem):
    N, H, W, C = x_ref.shape
    Hp = H + 2          # 1-pixel zero border in H (outer dim: no packing constraint)
    Wp = W + 4          # 2-wide zero strips in W keep bf16 stores packed-word aligned
    XO = 2              # interior starts at X = XO (even sublane offset)
    M = N * H * W
    eps = 1e-5
    inv_m = 1.0 / M

    # Kick off both weight DMAs immediately.  With no grid there is no BlockSpec
    # pipelining, so manual DMA is the only way to hide the weight HBM traffic:
    # w1 hides behind the pad fill, w2 hides behind conv1 + BN1 + ReLU.
    cp_w1 = pltpu.make_async_copy(w1_hbm, w1_vmem, sem.at[0])
    cp_w2 = pltpu.make_async_copy(w2_hbm, w2_vmem, sem.at[1])
    cp_w1.start()
    cp_w2.start()

    # Zero only the border strips (interior is fully overwritten below and again
    # before conv2); all four strips are full-packed-word aligned stores.
    pad_ref[:, 0:1, :, :] = jnp.zeros((N, 1, Wp, C), jnp.bfloat16)
    pad_ref[:, H + 1:H + 2, :, :] = jnp.zeros((N, 1, Wp, C), jnp.bfloat16)
    pad_ref[:, :, 0:XO, :] = jnp.zeros((N, Hp, XO, C), jnp.bfloat16)
    pad_ref[:, :, W + XO:W + 2 * XO, :] = jnp.zeros((N, Hp, XO, C), jnp.bfloat16)

    # Fill the interior, casting f32 -> bf16 exactly once.
    pad_ref[:, 1:H + 1, XO:XO + W, :] = x_ref[...].astype(jnp.bfloat16)

    def conv3x3(w_vmem):
        # 9 shifted taps, each a direct (M, C) x (C, C) MXU matmul read straight from
        # the padded bf16 buffer; f32 accumulation (on v7x the compiler can keep the
        # running sum in the MRB, on v5e/v6e the 8 extra vector adds are negligible).
        acc = None
        for ky in range(3):
            for kx in range(3):
                lhs = pad_ref[:, ky:ky + H, kx + 1:kx + 1 + W, :].reshape(M, C)
                part = jnp.dot(lhs, w_vmem[ky * 3 + kx],
                               preferred_element_type=jnp.float32)
                acc = part if acc is None else acc + part
        return acc

    def bn_scale_shift(y, g_ref, bt_ref):
        # Training-mode BatchNorm2d (batch stats, biased variance, eps=1e-5) folded
        # into a single per-channel scale/shift.  One pass over y: sum and
        # sum-of-squares together, var = E[y^2] - mean^2, all in f32.
        s1 = jnp.sum(y, axis=0, keepdims=True)
        s2 = jnp.sum(y * y, axis=0, keepdims=True)
        mean = s1 * inv_m
        var = jnp.maximum(s2 * inv_m - mean * mean, 0.0)
        scale = lax.rsqrt(var + eps) * g_ref[...]
        shift = bt_ref[...] - mean * scale
        return scale, shift

    # conv1 -> bn1 -> relu
    cp_w1.wait()
    y1 = conv3x3(w1_vmem)
    scale1, shift1 = bn_scale_shift(y1, g1_ref, bt1_ref)
    h1 = jnp.maximum(y1 * scale1 + shift1, 0.0)

    # Refill the interior for conv2 (single f32 -> bf16 cast; border strips stay zero).
    pad_ref[:, 1:H + 1, XO:XO + W, :] = h1.reshape(N, H, W, C).astype(jnp.bfloat16)

    # conv2 -> bn2 -> residual add (x_ref already resident in VMEM, f32)
    cp_w2.wait()
    y2 = conv3x3(w2_vmem)
    scale2, shift2 = bn_scale_shift(y2, g2_ref, bt2_ref)
    out = (y2 * scale2 + shift2).reshape(N, H, W, C) + x_ref[...]
    o_ref[...] = out.astype(o_ref.dtype)

    # TODO(synk): BatchNorm running_mean/running_var buffer updates (training-time side
    # effect) are not materialized; they do not affect the forward output.
    # TODO(synk): tap reads still start at odd sublane offsets for kx in {0, 2}; a
    # pltpu.roll-based shift would move that work to the XLU slot.
    # TODO(synk): BN normalize is applied whole-array (not 8-row chunked streaming);
    # modest vreg spill is accepted since the kernel is DMA-bound at this size.
    # TODO(synk): v7x dual-TensorCore Cout split not implemented (single TC).


def prepare_params(params):
    """One-time parameter prep (hoisted out of the per-call path):
    OIHW -> (ky, kx, Cin, Cout) -> (9, Cin, Cout) reshape + bf16 cast for the MXU,
    (1, C) BN affine terms.  Conv biases are intentionally omitted (cancelled exactly
    by training-mode BN)."""
    C = params["g1"].shape[0]

    def prep_w(w):
        return jnp.transpose(w, (2, 3, 1, 0)).reshape(9, C, C).astype(jnp.bfloat16)

    to2d = lambda v: v.reshape(1, C)
    return dict(
        w1=prep_w(params["w1"]), g1=to2d(params["g1"]), bt1=to2d(params["bt1"]),
        w2=prep_w(params["w2"]), g2=to2d(params["g2"]), bt2=to2d(params["bt2"]),
    )


@jax.jit
def residual_block(x_nchw, p):
    N, C, H, W = x_nchw.shape
    # NCHW<->NHWC transposes kept only for PyTorch interface parity; in a real model
    # the surrounding graph should stay NHWC so these disappear.
    x = jnp.transpose(x_nchw, (0, 2, 3, 1))
    vspec = pl.BlockSpec(memory_space=pltpu.MemorySpace.VMEM)
    hbmspec = pl.BlockSpec(memory_space=pl.ANY)   # weights stay in HBM; kernel DMAs them

    out_nhwc = pl.pallas_call(
        residual_block_kernel,
        out_shape=jax.ShapeDtypeStruct((N, H, W, C), x.dtype),
        in_specs=[vspec, vspec, vspec, vspec, vspec, hbmspec, hbmspec],
        out_specs=vspec,
        scratch_shapes=[
            pltpu.VMEM((9, C, C), jnp.bfloat16),              # w1 (per-tap weights)
            pltpu.VMEM((9, C, C), jnp.bfloat16),              # w2 (per-tap weights)
            pltpu.VMEM((N, H + 2, W + 4, C), jnp.bfloat16),   # zero-bordered activations
            pltpu.SemaphoreType.DMA((2,)),                    # weight-copy semaphores
        ],
    )(x, p["g1"], p["bt1"], p["g2"], p["bt2"], p["w1"], p["w2"])
    return jnp.transpose(out_nhwc, (0, 3, 1, 2))


def reference(x, params):
    """Pure-JAX f32 reference (XLA conv) matching the PyTorch module's forward()."""
    def conv(h, w, b):
        y = jax.lax.conv_general_dilated(
            h, w, window_strides=(1, 1), padding=((1, 1), (1, 1)),
            dimension_numbers=("NCHW", "OIHW", "NCHW"))
        return y + b.reshape(1, -1, 1, 1)

    def bn(h, g, bt):
        mean = jnp.mean(h, axis=(0, 2, 3), keepdims=True)
        var = jnp.mean((h - mean) ** 2, axis=(0, 2, 3), keepdims=True)
        return (h - mean) * jax.lax.rsqrt(var + 1e-5) * g.reshape(1, -1, 1, 1) \
               + bt.reshape(1, -1, 1, 1)

    h = jnp.maximum(bn(conv(x, params["w1"], params["b1"]), params["g1"], params["bt1"]), 0.0)
    h = bn(conv(h, params["w2"], params["b2"]), params["g2"], params["bt2"])
    return h + x


if __name__ == "__main__":
    key = jax.random.PRNGKey(0)
    N, C, H, W = 2, 256, 8, 8   # C=256 fixed by the module; small batch/spatial dims
    k_x, k_w1, k_b1, k_w2, k_b2 = jax.random.split(key, 5)

    x = jax.random.normal(k_x, (N, C, H, W), jnp.float32)
    fan_in = C * 3 * 3
    params = dict(
        w1=jax.random.normal(k_w1, (C, C, 3, 3), jnp.float32) / jnp.sqrt(fan_in),
        b1=jax.random.normal(k_b1, (C,), jnp.float32) * 0.01,
        g1=jnp.ones((C,), jnp.float32),
        bt1=jnp.zeros((C,), jnp.float32),
        w2=jax.random.normal(k_w2, (C, C, 3, 3), jnp.float32) / jnp.sqrt(fan_in),
        b2=jax.random.normal(k_b2, (C,), jnp.float32) * 0.01,
        g2=jnp.ones((C,), jnp.float32),
        bt2=jnp.zeros((C,), jnp.float32),
    )

    prepped = prepare_params(params)               # one-time weight reshape + bf16 cast
    out = jax.block_until_ready(residual_block(x, prepped))
    ref = jax.block_until_ready(reference(x, params))
    # Tolerance accounts for bf16 MXU operands (f32 accumulation) vs. the f32 reference.
    np.testing.assert_allclose(np.asarray(out), np.asarray(ref), rtol=2e-2, atol=2e-2)
    print("KERNEL_OK")
</pallas_src>

<mosaic_0001>
module attributes {stable_mosaic.version = 11 : i64} {
  func.func @residual_block_kernel(%arg0: memref<2x8x8x256xf32, #tpu.memory_space<vmem>>, %arg1: memref<1x256xf32, #tpu.memory_space<vmem>>, %arg2: memref<1x256xf32, #tpu.memory_space<vmem>>, %arg3: memref<1x256xf32, #tpu.memory_space<vmem>>, %arg4: memref<1x256xf32, #tpu.memory_space<vmem>>, %arg5: memref<9x256x256xbf16, #tpu.memory_space<any>>, %arg6: memref<9x256x256xbf16, #tpu.memory_space<any>>, %arg7: memref<2x8x8x256xf32, #tpu.memory_space<vmem>>, %arg8: memref<9x256x256xbf16, #tpu.memory_space<vmem>>, %arg9: memref<9x256x256xbf16, #tpu.memory_space<vmem>>, %arg10: memref<2x10x12x256xbf16, #tpu.memory_space<vmem>>, %arg11: memref<2x!tpu.dma_semaphore, #tpu.memory_space<semaphore_mem>>) attributes {dimension_semantics = [], scalar_prefetch = 0 : i64, scratch_operands = 4 : i64, tpu.core_type = #tpu.core_type<tc>} {
    %c0_i32 = arith.constant 0 : i32
    %0 = tpu.memref_slice %arg11[%c0_i32] : memref<2x!tpu.dma_semaphore, #tpu.memory_space<semaphore_mem>> -> memref<1x!tpu.dma_semaphore, #tpu.memory_space<semaphore_mem>>
    %1 = tpu.memref_squeeze %0 : memref<1x!tpu.dma_semaphore, #tpu.memory_space<semaphore_mem>> -> memref<!tpu.dma_semaphore, #tpu.memory_space<semaphore_mem>>
    tpu.enqueue_dma source(%arg5 : memref<9x256x256xbf16, #tpu.memory_space<any>>) target(%arg8 : memref<9x256x256xbf16, #tpu.memory_space<vmem>>) target_semaphore(%1 : memref<!tpu.dma_semaphore, #tpu.memory_space<semaphore_mem>>)
    %c1_i32 = arith.constant 1 : i32
    %2 = tpu.memref_slice %arg11[%c1_i32] : memref<2x!tpu.dma_semaphore, #tpu.memory_space<semaphore_mem>> -> memref<1x!tpu.dma_semaphore, #tpu.memory_space<semaphore_mem>>
    %3 = tpu.memref_squeeze %2 : memref<1x!tpu.dma_semaphore, #tpu.memory_space<semaphore_mem>> -> memref<!tpu.dma_semaphore, #tpu.memory_space<semaphore_mem>>
    tpu.enqueue_dma source(%arg6 : memref<9x256x256xbf16, #tpu.memory_space<any>>) target(%arg9 : memref<9x256x256xbf16, #tpu.memory_space<vmem>>) target_semaphore(%3 : memref<!tpu.dma_semaphore, #tpu.memory_space<semaphore_mem>>)
    %cst = arith.constant 0.000000e+00 : bf16
    %4 = vector.broadcast %cst : bf16 to vector<2x1x12x256xbf16>
    %c0 = arith.constant 0 : index
    %c0_0 = arith.constant 0 : index
    %c0_1 = arith.constant 0 : index
    %c0_2 = arith.constant 0 : index
    %5 = vector.load %arg10[%c0, %c0_0, %c0_1, %c0_2] : memref<2x10x12x256xbf16, #tpu.memory_space<vmem>>, vector<2x1x12x256xbf16>
    tpu.vector_store %arg10[%c0, %c0_0, %c0_1, %c0_2], %4 {strides = array<i32>} : memref<2x10x12x256xbf16, #tpu.memory_space<vmem>>, vector<2x1x12x256xbf16>,
    %cst_3 = arith.constant 0.000000e+00 : bf16
    %6 = vector.broadcast %cst_3 : bf16 to vector<2x1x12x256xbf16>
    %c0_4 = arith.constant 0 : index
    %c9 = arith.constant 9 : index
    %c0_5 = arith.constant 0 : index
    %c0_6 = arith.constant 0 : index
    %7 = vector.load %arg10[%c0_4, %c9, %c0_5, %c0_6] : memref<2x10x12x256xbf16, #tpu.memory_space<vmem>>, vector<2x1x12x256xbf16>
    tpu.vector_store %arg10[%c0_4, %c9, %c0_5, %c0_6], %6 {strides = array<i32>} : memref<2x10x12x256xbf16, #tpu.memory_space<vmem>>, vector<2x1x12x256xbf16>,
    %cst_7 = arith.constant 0.000000e+00 : bf16
    %8 = vector.broadcast %cst_7 : bf16 to vector<2x10x2x256xbf16>
    %c0_8 = arith.constant 0 : index
    %c0_9 = arith.constant 0 : index
    %c0_10 = arith.constant 0 : index
    %c0_11 = arith.constant 0 : index
    %9 = vector.load %arg10[%c0_8, %c0_9, %c0_10, %c0_11] : memref<2x10x12x256xbf16, #tpu.memory_space<vmem>>, vector<2x10x2x256xbf16>
    tpu.vector_store %arg10[%c0_8, %c0_9, %c0_10, %c0_11], %8 {strides = array<i32>} : memref<2x10x12x256xbf16, #tpu.memory_space<vmem>>, vector<2x10x2x256xbf16>,
    %cst_12 = arith.constant 0.000000e+00 : bf16
    %10 = vector.broadcast %cst_12 : bf16 to vector<2x10x2x256xbf16>
    %c0_13 = arith.constant 0 : index
    %c0_14 = arith.constant 0 : index
    %c10 = arith.constant 10 : index
    %c0_15 = arith.constant 0 : index
    %11 = vector.load %arg10[%c0_13, %c0_14, %c10, %c0_15] : memref<2x10x12x256xbf16, #tpu.memory_space<vmem>>, vector<2x10x2x256xbf16>
    tpu.vector_store %arg10[%c0_13, %c0_14, %c10, %c0_15], %10 {strides = array<i32>} : memref<2x10x12x256xbf16, #tpu.memory_space<vmem>>, vector<2x10x2x256xbf16>,
    %c0_16 = arith.constant 0 : index
    %c0_17 = arith.constant 0 : index
    %c0_18 = arith.constant 0 : index
    %c0_19 = arith.constant 0 : index
    %12 = vector.load %arg0[%c0_16, %c0_17, %c0_18, %c0_19] : memref<2x8x8x256xf32, #tpu.memory_space<vmem>>, vector<2x8x8x256xf32>
    %13 = arith.truncf %12 : vector<2x8x8x256xf32> to vector<2x8x8x256xbf16>
    %c0_20 = arith.constant 0 : index
    %c1 = arith.constant 1 : index
    %c2 = arith.constant 2 : index
    %c0_21 = arith.constant 0 : index
    %14 = vector.load %arg10[%c0_20, %c1, %c2, %c0_21] : memref<2x10x12x256xbf16, #tpu.memory_space<vmem>>, vector<2x8x8x256xbf16>
    tpu.vector_store %arg10[%c0_20, %c1, %c2, %c0_21], %13 {strides = array<i32>} : memref<2x10x12x256xbf16, #tpu.memory_space<vmem>>, vector<2x8x8x256xbf16>,
    %c0_i32_22 = arith.constant 0 : i32
    %15 = tpu.memref_slice %arg11[%c0_i32_22] : memref<2x!tpu.dma_semaphore, #tpu.memory_space<semaphore_mem>> -> memref<1x!tpu.dma_semaphore, #tpu.memory_space<semaphore_mem>>
    %16 = tpu.memref_squeeze %15 : memref<1x!tpu.dma_semaphore, #tpu.memory_space<semaphore_mem>> -> memref<!tpu.dma_semaphore, #tpu.memory_space<semaphore_mem>>
    tpu.wait_dma2 semaphore(%16 : memref<!tpu.dma_semaphore, #tpu.memory_space<semaphore_mem>>) src(%arg5 : memref<9x256x256xbf16, #tpu.memory_space<any>>) dst(%arg8 : memref<9x256x256xbf16, #tpu.memory_space<vmem>>)
    %c0_23 = arith.constant 0 : index
    %c0_24 = arith.constant 0 : index
    %c1_25 = arith.constant 1 : index
    %c0_26 = arith.constant 0 : index
    %17 = vector.load %arg10[%c0_23, %c0_24, %c1_25, %c0_26] : memref<2x10x12x256xbf16, #tpu.memory_space<vmem>>, vector<2x8x8x256xbf16>
    %18 = vector.shape_cast %17 : vector<2x8x8x256xbf16> to vector<128x256xbf16>
    %c0_27 = arith.constant 0 : index
    %c0_28 = arith.constant 0 : index
    %c0_29 = arith.constant 0 : index
    %19 = vector.load %arg8[%c0_27, %c0_28, %c0_29] : memref<9x256x256xbf16, #tpu.memory_space<vmem>>, vector<1x256x256xbf16>
    %20 = vector.shape_cast %19 : vector<1x256x256xbf16> to vector<256x256xbf16>
    %cst_30 = arith.constant dense<0.000000e+00> : vector<128x256xf32>
    %21 = tpu.matmul %18, %20, %cst_30 {dimension_numbers = #tpu.dot_dimension_numbers<[1], [0], [0], [1], [0, 0, 1, 1], [], []>} : vector<128x256xbf16>, vector<256x256xbf16>, vector<128x256xf32> -> vector<128x256xf32>
    %c0_31 = arith.constant 0 : index
    %c0_32 = arith.constant 0 : index
    %c2_33 = arith.constant 2 : index
    %c0_34 = arith.constant 0 : index
    %22 = vector.load %arg10[%c0_31, %c0_32, %c2_33, %c0_34] : memref<2x10x12x256xbf16, #tpu.memory_space<vmem>>, vector<2x8x8x256xbf16>
    %23 = vector.shape_cast %22 : vector<2x8x8x256xbf16> to vector<128x256xbf16>
    %c1_35 = arith.constant 1 : index
    %c0_36 = arith.constant 0 : index
    %c0_37 = arith.constant 0 : index
    %24 = vector.load %arg8[%c1_35, %c0_36, %c0_37] : memref<9x256x256xbf16, #tpu.memory_space<vmem>>, vector<1x256x256xbf16>
    %25 = vector.shape_cast %24 : vector<1x256x256xbf16> to vector<256x256xbf16>
    %cst_38 = arith.constant dense<0.000000e+00> : vector<128x256xf32>
    %26 = tpu.matmul %23, %25, %cst_38 {dimension_numbers = #tpu.dot_dimension_numbers<[1], [0], [0], [1], [0, 0, 1, 1], [], []>} : vector<128x256xbf16>, vector<256x256xbf16>, vector<128x256xf32> -> vector<128x256xf32>
    %27 = arith.addf %21, %26 : vector<128x256xf32>
    %c0_39 = arith.constant 0 : index
    %c0_40 = arith.constant 0 : index
    %c3 = arith.constant 3 : index
    %c0_41 = arith.constant 0 : index
    %28 = vector.load %arg10[%c0_39, %c0_40, %c3, %c0_41] : memref<2x10x12x256xbf16, #tpu.memory_space<vmem>>, vector<2x8x8x256xbf16>
    %29 = vector.shape_cast %28 : vector<2x8x8x256xbf16> to vector<128x256xbf16>
    %c2_42 = arith.constant 2 : index
    %c0_43 = arith.constant 0 : index
    %c0_44 = arith.constant 0 : index
    %30 = vector.load %arg8[%c2_42, %c0_43, %c0_44] : memref<9x256x256xbf16, #tpu.memory_space<vmem>>, vector<1x256x256xbf16>
    %31 = vector.shape_cast %30 : vector<1x256x256xbf16> to vector<256x256xbf16>
    %cst_45 = arith.constant dense<0.000000e+00> : vector<128x256xf32>
    %32 = tpu.matmul %29, %31, %cst_45 {dimension_numbers = #tpu.dot_dimension_numbers<[1], [0], [0], [1], [0, 0, 1, 1], [], []>} : vector<128x256xbf16>, vector<256x256xbf16>, vector<128x256xf32> -> vector<128x256xf32>
    %33 = arith.addf %27, %32 : vector<128x256xf32>
    %c0_46 = arith.constant 0 : index
    %c1_47 = arith.constant 1 : index
    %c1_48 = arith.constant 1 : index
    %c0_49 = arith.constant 0 : index
    %34 = vector.load %arg10[%c0_46, %c1_47, %c1_48, %c0_49] : memref<2x10x12x256xbf16, #tpu.memory_space<vmem>>, vector<2x8x8x256xbf16>
    %35 = vector.shape_cast %34 : vector<2x8x8x256xbf16> to vector<128x256xbf16>
    %c3_50 = arith.constant 3 : index
    %c0_51 = arith.constant 0 : index
    %c0_52 = arith.constant 0 : index
    %36 = vector.load %arg8[%c3_50, %c0_51, %c0_52] : memref<9x256x256xbf16, #tpu.memory_space<vmem>>, vector<1x256x256xbf16>
    %37 = vector.shape_cast %36 : vector<1x256x256xbf16> to vector<256x256xbf16>
    %cst_53 = arith.constant dense<0.000000e+00> : vector<128x256xf32>
    %38 = tpu.matmul %35, %37, %cst_53 {dimension_numbers = #tpu.dot_dimension_numbers<[1], [0], [0], [1], [0, 0, 1, 1], [], []>} : vector<128x256xbf16>, vector<256x256xbf16>, vector<128x256xf32> -> vector<128x256xf32>
    %39 = arith.addf %33, %38 : vector<128x256xf32>
    %c0_54 = arith.constant 0 : index
    %c1_55 = arith.constant 1 : index
    %c2_56 = arith.constant 2 : index
    %c0_57 = arith.constant 0 : index
    %40 = vector.load %arg10[%c0_54, %c1_55, %c2_56, %c0_57] : memref<2x10x12x256xbf16, #tpu.memory_space<vmem>>, vector<2x8x8x256xbf16>
    %41 = vector.shape_cast %40 : vector<2x8x8x256xbf16> to vector<128x256xbf16>
    %c4 = arith.constant 4 : index
    %c0_58 = arith.constant 0 : index
    %c0_59 = arith.constant 0 : index
    %42 = vector.load %arg8[%c4, %c0_58, %c0_59] : memref<9x256x256xbf16, #tpu.memory_space<vmem>>, vector<1x256x256xbf16>
    %43 = vector.shape_cast %42 : vector<1x256x256xbf16> to vector<256x256xbf16>
    %cst_60 = arith.constant dense<0.000000e+00> : vector<128x256xf32>
    %44 = tpu.matmul %41, %43, %cst_60 {dimension_numbers = #tpu.dot_dimension_numbers<[1], [0], [0], [1], [0, 0, 1, 1], [], []>} : vector<128x256xbf16>, vector<256x256xbf16>, vector<128x256xf32> -> vector<128x256xf32>
    %45 = arith.addf %39, %44 : vector<128x256xf32>
    %c0_61 = arith.constant 0 : index
    %c1_62 = arith.constant 1 : index
    %c3_63 = arith.constant 3 : index
    %c0_64 = arith.constant 0 : index
    %46 = vector.load %arg10[%c0_61, %c1_62, %c3_63, %c0_64] : memref<2x10x12x256xbf16, #tpu.memory_space<vmem>>, vector<2x8x8x256xbf16>
    %47 = vector.shape_cast %46 : vector<2x8x8x256xbf16> to vector<128x256xbf16>
    %c5 = arith.constant 5 : index
    %c0_65 = arith.constant 0 : index
    %c0_66 = arith.constant 0 : index
    %48 = vector.load %arg8[%c5, %c0_65, %c0_66] : memref<9x256x256xbf16, #tpu.memory_space<vmem>>, vector<1x256x256xbf16>
    %49 = vector.shape_cast %48 : vector<1x256x256xbf16> to vector<256x256xbf16>
    %cst_67 = arith.constant dense<0.000000e+00> : vector<128x256xf32>
    %50 = tpu.matmul %47, %49, %cst_67 {dimension_numbers = #tpu.dot_dimension_numbers<[1], [0], [0], [1], [0, 0, 1, 1], [], []>} : vector<128x256xbf16>, vector<256x256xbf16>, vector<128x256xf32> -> vector<128x256xf32>
    %51 = arith.addf %45, %50 : vector<128x256xf32>
    %c0_68 = arith.constant 0 : index
    %c2_69 = arith.constant 2 : index
    %c1_70 = arith.constant 1 : index
    %c0_71 = arith.constant 0 : index
    %52 = vector.load %arg10[%c0_68, %c2_69, %c1_70, %c0_71] : memref<2x10x12x256xbf16, #tpu.memory_space<vmem>>, vector<2x8x8x256xbf16>
    %53 = vector.shape_cast %52 : vector<2x8x8x256xbf16> to vector<128x256xbf16>
    %c6 = arith.constant 6 : index
    %c0_72 = arith.constant 0 : index
    %c0_73 = arith.constant 0 : index
    %54 = vector.load %arg8[%c6, %c0_72, %c0_73] : memref<9x256x256xbf16, #tpu.memory_space<vmem>>, vector<1x256x256xbf16>
    %55 = vector.shape_cast %54 : vector<1x256x256xbf16> to vector<256x256xbf16>
    %cst_74 = arith.constant dense<0.000000e+00> : vector<128x256xf32>
    %56 = tpu.matmul %53, %55, %cst_74 {dimension_numbers = #tpu.dot_dimension_numbers<[1], [0], [0], [1], [0, 0, 1, 1], [], []>} : vector<128x256xbf16>, vector<256x256xbf16>, vector<128x256xf32> -> vector<128x256xf32>
    %57 = arith.addf %51, %56 : vector<128x256xf32>
    %c0_75 = arith.constant 0 : index
    %c2_76 = arith.constant 2 : index
    %c2_77 = arith.constant 2 : index
    %c0_78 = arith.constant 0 : index
    %58 = vector.load %arg10[%c0_75, %c2_76, %c2_77, %c0_78] : memref<2x10x12x256xbf16, #tpu.memory_space<vmem>>, vector<2x8x8x256xbf16>
    %59 = vector.shape_cast %58 : vector<2x8x8x256xbf16> to vector<128x256xbf16>
    %c7 = arith.constant 7 : index
    %c0_79 = arith.constant 0 : index
    %c0_80 = arith.constant 0 : index
    %60 = vector.load %arg8[%c7, %c0_79, %c0_80] : memref<9x256x256xbf16, #tpu.memory_space<vmem>>, vector<1x256x256xbf16>
    %61 = vector.shape_cast %60 : vector<1x256x256xbf16> to vector<256x256xbf16>
    %cst_81 = arith.constant dense<0.000000e+00> : vector<128x256xf32>
    %62 = tpu.matmul %59, %61, %cst_81 {dimension_numbers = #tpu.dot_dimension_numbers<[1], [0], [0], [1], [0, 0, 1, 1], [], []>} : vector<128x256xbf16>, vector<256x256xbf16>, vector<128x256xf32> -> vector<128x256xf32>
    %63 = arith.addf %57, %62 : vector<128x256xf32>
    %c0_82 = arith.constant 0 : index
    %c2_83 = arith.constant 2 : index
    %c3_84 = arith.constant 3 : index
    %c0_85 = arith.constant 0 : index
    %64 = vector.load %arg10[%c0_82, %c2_83, %c3_84, %c0_85] : memref<2x10x12x256xbf16, #tpu.memory_space<vmem>>, vector<2x8x8x256xbf16>
    %65 = vector.shape_cast %64 : vector<2x8x8x256xbf16> to vector<128x256xbf16>
    %c8 = arith.constant 8 : index
    %c0_86 = arith.constant 0 : index
    %c0_87 = arith.constant 0 : index
    %66 = vector.load %arg8[%c8, %c0_86, %c0_87] : memref<9x256x256xbf16, #tpu.memory_space<vmem>>, vector<1x256x256xbf16>
    %67 = vector.shape_cast %66 : vector<1x256x256xbf16> to vector<256x256xbf16>
    %cst_88 = arith.constant dense<0.000000e+00> : vector<128x256xf32>
    %68 = tpu.matmul %65, %67, %cst_88 {dimension_numbers = #tpu.dot_dimension_numbers<[1], [0], [0], [1], [0, 0, 1, 1], [], []>} : vector<128x256xbf16>, vector<256x256xbf16>, vector<128x256xf32> -> vector<128x256xf32>
    %69 = arith.addf %63, %68 : vector<128x256xf32>
    %cst_89 = arith.constant dense<0.000000e+00> : vector<256xf32>
    %70 = vector.multi_reduction <add>, %69, %cst_89 [0] : vector<128x256xf32> to vector<256xf32>
    %71 = vector.shape_cast %70 : vector<256xf32> to vector<1x256xf32>
    %72 = arith.mulf %69, %69 : vector<128x256xf32>
    %cst_90 = arith.constant dense<0.000000e+00> : vector<256xf32>
    %73 = vector.multi_reduction <add>, %72, %cst_90 [0] : vector<128x256xf32> to vector<256xf32>
    %74 = vector.shape_cast %73 : vector<256xf32> to vector<1x256xf32>
    %cst_91 = arith.constant 7.812500e-03 : f32
    %75 = vector.broadcast %cst_91 : f32 to vector<1x256xf32>
    %76 = arith.mulf %71, %75 : vector<1x256xf32>
    %cst_92 = arith.constant 7.812500e-03 : f32
    %77 = vector.broadcast %cst_92 : f32 to vector<1x256xf32>
    %78 = arith.mulf %74, %77 : vector<1x256xf32>
    %79 = arith.mulf %76, %76 : vector<1x256xf32>
    %80 = arith.subf %78, %79 : vector<1x256xf32>
    %cst_93 = arith.constant 0.000000e+00 : f32
    %81 = vector.broadcast %cst_93 : f32 to vector<1x256xf32>
    %82 = arith.maximumf %80, %81 : vector<1x256xf32>
    %cst_94 = arith.constant 9.99999974E-6 : f32
    %83 = vector.broadcast %cst_94 : f32 to vector<1x256xf32>
    %84 = arith.addf %82, %83 : vector<1x256xf32>
    %85 = math.rsqrt %84 : vector<1x256xf32>
    %c0_95 = arith.constant 0 : index
    %c0_96 = arith.constant 0 : index
    %86 = vector.load %arg1[%c0_95, %c0_96] : memref<1x256xf32, #tpu.memory_space<vmem>>, vector<1x256xf32>
    %87 = arith.mulf %85, %86 : vector<1x256xf32>
    %c0_97 = arith.constant 0 : index
    %c0_98 = arith.constant 0 : index
    %88 = vector.load %arg2[%c0_97, %c0_98] : memref<1x256xf32, #tpu.memory_space<vmem>>, vector<1x256xf32>
    %89 = arith.mulf %76, %87 : vector<1x256xf32>
    %90 = arith.subf %88, %89 : vector<1x256xf32>
    %91 = vector.broadcast %87 : vector<1x256xf32> to vector<128x256xf32>
    %92 = arith.mulf %69, %91 : vector<128x256xf32>
    %93 = vector.broadcast %90 : vector<1x256xf32> to vector<128x256xf32>
    %94 = arith.addf %92, %93 : vector<128x256xf32>
    %cst_99 = arith.constant 0.000000e+00 : f32
    %95 = vector.broadcast %cst_99 : f32 to vector<128x256xf32>
    %96 = arith.maximumf %94, %95 : vector<128x256xf32>
    %97 = vector.shape_cast %96 : vector<128x256xf32> to vector<2x8x8x256xf32>
    %98 = arith.truncf %97 : vector<2x8x8x256xf32> to vector<2x8x8x256xbf16>
    %c0_100 = arith.constant 0 : index
    %c1_101 = arith.constant 1 : index
    %c2_102 = arith.constant 2 : index
    %c0_103 = arith.constant 0 : index
    %99 = vector.load %arg10[%c0_100, %c1_101, %c2_102, %c0_103] : memref<2x10x12x256xbf16, #tpu.memory_space<vmem>>, vector<2x8x8x256xbf16>
    tpu.vector_store %arg10[%c0_100, %c1_101, %c2_102, %c0_103], %98 {strides = array<i32>} : memref<2x10x12x256xbf16, #tpu.memory_space<vmem>>, vector<2x8x8x256xbf16>,
    %c1_i32_104 = arith.constant 1 : i32
    %100 = tpu.memref_slice %arg11[%c1_i32_104] : memref<2x!tpu.dma_semaphore, #tpu.memory_space<semaphore_mem>> -> memref<1x!tpu.dma_semaphore, #tpu.memory_space<semaphore_mem>>
    %101 = tpu.memref_squeeze %100 : memref<1x!tpu.dma_semaphore, #tpu.memory_space<semaphore_mem>> -> memref<!tpu.dma_semaphore, #tpu.memory_space<semaphore_mem>>
    tpu.wait_dma2 semaphore(%101 : memref<!tpu.dma_semaphore, #tpu.memory_space<semaphore_mem>>) src(%arg6 : memref<9x256x256xbf16, #tpu.memory_space<any>>) dst(%arg9 : memref<9x256x256xbf16, #tpu.memory_space<vmem>>)
    %c0_105 = arith.constant 0 : index
    %c0_106 = arith.constant 0 : index
    %c1_107 = arith.constant 1 : index
    %c0_108 = arith.constant 0 : index
    %102 = vector.load %arg10[%c0_105, %c0_106, %c1_107, %c0_108] : memref<2x10x12x256xbf16, #tpu.memory_space<vmem>>, vector<2x8x8x256xbf16>
    %103 = vector.shape_cast %102 : vector<2x8x8x256xbf16> to vector<128x256xbf16>
    %c0_109 = arith.constant 0 : index
    %c0_110 = arith.constant 0 : index
    %c0_111 = arith.constant 0 : index
    %104 = vector.load %arg9[%c0_109, %c0_110, %c0_111] : memref<9x256x256xbf16, #tpu.memory_space<vmem>>, vector<1x256x256xbf16>
    %105 = vector.shape_cast %104 : vector<1x256x256xbf16> to vector<256x256xbf16>
    %cst_112 = arith.constant dense<0.000000e+00> : vector<128x256xf32>
    %106 = tpu.matmul %103, %105, %cst_112 {dimension_numbers = #tpu.dot_dimension_numbers<[1], [0], [0], [1], [0, 0, 1, 1], [], []>} : vector<128x256xbf16>, vector<256x256xbf16>, vector<128x256xf32> -> vector<128x256xf32>
    %c0_113 = arith.constant 0 : index
    %c0_114 = arith.constant 0 : index
    %c2_115 = arith.constant 2 : index
    %c0_116 = arith.constant 0 : index
    %107 = vector.load %arg10[%c0_113, %c0_114, %c2_115, %c0_116] : memref<2x10x12x256xbf16, #tpu.memory_space<vmem>>, vector<2x8x8x256xbf16>
    %108 = vector.shape_cast %107 : vector<2x8x8x256xbf16> to vector<128x256xbf16>
    %c1_117 = arith.constant 1 : index
    %c0_118 = arith.constant 0 : index
    %c0_119 = arith.constant 0 : index
    %109 = vector.load %arg9[%c1_117, %c0_118, %c0_119] : memref<9x256x256xbf16, #tpu.memory_space<vmem>>, vector<1x256x256xbf16>
    %110 = vector.shape_cast %109 : vector<1x256x256xbf16> to vector<256x256xbf16>
    %cst_120 = arith.constant dense<0.000000e+00> : vector<128x256xf32>
    %111 = tpu.matmul %108, %110, %cst_120 {dimension_numbers = #tpu.dot_dimension_numbers<[1], [0], [0], [1], [0, 0, 1, 1], [], []>} : vector<128x256xbf16>, vector<256x256xbf16>, vector<128x256xf32> -> vector<128x256xf32>
    %112 = arith.addf %106, %111 : vector<128x256xf32>
    %c0_121 = arith.constant 0 : index
    %c0_122 = arith.constant 0 : index
    %c3_123 = arith.constant 3 : index
    %c0_124 = arith.constant 0 : index
    %113 = vector.load %arg10[%c0_121, %c0_122, %c3_123, %c0_124] : memref<2x10x12x256xbf16, #tpu.memory_space<vmem>>, vector<2x8x8x256xbf16>
    %114 = vector.shape_cast %113 : vector<2x8x8x256xbf16> to vector<128x256xbf16>
    %c2_125 = arith.constant 2 : index
    %c0_126 = arith.constant 0 : index
    %c0_127 = arith.constant 0 : index
    %115 = vector.load %arg9[%c2_125, %c0_126, %c0_127] : memref<9x256x256xbf16, #tpu.memory_space<vmem>>, vector<1x256x256xbf16>
    %116 = vector.shape_cast %115 : vector<1x256x256xbf16> to vector<256x256xbf16>
    %cst_128 = arith.constant dense<0.000000e+00> : vector<128x256xf32>
    %117 = tpu.matmul %114, %116, %cst_128 {dimension_numbers = #tpu.dot_dimension_numbers<[1], [0], [0], [1], [0, 0, 1, 1], [], []>} : vector<128x256xbf16>, vector<256x256xbf16>, vector<128x256xf32> -> vector<128x256xf32>
    %118 = arith.addf %112, %117 : vector<128x256xf32>
    %c0_129 = arith.constant 0 : index
    %c1_130 = arith.constant 1 : index
    %c1_131 = arith.constant 1 : index
    %c0_132 = arith.constant 0 : index
    %119 = vector.load %arg10[%c0_129, %c1_130, %c1_131, %c0_132] : memref<2x10x12x256xbf16, #tpu.memory_space<vmem>>, vector<2x8x8x256xbf16>
    %120 = vector.shape_cast %119 : vector<2x8x8x256xbf16> to vector<128x256xbf16>
    %c3_133 = arith.constant 3 : index
    %c0_134 = arith.constant 0 : index
    %c0_135 = arith.constant 0 : index
    %121 = vector.load %arg9[%c3_133, %c0_134, %c0_135] : memref<9x256x256xbf16, #tpu.memory_space<vmem>>, vector<1x256x256xbf16>
    %122 = vector.shape_cast %121 : vector<1x256x256xbf16> to vector<256x256xbf16>
    %cst_136 = arith.constant dense<0.000000e+00> : vector<128x256xf32>
    %123 = tpu.matmul %120, %122, %cst_136 {dimension_numbers = #tpu.dot_dimension_numbers<[1], [0], [0], [1], [0, 0, 1, 1], [], []>} : vector<128x256xbf16>, vector<256x256xbf16>, vector<128x256xf32> -> vector<128x256xf32>
    %124 = arith.addf %118, %123 : vector<128x256xf32>
    %c0_137 = arith.constant 0 : index
    %c1_138 = arith.constant 1 : index
    %c2_139 = arith.constant 2 : index
    %c0_140 = arith.constant 0 : index
    %125 = vector.load %arg10[%c0_137, %c1_138, %c2_139, %c0_140] : memref<2x10x12x256xbf16, #tpu.memory_space<vmem>>, vector<2x8x8x256xbf16>
    %126 = vector.shape_cast %125 : vector<2x8x8x256xbf16> to vector<128x256xbf16>
    %c4_141 = arith.constant 4 : index
    %c0_142 = arith.constant 0 : index
    %c0_143 = arith.constant 0 : index
    %127 = vector.load %arg9[%c4_141, %c0_142, %c0_143] : memref<9x256x256xbf16, #tpu.memory_space<vmem>>, vector<1x256x256xbf16>
    %128 = vector.shape_cast %127 : vector<1x256x256xbf16> to vector<256x256xbf16>
    %cst_144 = arith.constant dense<0.000000e+00> : vector<128x256xf32>
    %129 = tpu.matmul %126, %128, %cst_144 {dimension_numbers = #tpu.dot_dimension_numbers<[1], [0], [0], [1], [0, 0, 1, 1], [], []>} : vector<128x256xbf16>, vector<256x256xbf16>, vector<128x256xf32> -> vector<128x256xf32>
    %130 = arith.addf %124, %129 : vector<128x256xf32>
    %c0_145 = arith.constant 0 : index
    %c1_146 = arith.constant 1 : index
    %c3_147 = arith.constant 3 : index
    %c0_148 = arith.constant 0 : index
    %131 = vector.load %arg10[%c0_145, %c1_146, %c3_147, %c0_148] : memref<2x10x12x256xbf16, #tpu.memory_space<vmem>>, vector<2x8x8x256xbf16>
    %132 = vector.shape_cast %131 : vector<2x8x8x256xbf16> to vector<128x256xbf16>
    %c5_149 = arith.constant 5 : index
    %c0_150 = arith.constant 0 : index
    %c0_151 = arith.constant 0 : index
    %133 = vector.load %arg9[%c5_149, %c0_150, %c0_151] : memref<9x256x256xbf16, #tpu.memory_space<vmem>>, vector<1x256x256xbf16>
    %134 = vector.shape_cast %133 : vector<1x256x256xbf16> to vector<256x256xbf16>
    %cst_152 = arith.constant dense<0.000000e+00> : vector<128x256xf32>
    %135 = tpu.matmul %132, %134, %cst_152 {dimension_numbers = #tpu.dot_dimension_numbers<[1], [0], [0], [1], [0, 0, 1, 1], [], []>} : vector<128x256xbf16>, vector<256x256xbf16>, vector<128x256xf32> -> vector<128x256xf32>
    %136 = arith.addf %130, %135 : vector<128x256xf32>
    %c0_153 = arith.constant 0 : index
    %c2_154 = arith.constant 2 : index
    %c1_155 = arith.constant 1 : index
    %c0_156 = arith.constant 0 : index
    %137 = vector.load %arg10[%c0_153, %c2_154, %c1_155, %c0_156] : memref<2x10x12x256xbf16, #tpu.memory_space<vmem>>, vector<2x8x8x256xbf16>
    %138 = vector.shape_cast %137 : vector<2x8x8x256xbf16> to vector<128x256xbf16>
    %c6_157 = arith.constant 6 : index
    %c0_158 = arith.constant 0 : index
    %c0_159 = arith.constant 0 : index
    %139 = vector.load %arg9[%c6_157, %c0_158, %c0_159] : memref<9x256x256xbf16, #tpu.memory_space<vmem>>, vector<1x256x256xbf16>
    %140 = vector.shape_cast %139 : vector<1x256x256xbf16> to vector<256x256xbf16>
    %cst_160 = arith.constant dense<0.000000e+00> : vector<128x256xf32>
    %141 = tpu.matmul %138, %140, %cst_160 {dimension_numbers = #tpu.dot_dimension_numbers<[1], [0], [0], [1], [0, 0, 1, 1], [], []>} : vector<128x256xbf16>, vector<256x256xbf16>, vector<128x256xf32> -> vector<128x256xf32>
    %142 = arith.addf %136, %141 : vector<128x256xf32>
    %c0_161 = arith.constant 0 : index
    %c2_162 = arith.constant 2 : index
    %c2_163 = arith.constant 2 : index
    %c0_164 = arith.constant 0 : index
    %143 = vector.load %arg10[%c0_161, %c2_162, %c2_163, %c0_164] : memref<2x10x12x256xbf16, #tpu.memory_space<vmem>>, vector<2x8x8x256xbf16>
    %144 = vector.shape_cast %143 : vector<2x8x8x256xbf16> to vector<128x256xbf16>
    %c7_165 = arith.constant 7 : index
    %c0_166 = arith.constant 0 : index
    %c0_167 = arith.constant 0 : index
    %145 = vector.load %arg9[%c7_165, %c0_166, %c0_167] : memref<9x256x256xbf16, #tpu.memory_space<vmem>>, vector<1x256x256xbf16>
    %146 = vector.shape_cast %145 : vector<1x256x256xbf16> to vector<256x256xbf16>
    %cst_168 = arith.constant dense<0.000000e+00> : vector<128x256xf32>
    %147 = tpu.matmul %144, %146, %cst_168 {dimension_numbers = #tpu.dot_dimension_numbers<[1], [0], [0], [1], [0, 0, 1, 1], [], []>} : vector<128x256xbf16>, vector<256x256xbf16>, vector<128x256xf32> -> vector<128x256xf32>
    %148 = arith.addf %142, %147 : vector<128x256xf32>
    %c0_169 = arith.constant 0 : index
    %c2_170 = arith.constant 2 : index
    %c3_171 = arith.constant 3 : index
    %c0_172 = arith.constant 0 : index
    %149 = vector.load %arg10[%c0_169, %c2_170, %c3_171, %c0_172] : memref<2x10x12x256xbf16, #tpu.memory_space<vmem>>, vector<2x8x8x256xbf16>
    %150 = vector.shape_cast %149 : vector<2x8x8x256xbf16> to vector<128x256xbf16>
    %c8_173 = arith.constant 8 : index
    %c0_174 = arith.constant 0 : index
    %c0_175 = arith.constant 0 : index
    %151 = vector.load %arg9[%c8_173, %c0_174, %c0_175] : memref<9x256x256xbf16, #tpu.memory_space<vmem>>, vector<1x256x256xbf16>
    %152 = vector.shape_cast %151 : vector<1x256x256xbf16> to vector<256x256xbf16>
    %cst_176 = arith.constant dense<0.000000e+00> : vector<128x256xf32>
    %153 = tpu.matmul %150, %152, %cst_176 {dimension_numbers = #tpu.dot_dimension_numbers<[1], [0], [0], [1], [0, 0, 1, 1], [], []>} : vector<128x256xbf16>, vector<256x256xbf16>, vector<128x256xf32> -> vector<128x256xf32>
    %154 = arith.addf %148, %153 : vector<128x256xf32>
    %cst_177 = arith.constant dense<0.000000e+00> : vector<256xf32>
    %155 = vector.multi_reduction <add>, %154, %cst_177 [0] : vector<128x256xf32> to vector<256xf32>
    %156 = vector.shape_cast %155 : vector<256xf32> to vector<1x256xf32>
    %157 = arith.mulf %154, %154 : vector<128x256xf32>
    %cst_178 = arith.constant dense<0.000000e+00> : vector<256xf32>
    %158 = vector.multi_reduction <add>, %157, %cst_178 [0] : vector<128x256xf32> to vector<256xf32>
    %159 = vector.shape_cast %158 : vector<256xf32> to vector<1x256xf32>
    %cst_179 = arith.constant 7.812500e-03 : f32
    %160 = vector.broadcast %cst_179 : f32 to vector<1x256xf32>
    %161 = arith.mulf %156, %160 : vector<1x256xf32>
    %cst_180 = arith.constant 7.812500e-03 : f32
    %162 = vector.broadcast %cst_180 : f32 to vector<1x256xf32>
    %163 = arith.mulf %159, %162 : vector<1x256xf32>
    %164 = arith.mulf %161, %161 : vector<1x256xf32>
    %165 = arith.subf %163, %164 : vector<1x256xf32>
    %cst_181 = arith.constant 0.000000e+00 : f32
    %166 = vector.broadcast %cst_181 : f32 to vector<1x256xf32>
    %167 = arith.maximumf %165, %166 : vector<1x256xf32>
    %cst_182 = arith.constant 9.99999974E-6 : f32
    %168 = vector.broadcast %cst_182 : f32 to vector<1x256xf32>
    %169 = arith.addf %167, %168 : vector<1x256xf32>
    %170 = math.rsqrt %169 : vector<1x256xf32>
    %c0_183 = arith.constant 0 : index
    %c0_184 = arith.constant 0 : index
    %171 = vector.load %arg3[%c0_183, %c0_184] : memref<1x256xf32, #tpu.memory_space<vmem>>, vector<1x256xf32>
    %172 = arith.mulf %170, %171 : vector<1x256xf32>
    %c0_185 = arith.constant 0 : index
    %c0_186 = arith.constant 0 : index
    %173 = vector.load %arg4[%c0_185, %c0_186] : memref<1x256xf32, #tpu.memory_space<vmem>>, vector<1x256xf32>
    %174 = arith.mulf %161, %172 : vector<1x256xf32>
    %175 = arith.subf %173, %174 : vector<1x256xf32>
    %176 = vector.broadcast %172 : vector<1x256xf32> to vector<128x256xf32>
    %177 = arith.mulf %154, %176 : vector<128x256xf32>
    %178 = vector.broadcast %175 : vector<1x256xf32> to vector<128x256xf32>
    %179 = arith.addf %177, %178 : vector<128x256xf32>
    %180 = vector.shape_cast %179 : vector<128x256xf32> to vector<2x8x8x256xf32>
    %c0_187 = arith.constant 0 : index
    %c0_188 = arith.constant 0 : index
    %c0_189 = arith.constant 0 : index
    %c0_190 = arith.constant 0 : index
    %181 = vector.load %arg0[%c0_187, %c0_188, %c0_189, %c0_190] : memref<2x8x8x256xf32, #tpu.memory_space<vmem>>, vector<2x8x8x256xf32>
    %182 = arith.addf %180, %181 : vector<2x8x8x256xf32>
    %c0_191 = arith.constant 0 : index
    %c0_192 = arith.constant 0 : index
    %c0_193 = arith.constant 0 : index
    %c0_194 = arith.constant 0 : index
    %183 = vector.load %arg7[%c0_191, %c0_192, %c0_193, %c0_194] : memref<2x8x8x256xf32, #tpu.memory_space<vmem>>, vector<2x8x8x256xf32>
    tpu.vector_store %arg7[%c0_191, %c0_192, %c0_193, %c0_194], %182 {strides = array<i32>} : memref<2x8x8x256xf32, #tpu.memory_space<vmem>>, vector<2x8x8x256xf32>,
    return
  }
}

</mosaic_0001>

<llo_original>
// kernel: residual_block.1
$region0: #{residual_block.1}
  #allocation0 [shape = 'u32[]', space=smem, size = 0x4, offset = 0x4, fixed_abs, tag = 'smem constant byte address 0x4 - core index']
  #allocation1 [shape = 'u32[144,128]{1,0:T(1,128)}', space=vmem, size = 0x12000, scoped, tag = 'internal scratch']
  #allocation2 [shape = 'bf16[9,256,256]{2,1,0:T(16,128)(2,1)}', space=vmem, size = 0x120000, scoped, tag = 'scratch operand']
  #allocation3 [shape = 'bf16[9,256,256]{2,1,0:T(16,128)(2,1)}', space=vmem, size = 0x120000, scoped, tag = 'scratch operand']
  #allocation4 [shape = 'bf16[2,10,12,256]{3,2,1,0:T(8,128)(2,1)}', space=vmem, size = 0x28000, scoped, tag = 'scratch operand']
  #allocation5 [shape = 's32[2]{0}', space=sflag, size = 0x8, scoped, tag = 'scratch operand']
  #allocation16 [shape = 's32[]', space=sflag, size = 0x4, offset = 0, fixed_abs, tag = 'sflag constant byte address 0x0 - dummy sync flag']
  #allocation18 [shape = 's32[]', space=sflag, size = 0x4, offset = 0, fixed_abs, tag = 'sflag constant byte address 0x0 - dummy sync flag']
  %s0 = inlined_call_operand.hbm [shape: f32[2,8,8,256], index: 0, kind: input, shape index: {}]
  %s1 = inlined_call_operand.hbm [shape: f32[1,256], index: 1, kind: input, shape index: {}]
  %s2 = inlined_call_operand.hbm [shape: f32[1,256], index: 2, kind: input, shape index: {}]
  %s3 = inlined_call_operand.hbm [shape: f32[1,256], index: 3, kind: input, shape index: {}]
  %s4 = inlined_call_operand.hbm [shape: f32[1,256], index: 4, kind: input, shape index: {}]
  %s5 = inlined_call_operand.hbm [shape: bf16[9,256,256], index: 5, kind: input, shape index: {}]
  %s6 = inlined_call_operand.hbm [shape: bf16[9,256,256], index: 6, kind: input, shape index: {}]
  %s7 = inlined_call_operand.hbm [shape: f32[2,8,8,256], index: 7, kind: output, shape index: {}]
  %s8 = sld [smem:[#allocation0]]
  $region50: #{residual_block.1} parent=0
    _
  %s10 = ssub.s32 1, %s8
  %s11 = scalar_select 0, %s10, %s8
  $region1: #{residual_block.1} parent=0
    #allocation6 [shape = 'u8[131072]{0}', space=vmem, size = 0x20000, scoped, tag = 'input window, operand 0, single buffered']
    #allocation7 [shape = 's32[1]{0}', space=sflag, size = 0x4, scoped, tag = 'scoped memory for residual_block.1']
    #allocation8 [shape = 's32[1]{0}', space=sflag, size = 0x4, scoped, tag = 'scoped memory for residual_block.1']
    #allocation9 [shape = 'u8[1024]{0}', space=vmem, size = 0x400, scoped, tag = 'input window, operand 1, single buffered']
    #allocation10 [shape = 's32[1]{0}', space=sflag, size = 0x4, scoped, tag = 'scoped memory for residual_block.1']
    #allocation11 [shape = 'u8[1024]{0}', space=vmem, size = 0x400, scoped, tag = 'input window, operand 2, single buffered']
    #allocation12 [shape = 'u8[1024]{0}', space=vmem, size = 0x400, scoped, tag = 'input window, operand 3, single buffered']
    #allocation13 [shape = 's32[1]{0}', space=sflag, size = 0x4, scoped, tag = 'scoped memory for residual_block.1']
    #allocation14 [shape = 'u8[1024]{0}', space=vmem, size = 0x400, scoped, tag = 'input window, operand 4, single buffered']
    #allocation15 [shape = 'u8[131072]{0}', space=vmem, size = 0x20000, scoped, tag = 'output window, operand 0, single buffered']
    #allocation17 [shape = 'u32[9]{0}', space=smem, size = 0x24, scoped, tag = 'DMA stride descriptor']
    #allocation19 [shape = 'u32[9]{0}', space=smem, size = 0x24, scoped, tag = 'DMA stride descriptor']
    %12 = vsyncpa [#allocation7], 0
    %13 = vsyncpa [#allocation10], 0
    %14 = vsyncpa [#allocation13], 0
    %15 = vsyncpa [#allocation8], 0
    // Predicated region
    $region2: #{residual_block.1} parent=1 // pred_check
      _
    $region3: #{residual_block.1} parent=1 // pred_check_branch
      %17 = sbr.rel (0) target = $region5
    $region4: #{residual_block.1} parent=1 // pred_region
      %s19 = ssub.s32 4096, 4096
      %20 = vsyncadd [#allocation7], %s19
      %s21 = sshll.u32 [#allocation6], 4
      %s22 = int_to_ptr.vmem [resolvable:$true] %s21
      %27 = dma.hbm_to_vmem [thread:$0]  %s0, 4096, %s22, [#allocation7], 256, 256, 16
    $region5: #{residual_block.1} parent=1 // pred_fallthru
      _
    // Predicated region
    $region6: #{residual_block.1} parent=1 // pred_check
      _
    $region7: #{residual_block.1} parent=1 // pred_check_branch
      %29 = sbr.rel (0) target = $region9
    $region8: #{residual_block.1} parent=1 // pred_region
      %s31 = ssub.s32 32, 32
      %32 = vsyncadd [#allocation10], %s31
      %s34 = sshll.u32 [#allocation9], 4
      %s35 = int_to_ptr.vmem [resolvable:$true] %s34
      %37 = dma.hbm_to_vmem [thread:$0]  %s1, 32, %s35, [#allocation10]
    $region9: #{residual_block.1} parent=1 // pred_fallthru
      _
    // Predicated region
    $region10: #{residual_block.1} parent=1 // pred_check
      _
    $region11: #{residual_block.1} parent=1 // pred_check_branch
      %39 = sbr.rel (0) target = $region13
    $region12: #{residual_block.1} parent=1 // pred_region
      %s41 = ssub.s32 32, 32
      %42 = vsyncadd [#allocation10], %s41
      %s44 = sshll.u32 [#allocation11], 4
      %s45 = int_to_ptr.vmem [resolvable:$true] %s44
      %47 = dma.hbm_to_vmem [thread:$0]  %s2, 32, %s45, [#allocation10]
    $region13: #{residual_block.1} parent=1 // pred_fallthru
      _
    // Predicated region
    $region14: #{residual_block.1} parent=1 // pred_check
      _
    $region15: #{residual_block.1} parent=1 // pred_check_branch
      %49 = sbr.rel (0) target = $region17
    $region16: #{residual_block.1} parent=1 // pred_region
      %s51 = ssub.s32 32, 32
      %52 = vsyncadd [#allocation13], %s51
      %s54 = sshll.u32 [#allocation12], 4
      %s55 = int_to_ptr.vmem [resolvable:$true] %s54
      %57 = dma.hbm_to_vmem [thread:$0]  %s3, 32, %s55, [#allocation13]
    $region17: #{residual_block.1} parent=1 // pred_fallthru
      _
    // Predicated region
    $region18: #{residual_block.1} parent=1 // pred_check
      _
    $region19: #{residual_block.1} parent=1 // pred_check_branch
      %59 = sbr.rel (0) target = $region21
    $region20: #{residual_block.1} parent=1 // pred_region
      %s61 = ssub.s32 32, 32
      %62 = vsyncadd [#allocation13], %s61
      %s64 = sshll.u32 [#allocation14], 4
      %s65 = int_to_ptr.vmem [resolvable:$true] %s64
      %67 = dma.hbm_to_vmem [thread:$0]  %s4, 32, %s65, [#allocation13]
    $region21: #{residual_block.1} parent=1 // pred_fallthru
      _
    // Predicated region
    $region22: #{residual_block.1} parent=1 // pred_check
      _
    $region23: #{residual_block.1} parent=1 // pred_check_branch
      %69 = sbr.rel (0) target = $region25
    $region24: #{residual_block.1} parent=1 // pred_region
      %70 = dma.done [#allocation7], 4096
    $region25: #{residual_block.1} parent=1 // pred_fallthru
      _
    // Predicated region
    $region26: #{residual_block.1} parent=1 // pred_check
      _
    $region27: #{residual_block.1} parent=1 // pred_check_branch
      %72 = sbr.rel (0) target = $region29
    $region28: #{residual_block.1} parent=1 // pred_region
      %73 = dma.done [#allocation10], 32
    $region29: #{residual_block.1} parent=1 // pred_fallthru
      _
    // Predicated region
    $region30: #{residual_block.1} parent=1 // pred_check
      _
    $region31: #{residual_block.1} parent=1 // pred_check_branch
      %75 = sbr.rel (0) target = $region33
    $region32: #{residual_block.1} parent=1 // pred_region
      %76 = dma.done [#allocation10], 32
    $region33: #{residual_block.1} parent=1 // pred_fallthru
      _
    // Predicated region
    $region34: #{residual_block.1} parent=1 // pred_check
      _
    $region35: #{residual_block.1} parent=1 // pred_check_branch
      %78 = sbr.rel (0) target = $region37
    $region36: #{residual_block.1} parent=1 // pred_region
      %79 = dma.done [#allocation13], 32
    $region37: #{residual_block.1} parent=1 // pred_fallthru
      _
    // Predicated region
    $region38: #{residual_block.1} parent=1 // pred_check
      _
    $region39: #{residual_block.1} parent=1 // pred_check_branch
      %81 = sbr.rel (0) target = $region41
    $region40: #{residual_block.1} parent=1 // pred_region
      %82 = dma.done [#allocation13], 32
    $region41: #{residual_block.1} parent=1 // pred_fallthru
      _
    %s85 = sshll.u32 1, 14
    %s86 = sxor.u32 4294967295, %s85
    %s88 = sld [smem:[#allocation0]]
    %s89 = sadd.s32 2, %s88
    %s91 = sshll.u32 7, 26
    %s92 = sxor.u32 4294967295, %s91
    %s93 = sand.u32 0, %s92
    %s94 = sshll.u32 %s89, 26
    %s95 = sor.u32 %s93, %s94
    %s96 = sshll.u32 [#allocation2], 4
    %s97 = int_to_ptr.vmem [resolvable:$true] %s96
    %100 = sst [smem:[#allocation17]] 256
    %s101 = scalar_lea.smem [#allocation17], 1
    %102 = sst [smem:[%s101]] 256
    %s103 = scalar_lea.smem [#allocation17], 2
    %104 = sst [smem:[%s103]] 2
    %s105 = scalar_lea.smem [#allocation17], 3
    %106 = sst [smem:[%s105]] 64
    %s107 = scalar_lea.smem [#allocation17], 4
    %108 = sst [smem:[%s107]] 128
    %s109 = scalar_lea.smem [#allocation17], 5
    %110 = sst [smem:[%s109]] 2
    %s111 = scalar_lea.smem [#allocation17], 6
    %112 = sst [smem:[%s111]] 128
    %s113 = scalar_lea.smem [#allocation17], 7
    %114 = sst [smem:[%s113]] 64
    %s115 = scalar_lea.smem [#allocation17], 8
    %116 = sst [smem:[%s115]] 4
    %118 = dma.general %s5, 36864, %s97, [#allocation5], [#allocation16], [#allocation17], %s95, 0
    %s119 = scalar_lea.sflag [#allocation5], 1
    %s121 = sshll.u32 1, 14
    %s122 = sxor.u32 4294967295, %s121
    %s124 = sadd.s32 2, %s88
    %s126 = sshll.u32 7, 26
    %s127 = sxor.u32 4294967295, %s126
    %s128 = sand.u32 0, %s127
    %s129 = sshll.u32 %s124, 26
    %s130 = sor.u32 %s128, %s129
    %s131 = sshll.u32 [#allocation3], 4
    %s132 = int_to_ptr.vmem [resolvable:$true] %s131
    %135 = sst [smem:[#allocation19]] 256
    %s136 = scalar_lea.smem [#allocation19], 1
    %137 = sst [smem:[%s136]] 256
    %s138 = scalar_lea.smem [#allocation19], 2
    %139 = sst [smem:[%s138]] 2
    %s140 = scalar_lea.smem [#allocation19], 3
    %141 = sst [smem:[%s140]] 64
    %s142 = scalar_lea.smem [#allocation19], 4
    %143 = sst [smem:[%s142]] 128
    %s144 = scalar_lea.smem [#allocation19], 5
    %145 = sst [smem:[%s144]] 2
    %s146 = scalar_lea.smem [#allocation19], 6
    %147 = sst [smem:[%s146]] 128
    %s148 = scalar_lea.smem [#allocation19], 7
    %149 = sst [smem:[%s148]] 64
    %s150 = scalar_lea.smem [#allocation19], 8
    %151 = sst [smem:[%s150]] 4
    %153 = dma.general %s6, 36864, %s132, %s119, [#allocation18], [#allocation19], %s130, 0
    %154 = vst [vmem:[#allocation4] sm:$0xff] 0
    %155 = vst [vmem:[#allocation4 + $0x8] sm:$0x33] 0
    %156 = vst [vmem:[#allocation4 + $0xa0] sm:$0xff] 0
    %157 = vst [vmem:[#allocation4 + $0xa8] sm:$0x33] 0
    %s158 = scalar_lea.vmem [#allocation4], 144
    %159 = vst [vmem:[%s158] sm:$0xff] 0
    %160 = vst [vmem:[%s158 + $0x8] sm:$0x33] 0
    %161 = vst [vmem:[%s158 + $0xa0] sm:$0xff] 0
    %162 = vst [vmem:[%s158 + $0xa8] sm:$0x33] 0
    %163 = vst [vmem:[#allocation4] sm:$0x11] 0
    %164 = vst [vmem:[#allocation4 + $0x10] sm:$0x11] 0
    %165 = vst [vmem:[#allocation4 + $0x20] sm:$0x11] 0
    %166 = vst [vmem:[#allocation4 + $0x30] sm:$0x11] 0
    %167 = vst [vmem:[#allocation4 + $0x40] sm:$0x11] 0
    %168 = vst [vmem:[#allocation4 + $0x50] sm:$0x11] 0
    %169 = vst [vmem:[#allocation4 + $0x60] sm:$0x11] 0
    %170 = vst [vmem:[#allocation4 + $0x70] sm:$0x11] 0
    %171 = vst [vmem:[#allocation4 + $0x80] sm:$0x11] 0
    %172 = vst [vmem:[#allocation4 + $0x90] sm:$0x11] 0
    %173 = vst [vmem:[#allocation4 + $0xa0] sm:$0x11] 0
    %174 = vst [vmem:[#allocation4 + $0xb0] sm:$0x11] 0
    %175 = vst [vmem:[#allocation4 + $0xc0] sm:$0x11] 0
    %176 = vst [vmem:[#allocation4 + $0xd0] sm:$0x11] 0
    %177 = vst [vmem:[#allocation4 + $0xe0] sm:$0x11] 0
    %178 = vst [vmem:[#allocation4 + $0xf0] sm:$0x11] 0
    %179 = vst [vmem:[#allocation4 + $0x100] sm:$0x11] 0
    %180 = vst [vmem:[#allocation4 + $0x110] sm:$0x11] 0
    %181 = vst [vmem:[#allocation4 + $0x120] sm:$0x11] 0
    %182 = vst [vmem:[#allocation4 + $0x130] sm:$0x11] 0
    %183 = vst [vmem:[#allocation4 + $0x8] sm:$0x22] 0
    %184 = vst [vmem:[#allocation4 + $0x18] sm:$0x22] 0
    %185 = vst [vmem:[#allocation4 + $0x28] sm:$0x22] 0
    %186 = vst [vmem:[#allocation4 + $0x38] sm:$0x22] 0
    %187 = vst [vmem:[#allocation4 + $0x48] sm:$0x22] 0
    %188 = vst [vmem:[#allocation4 + $0x58] sm:$0x22] 0
    %189 = vst [vmem:[#allocation4 + $0x68] sm:$0x22] 0
    %190 = vst [vmem:[#allocation4 + $0x78] sm:$0x22] 0
    %191 = vst [vmem:[#allocation4 + $0x88] sm:$0x22] 0
    %192 = vst [vmem:[#allocation4 + $0x98] sm:$0x22] 0
    %193 = vst [vmem:[#allocation4 + $0xa8] sm:$0x22] 0
    %194 = vst [vmem:[#allocation4 + $0xb8] sm:$0x22] 0
    %195 = vst [vmem:[#allocation4 + $0xc8] sm:$0x22] 0
    %196 = vst [vmem:[#allocation4 + $0xd8] sm:$0x22] 0
    %197 = vst [vmem:[#allocation4 + $0xe8] sm:$0x22] 0
    %198 = vst [vmem:[#allocation4 + $0xf8] sm:$0x22] 0
    %199 = vst [vmem:[#allocation4 + $0x108] sm:$0x22] 0
    %200 = vst [vmem:[#allocation4 + $0x118] sm:$0x22] 0
    %201 = vst [vmem:[#allocation4 + $0x128] sm:$0x22] 0
    %202 = vst [vmem:[#allocation4 + $0x138] sm:$0x22] 0
    %v203 = vld [vmem:[#allocation6] sm:$0xff]
    %v204 = vld [vmem:[#allocation6 + $0x8] sm:$0xff]
    %v205 = vld [vmem:[#allocation6 + $0x10] sm:$0xff]
    %v206 = vld [vmem:[#allocation6 + $0x18] sm:$0xff]
    %v207 = vld [vmem:[#allocation6 + $0x20] sm:$0xff]
    %v208 = vld [vmem:[#allocation6 + $0x28] sm:$0xff]
    %v209 = vld [vmem:[#allocation6 + $0x30] sm:$0xff]
    %v210 = vld [vmem:[#allocation6 + $0x38] sm:$0xff]
    %v211 = vld [vmem:[#allocation6 + $0x40] sm:$0xff]
    %v212 = vld [vmem:[#allocation6 + $0x48] sm:$0xff]
    %v213 = vld [vmem:[#allocation6 + $0x50] sm:$0xff]
    %v214 = vld [vmem:[#allocation6 + $0x58] sm:$0xff]
    %v215 = vld [vmem:[#allocation6 + $0x60] sm:$0xff]
    %v216 = vld [vmem:[#allocation6 + $0x68] sm:$0xff]
    %v217 = vld [vmem:[#allocation6 + $0x70] sm:$0xff]
    %v218 = vld [vmem:[#allocation6 + $0x78] sm:$0xff]
    %v219 = vld [vmem:[#allocation6 + $0x80] sm:$0xff]
    %v220 = vld [vmem:[#allocation6 + $0x88] sm:$0xff]
    %v221 = vld [vmem:[#allocation6 + $0x90] sm:$0xff]
    %v222 = vld [vmem:[#allocation6 + $0x98] sm:$0xff]
    %v223 = vld [vmem:[#allocation6 + $0xa0] sm:$0xff]
    %v224 = vld [vmem:[#allocation6 + $0xa8] sm:$0xff]
    %v225 = vld [vmem:[#allocation6 + $0xb0] sm:$0xff]
    %v226 = vld [vmem:[#allocation6 + $0xb8] sm:$0xff]
    %v227 = vld [vmem:[#allocation6 + $0xc0] sm:$0xff]
    %v228 = vld [vmem:[#allocation6 + $0xc8] sm:$0xff]
    %v229 = vld [vmem:[#allocation6 + $0xd0] sm:$0xff]
    %v230 = vld [vmem:[#allocation6 + $0xd8] sm:$0xff]
    %v231 = vld [vmem:[#allocation6 + $0xe0] sm:$0xff]
    %v232 = vld [vmem:[#allocation6 + $0xe8] sm:$0xff]
    %v233 = vld [vmem:[#allocation6 + $0xf0] sm:$0xff]
    %v234 = vld [vmem:[#allocation6 + $0xf8] sm:$0xff]
    %v235 = vpack.c.bf16 %v203, %v203
    %v236 = vpack.c.bf16 %v204, %v204
    %v237 = vpack.c.bf16 %v205, %v205
    %v238 = vpack.c.bf16 %v206, %v206
    %v239 = vpack.c.bf16 %v207, %v207
    %v240 = vpack.c.bf16 %v208, %v208
    %v241 = vpack.c.bf16 %v209, %v209
    %v242 = vpack.c.bf16 %v210, %v210
    %v243 = vpack.c.bf16 %v211, %v211
    %v244 = vpack.c.bf16 %v212, %v212
    %v245 = vpack.c.bf16 %v213, %v213
    %v246 = vpack.c.bf16 %v214, %v214
    %v247 = vpack.c.bf16 %v215, %v215
    %v248 = vpack.c.bf16 %v216, %v216
    %v249 = vpack.c.bf16 %v217, %v217
    %v250 = vpack.c.bf16 %v218, %v218
    %v251 = vpack.c.bf16 %v219, %v219
    %v252 = vpack.c.bf16 %v220, %v220
    %v253 = vpack.c.bf16 %v221, %v221
    %v254 = vpack.c.bf16 %v222, %v222
    %v255 = vpack.c.bf16 %v223, %v223
    %v256 = vpack.c.bf16 %v224, %v224
    %v257 = vpack.c.bf16 %v225, %v225
    %v258 = vpack.c.bf16 %v226, %v226
    %v259 = vpack.c.bf16 %v227, %v227
    %v260 = vpack.c.bf16 %v228, %v228
    %v261 = vpack.c.bf16 %v229, %v229
    %v262 = vpack.c.bf16 %v230, %v230
    %v263 = vpack.c.bf16 %v231, %v231
    %v264 = vpack.c.bf16 %v232, %v232
    %v265 = vpack.c.bf16 %v233, %v233
    %v266 = vpack.c.bf16 %v234, %v234
    %v299 = vunpack.c.l.b16 %v235
    %v300 = vunpack.c.l.b16 %v236
    %v301 = vunpack.c.l.b16 %v237
    %v302 = vunpack.c.l.b16 %v238
    %v303 = vunpack.c.l.b16 %v239
    %v304 = vunpack.c.l.b16 %v240
    %v305 = vunpack.c.l.b16 %v241
    %v306 = vunpack.c.l.b16 %v242
    %v307 = vunpack.c.l.b16 %v243
    %v308 = vunpack.c.l.b16 %v244
    %v309 = vunpack.c.l.b16 %v245
    %v310 = vunpack.c.l.b16 %v246
    %v311 = vunpack.c.l.b16 %v247
    %v312 = vunpack.c.l.b16 %v248
    %v313 = vunpack.c.l.b16 %v249
    %v314 = vunpack.c.l.b16 %v250
    %v315 = vunpack.c.l.b16 %v251
    %v316 = vunpack.c.l.b16 %v252
    %v317 = vunpack.c.l.b16 %v253
    %v318 = vunpack.c.l.b16 %v254
    %v319 = vunpack.c.l.b16 %v255
    %v320 = vunpack.c.l.b16 %v256
    %v321 = vunpack.c.l.b16 %v257
    %v322 = vunpack.c.l.b16 %v258
    %v323 = vunpack.c.l.b16 %v259
    %v324 = vunpack.c.l.b16 %v260
    %v325 = vunpack.c.l.b16 %v261
    %v326 = vunpack.c.l.b16 %v262
    %v327 = vunpack.c.l.b16 %v263
    %v328 = vunpack.c.l.b16 %v264
    %v329 = vunpack.c.l.b16 %v265
    %v330 = vunpack.c.l.b16 %v266
    %v331 = vpack.c.b16 %v300, %v299
    %v332 = vpack.c.b16 %v302, %v301
    %v333 = vpack.c.b16 %v304, %v303
    %v334 = vpack.c.b16 %v306, %v305
    %v335 = vpack.c.b16 %v308, %v307
    %v336 = vpack.c.b16 %v310, %v309
    %v337 = vpack.c.b16 %v312, %v311
    %v338 = vpack.c.b16 %v314, %v313
    %v339 = vpack.c.b16 %v316, %v315
    %v340 = vpack.c.b16 %v318, %v317
    %v341 = vpack.c.b16 %v320, %v319
    %v342 = vpack.c.b16 %v322, %v321
    %v343 = vpack.c.b16 %v324, %v323
    %v344 = vpack.c.b16 %v326, %v325
    %v345 = vpack.c.b16 %v328, %v327
    %v346 = vpack.c.b16 %v330, %v329
    %v347 = vrot.slane %v331, 7
    %v348 = vrot.slane %v347, 4
    %v349 = vrot.slane %v332, 7
    %v350 = vrot.slane %v349, 4
    %v351 = vrot.slane %v333, 7
    %v352 = vrot.slane %v351, 4
    %v353 = vrot.slane %v334, 7
    %v354 = vrot.slane %v353, 4
    %v355 = vrot.slane %v335, 7
    %v356 = vrot.slane %v355, 4
    %v357 = vrot.slane %v336, 7
    %v358 = vrot.slane %v357, 4
    %v359 = vrot.slane %v337, 7
    %v360 = vrot.slane %v359, 4
    %v361 = vrot.slane %v338, 7
    %v362 = vrot.slane %v361, 4
    %v363 = vrot.slane %v339, 7
    %v364 = vrot.slane %v363, 4
    %v365 = vrot.slane %v340, 7
    %v366 = vrot.slane %v365, 4
    %v367 = vrot.slane %v341, 7
    %v368 = vrot.slane %v367, 4
    %v369 = vrot.slane %v342, 7
    %v370 = vrot.slane %v369, 4
    %v371 = vrot.slane %v343, 7
    %v372 = vrot.slane %v371, 4
    %v373 = vrot.slane %v344, 7
    %v374 = vrot.slane %v373, 4
    %v375 = vrot.slane %v345, 7
    %v376 = vrot.slane %v375, 4
    %v377 = vrot.slane %v346, 7
    %v378 = vrot.slane %v377, 4
    %s411 = scalar_lea.vmem [#allocation4], 16
    %412 = vst [vmem:[%s411] sm:$0xee] %v347
    %413 = vst [vmem:[%s411 + $0x8] sm:$0x11] %v348
    %414 = vst [vmem:[%s411 + $0x10] sm:$0xee] %v349
    %415 = vst [vmem:[%s411 + $0x18] sm:$0x11] %v350
    %416 = vst [vmem:[%s411 + $0x20] sm:$0xee] %v351
    %417 = vst [vmem:[%s411 + $0x28] sm:$0x11] %v352
    %418 = vst [vmem:[%s411 + $0x30] sm:$0xee] %v353
    %419 = vst [vmem:[%s411 + $0x38] sm:$0x11] %v354
    %420 = vst [vmem:[%s411 + $0x40] sm:$0xee] %v355
    %421 = vst [vmem:[%s411 + $0x48] sm:$0x11] %v356
    %422 = vst [vmem:[%s411 + $0x50] sm:$0xee] %v357
    %423 = vst [vmem:[%s411 + $0x58] sm:$0x11] %v358
    %424 = vst [vmem:[%s411 + $0x60] sm:$0xee] %v359
    %425 = vst [vmem:[%s411 + $0x68] sm:$0x11] %v360
    %426 = vst [vmem:[%s411 + $0x70] sm:$0xee] %v361
    %427 = vst [vmem:[%s411 + $0x78] sm:$0x11] %v362
    %428 = vst [vmem:[%s411 + $0xa0] sm:$0xee] %v363
    %429 = vst [vmem:[%s411 + $0xa8] sm:$0x11] %v364
    %430 = vst [vmem:[%s411 + $0xb0] sm:$0xee] %v365
    %431 = vst [vmem:[%s411 + $0xb8] sm:$0x11] %v366
    %432 = vst [vmem:[%s411 + $0xc0] sm:$0xee] %v367
    %433 = vst [vmem:[%s411 + $0xc8] sm:$0x11] %v368
    %434 = vst [vmem:[%s411 + $0xd0] sm:$0xee] %v369
    %435 = vst [vmem:[%s411 + $0xd8] sm:$0x11] %v370
    %436 = vst [vmem:[%s411 + $0xe0] sm:$0xee] %v371
    %437 = vst [vmem:[%s411 + $0xe8] sm:$0x11] %v372
    %438 = vst [vmem:[%s411 + $0xf0] sm:$0xee] %v373
    %439 = vst [vmem:[%s411 + $0xf8] sm:$0x11] %v374
    %440 = vst [vmem:[%s411 + $0x100] sm:$0xee] %v375
    %441 = vst [vmem:[%s411 + $0x108] sm:$0x11] %v376
    %442 = vst [vmem:[%s411 + $0x110] sm:$0xee] %v377
    %443 = vst [vmem:[%s411 + $0x118] sm:$0x11] %v378
    %s444 = smul.u32 4, 9
    %s445 = smul.u32 %s444, 32
    %s446 = smul.u32 %s445, 2
    %s447 = sshll.u32 %s446, 4
    %448 = dma.done [#allocation5], %s447
    %v449 = vld [vmem:[#allocation4] sm:$0xff]
    %v450 = vld [vmem:[#allocation4 + $0x8] sm:$0x11]
    %v451 = vld [vmem:[#allocation4 + $0x10] sm:$0xff]
    %v452 = vld [vmem:[#allocation4 + $0x18] sm:$0x11]
    %v453 = vld [vmem:[#allocation4 + $0x20] sm:$0xff]
    %v454 = vld [vmem:[#allocation4 + $0x28] sm:$0x11]
    %v455 = vld [vmem:[#allocation4 + $0x30] sm:$0xff]
    %v456 = vld [vmem:[#allocation4 + $0x38] sm:$0x11]
    %v457 = vld [vmem:[#allocation4 + $0x40] sm:$0xff]
    %v458 = vld [vmem:[#allocation4 + $0x48] sm:$0x11]
    %v459 = vld [vmem:[#allocation4 + $0x50] sm:$0xff]
    %v460 = vld [vmem:[#allocation4 + $0x58] sm:$0x11]
    %v461 = vld [vmem:[#allocation4 + $0x60] sm:$0xff]
    %v462 = vld [vmem:[#allocation4 + $0x68] sm:$0x11]
    %v463 = vld [vmem:[#allocation4 + $0x70] sm:$0xff]
    %v464 = vld [vmem:[#allocation4 + $0x78] sm:$0x11]
    %v465 = vld [vmem:[#allocation4 + $0xa0] sm:$0xff]
    %v466 = vld [vmem:[#allocation4 + $0xa8] sm:$0x11]
    %v467 = vld [vmem:[#allocation4 + $0xb0] sm:$0xff]
    %v468 = vld [vmem:[#allocation4 + $0xb8] sm:$0x11]
    %v469 = vld [vmem:[#allocation4 + $0xc0] sm:$0xff]
    %v470 = vld [vmem:[#allocation4 + $0xc8] sm:$0x11]
    %v471 = vld [vmem:[#allocation4 + $0xd0] sm:$0xff]
    %v472 = vld [vmem:[#allocation4 + $0xd8] sm:$0x11]
    %v473 = vld [vmem:[#allocation4 + $0xe0] sm:$0xff]
    %v474 = vld [vmem:[#allocation4 + $0xe8] sm:$0x11]
    %v475 = vld [vmem:[#allocation4 + $0xf0] sm:$0xff]
    %v476 = vld [vmem:[#allocation4 + $0xf8] sm:$0x11]
    %v477 = vld [vmem:[#allocation4 + $0x100] sm:$0xff]
    %v478 = vld [vmem:[#allocation4 + $0x108] sm:$0x11]
    %v479 = vld [vmem:[#allocation4 + $0x110] sm:$0xff]
    %v480 = vld [vmem:[#allocation4 + $0x118] sm:$0x11]
    %vm481 = vsmask.f32 3328
    %vm482 = vsmask.f32 7440
    %vm483 = vmor %vm481, %vm482
    %v485 = vshrl.u32 %v449, 16
    %v487 = vrot.slane %v485, 4
    %v488 = vshll.u32 %v449, 16
    %v490 = vrot.slane %v488, 5
    %v491 = vor.u32 %v487, %v490
    %v492 = vrot.slane %v491, 4
    %v494 = vshll.u32 %v450, 16
    %v496 = vrot.slane %v494, 5
    %v497 = vsel %vm483, %v492, %v496
    %v499 = vshrl.u32 %v451, 16
    %v501 = vrot.slane %v499, 4
    %v502 = vshll.u32 %v451, 16
    %v504 = vrot.slane %v502, 5
    %v505 = vor.u32 %v501, %v504
    %v506 = vrot.slane %v505, 4
    %v508 = vshll.u32 %v452, 16
    %v510 = vrot.slane %v508, 5
    %v511 = vsel %vm483, %v506, %v510
    %v513 = vshrl.u32 %v453, 16
    %v515 = vrot.slane %v513, 4
    %v516 = vshll.u32 %v453, 16
    %v518 = vrot.slane %v516, 5
    %v519 = vor.u32 %v515, %v518
    %v520 = vrot.slane %v519, 4
    %v522 = vshll.u32 %v454, 16
    %v524 = vrot.slane %v522, 5
    %v525 = vsel %vm483, %v520, %v524
    %v527 = vshrl.u32 %v455, 16
    %v529 = vrot.slane %v527, 4
    %v530 = vshll.u32 %v455, 16
    %v532 = vrot.slane %v530, 5
    %v533 = vor.u32 %v529, %v532
    %v534 = vrot.slane %v533, 4
    %v536 = vshll.u32 %v456, 16
    %v538 = vrot.slane %v536, 5
    %v539 = vsel %vm483, %v534, %v538
    %v541 = vshrl.u32 %v457, 16
    %v543 = vrot.slane %v541, 4
    %v544 = vshll.u32 %v457, 16
    %v546 = vrot.slane %v544, 5
    %v547 = vor.u32 %v543, %v546
    %v548 = vrot.slane %v547, 4
    %v550 = vshll.u32 %v458, 16
    %v552 = vrot.slane %v550, 5
    %v553 = vsel %vm483, %v548, %v552
    %v555 = vshrl.u32 %v459, 16
    %v557 = vrot.slane %v555, 4
    %v558 = vshll.u32 %v459, 16
    %v560 = vrot.slane %v558, 5
    %v561 = vor.u32 %v557, %v560
    %v562 = vrot.slane %v561, 4
    %v564 = vshll.u32 %v460, 16
    %v566 = vrot.slane %v564, 5
    %v567 = vsel %vm483, %v562, %v566
    %v569 = vshrl.u32 %v461, 16
    %v571 = vrot.slane %v569, 4
    %v572 = vshll.u32 %v461, 16
    %v574 = vrot.slane %v572, 5
    %v575 = vor.u32 %v571, %v574
    %v576 = vrot.slane %v575, 4
    %v578 = vshll.u32 %v462, 16
    %v580 = vrot.slane %v578, 5
    %v581 = vsel %vm483, %v576, %v580
    %v583 = vshrl.u32 %v463, 16
    %v585 = vrot.slane %v583, 4
    %v586 = vshll.u32 %v463, 16
    %v588 = vrot.slane %v586, 5
    %v589 = vor.u32 %v585, %v588
    %v590 = vrot.slane %v589, 4
    %v592 = vshll.u32 %v464, 16
    %v594 = vrot.slane %v592, 5
    %v595 = vsel %vm483, %v590, %v594
    %v597 = vshrl.u32 %v465, 16
    %v599 = vrot.slane %v597, 4
    %v600 = vshll.u32 %v465, 16
    %v602 = vrot.slane %v600, 5
    %v603 = vor.u32 %v599, %v602
    %v604 = vrot.slane %v603, 4
    %v606 = vshll.u32 %v466, 16
    %v608 = vrot.slane %v606, 5
    %v609 = vsel %vm483, %v604, %v608
    %v611 = vshrl.u32 %v467, 16
    %v613 = vrot.slane %v611, 4
    %v614 = vshll.u32 %v467, 16
    %v616 = vrot.slane %v614, 5
    %v617 = vor.u32 %v613, %v616
    %v618 = vrot.slane %v617, 4
    %v620 = vshll.u32 %v468, 16
    %v622 = vrot.slane %v620, 5
    %v623 = vsel %vm483, %v618, %v622
    %v625 = vshrl.u32 %v469, 16
    %v627 = vrot.slane %v625, 4
    %v628 = vshll.u32 %v469, 16
    %v630 = vrot.slane %v628, 5
    %v631 = vor.u32 %v627, %v630
    %v632 = vrot.slane %v631, 4
    %v634 = vshll.u32 %v470, 16
    %v636 = vrot.slane %v634, 5
    %v637 = vsel %vm483, %v632, %v636
    %v639 = vshrl.u32 %v471, 16
    %v641 = vrot.slane %v639, 4
    %v642 = vshll.u32 %v471, 16
    %v644 = vrot.slane %v642, 5
    %v645 = vor.u32 %v641, %v644
    %v646 = vrot.slane %v645, 4
    %v648 = vshll.u32 %v472, 16
    %v650 = vrot.slane %v648, 5
    %v651 = vsel %vm483, %v646, %v650
    %v653 = vshrl.u32 %v473, 16
    %v655 = vrot.slane %v653, 4
    %v656 = vshll.u32 %v473, 16
    %v658 = vrot.slane %v656, 5
    %v659 = vor.u32 %v655, %v658
    %v660 = vrot.slane %v659, 4
    %v662 = vshll.u32 %v474, 16
    %v664 = vrot.slane %v662, 5
    %v665 = vsel %vm483, %v660, %v664
    %v667 = vshrl.u32 %v475, 16
    %v669 = vrot.slane %v667, 4
    %v670 = vshll.u32 %v475, 16
    %v672 = vrot.slane %v670, 5
    %v673 = vor.u32 %v669, %v672
    %v674 = vrot.slane %v673, 4
    %v676 = vshll.u32 %v476, 16
    %v678 = vrot.slane %v676, 5
    %v679 = vsel %vm483, %v674, %v678
    %v681 = vshrl.u32 %v477, 16
    %v683 = vrot.slane %v681, 4
    %v684 = vshll.u32 %v477, 16
    %v686 = vrot.slane %v684, 5
    %v687 = vor.u32 %v683, %v686
    %v688 = vrot.slane %v687, 4
    %v690 = vshll.u32 %v478, 16
    %v692 = vrot.slane %v690, 5
    %v693 = vsel %vm483, %v688, %v692
    %v695 = vshrl.u32 %v479, 16
    %v697 = vrot.slane %v695, 4
    %v698 = vshll.u32 %v479, 16
    %v700 = vrot.slane %v698, 5
    %v701 = vor.u32 %v697, %v700
    %v702 = vrot.slane %v701, 4
    %v704 = vshll.u32 %v480, 16
    %v706 = vrot.slane %v704, 5
    %v707 = vsel %vm483, %v702, %v706
    %v708 = vld [vmem:[#allocation2] sm:$0xff]
    %v709 = vld [vmem:[#allocation2 + $0x8] sm:$0xff]
    %v710 = vld [vmem:[#allocation2 + $0x10] sm:$0xff]
    %v711 = vld [vmem:[#allocation2 + $0x18] sm:$0xff]
    %v712 = vld [vmem:[#allocation2 + $0x20] sm:$0xff]
    %v713 = vld [vmem:[#allocation2 + $0x28] sm:$0xff]
    %v714 = vld [vmem:[#allocation2 + $0x30] sm:$0xff]
    %v715 = vld [vmem:[#allocation2 + $0x38] sm:$0xff]
    %v716 = vld [vmem:[#allocation2 + $0x40] sm:$0xff]
    %v717 = vld [vmem:[#allocation2 + $0x48] sm:$0xff]
    %v718 = vld [vmem:[#allocation2 + $0x50] sm:$0xff]
    %v719 = vld [vmem:[#allocation2 + $0x58] sm:$0xff]
    %v720 = vld [vmem:[#allocation2 + $0x60] sm:$0xff]
    %v721 = vld [vmem:[#allocation2 + $0x68] sm:$0xff]
    %v722 = vld [vmem:[#allocation2 + $0x70] sm:$0xff]
    %v723 = vld [vmem:[#allocation2 + $0x78] sm:$0xff]
    %v724 = vld [vmem:[#allocation2 + $0x80] sm:$0xff]
    %v725 = vld [vmem:[#allocation2 + $0x88] sm:$0xff]
    %v726 = vld [vmem:[#allocation2 + $0x90] sm:$0xff]
    %v727 = vld [vmem:[#allocation2 + $0x98] sm:$0xff]
    %v728 = vld [vmem:[#allocation2 + $0xa0] sm:$0xff]
    %v729 = vld [vmem:[#allocation2 + $0xa8] sm:$0xff]
    %v730 = vld [vmem:[#allocation2 + $0xb0] sm:$0xff]
    %v731 = vld [vmem:[#allocation2 + $0xb8] sm:$0xff]
    %v732 = vld [vmem:[#allocation2 + $0xc0] sm:$0xff]
    %v733 = vld [vmem:[#allocation2 + $0xc8] sm:$0xff]
    %v734 = vld [vmem:[#allocation2 + $0xd0] sm:$0xff]
    %v735 = vld [vmem:[#allocation2 + $0xd8] sm:$0xff]
    %v736 = vld [vmem:[#allocation2 + $0xe0] sm:$0xff]
    %v737 = vld [vmem:[#allocation2 + $0xe8] sm:$0xff]
    %v738 = vld [vmem:[#allocation2 + $0xf0] sm:$0xff]
    %v739 = vld [vmem:[#allocation2 + $0xf8] sm:$0xff]
    %v740 = vld [vmem:[#allocation4] sm:$0xee]
    %v741 = vld [vmem:[#allocation4 + $0x10] sm:$0xee]
    %v742 = vld [vmem:[#allocation4 + $0x20] sm:$0xee]
    %v743 = vld [vmem:[#allocation4 + $0x30] sm:$0xee]
    %v744 = vld [vmem:[#allocation4 + $0x40] sm:$0xee]
    %v745 = vld [vmem:[#allocation4 + $0x50] sm:$0xee]
    %v746 = vld [vmem:[#allocation4 + $0x60] sm:$0xee]
    %v747 = vld [vmem:[#allocation4 + $0x70] sm:$0xee]
    %v748 = vld [vmem:[#allocation4 + $0xa0] sm:$0xee]
    %v749 = vld [vmem:[#allocation4 + $0xb0] sm:$0xee]
    %v750 = vld [vmem:[#allocation4 + $0xc0] sm:$0xee]
    %v751 = vld [vmem:[#allocation4 + $0xd0] sm:$0xee]
    %v752 = vld [vmem:[#allocation4 + $0xe0] sm:$0xee]
    %v753 = vld [vmem:[#allocation4 + $0xf0] sm:$0xee]
    %v754 = vld [vmem:[#allocation4 + $0x100] sm:$0xee]
    %v755 = vld [vmem:[#allocation4 + $0x110] sm:$0xee]
    %vm788 = vcmask 1042432
    %vm789 = vcmask 1046532
    %vm790 = vmor %vm788, %vm789
    %v791 = vrot.slane %v740, 5
    %v792 = vrot.slane %v791, 4
    %v793 = vrot.slane %v450, 5
    %v794 = vsel %vm790, %v792, %v793
    %v795 = vrot.slane %v741, 5
    %v796 = vrot.slane %v795, 4
    %v797 = vrot.slane %v452, 5
    %v798 = vsel %vm790, %v796, %v797
    %v799 = vrot.slane %v742, 5
    %v800 = vrot.slane %v799, 4
    %v801 = vrot.slane %v454, 5
    %v802 = vsel %vm790, %v800, %v801
    %v803 = vrot.slane %v743, 5
    %v804 = vrot.slane %v803, 4
    %v805 = vrot.slane %v456, 5
    %v806 = vsel %vm790, %v804, %v805
    %v807 = vrot.slane %v744, 5
    %v808 = vrot.slane %v807, 4
    %v809 = vrot.slane %v458, 5
    %v810 = vsel %vm790, %v808, %v809
    %v811 = vrot.slane %v745, 5
    %v812 = vrot.slane %v811, 4
    %v813 = vrot.slane %v460, 5
    %v814 = vsel %vm790, %v812, %v813
    %v815 = vrot.slane %v746, 5
    %v816 = vrot.slane %v815, 4
    %v817 = vrot.slane %v462, 5
    %v818 = vsel %vm790, %v816, %v817
    %v819 = vrot.slane %v747, 5
    %v820 = vrot.slane %v819, 4
    %v821 = vrot.slane %v464, 5
    %v822 = vsel %vm790, %v820, %v821
    %v823 = vrot.slane %v748, 5
    %v824 = vrot.slane %v823, 4
    %v825 = vrot.slane %v466, 5
    %v826 = vsel %vm790, %v824, %v825
    %v827 = vrot.slane %v749, 5
    %v828 = vrot.slane %v827, 4
    %v829 = vrot.slane %v468, 5
    %v830 = vsel %vm790, %v828, %v829
    %v831 = vrot.slane %v750, 5
    %v832 = vrot.slane %v831, 4
    %v833 = vrot.slane %v470, 5
    %v834 = vsel %vm790, %v832, %v833
    %v835 = vrot.slane %v751, 5
    %v836 = vrot.slane %v835, 4
    %v837 = vrot.slane %v472, 5
    %v838 = vsel %vm790, %v836, %v837
    %v839 = vrot.slane %v752, 5
    %v840 = vrot.slane %v839, 4
    %v841 = vrot.slane %v474, 5
    %v842 = vsel %vm790, %v840, %v841
    %v843 = vrot.slane %v753, 5
    %v844 = vrot.slane %v843, 4
    %v845 = vrot.slane %v476, 5
    %v846 = vsel %vm790, %v844, %v845
    %v847 = vrot.slane %v754, 5
    %v848 = vrot.slane %v847, 4
    %v849 = vrot.slane %v478, 5
    %v850 = vsel %vm790, %v848, %v849
    %v851 = vrot.slane %v755, 5
    %v852 = vrot.slane %v851, 4
    %v853 = vrot.slane %v480, 5
    %v854 = vsel %vm790, %v852, %v853
    %s855 = scalar_lea.vmem [#allocation2], 256
    %v856 = vld [vmem:[%s855] sm:$0xff]
    %v857 = vld [vmem:[%s855 + $0x8] sm:$0xff]
    %v858 = vld [vmem:[%s855 + $0x10] sm:$0xff]
    %v859 = vld [vmem:[%s855 + $0x18] sm:$0xff]
    %v860 = vld [vmem:[%s855 + $0x20] sm:$0xff]
    %v861 = vld [vmem:[%s855 + $0x28] sm:$0xff]
    %v862 = vld [vmem:[%s855 + $0x30] sm:$0xff]
    %v863 = vld [vmem:[%s855 + $0x38] sm:$0xff]
    %v864 = vld [vmem:[%s855 + $0x40] sm:$0xff]
    %v865 = vld [vmem:[%s855 + $0x48] sm:$0xff]
    %v866 = vld [vmem:[%s855 + $0x50] sm:$0xff]
    %v867 = vld [vmem:[%s855 + $0x58] sm:$0xff]
    %v868 = vld [vmem:[%s855 + $0x60] sm:$0xff]
    %v869 = vld [vmem:[%s855 + $0x68] sm:$0xff]
    %v870 = vld [vmem:[%s855 + $0x70] sm:$0xff]
    %v871 = vld [vmem:[%s855 + $0x78] sm:$0xff]
    %v872 = vld [vmem:[%s855 + $0x80] sm:$0xff]
    %v873 = vld [vmem:[%s855 + $0x88] sm:$0xff]
    %v874 = vld [vmem:[%s855 + $0x90] sm:$0xff]
    %v875 = vld [vmem:[%s855 + $0x98] sm:$0xff]
    %v876 = vld [vmem:[%s855 + $0xa0] sm:$0xff]
    %v877 = vld [vmem:[%s855 + $0xa8] sm:$0xff]
    %v878 = vld [vmem:[%s855 + $0xb0] sm:$0xff]
    %v879 = vld [vmem:[%s855 + $0xb8] sm:$0xff]
    %v880 = vld [vmem:[%s855 + $0xc0] sm:$0xff]
    %v881 = vld [vmem:[%s855 + $0xc8] sm:$0xff]
    %v882 = vld [vmem:[%s855 + $0xd0] sm:$0xff]
    %v883 = vld [vmem:[%s855 + $0xd8] sm:$0xff]
    %v884 = vld [vmem:[%s855 + $0xe0] sm:$0xff]
    %v885 = vld [vmem:[%s855 + $0xe8] sm:$0xff]
    %v886 = vld [vmem:[%s855 + $0xf0] sm:$0xff]
    %v887 = vld [vmem:[%s855 + $0xf8] sm:$0xff]
    %v888 = vunpack.c.l.b16 %v794
    %v889 = vunpack.c.h.b16 %v794
    %v890 = vunpack.c.l.b16 %v798
    %v891 = vunpack.c.h.b16 %v798
    %v892 = vunpack.c.l.b16 %v802
    %v893 = vunpack.c.h.b16 %v802
    %v894 = vunpack.c.l.b16 %v806
    %v895 = vunpack.c.h.b16 %v806
    %v896 = vunpack.c.l.b16 %v810
    %v897 = vunpack.c.h.b16 %v810
    %v898 = vunpack.c.l.b16 %v814
    %v899 = vunpack.c.h.b16 %v814
    %v900 = vunpack.c.l.b16 %v818
    %v901 = vunpack.c.h.b16 %v818
    %v902 = vunpack.c.l.b16 %v822
    %v903 = vunpack.c.h.b16 %v822
    %v904 = vunpack.c.l.b16 %v826
    %v905 = vunpack.c.h.b16 %v826
    %v906 = vunpack.c.l.b16 %v830
    %v907 = vunpack.c.h.b16 %v830
    %v908 = vunpack.c.l.b16 %v834
    %v909 = vunpack.c.h.b16 %v834
    %v910 = vunpack.c.l.b16 %v838
    %v911 = vunpack.c.h.b16 %v838
    %v912 = vunpack.c.l.b16 %v842
    %v913 = vunpack.c.h.b16 %v842
    %v914 = vunpack.c.l.b16 %v846
    %v915 = vunpack.c.h.b16 %v846
    %v916 = vunpack.c.l.b16 %v850
    %v917 = vunpack.c.h.b16 %v850
    %v918 = vunpack.c.l.b16 %v854
    %v919 = vunpack.c.h.b16 %v854
    %v920 = vpack.c.b16 %v890, %v888
    %v921 = vpack.c.b16 %v891, %v889
    %v922 = vpack.c.b16 %v894, %v892
    %v923 = vpack.c.b16 %v895, %v893
    %v924 = vpack.c.b16 %v898, %v896
    %v925 = vpack.c.b16 %v899, %v897
    %v926 = vpack.c.b16 %v902, %v900
    %v927 = vpack.c.b16 %v903, %v901
    %v928 = vpack.c.b16 %v906, %v904
    %v929 = vpack.c.b16 %v907, %v905
    %v930 = vpack.c.b16 %v910, %v908
    %v931 = vpack.c.b16 %v911, %v909
    %v932 = vpack.c.b16 %v914, %v912
    %v933 = vpack.c.b16 %v915, %v913
    %v934 = vpack.c.b16 %v918, %v916
    %v935 = vpack.c.b16 %v919, %v917
    %952 = vmatprep.subr.bf16.mxu0 %v857
    %953 = vmatpush1.bf16.msra.mxu0 %v856
    %954 = vmatprep.subr.bf16.mxu0 %v859
    %955 = vmatpush1.bf16.msra.mxu0 %v858
    %956 = vmatprep.subr.bf16.mxu0 %v861
    %957 = vmatpush1.bf16.msra.mxu0 %v860
    %958 = vmatprep.subr.bf16.mxu0 %v863
    %959 = vmatpush1.bf16.msra.mxu0 %v862
    %960 = vmatprep.subr.bf16.mxu0 %v865
    %961 = vmatpush1.bf16.msra.mxu0 %v864
    %962 = vmatprep.subr.bf16.mxu0 %v867
    %963 = vmatpush1.bf16.msra.mxu0 %v866
    %964 = vmatprep.subr.bf16.mxu0 %v869
    %965 = vmatpush1.bf16.msra.mxu0 %v868
    %966 = vmatprep.subr.bf16.mxu0 %v871
    %967 = vmatpush1.bf16.msra.mxu0 %v870
    %968 = vmatprep.subr.bf16.mxu0 %v873
    %969 = vmatpush1.bf16.msra.mxu0 %v872
    %970 = vmatprep.subr.bf16.mxu0 %v875
    %971 = vmatpush1.bf16.msra.mxu0 %v874
    %972 = vmatprep.subr.bf16.mxu0 %v877
    %973 = vmatpush1.bf16.msra.mxu0 %v876
    %974 = vmatprep.subr.bf16.mxu0 %v879
    %975 = vmatpush1.bf16.msra.mxu0 %v878
    %976 = vmatprep.subr.bf16.mxu0 %v881
    %977 = vmatpush1.bf16.msra.mxu0 %v880
    %978 = vmatprep.subr.bf16.mxu0 %v883
    %979 = vmatpush1.bf16.msra.mxu0 %v882
    %980 = vmatprep.subr.bf16.mxu0 %v885
    %981 = vmatpush1.bf16.msra.mxu0 %v884
    %982 = vmatprep.subr.bf16.mxu0 %v887
    %983 = vmatpush1.bf16.msra.mxu0 %v886
    %984 = vmatprep.mubr.bf16.mxu0 %v921
    %985 = vmatmul.mubr.bf16.gmra.mrb[0].mxu0 %v920
    %v986 = vpop.f32.mrb[0].mxu0
    %v987 = vadd.f32 0.0, %v986
    %v988 = vpop.f32.mrb[0].mxu0
    %v989 = vadd.f32 0.0, %v988
    %v990 = vpop.f32.mrb[0].mxu0
    %v991 = vadd.f32 0.0, %v990
    %v992 = vpop.f32.mrb[0].mxu0
    %v993 = vadd.f32 0.0, %v992
    %994 = vmatprep.mubr.bf16.mxu0 %v923
    %995 = vmatmul.mubr.bf16.gmra.mrb[0].mxu0 %v922
    %v996 = vpop.f32.mrb[0].mxu0
    %v997 = vadd.f32 0.0, %v996
    %v998 = vpop.f32.mrb[0].mxu0
    %v999 = vadd.f32 0.0, %v998
    %v1000 = vpop.f32.mrb[0].mxu0
    %v1001 = vadd.f32 0.0, %v1000
    %v1002 = vpop.f32.mrb[0].mxu0
    %v1003 = vadd.f32 0.0, %v1002
    %1004 = vmatprep.mubr.bf16.mxu0 %v925
    %1005 = vmatmul.mubr.bf16.gmra.mrb[0].mxu0 %v924
    %v1006 = vpop.f32.mrb[0].mxu0
    %v1007 = vadd.f32 0.0, %v1006
    %v1008 = vpop.f32.mrb[0].mxu0
    %v1009 = vadd.f32 0.0, %v1008
    %v1010 = vpop.f32.mrb[0].mxu0
    %v1011 = vadd.f32 0.0, %v1010
    %v1012 = vpop.f32.mrb[0].mxu0
    %v1013 = vadd.f32 0.0, %v1012
    %1014 = vmatprep.mubr.bf16.mxu0 %v927
    %1015 = vmatmul.mubr.bf16.gmra.mrb[0].mxu0 %v926
    %v1016 = vpop.f32.mrb[0].mxu0
    %v1017 = vadd.f32 0.0, %v1016
    %v1018 = vpop.f32.mrb[0].mxu0
    %v1019 = vadd.f32 0.0, %v1018
    %v1020 = vpop.f32.mrb[0].mxu0
    %v1021 = vadd.f32 0.0, %v1020
    %v1022 = vpop.f32.mrb[0].mxu0
    %v1023 = vadd.f32 0.0, %v1022
    %1024 = vmatprep.mubr.bf16.mxu0 %v929
    %1025 = vmatmul.mubr.bf16.gmra.mrb[0].mxu0 %v928
    %v1026 = vpop.f32.mrb[0].mxu0
    %v1027 = vadd.f32 0.0, %v1026
    %v1028 = vpop.f32.mrb[0].mxu0
    %v1029 = vadd.f32 0.0, %v1028
    %v1030 = vpop.f32.mrb[0].mxu0
    %v1031 = vadd.f32 0.0, %v1030
    %v1032 = vpop.f32.mrb[0].mxu0
    %v1033 = vadd.f32 0.0, %v1032
    %1034 = vmatprep.mubr.bf16.mxu0 %v931
    %1035 = vmatmul.mubr.bf16.gmra.mrb[0].mxu0 %v930
    %v1036 = vpop.f32.mrb[0].mxu0
    %v1037 = vadd.f32 0.0, %v1036
    %v1038 = vpop.f32.mrb[0].mxu0
    %v1039 = vadd.f32 0.0, %v1038
    %v1040 = vpop.f32.mrb[0].mxu0
    %v1041 = vadd.f32 0.0, %v1040
    %v1042 = vpop.f32.mrb[0].mxu0
    %v1043 = vadd.f32 0.0, %v1042
    %1044 = vmatprep.mubr.bf16.mxu0 %v933
    %1045 = vmatmul.mubr.bf16.gmra.mrb[0].mxu0 %v932
    %v1046 = vpop.f32.mrb[0].mxu0
    %v1047 = vadd.f32 0.0, %v1046
    %v1048 = vpop.f32.mrb[0].mxu0
    %v1049 = vadd.f32 0.0, %v1048
    %v1050 = vpop.f32.mrb[0].mxu0
    %v1051 = vadd.f32 0.0, %v1050
    %v1052 = vpop.f32.mrb[0].mxu0
    %v1053 = vadd.f32 0.0, %v1052
    %1054 = vmatprep.mubr.bf16.mxu0 %v935
    %1055 = vmatmul.mubr.bf16.gmra.mrb[0].mxu0 %v934
    %v1056 = vpop.f32.mrb[0].mxu0
    %v1057 = vadd.f32 0.0, %v1056
    %v1058 = vpop.f32.mrb[0].mxu0
    %v1059 = vadd.f32 0.0, %v1058
    %v1060 = vpop.f32.mrb[0].mxu0
    %v1061 = vadd.f32 0.0, %v1060
    %v1062 = vpop.f32.mrb[0].mxu0
    %v1063 = vadd.f32 0.0, %v1062
    %1064 = vdwg.mxu0
    %v1065 = vunpack.c.l.b16 %v497
    %v1066 = vunpack.c.h.b16 %v497
    %v1067 = vunpack.c.l.b16 %v511
    %v1068 = vunpack.c.h.b16 %v511
    %v1069 = vunpack.c.l.b16 %v525
    %v1070 = vunpack.c.h.b16 %v525
    %v1071 = vunpack.c.l.b16 %v539
    %v1072 = vunpack.c.h.b16 %v539
    %v1073 = vunpack.c.l.b16 %v553
    %v1074 = vunpack.c.h.b16 %v553
    %v1075 = vunpack.c.l.b16 %v567
    %v1076 = vunpack.c.h.b16 %v567
    %v1077 = vunpack.c.l.b16 %v581
    %v1078 = vunpack.c.h.b16 %v581
    %v1079 = vunpack.c.l.b16 %v595
    %v1080 = vunpack.c.h.b16 %v595
    %v1081 = vunpack.c.l.b16 %v609
    %v1082 = vunpack.c.h.b16 %v609
    %v1083 = vunpack.c.l.b16 %v623
    %v1084 = vunpack.c.h.b16 %v623
    %v1085 = vunpack.c.l.b16 %v637
    %v1086 = vunpack.c.h.b16 %v637
    %v1087 = vunpack.c.l.b16 %v651
    %v1088 = vunpack.c.h.b16 %v651
    %v1089 = vunpack.c.l.b16 %v665
    %v1090 = vunpack.c.h.b16 %v665
    %v1091 = vunpack.c.l.b16 %v679
    %v1092 = vunpack.c.h.b16 %v679
    %v1093 = vunpack.c.l.b16 %v693
    %v1094 = vunpack.c.h.b16 %v693
    %v1095 = vunpack.c.l.b16 %v707
    %v1096 = vunpack.c.h.b16 %v707
    %v1097 = vpack.c.b16 %v1067, %v1065
    %v1098 = vpack.c.b16 %v1068, %v1066
    %v1099 = vpack.c.b16 %v1071, %v1069
    %v1100 = vpack.c.b16 %v1072, %v1070
    %v1101 = vpack.c.b16 %v1075, %v1073
    %v1102 = vpack.c.b16 %v1076, %v1074
    %v1103 = vpack.c.b16 %v1079, %v1077
    %v1104 = vpack.c.b16 %v1080, %v1078
    %v1105 = vpack.c.b16 %v1083, %v1081
    %v1106 = vpack.c.b16 %v1084, %v1082
    %v1107 = vpack.c.b16 %v1087, %v1085
    %v1108 = vpack.c.b16 %v1088, %v1086
    %v1109 = vpack.c.b16 %v1091, %v1089
    %v1110 = vpack.c.b16 %v1092, %v1090
    %v1111 = vpack.c.b16 %v1095, %v1093
    %v1112 = vpack.c.b16 %v1096, %v1094
    %1129 = vmatprep.subr.bf16.mxu0 %v709
    %1130 = vmatpush1.bf16.msra.mxu0 %v708
    %1131 = vmatprep.subr.bf16.mxu0 %v711
    %1132 = vmatpush1.bf16.msra.mxu0 %v710
    %1133 = vmatprep.subr.bf16.mxu0 %v713
    %1134 = vmatpush1.bf16.msra.mxu0 %v712
    %1135 = vmatprep.subr.bf16.mxu0 %v715
    %1136 = vmatpush1.bf16.msra.mxu0 %v714
    %1137 = vmatprep.subr.bf16.mxu0 %v717
    %1138 = vmatpush1.bf16.msra.mxu0 %v716
    %1139 = vmatprep.subr.bf16.mxu0 %v719
    %1140 = vmatpush1.bf16.msra.mxu0 %v718
    %1141 = vmatprep.subr.bf16.mxu0 %v721
    %1142 = vmatpush1.bf16.msra.mxu0 %v720
    %1143 = vmatprep.subr.bf16.mxu0 %v723
    %1144 = vmatpush1.bf16.msra.mxu0 %v722
    %1145 = vmatprep.subr.bf16.mxu0 %v725
    %1146 = vmatpush1.bf16.msra.mxu0 %v724
    %1147 = vmatprep.subr.bf16.mxu0 %v727
    %1148 = vmatpush1.bf16.msra.mxu0 %v726
    %1149 = vmatprep.subr.bf16.mxu0 %v729
    %1150 = vmatpush1.bf16.msra.mxu0 %v728
    %1151 = vmatprep.subr.bf16.mxu0 %v731
    %1152 = vmatpush1.bf16.msra.mxu0 %v730
    %1153 = vmatprep.subr.bf16.mxu0 %v733
    %1154 = vmatpush1.bf16.msra.mxu0 %v732
    %1155 = vmatprep.subr.bf16.mxu0 %v735
    %1156 = vmatpush1.bf16.msra.mxu0 %v734
    %1157 = vmatprep.subr.bf16.mxu0 %v737
    %1158 = vmatpush1.bf16.msra.mxu0 %v736
    %1159 = vmatprep.subr.bf16.mxu0 %v739
    %1160 = vmatpush1.bf16.msra.mxu0 %v738
    %1161 = vmatprep.mubr.bf16.mxu0 %v1098
    %1162 = vmatmul.mubr.bf16.gmra.mrb[0].mxu0 %v1097
    %v1163 = vpop.f32.mrb[0].mxu0
    %v1164 = vadd.f32 %v987, %v1163
    %v1165 = vpop.f32.mrb[0].mxu0
    %v1166 = vadd.f32 %v989, %v1165
    %v1167 = vpop.f32.mrb[0].mxu0
    %v1168 = vadd.f32 %v991, %v1167
    %v1169 = vpop.f32.mrb[0].mxu0
    %v1170 = vadd.f32 %v993, %v1169
    %1171 = vmatprep.mubr.bf16.mxu0 %v1100
    %1172 = vmatmul.mubr.bf16.gmra.mrb[0].mxu0 %v1099
    %v1173 = vpop.f32.mrb[0].mxu0
    %v1174 = vadd.f32 %v997, %v1173
    %v1175 = vpop.f32.mrb[0].mxu0
    %v1176 = vadd.f32 %v999, %v1175
    %v1177 = vpop.f32.mrb[0].mxu0
    %v1178 = vadd.f32 %v1001, %v1177
    %v1179 = vpop.f32.mrb[0].mxu0
    %v1180 = vadd.f32 %v1003, %v1179
    %1181 = vmatprep.mubr.bf16.mxu0 %v1102
    %1182 = vmatmul.mubr.bf16.gmra.mrb[0].mxu0 %v1101
    %v1183 = vpop.f32.mrb[0].mxu0
    %v1184 = vadd.f32 %v1007, %v1183
    %v1185 = vpop.f32.mrb[0].mxu0
    %v1186 = vadd.f32 %v1009, %v1185
    %v1187 = vpop.f32.mrb[0].mxu0
    %v1188 = vadd.f32 %v1011, %v1187
    %v1189 = vpop.f32.mrb[0].mxu0
    %v1190 = vadd.f32 %v1013, %v1189
    %1191 = vmatprep.mubr.bf16.mxu0 %v1104
    %1192 = vmatmul.mubr.bf16.gmra.mrb[0].mxu0 %v1103
    %v1193 = vpop.f32.mrb[0].mxu0
    %v1194 = vadd.f32 %v1017, %v1193
    %v1195 = vpop.f32.mrb[0].mxu0
    %v1196 = vadd.f32 %v1019, %v1195
    %v1197 = vpop.f32.mrb[0].mxu0
    %v1198 = vadd.f32 %v1021, %v1197
    %v1199 = vpop.f32.mrb[0].mxu0
    %v1200 = vadd.f32 %v1023, %v1199
    %1201 = vmatprep.mubr.bf16.mxu0 %v1106
    %1202 = vmatmul.mubr.bf16.gmra.mrb[0].mxu0 %v1105
    %v1203 = vpop.f32.mrb[0].mxu0
    %v1204 = vadd.f32 %v1027, %v1203
    %v1205 = vpop.f32.mrb[0].mxu0
    %v1206 = vadd.f32 %v1029, %v1205
    %v1207 = vpop.f32.mrb[0].mxu0
    %v1208 = vadd.f32 %v1031, %v1207
    %v1209 = vpop.f32.mrb[0].mxu0
    %v1210 = vadd.f32 %v1033, %v1209
    %1211 = vmatprep.mubr.bf16.mxu0 %v1108
    %1212 = vmatmul.mubr.bf16.gmra.mrb[0].mxu0 %v1107
    %v1213 = vpop.f32.mrb[0].mxu0
    %v1214 = vadd.f32 %v1037, %v1213
    %v1215 = vpop.f32.mrb[0].mxu0
    %v1216 = vadd.f32 %v1039, %v1215
    %v1217 = vpop.f32.mrb[0].mxu0
    %v1218 = vadd.f32 %v1041, %v1217
    %v1219 = vpop.f32.mrb[0].mxu0
    %v1220 = vadd.f32 %v1043, %v1219
    %1221 = vmatprep.mubr.bf16.mxu0 %v1110
    %1222 = vmatmul.mubr.bf16.gmra.mrb[0].mxu0 %v1109
    %v1223 = vpop.f32.mrb[0].mxu0
    %v1224 = vadd.f32 %v1047, %v1223
    %v1225 = vpop.f32.mrb[0].mxu0
    %v1226 = vadd.f32 %v1049, %v1225
    %v1227 = vpop.f32.mrb[0].mxu0
    %v1228 = vadd.f32 %v1051, %v1227
    %v1229 = vpop.f32.mrb[0].mxu0
    %v1230 = vadd.f32 %v1053, %v1229
    %1231 = vmatprep.mubr.bf16.mxu0 %v1112
    %1232 = vmatmul.mubr.bf16.gmra.mrb[0].mxu0 %v1111
    %v1233 = vpop.f32.mrb[0].mxu0
    %v1234 = vadd.f32 %v1057, %v1233
    %v1235 = vpop.f32.mrb[0].mxu0
    %v1236 = vadd.f32 %v1059, %v1235
    %v1237 = vpop.f32.mrb[0].mxu0
    %v1238 = vadd.f32 %v1061, %v1237
    %v1239 = vpop.f32.mrb[0].mxu0
    %v1240 = vadd.f32 %v1063, %v1239
    %1241 = vdwg.mxu0
    %v1242 = vld [vmem:[#allocation4 + $0x8] sm:$0x33]
    %v1243 = vld [vmem:[#allocation4 + $0x18] sm:$0x33]
    %v1244 = vld [vmem:[#allocation4 + $0x28] sm:$0x33]
    %v1245 = vld [vmem:[#allocation4 + $0x38] sm:$0x33]
    %v1246 = vld [vmem:[#allocation4 + $0x48] sm:$0x33]
    %v1247 = vld [vmem:[#allocation4 + $0x58] sm:$0x33]
    %v1248 = vld [vmem:[#allocation4 + $0x68] sm:$0x33]
    %v1249 = vld [vmem:[#allocation4 + $0x78] sm:$0x33]
    %v1250 = vld [vmem:[#allocation4 + $0xa8] sm:$0x33]
    %v1251 = vld [vmem:[#allocation4 + $0xb8] sm:$0x33]
    %v1252 = vld [vmem:[#allocation4 + $0xc8] sm:$0x33]
    %v1253 = vld [vmem:[#allocation4 + $0xd8] sm:$0x33]
    %v1254 = vld [vmem:[#allocation4 + $0xe8] sm:$0x33]
    %v1255 = vld [vmem:[#allocation4 + $0xf8] sm:$0x33]
    %v1256 = vld [vmem:[#allocation4 + $0x108] sm:$0x33]
    %v1257 = vld [vmem:[#allocation4 + $0x118] sm:$0x33]
    %vm1258 = vsmask.f32 2304
    %vm1259 = vsmask.f32 6416
    %vm1260 = vmor %vm1258, %vm1259
    %v1262 = vshrl.u32 %v740, 16
    %v1264 = vrot.slane %v1262, 5
    %v1265 = vshll.u32 %v740, 16
    %v1267 = vrot.slane %v1265, 6
    %v1268 = vor.u32 %v1264, %v1267
    %v1269 = vrot.slane %v1268, 4
    %v1271 = vshrl.u32 %v1242, 16
    %v1273 = vrot.slane %v1271, 5
    %v1274 = vshll.u32 %v1242, 16
    %v1276 = vrot.slane %v1274, 6
    %v1277 = vor.u32 %v1273, %v1276
    %v1278 = vsel %vm1260, %v1269, %v1277
    %v1280 = vshrl.u32 %v741, 16
    %v1282 = vrot.slane %v1280, 5
    %v1283 = vshll.u32 %v741, 16
    %v1285 = vrot.slane %v1283, 6
    %v1286 = vor.u32 %v1282, %v1285
    %v1287 = vrot.slane %v1286, 4
    %v1289 = vshrl.u32 %v1243, 16
    %v1291 = vrot.slane %v1289, 5
    %v1292 = vshll.u32 %v1243, 16
    %v1294 = vrot.slane %v1292, 6
    %v1295 = vor.u32 %v1291, %v1294
    %v1296 = vsel %vm1260, %v1287, %v1295
    %v1298 = vshrl.u32 %v742, 16
    %v1300 = vrot.slane %v1298, 5
    %v1301 = vshll.u32 %v742, 16
    %v1303 = vrot.slane %v1301, 6
    %v1304 = vor.u32 %v1300, %v1303
    %v1305 = vrot.slane %v1304, 4
    %v1307 = vshrl.u32 %v1244, 16
    %v1309 = vrot.slane %v1307, 5
    %v1310 = vshll.u32 %v1244, 16
    %v1312 = vrot.slane %v1310, 6
    %v1313 = vor.u32 %v1309, %v1312
    %v1314 = vsel %vm1260, %v1305, %v1313
    %v1316 = vshrl.u32 %v743, 16
    %v1318 = vrot.slane %v1316, 5
    %v1319 = vshll.u32 %v743, 16
    %v1321 = vrot.slane %v1319, 6
    %v1322 = vor.u32 %v1318, %v1321
    %v1323 = vrot.slane %v1322, 4
    %v1325 = vshrl.u32 %v1245, 16
    %v1327 = vrot.slane %v1325, 5
    %v1328 = vshll.u32 %v1245, 16
    %v1330 = vrot.slane %v1328, 6
    %v1331 = vor.u32 %v1327, %v1330
    %v1332 = vsel %vm1260, %v1323, %v1331
    %v1334 = vshrl.u32 %v744, 16
    %v1336 = vrot.slane %v1334, 5
    %v1337 = vshll.u32 %v744, 16
    %v1339 = vrot.slane %v1337, 6
    %v1340 = vor.u32 %v1336, %v1339
    %v1341 = vrot.slane %v1340, 4
    %v1343 = vshrl.u32 %v1246, 16
    %v1345 = vrot.slane %v1343, 5
    %v1346 = vshll.u32 %v1246, 16
    %v1348 = vrot.slane %v1346, 6
    %v1349 = vor.u32 %v1345, %v1348
    %v1350 = vsel %vm1260, %v1341, %v1349
    %v1352 = vshrl.u32 %v745, 16
    %v1354 = vrot.slane %v1352, 5
    %v1355 = vshll.u32 %v745, 16
    %v1357 = vrot.slane %v1355, 6
    %v1358 = vor.u32 %v1354, %v1357
    %v1359 = vrot.slane %v1358, 4
    %v1361 = vshrl.u32 %v1247, 16
    %v1363 = vrot.slane %v1361, 5
    %v1364 = vshll.u32 %v1247, 16
    %v1366 = vrot.slane %v1364, 6
    %v1367 = vor.u32 %v1363, %v1366
    %v1368 = vsel %vm1260, %v1359, %v1367
    %v1370 = vshrl.u32 %v746, 16
    %v1372 = vrot.slane %v1370, 5
    %v1373 = vshll.u32 %v746, 16
    %v1375 = vrot.slane %v1373, 6
    %v1376 = vor.u32 %v1372, %v1375
    %v1377 = vrot.slane %v1376, 4
    %v1379 = vshrl.u32 %v1248, 16
    %v1381 = vrot.slane %v1379, 5
    %v1382 = vshll.u32 %v1248, 16
    %v1384 = vrot.slane %v1382, 6
    %v1385 = vor.u32 %v1381, %v1384
    %v1386 = vsel %vm1260, %v1377, %v1385
    %v1388 = vshrl.u32 %v747, 16
    %v1390 = vrot.slane %v1388, 5
    %v1391 = vshll.u32 %v747, 16
    %v1393 = vrot.slane %v1391, 6
    %v1394 = vor.u32 %v1390, %v1393
    %v1395 = vrot.slane %v1394, 4
    %v1397 = vshrl.u32 %v1249, 16
    %v1399 = vrot.slane %v1397, 5
    %v1400 = vshll.u32 %v1249, 16
    %v1402 = vrot.slane %v1400, 6
    %v1403 = vor.u32 %v1399, %v1402
    %v1404 = vsel %vm1260, %v1395, %v1403
    %v1406 = vshrl.u32 %v748, 16
    %v1408 = vrot.slane %v1406, 5
    %v1409 = vshll.u32 %v748, 16
    %v1411 = vrot.slane %v1409, 6
    %v1412 = vor.u32 %v1408, %v1411
    %v1413 = vrot.slane %v1412, 4
    %v1415 = vshrl.u32 %v1250, 16
    %v1417 = vrot.slane %v1415, 5
    %v1418 = vshll.u32 %v1250, 16
    %v1420 = vrot.slane %v1418, 6
    %v1421 = vor.u32 %v1417, %v1420
    %v1422 = vsel %vm1260, %v1413, %v1421
    %v1424 = vshrl.u32 %v749, 16
    %v1426 = vrot.slane %v1424, 5
    %v1427 = vshll.u32 %v749, 16
    %v1429 = vrot.slane %v1427, 6
    %v1430 = vor.u32 %v1426, %v1429
    %v1431 = vrot.slane %v1430, 4
    %v1433 = vshrl.u32 %v1251, 16
    %v1435 = vrot.slane %v1433, 5
    %v1436 = vshll.u32 %v1251, 16
    %v1438 = vrot.slane %v1436, 6
    %v1439 = vor.u32 %v1435, %v1438
    %v1440 = vsel %vm1260, %v1431, %v1439
    %v1442 = vshrl.u32 %v750, 16
    %v1444 = vrot.slane %v1442, 5
    %v1445 = vshll.u32 %v750, 16
    %v1447 = vrot.slane %v1445, 6
    %v1448 = vor.u32 %v1444, %v1447
    %v1449 = vrot.slane %v1448, 4
    %v1451 = vshrl.u32 %v1252, 16
    %v1453 = vrot.slane %v1451, 5
    %v1454 = vshll.u32 %v1252, 16
    %v1456 = vrot.slane %v1454, 6
    %v1457 = vor.u32 %v1453, %v1456
    %v1458 = vsel %vm1260, %v1449, %v1457
    %v1460 = vshrl.u32 %v751, 16
    %v1462 = vrot.slane %v1460, 5
    %v1463 = vshll.u32 %v751, 16
    %v1465 = vrot.slane %v1463, 6
    %v1466 = vor.u32 %v1462, %v1465
    %v1467 = vrot.slane %v1466, 4
    %v1469 = vshrl.u32 %v1253, 16
    %v1471 = vrot.slane %v1469, 5
    %v1472 = vshll.u32 %v1253, 16
    %v1474 = vrot.slane %v1472, 6
    %v1475 = vor.u32 %v1471, %v1474
    %v1476 = vsel %vm1260, %v1467, %v1475
    %v1478 = vshrl.u32 %v752, 16
    %v1480 = vrot.slane %v1478, 5
    %v1481 = vshll.u32 %v752, 16
    %v1483 = vrot.slane %v1481, 6
    %v1484 = vor.u32 %v1480, %v1483
    %v1485 = vrot.slane %v1484, 4
    %v1487 = vshrl.u32 %v1254, 16
    %v1489 = vrot.slane %v1487, 5
    %v1490 = vshll.u32 %v1254, 16
    %v1492 = vrot.slane %v1490, 6
    %v1493 = vor.u32 %v1489, %v1492
    %v1494 = vsel %vm1260, %v1485, %v1493
    %v1496 = vshrl.u32 %v753, 16
    %v1498 = vrot.slane %v1496, 5
    %v1499 = vshll.u32 %v753, 16
    %v1501 = vrot.slane %v1499, 6
    %v1502 = vor.u32 %v1498, %v1501
    %v1503 = vrot.slane %v1502, 4
    %v1505 = vshrl.u32 %v1255, 16
    %v1507 = vrot.slane %v1505, 5
    %v1508 = vshll.u32 %v1255, 16
    %v1510 = vrot.slane %v1508, 6
    %v1511 = vor.u32 %v1507, %v1510
    %v1512 = vsel %vm1260, %v1503, %v1511
    %v1514 = vshrl.u32 %v754, 16
    %v1516 = vrot.slane %v1514, 5
    %v1517 = vshll.u32 %v754, 16
    %v1519 = vrot.slane %v1517, 6
    %v1520 = vor.u32 %v1516, %v1519
    %v1521 = vrot.slane %v1520, 4
    %v1523 = vshrl.u32 %v1256, 16
    %v1525 = vrot.slane %v1523, 5
    %v1526 = vshll.u32 %v1256, 16
    %v1528 = vrot.slane %v1526, 6
    %v1529 = vor.u32 %v1525, %v1528
    %v1530 = vsel %vm1260, %v1521, %v1529
    %v1532 = vshrl.u32 %v755, 16
    %v1534 = vrot.slane %v1532, 5
    %v1535 = vshll.u32 %v755, 16
    %v1537 = vrot.slane %v1535, 6
    %v1538 = vor.u32 %v1534, %v1537
    %v1539 = vrot.slane %v1538, 4
    %v1541 = vshrl.u32 %v1257, 16
    %v1543 = vrot.slane %v1541, 5
    %v1544 = vshll.u32 %v1257, 16
    %v1546 = vrot.slane %v1544, 6
    %v1547 = vor.u32 %v1543, %v1546
    %v1548 = vsel %vm1260, %v1539, %v1547
    %s1549 = scalar_lea.vmem [#allocation2], 512
    %v1550 = vld [vmem:[%s1549] sm:$0xff]
    %v1551 = vld [vmem:[%s1549 + $0x8] sm:$0xff]
    %v1552 = vld [vmem:[%s1549 + $0x10] sm:$0xff]
    %v1553 = vld [vmem:[%s1549 + $0x18] sm:$0xff]
    %v1554 = vld [vmem:[%s1549 + $0x20] sm:$0xff]
    %v1555 = vld [vmem:[%s1549 + $0x28] sm:$0xff]
    %v1556 = vld [vmem:[%s1549 + $0x30] sm:$0xff]
    %v1557 = vld [vmem:[%s1549 + $0x38] sm:$0xff]
    %v1558 = vld [vmem:[%s1549 + $0x40] sm:$0xff]
    %v1559 = vld [vmem:[%s1549 + $0x48] sm:$0xff]
    %v1560 = vld [vmem:[%s1549 + $0x50] sm:$0xff]
    %v1561 = vld [vmem:[%s1549 + $0x58] sm:$0xff]
    %v1562 = vld [vmem:[%s1549 + $0x60] sm:$0xff]
    %v1563 = vld [vmem:[%s1549 + $0x68] sm:$0xff]
    %v1564 = vld [vmem:[%s1549 + $0x70] sm:$0xff]
    %v1565 = vld [vmem:[%s1549 + $0x78] sm:$0xff]
    %v1566 = vld [vmem:[%s1549 + $0x80] sm:$0xff]
    %v1567 = vld [vmem:[%s1549 + $0x88] sm:$0xff]
    %v1568 = vld [vmem:[%s1549 + $0x90] sm:$0xff]
    %v1569 = vld [vmem:[%s1549 + $0x98] sm:$0xff]
    %v1570 = vld [vmem:[%s1549 + $0xa0] sm:$0xff]
    %v1571 = vld [vmem:[%s1549 + $0xa8] sm:$0xff]
    %v1572 = vld [vmem:[%s1549 + $0xb0] sm:$0xff]
    %v1573 = vld [vmem:[%s1549 + $0xb8] sm:$0xff]
    %v1574 = vld [vmem:[%s1549 + $0xc0] sm:$0xff]
    %v1575 = vld [vmem:[%s1549 + $0xc8] sm:$0xff]
    %v1576 = vld [vmem:[%s1549 + $0xd0] sm:$0xff]
    %v1577 = vld [vmem:[%s1549 + $0xd8] sm:$0xff]
    %v1578 = vld [vmem:[%s1549 + $0xe0] sm:$0xff]
    %v1579 = vld [vmem:[%s1549 + $0xe8] sm:$0xff]
    %v1580 = vld [vmem:[%s1549 + $0xf0] sm:$0xff]
    %v1581 = vld [vmem:[%s1549 + $0xf8] sm:$0xff]
    %v1582 = vunpack.c.l.b16 %v1278
    %v1583 = vunpack.c.h.b16 %v1278
    %v1584 = vunpack.c.l.b16 %v1296
    %v1585 = vunpack.c.h.b16 %v1296
    %v1586 = vunpack.c.l.b16 %v1314
    %v1587 = vunpack.c.h.b16 %v1314
    %v1588 = vunpack.c.l.b16 %v1332
    %v1589 = vunpack.c.h.b16 %v1332
    %v1590 = vunpack.c.l.b16 %v1350
    %v1591 = vunpack.c.h.b16 %v1350
    %v1592 = vunpack.c.l.b16 %v1368
    %v1593 = vunpack.c.h.b16 %v1368
    %v1594 = vunpack.c.l.b16 %v1386
    %v1595 = vunpack.c.h.b16 %v1386
    %v1596 = vunpack.c.l.b16 %v1404
    %v1597 = vunpack.c.h.b16 %v1404
    %v1598 = vunpack.c.l.b16 %v1422
    %v1599 = vunpack.c.h.b16 %v1422
    %v1600 = vunpack.c.l.b16 %v1440
    %v1601 = vunpack.c.h.b16 %v1440
    %v1602 = vunpack.c.l.b16 %v1458
    %v1603 = vunpack.c.h.b16 %v1458
    %v1604 = vunpack.c.l.b16 %v1476
    %v1605 = vunpack.c.h.b16 %v1476
    %v1606 = vunpack.c.l.b16 %v1494
    %v1607 = vunpack.c.h.b16 %v1494
    %v1608 = vunpack.c.l.b16 %v1512
    %v1609 = vunpack.c.h.b16 %v1512
    %v1610 = vunpack.c.l.b16 %v1530
    %v1611 = vunpack.c.h.b16 %v1530
    %v1612 = vunpack.c.l.b16 %v1548
    %v1613 = vunpack.c.h.b16 %v1548
    %v1614 = vpack.c.b16 %v1584, %v1582
    %v1615 = vpack.c.b16 %v1585, %v1583
    %v1616 = vpack.c.b16 %v1588, %v1586
    %v1617 = vpack.c.b16 %v1589, %v1587
    %v1618 = vpack.c.b16 %v1592, %v1590
    %v1619 = vpack.c.b16 %v1593, %v1591
    %v1620 = vpack.c.b16 %v1596, %v1594
    %v1621 = vpack.c.b16 %v1597, %v1595
    %v1622 = vpack.c.b16 %v1600, %v1598
    %v1623 = vpack.c.b16 %v1601, %v1599
    %v1624 = vpack.c.b16 %v1604, %v1602
    %v1625 = vpack.c.b16 %v1605, %v1603
    %v1626 = vpack.c.b16 %v1608, %v1606
    %v1627 = vpack.c.b16 %v1609, %v1607
    %v1628 = vpack.c.b16 %v1612, %v1610
    %v1629 = vpack.c.b16 %v1613, %v1611
    %1646 = vmatprep.subr.bf16.mxu0 %v1551
    %1647 = vmatpush1.bf16.msra.mxu0 %v1550
    %1648 = vmatprep.subr.bf16.mxu0 %v1553
    %1649 = vmatpush1.bf16.msra.mxu0 %v1552
    %1650 = vmatprep.subr.bf16.mxu0 %v1555
    %1651 = vmatpush1.bf16.msra.mxu0 %v1554
    %1652 = vmatprep.subr.bf16.mxu0 %v1557
    %1653 = vmatpush1.bf16.msra.mxu0 %v1556
    %1654 = vmatprep.subr.bf16.mxu0 %v1559
    %1655 = vmatpush1.bf16.msra.mxu0 %v1558
    %1656 = vmatprep.subr.bf16.mxu0 %v1561
    %1657 = vmatpush1.bf16.msra.mxu0 %v1560
    %1658 = vmatprep.subr.bf16.mxu0 %v1563
    %1659 = vmatpush1.bf16.msra.mxu0 %v1562
    %1660 = vmatprep.subr.bf16.mxu0 %v1565
    %1661 = vmatpush1.bf16.msra.mxu0 %v1564
    %1662 = vmatprep.subr.bf16.mxu0 %v1567
    %1663 = vmatpush1.bf16.msra.mxu0 %v1566
    %1664 = vmatprep.subr.bf16.mxu0 %v1569
    %1665 = vmatpush1.bf16.msra.mxu0 %v1568
    %1666 = vmatprep.subr.bf16.mxu0 %v1571
    %1667 = vmatpush1.bf16.msra.mxu0 %v1570
    %1668 = vmatprep.subr.bf16.mxu0 %v1573
    %1669 = vmatpush1.bf16.msra.mxu0 %v1572
    %1670 = vmatprep.subr.bf16.mxu0 %v1575
    %1671 = vmatpush1.bf16.msra.mxu0 %v1574
    %1672 = vmatprep.subr.bf16.mxu0 %v1577
    %1673 = vmatpush1.bf16.msra.mxu0 %v1576
    %1674 = vmatprep.subr.bf16.mxu0 %v1579
    %1675 = vmatpush1.bf16.msra.mxu0 %v1578
    %1676 = vmatprep.subr.bf16.mxu0 %v1581
    %1677 = vmatpush1.bf16.msra.mxu0 %v1580
    %1678 = vmatprep.mubr.bf16.mxu0 %v1615
    %1679 = vmatmul.mubr.bf16.gmra.mrb[0].mxu0 %v1614
    %v1680 = vpop.f32.mrb[0].mxu0
    %v1681 = vadd.f32 0.0, %v1680
    %v1682 = vpop.f32.mrb[0].mxu0
    %v1683 = vadd.f32 0.0, %v1682
    %v1684 = vpop.f32.mrb[0].mxu0
    %v1685 = vadd.f32 0.0, %v1684
    %v1686 = vpop.f32.mrb[0].mxu0
    %v1687 = vadd.f32 0.0, %v1686
    %1688 = vmatprep.mubr.bf16.mxu0 %v1617
    %1689 = vmatmul.mubr.bf16.gmra.mrb[0].mxu0 %v1616
    %v1690 = vpop.f32.mrb[0].mxu0
    %v1691 = vadd.f32 0.0, %v1690
    %v1692 = vpop.f32.mrb[0].mxu0
    %v1693 = vadd.f32 0.0, %v1692
    %v1694 = vpop.f32.mrb[0].mxu0
    %v1695 = vadd.f32 0.0, %v1694
    %v1696 = vpop.f32.mrb[0].mxu0
    %v1697 = vadd.f32 0.0, %v1696
    %1698 = vmatprep.mubr.bf16.mxu0 %v1619
    %1699 = vmatmul.mubr.bf16.gmra.mrb[0].mxu0 %v1618
    %v1700 = vpop.f32.mrb[0].mxu0
    %v1701 = vadd.f32 0.0, %v1700
    %v1702 = vpop.f32.mrb[0].mxu0
    %v1703 = vadd.f32 0.0, %v1702
    %v1704 = vpop.f32.mrb[0].mxu0
    %v1705 = vadd.f32 0.0, %v1704
    %v1706 = vpop.f32.mrb[0].mxu0
    %v1707 = vadd.f32 0.0, %v1706
    %1708 = vmatprep.mubr.bf16.mxu0 %v1621
    %1709 = vmatmul.mubr.bf16.gmra.mrb[0].mxu0 %v1620
    %v1710 = vpop.f32.mrb[0].mxu0
    %v1711 = vadd.f32 0.0, %v1710
    %v1712 = vpop.f32.mrb[0].mxu0
    %v1713 = vadd.f32 0.0, %v1712
    %v1714 = vpop.f32.mrb[0].mxu0
    %v1715 = vadd.f32 0.0, %v1714
    %v1716 = vpop.f32.mrb[0].mxu0
    %v1717 = vadd.f32 0.0, %v1716
    %1718 = vmatprep.mubr.bf16.mxu0 %v1623
    %1719 = vmatmul.mubr.bf16.gmra.mrb[0].mxu0 %v1622
    %v1720 = vpop.f32.mrb[0].mxu0
    %v1721 = vadd.f32 0.0, %v1720
    %v1722 = vpop.f32.mrb[0].mxu0
    %v1723 = vadd.f32 0.0, %v1722
    %v1724 = vpop.f32.mrb[0].mxu0
    %v1725 = vadd.f32 0.0, %v1724
    %v1726 = vpop.f32.mrb[0].mxu0
    %v1727 = vadd.f32 0.0, %v1726
    %1728 = vmatprep.mubr.bf16.mxu0 %v1625
    %1729 = vmatmul.mubr.bf16.gmra.mrb[0].mxu0 %v1624
    %v1730 = vpop.f32.mrb[0].mxu0
    %v1731 = vadd.f32 0.0, %v1730
    %v1732 = vpop.f32.mrb[0].mxu0
    %v1733 = vadd.f32 0.0, %v1732
    %v1734 = vpop.f32.mrb[0].mxu0
    %v1735 = vadd.f32 0.0, %v1734
    %v1736 = vpop.f32.mrb[0].mxu0
    %v1737 = vadd.f32 0.0, %v1736
    %1738 = vmatprep.mubr.bf16.mxu0 %v1627
    %1739 = vmatmul.mubr.bf16.gmra.mrb[0].mxu0 %v1626
    %v1740 = vpop.f32.mrb[0].mxu0
    %v1741 = vadd.f32 0.0, %v1740
    %v1742 = vpop.f32.mrb[0].mxu0
    %v1743 = vadd.f32 0.0, %v1742
    %v1744 = vpop.f32.mrb[0].mxu0
    %v1745 = vadd.f32 0.0, %v1744
    %v1746 = vpop.f32.mrb[0].mxu0
    %v1747 = vadd.f32 0.0, %v1746
    %1748 = vmatprep.mubr.bf16.mxu0 %v1629
    %1749 = vmatmul.mubr.bf16.gmra.mrb[0].mxu0 %v1628
    %v1750 = vpop.f32.mrb[0].mxu0
    %v1751 = vadd.f32 0.0, %v1750
    %v1752 = vpop.f32.mrb[0].mxu0
    %v1753 = vadd.f32 0.0, %v1752
    %v1754 = vpop.f32.mrb[0].mxu0
    %v1755 = vadd.f32 0.0, %v1754
    %v1756 = vpop.f32.mrb[0].mxu0
    %v1757 = vadd.f32 0.0, %v1756
    %1758 = vdwg.mxu0
    %v1759 = vadd.f32 %v1164, %v1681
    %v1760 = vadd.f32 %v1166, %v1683
    %v1761 = vadd.f32 %v1168, %v1685
    %v1762 = vadd.f32 %v1170, %v1687
    %v1763 = vadd.f32 %v1174, %v1691
    %v1764 = vadd.f32 %v1176, %v1693
    %v1765 = vadd.f32 %v1178, %v1695
    %v1766 = vadd.f32 %v1180, %v1697
    %v1767 = vadd.f32 %v1184, %v1701
    %v1768 = vadd.f32 %v1186, %v1703
    %v1769 = vadd.f32 %v1188, %v1705
    %v1770 = vadd.f32 %v1190, %v1707
    %v1771 = vadd.f32 %v1194, %v1711
    %v1772 = vadd.f32 %v1196, %v1713
    %v1773 = vadd.f32 %v1198, %v1715
    %v1774 = vadd.f32 %v1200, %v1717
    %v1775 = vadd.f32 %v1204, %v1721
    %v1776 = vadd.f32 %v1206, %v1723
    %v1777 = vadd.f32 %v1208, %v1725
    %v1778 = vadd.f32 %v1210, %v1727
    %v1779 = vadd.f32 %v1214, %v1731
    %v1780 = vadd.f32 %v1216, %v1733
    %v1781 = vadd.f32 %v1218, %v1735
    %v1782 = vadd.f32 %v1220, %v1737
    %v1783 = vadd.f32 %v1224, %v1741
    %v1784 = vadd.f32 %v1226, %v1743
    %v1785 = vadd.f32 %v1228, %v1745
    %v1786 = vadd.f32 %v1230, %v1747
    %v1787 = vadd.f32 %v1234, %v1751
    %v1788 = vadd.f32 %v1236, %v1753
    %v1789 = vadd.f32 %v1238, %v1755
    %v1790 = vadd.f32 %v1240, %v1757
    %v1791 = vld [vmem:[%s411] sm:$0xff]
    %v1792 = vld [vmem:[%s411 + $0x8] sm:$0x11]
    %v1793 = vld [vmem:[%s411 + $0x10] sm:$0xff]
    %v1794 = vld [vmem:[%s411 + $0x18] sm:$0x11]
    %v1795 = vld [vmem:[%s411 + $0x20] sm:$0xff]
    %v1796 = vld [vmem:[%s411 + $0x28] sm:$0x11]
    %v1797 = vld [vmem:[%s411 + $0x30] sm:$0xff]
    %v1798 = vld [vmem:[%s411 + $0x38] sm:$0x11]
    %v1799 = vld [vmem:[%s411 + $0x40] sm:$0xff]
    %v1800 = vld [vmem:[%s411 + $0x48] sm:$0x11]
    %v1801 = vld [vmem:[%s411 + $0x50] sm:$0xff]
    %v1802 = vld [vmem:[%s411 + $0x58] sm:$0x11]
    %v1803 = vld [vmem:[%s411 + $0x60] sm:$0xff]
    %v1804 = vld [vmem:[%s411 + $0x68] sm:$0x11]
    %v1805 = vld [vmem:[%s411 + $0x70] sm:$0xff]
    %v1806 = vld [vmem:[%s411 + $0x78] sm:$0x11]
    %v1807 = vld [vmem:[%s411 + $0xa0] sm:$0xff]
    %v1808 = vld [vmem:[%s411 + $0xa8] sm:$0x11]
    %v1809 = vld [vmem:[%s411 + $0xb0] sm:$0xff]
    %v1810 = vld [vmem:[%s411 + $0xb8] sm:$0x11]
    %v1811 = vld [vmem:[%s411 + $0xc0] sm:$0xff]
    %v1812 = vld [vmem:[%s411 + $0xc8] sm:$0x11]
    %v1813 = vld [vmem:[%s411 + $0xd0] sm:$0xff]
    %v1814 = vld [vmem:[%s411 + $0xd8] sm:$0x11]
    %v1815 = vld [vmem:[%s411 + $0xe0] sm:$0xff]
    %v1816 = vld [vmem:[%s411 + $0xe8] sm:$0x11]
    %v1817 = vld [vmem:[%s411 + $0xf0] sm:$0xff]
    %v1818 = vld [vmem:[%s411 + $0xf8] sm:$0x11]
    %v1819 = vld [vmem:[%s411 + $0x100] sm:$0xff]
    %v1820 = vld [vmem:[%s411 + $0x108] sm:$0x11]
    %v1821 = vld [vmem:[%s411 + $0x110] sm:$0xff]
    %v1822 = vld [vmem:[%s411 + $0x118] sm:$0x11]
    %v1824 = vshrl.u32 %v1791, 16
    %v1826 = vrot.slane %v1824, 4
    %v1827 = vshll.u32 %v1791, 16
    %v1829 = vrot.slane %v1827, 5
    %v1830 = vor.u32 %v1826, %v1829
    %v1831 = vrot.slane %v1830, 4
    %v1833 = vshll.u32 %v1792, 16
    %v1835 = vrot.slane %v1833, 5
    %v1836 = vsel %vm483, %v1831, %v1835
    %v1838 = vshrl.u32 %v1793, 16
    %v1840 = vrot.slane %v1838, 4
    %v1841 = vshll.u32 %v1793, 16
    %v1843 = vrot.slane %v1841, 5
    %v1844 = vor.u32 %v1840, %v1843
    %v1845 = vrot.slane %v1844, 4
    %v1847 = vshll.u32 %v1794, 16
    %v1849 = vrot.slane %v1847, 5
    %v1850 = vsel %vm483, %v1845, %v1849
    %v1852 = vshrl.u32 %v1795, 16
    %v1854 = vrot.slane %v1852, 4
    %v1855 = vshll.u32 %v1795, 16
    %v1857 = vrot.slane %v1855, 5
    %v1858 = vor.u32 %v1854, %v1857
    %v1859 = vrot.slane %v1858, 4
    %v1861 = vshll.u32 %v1796, 16
    %v1863 = vrot.slane %v1861, 5
    %v1864 = vsel %vm483, %v1859, %v1863
    %v1866 = vshrl.u32 %v1797, 16
    %v1868 = vrot.slane %v1866, 4
    %v1869 = vshll.u32 %v1797, 16
    %v1871 = vrot.slane %v1869, 5
    %v1872 = vor.u32 %v1868, %v1871
    %v1873 = vrot.slane %v1872, 4
    %v1875 = vshll.u32 %v1798, 16
    %v1877 = vrot.slane %v1875, 5
    %v1878 = vsel %vm483, %v1873, %v1877
    %v1880 = vshrl.u32 %v1799, 16
    %v1882 = vrot.slane %v1880, 4
    %v1883 = vshll.u32 %v1799, 16
    %v1885 = vrot.slane %v1883, 5
    %v1886 = vor.u32 %v1882, %v1885
    %v1887 = vrot.slane %v1886, 4
    %v1889 = vshll.u32 %v1800, 16
    %v1891 = vrot.slane %v1889, 5
    %v1892 = vsel %vm483, %v1887, %v1891
    %v1894 = vshrl.u32 %v1801, 16
    %v1896 = vrot.slane %v1894, 4
    %v1897 = vshll.u32 %v1801, 16
    %v1899 = vrot.slane %v1897, 5
    %v1900 = vor.u32 %v1896, %v1899
    %v1901 = vrot.slane %v1900, 4
    %v1903 = vshll.u32 %v1802, 16
    %v1905 = vrot.slane %v1903, 5
    %v1906 = vsel %vm483, %v1901, %v1905
    %v1908 = vshrl.u32 %v1803, 16
    %v1910 = vrot.slane %v1908, 4
    %v1911 = vshll.u32 %v1803, 16
    %v1913 = vrot.slane %v1911, 5
    %v1914 = vor.u32 %v1910, %v1913
    %v1915 = vrot.slane %v1914, 4
    %v1917 = vshll.u32 %v1804, 16
    %v1919 = vrot.slane %v1917, 5
    %v1920 = vsel %vm483, %v1915, %v1919
    %v1922 = vshrl.u32 %v1805, 16
    %v1924 = vrot.slane %v1922, 4
    %v1925 = vshll.u32 %v1805, 16
    %v1927 = vrot.slane %v1925, 5
    %v1928 = vor.u32 %v1924, %v1927
    %v1929 = vrot.slane %v1928, 4
    %v1931 = vshll.u32 %v1806, 16
    %v1933 = vrot.slane %v1931, 5
    %v1934 = vsel %vm483, %v1929, %v1933
    %v1936 = vshrl.u32 %v1807, 16
    %v1938 = vrot.slane %v1936, 4
    %v1939 = vshll.u32 %v1807, 16
    %v1941 = vrot.slane %v1939, 5
    %v1942 = vor.u32 %v1938, %v1941
    %v1943 = vrot.slane %v1942, 4
    %v1945 = vshll.u32 %v1808, 16
    %v1947 = vrot.slane %v1945, 5
    %v1948 = vsel %vm483, %v1943, %v1947
    %v1950 = vshrl.u32 %v1809, 16
    %v1952 = vrot.slane %v1950, 4
    %v1953 = vshll.u32 %v1809, 16
    %v1955 = vrot.slane %v1953, 5
    %v1956 = vor.u32 %v1952, %v1955
    %v1957 = vrot.slane %v1956, 4
    %v1959 = vshll.u32 %v1810, 16
    %v1961 = vrot.slane %v1959, 5
    %v1962 = vsel %vm483, %v1957, %v1961
    %v1964 = vshrl.u32 %v1811, 16
    %v1966 = vrot.slane %v1964, 4
    %v1967 = vshll.u32 %v1811, 16
    %v1969 = vrot.slane %v1967, 5
    %v1970 = vor.u32 %v1966, %v1969
    %v1971 = vrot.slane %v1970, 4
    %v1973 = vshll.u32 %v1812, 16
    %v1975 = vrot.slane %v1973, 5
    %v1976 = vsel %vm483, %v1971, %v1975
    %v1978 = vshrl.u32 %v1813, 16
    %v1980 = vrot.slane %v1978, 4
    %v1981 = vshll.u32 %v1813, 16
    %v1983 = vrot.slane %v1981, 5
    %v1984 = vor.u32 %v1980, %v1983
    %v1985 = vrot.slane %v1984, 4
    %v1987 = vshll.u32 %v1814, 16
    %v1989 = vrot.slane %v1987, 5
    %v1990 = vsel %vm483, %v1985, %v1989
    %v1992 = vshrl.u32 %v1815, 16
    %v1994 = vrot.slane %v1992, 4
    %v1995 = vshll.u32 %v1815, 16
    %v1997 = vrot.slane %v1995, 5
    %v1998 = vor.u32 %v1994, %v1997
    %v1999 = vrot.slane %v1998, 4
    %v2001 = vshll.u32 %v1816, 16
    %v2003 = vrot.slane %v2001, 5
    %v2004 = vsel %vm483, %v1999, %v2003
    %v2006 = vshrl.u32 %v1817, 16
    %v2008 = vrot.slane %v2006, 4
    %v2009 = vshll.u32 %v1817, 16
    %v2011 = vrot.slane %v2009, 5
    %v2012 = vor.u32 %v2008, %v2011
    %v2013 = vrot.slane %v2012, 4
    %v2015 = vshll.u32 %v1818, 16
    %v2017 = vrot.slane %v2015, 5
    %v2018 = vsel %vm483, %v2013, %v2017
    %v2020 = vshrl.u32 %v1819, 16
    %v2022 = vrot.slane %v2020, 4
    %v2023 = vshll.u32 %v1819, 16
    %v2025 = vrot.slane %v2023, 5
    %v2026 = vor.u32 %v2022, %v2025
    %v2027 = vrot.slane %v2026, 4
    %v2029 = vshll.u32 %v1820, 16
    %v2031 = vrot.slane %v2029, 5
    %v2032 = vsel %vm483, %v2027, %v2031
    %v2034 = vshrl.u32 %v1821, 16
    %v2036 = vrot.slane %v2034, 4
    %v2037 = vshll.u32 %v1821, 16
    %v2039 = vrot.slane %v2037, 5
    %v2040 = vor.u32 %v2036, %v2039
    %v2041 = vrot.slane %v2040, 4
    %v2043 = vshll.u32 %v1822, 16
    %v2045 = vrot.slane %v2043, 5
    %v2046 = vsel %vm483, %v2041, %v2045
    %s2047 = scalar_lea.vmem [#allocation2], 768
    %v2048 = vld [vmem:[%s2047] sm:$0xff]
    %v2049 = vld [vmem:[%s2047 + $0x8] sm:$0xff]
    %v2050 = vld [vmem:[%s2047 + $0x10] sm:$0xff]
    %v2051 = vld [vmem:[%s2047 + $0x18] sm:$0xff]
    %v2052 = vld [vmem:[%s2047 + $0x20] sm:$0xff]
    %v2053 = vld [vmem:[%s2047 + $0x28] sm:$0xff]
    %v2054 = vld [vmem:[%s2047 + $0x30] sm:$0xff]
    %v2055 = vld [vmem:[%s2047 + $0x38] sm:$0xff]
    %v2056 = vld [vmem:[%s2047 + $0x40] sm:$0xff]
    %v2057 = vld [vmem:[%s2047 + $0x48] sm:$0xff]
    %v2058 = vld [vmem:[%s2047 + $0x50] sm:$0xff]
    %v2059 = vld [vmem:[%s2047 + $0x58] sm:$0xff]
    %v2060 = vld [vmem:[%s2047 + $0x60] sm:$0xff]
    %v2061 = vld [vmem:[%s2047 + $0x68] sm:$0xff]
    %v2062 = vld [vmem:[%s2047 + $0x70] sm:$0xff]
    %v2063 = vld [vmem:[%s2047 + $0x78] sm:$0xff]
    %v2064 = vld [vmem:[%s2047 + $0x80] sm:$0xff]
    %v2065 = vld [vmem:[%s2047 + $0x88] sm:$0xff]
    %v2066 = vld [vmem:[%s2047 + $0x90] sm:$0xff]
    %v2067 = vld [vmem:[%s2047 + $0x98] sm:$0xff]
    %v2068 = vld [vmem:[%s2047 + $0xa0] sm:$0xff]
    %v2069 = vld [vmem:[%s2047 + $0xa8] sm:$0xff]
    %v2070 = vld [vmem:[%s2047 + $0xb0] sm:$0xff]
    %v2071 = vld [vmem:[%s2047 + $0xb8] sm:$0xff]
    %v2072 = vld [vmem:[%s2047 + $0xc0] sm:$0xff]
    %v2073 = vld [vmem:[%s2047 + $0xc8] sm:$0xff]
    %v2074 = vld [vmem:[%s2047 + $0xd0] sm:$0xff]
    %v2075 = vld [vmem:[%s2047 + $0xd8] sm:$0xff]
    %v2076 = vld [vmem:[%s2047 + $0xe0] sm:$0xff]
    %v2077 = vld [vmem:[%s2047 + $0xe8] sm:$0xff]
    %v2078 = vld [vmem:[%s2047 + $0xf0] sm:$0xff]
    %v2079 = vld [vmem:[%s2047 + $0xf8] sm:$0xff]
    %v2080 = vunpack.c.l.b16 %v1836
    %v2081 = vunpack.c.h.b16 %v1836
    %v2082 = vunpack.c.l.b16 %v1850
    %v2083 = vunpack.c.h.b16 %v1850
    %v2084 = vunpack.c.l.b16 %v1864
    %v2085 = vunpack.c.h.b16 %v1864
    %v2086 = vunpack.c.l.b16 %v1878
    %v2087 = vunpack.c.h.b16 %v1878
    %v2088 = vunpack.c.l.b16 %v1892
    %v2089 = vunpack.c.h.b16 %v1892
    %v2090 = vunpack.c.l.b16 %v1906
    %v2091 = vunpack.c.h.b16 %v1906
    %v2092 = vunpack.c.l.b16 %v1920
    %v2093 = vunpack.c.h.b16 %v1920
    %v2094 = vunpack.c.l.b16 %v1934
    %v2095 = vunpack.c.h.b16 %v1934
    %v2096 = vunpack.c.l.b16 %v1948
    %v2097 = vunpack.c.h.b16 %v1948
    %v2098 = vunpack.c.l.b16 %v1962
    %v2099 = vunpack.c.h.b16 %v1962
    %v2100 = vunpack.c.l.b16 %v1976
    %v2101 = vunpack.c.h.b16 %v1976
    %v2102 = vunpack.c.l.b16 %v1990
    %v2103 = vunpack.c.h.b16 %v1990
    %v2104 = vunpack.c.l.b16 %v2004
    %v2105 = vunpack.c.h.b16 %v2004
    %v2106 = vunpack.c.l.b16 %v2018
    %v2107 = vunpack.c.h.b16 %v2018
    %v2108 = vunpack.c.l.b16 %v2032
    %v2109 = vunpack.c.h.b16 %v2032
    %v2110 = vunpack.c.l.b16 %v2046
    %v2111 = vunpack.c.h.b16 %v2046
    %v2112 = vpack.c.b16 %v2082, %v2080
    %v2113 = vpack.c.b16 %v2083, %v2081
    %v2114 = vpack.c.b16 %v2086, %v2084
    %v2115 = vpack.c.b16 %v2087, %v2085
    %v2116 = vpack.c.b16 %v2090, %v2088
    %v2117 = vpack.c.b16 %v2091, %v2089
    %v2118 = vpack.c.b16 %v2094, %v2092
    %v2119 = vpack.c.b16 %v2095, %v2093
    %v2120 = vpack.c.b16 %v2098, %v2096
    %v2121 = vpack.c.b16 %v2099, %v2097
    %v2122 = vpack.c.b16 %v2102, %v2100
    %v2123 = vpack.c.b16 %v2103, %v2101
    %v2124 = vpack.c.b16 %v2106, %v2104
    %v2125 = vpack.c.b16 %v2107, %v2105
    %v2126 = vpack.c.b16 %v2110, %v2108
    %v2127 = vpack.c.b16 %v2111, %v2109
    %2144 = vmatprep.subr.bf16.mxu0 %v2049
    %2145 = vmatpush1.bf16.msra.mxu0 %v2048
    %2146 = vmatprep.subr.bf16.mxu0 %v2051
    %2147 = vmatpush1.bf16.msra.mxu0 %v2050
    %2148 = vmatprep.subr.bf16.mxu0 %v2053
    %2149 = vmatpush1.bf16.msra.mxu0 %v2052
    %2150 = vmatprep.subr.bf16.mxu0 %v2055
    %2151 = vmatpush1.bf16.msra.mxu0 %v2054
    %2152 = vmatprep.subr.bf16.mxu0 %v2057
    %2153 = vmatpush1.bf16.msra.mxu0 %v2056
    %2154 = vmatprep.subr.bf16.mxu0 %v2059
    %2155 = vmatpush1.bf16.msra.mxu0 %v2058
    %2156 = vmatprep.subr.bf16.mxu0 %v2061
    %2157 = vmatpush1.bf16.msra.mxu0 %v2060
    %2158 = vmatprep.subr.bf16.mxu0 %v2063
    %2159 = vmatpush1.bf16.msra.mxu0 %v2062
    %2160 = vmatprep.subr.bf16.mxu0 %v2065
    %2161 = vmatpush1.bf16.msra.mxu0 %v2064
    %2162 = vmatprep.subr.bf16.mxu0 %v2067
    %2163 = vmatpush1.bf16.msra.mxu0 %v2066
    %2164 = vmatprep.subr.bf16.mxu0 %v2069
    %2165 = vmatpush1.bf16.msra.mxu0 %v2068
    %2166 = vmatprep.subr.bf16.mxu0 %v2071
    %2167 = vmatpush1.bf16.msra.mxu0 %v2070
    %2168 = vmatprep.subr.bf16.mxu0 %v2073
    %2169 = vmatpush1.bf16.msra.mxu0 %v2072
    %2170 = vmatprep.subr.bf16.mxu0 %v2075
    %2171 = vmatpush1.bf16.msra.mxu0 %v2074
    %2172 = vmatprep.subr.bf16.mxu0 %v2077
    %2173 = vmatpush1.bf16.msra.mxu0 %v2076
    %2174 = vmatprep.subr.bf16.mxu0 %v2079
    %2175 = vmatpush1.bf16.msra.mxu0 %v2078
    %2176 = vmatprep.mubr.bf16.mxu0 %v2113
    %2177 = vmatmul.mubr.bf16.gmra.mrb[0].mxu0 %v2112
    %v2178 = vpop.f32.mrb[0].mxu0
    %v2179 = vadd.f32 0.0, %v2178
    %v2180 = vpop.f32.mrb[0].mxu0
    %v2181 = vadd.f32 0.0, %v2180
    %v2182 = vpop.f32.mrb[0].mxu0
    %v2183 = vadd.f32 0.0, %v2182
    %v2184 = vpop.f32.mrb[0].mxu0
    %v2185 = vadd.f32 0.0, %v2184
    %2186 = vmatprep.mubr.bf16.mxu0 %v2115
    %2187 = vmatmul.mubr.bf16.gmra.mrb[0].mxu0 %v2114
    %v2188 = vpop.f32.mrb[0].mxu0
    %v2189 = vadd.f32 0.0, %v2188
    %v2190 = vpop.f32.mrb[0].mxu0
    %v2191 = vadd.f32 0.0, %v2190
    %v2192 = vpop.f32.mrb[0].mxu0
    %v2193 = vadd.f32 0.0, %v2192
    %v2194 = vpop.f32.mrb[0].mxu0
    %v2195 = vadd.f32 0.0, %v2194
    %2196 = vmatprep.mubr.bf16.mxu0 %v2117
    %2197 = vmatmul.mubr.bf16.gmra.mrb[0].mxu0 %v2116
    %v2198 = vpop.f32.mrb[0].mxu0
    %v2199 = vadd.f32 0.0, %v2198
    %v2200 = vpop.f32.mrb[0].mxu0
    %v2201 = vadd.f32 0.0, %v2200
    %v2202 = vpop.f32.mrb[0].mxu0
    %v2203 = vadd.f32 0.0, %v2202
    %v2204 = vpop.f32.mrb[0].mxu0
    %v2205 = vadd.f32 0.0, %v2204
    %2206 = vmatprep.mubr.bf16.mxu0 %v2119
    %2207 = vmatmul.mubr.bf16.gmra.mrb[0].mxu0 %v2118
    %v2208 = vpop.f32.mrb[0].mxu0
    %v2209 = vadd.f32 0.0, %v2208
    %v2210 = vpop.f32.mrb[0].mxu0
    %v2211 = vadd.f32 0.0, %v2210
    %v2212 = vpop.f32.mrb[0].mxu0
    %v2213 = vadd.f32 0.0, %v2212
    %v2214 = vpop.f32.mrb[0].mxu0
    %v2215 = vadd.f32 0.0, %v2214
    %2216 = vmatprep.mubr.bf16.mxu0 %v2121
    %2217 = vmatmul.mubr.bf16.gmra.mrb[0].mxu0 %v2120
    %v2218 = vpop.f32.mrb[0].mxu0
    %v2219 = vadd.f32 0.0, %v2218
    %v2220 = vpop.f32.mrb[0].mxu0
    %v2221 = vadd.f32 0.0, %v2220
    %v2222 = vpop.f32.mrb[0].mxu0
    %v2223 = vadd.f32 0.0, %v2222
    %v2224 = vpop.f32.mrb[0].mxu0
    %v2225 = vadd.f32 0.0, %v2224
    %2226 = vmatprep.mubr.bf16.mxu0 %v2123
    %2227 = vmatmul.mubr.bf16.gmra.mrb[0].mxu0 %v2122
    %v2228 = vpop.f32.mrb[0].mxu0
    %v2229 = vadd.f32 0.0, %v2228
    %v2230 = vpop.f32.mrb[0].mxu0
    %v2231 = vadd.f32 0.0, %v2230
    %v2232 = vpop.f32.mrb[0].mxu0
    %v2233 = vadd.f32 0.0, %v2232
    %v2234 = vpop.f32.mrb[0].mxu0
    %v2235 = vadd.f32 0.0, %v2234
    %2236 = vmatprep.mubr.bf16.mxu0 %v2125
    %2237 = vmatmul.mubr.bf16.gmra.mrb[0].mxu0 %v2124
    %v2238 = vpop.f32.mrb[0].mxu0
    %v2239 = vadd.f32 0.0, %v2238
    %v2240 = vpop.f32.mrb[0].mxu0
    %v2241 = vadd.f32 0.0, %v2240
    %v2242 = vpop.f32.mrb[0].mxu0
    %v2243 = vadd.f32 0.0, %v2242
    %v2244 = vpop.f32.mrb[0].mxu0
    %v2245 = vadd.f32 0.0, %v2244
    %2246 = vmatprep.mubr.bf16.mxu0 %v2127
    %2247 = vmatmul.mubr.bf16.gmra.mrb[0].mxu0 %v2126
    %v2248 = vpop.f32.mrb[0].mxu0
    %v2249 = vadd.f32 0.0, %v2248
    %v2250 = vpop.f32.mrb[0].mxu0
    %v2251 = vadd.f32 0.0, %v2250
    %v2252 = vpop.f32.mrb[0].mxu0
    %v2253 = vadd.f32 0.0, %v2252
    %v2254 = vpop.f32.mrb[0].mxu0
    %v2255 = vadd.f32 0.0, %v2254
    %2256 = vdwg.mxu0
    %v2257 = vadd.f32 %v1759, %v2179
    %v2258 = vadd.f32 %v1760, %v2181
    %v2259 = vadd.f32 %v1761, %v2183
    %v2260 = vadd.f32 %v1762, %v2185
    %v2261 = vadd.f32 %v1763, %v2189
    %v2262 = vadd.f32 %v1764, %v2191
    %v2263 = vadd.f32 %v1765, %v2193
    %v2264 = vadd.f32 %v1766, %v2195
    %v2265 = vadd.f32 %v1767, %v2199
    %v2266 = vadd.f32 %v1768, %v2201
    %v2267 = vadd.f32 %v1769, %v2203
    %v2268 = vadd.f32 %v1770, %v2205
    %v2269 = vadd.f32 %v1771, %v2209
    %v2270 = vadd.f32 %v1772, %v2211
    %v2271 = vadd.f32 %v1773, %v2213
    %v2272 = vadd.f32 %v1774, %v2215
    %v2273 = vadd.f32 %v1775, %v2219
    %v2274 = vadd.f32 %v1776, %v2221
    %v2275 = vadd.f32 %v1777, %v2223
    %v2276 = vadd.f32 %v1778, %v2225
    %v2277 = vadd.f32 %v1779, %v2229
    %v2278 = vadd.f32 %v1780, %v2231
    %v2279 = vadd.f32 %v1781, %v2233
    %v2280 = vadd.f32 %v1782, %v2235
    %v2281 = vadd.f32 %v1783, %v2239
    %v2282 = vadd.f32 %v1784, %v2241
    %v2283 = vadd.f32 %v1785, %v2243
    %v2284 = vadd.f32 %v1786, %v2245
    %v2285 = vadd.f32 %v1787, %v2249
    %v2286 = vadd.f32 %v1788, %v2251
    %v2287 = vadd.f32 %v1789, %v2253
    %v2288 = vadd.f32 %v1790, %v2255
    %v2289 = vld [vmem:[%s411] sm:$0xee]
    %v2290 = vld [vmem:[%s411 + $0x10] sm:$0xee]
    %v2291 = vld [vmem:[%s411 + $0x20] sm:$0xee]
    %v2292 = vld [vmem:[%s411 + $0x30] sm:$0xee]
    %v2293 = vld [vmem:[%s411 + $0x40] sm:$0xee]
    %v2294 = vld [vmem:[%s411 + $0x50] sm:$0xee]
    %v2295 = vld [vmem:[%s411 + $0x60] sm:$0xee]
    %v2296 = vld [vmem:[%s411 + $0x70] sm:$0xee]
    %v2297 = vld [vmem:[%s411 + $0xa0] sm:$0xee]
    %v2298 = vld [vmem:[%s411 + $0xb0] sm:$0xee]
    %v2299 = vld [vmem:[%s411 + $0xc0] sm:$0xee]
    %v2300 = vld [vmem:[%s411 + $0xd0] sm:$0xee]
    %v2301 = vld [vmem:[%s411 + $0xe0] sm:$0xee]
    %v2302 = vld [vmem:[%s411 + $0xf0] sm:$0xee]
    %v2303 = vld [vmem:[%s411 + $0x100] sm:$0xee]
    %v2304 = vld [vmem:[%s411 + $0x110] sm:$0xee]
    %v2337 = vrot.slane %v2289, 5
    %v2338 = vrot.slane %v2337, 4
    %v2339 = vrot.slane %v1792, 5
    %v2340 = vsel %vm790, %v2338, %v2339
    %v2341 = vrot.slane %v2290, 5
    %v2342 = vrot.slane %v2341, 4
    %v2343 = vrot.slane %v1794, 5
    %v2344 = vsel %vm790, %v2342, %v2343
    %v2345 = vrot.slane %v2291, 5
    %v2346 = vrot.slane %v2345, 4
    %v2347 = vrot.slane %v1796, 5
    %v2348 = vsel %vm790, %v2346, %v2347
    %v2349 = vrot.slane %v2292, 5
    %v2350 = vrot.slane %v2349, 4
    %v2351 = vrot.slane %v1798, 5
    %v2352 = vsel %vm790, %v2350, %v2351
    %v2353 = vrot.slane %v2293, 5
    %v2354 = vrot.slane %v2353, 4
    %v2355 = vrot.slane %v1800, 5
    %v2356 = vsel %vm790, %v2354, %v2355
    %v2357 = vrot.slane %v2294, 5
    %v2358 = vrot.slane %v2357, 4
    %v2359 = vrot.slane %v1802, 5
    %v2360 = vsel %vm790, %v2358, %v2359
    %v2361 = vrot.slane %v2295, 5
    %v2362 = vrot.slane %v2361, 4
    %v2363 = vrot.slane %v1804, 5
    %v2364 = vsel %vm790, %v2362, %v2363
    %v2365 = vrot.slane %v2296, 5
    %v2366 = vrot.slane %v2365, 4
    %v2367 = vrot.slane %v1806, 5
    %v2368 = vsel %vm790, %v2366, %v2367
    %v2369 = vrot.slane %v2297, 5
    %v2370 = vrot.slane %v2369, 4
    %v2371 = vrot.slane %v1808, 5
    %v2372 = vsel %vm790, %v2370, %v2371
    %v2373 = vrot.slane %v2298, 5
    %v2374 = vrot.slane %v2373, 4
    %v2375 = vrot.slane %v1810, 5
    %v2376 = vsel %vm790, %v2374, %v2375
    %v2377 = vrot.slane %v2299, 5
    %v2378 = vrot.slane %v2377, 4
    %v2379 = vrot.slane %v1812, 5
    %v2380 = vsel %vm790, %v2378, %v2379
    %v2381 = vrot.slane %v2300, 5
    %v2382 = vrot.slane %v2381, 4
    %v2383 = vrot.slane %v1814, 5
    %v2384 = vsel %vm790, %v2382, %v2383
    %v2385 = vrot.slane %v2301, 5
    %v2386 = vrot.slane %v2385, 4
    %v2387 = vrot.slane %v1816, 5
    %v2388 = vsel %vm790, %v2386, %v2387
    %v2389 = vrot.slane %v2302, 5
    %v2390 = vrot.slane %v2389, 4
    %v2391 = vrot.slane %v1818, 5
    %v2392 = vsel %vm790, %v2390, %v2391
    %v2393 = vrot.slane %v2303, 5
    %v2394 = vrot.slane %v2393, 4
    %v2395 = vrot.slane %v1820, 5
    %v2396 = vsel %vm790, %v2394, %v2395
    %v2397 = vrot.slane %v2304, 5
    %v2398 = vrot.slane %v2397, 4
    %v2399 = vrot.slane %v1822, 5
    %v2400 = vsel %vm790, %v2398, %v2399
    %s2401 = scalar_lea.vmem [#allocation2], 1024
    %v2402 = vld [vmem:[%s2401] sm:$0xff]
    %v2403 = vld [vmem:[%s2401 + $0x8] sm:$0xff]
    %v2404 = vld [vmem:[%s2401 + $0x10] sm:$0xff]
    %v2405 = vld [vmem:[%s2401 + $0x18] sm:$0xff]
    %v2406 = vld [vmem:[%s2401 + $0x20] sm:$0xff]
    %v2407 = vld [vmem:[%s2401 + $0x28] sm:$0xff]
    %v2408 = vld [vmem:[%s2401 + $0x30] sm:$0xff]
    %v2409 = vld [vmem:[%s2401 + $0x38] sm:$0xff]
    %v2410 = vld [vmem:[%s2401 + $0x40] sm:$0xff]
    %v2411 = vld [vmem:[%s2401 + $0x48] sm:$0xff]
    %v2412 = vld [vmem:[%s2401 + $0x50] sm:$0xff]
    %v2413 = vld [vmem:[%s2401 + $0x58] sm:$0xff]
    %v2414 = vld [vmem:[%s2401 + $0x60] sm:$0xff]
    %v2415 = vld [vmem:[%s2401 + $0x68] sm:$0xff]
    %v2416 = vld [vmem:[%s2401 + $0x70] sm:$0xff]
    %v2417 = vld [vmem:[%s2401 + $0x78] sm:$0xff]
    %v2418 = vld [vmem:[%s2401 + $0x80] sm:$0xff]
    %v2419 = vld [vmem:[%s2401 + $0x88] sm:$0xff]
    %v2420 = vld [vmem:[%s2401 + $0x90] sm:$0xff]
    %v2421 = vld [vmem:[%s2401 + $0x98] sm:$0xff]
    %v2422 = vld [vmem:[%s2401 + $0xa0] sm:$0xff]
    %v2423 = vld [vmem:[%s2401 + $0xa8] sm:$0xff]
    %v2424 = vld [vmem:[%s2401 + $0xb0] sm:$0xff]
    %v2425 = vld [vmem:[%s2401 + $0xb8] sm:$0xff]
    %v2426 = vld [vmem:[%s2401 + $0xc0] sm:$0xff]
    %v2427 = vld [vmem:[%s2401 + $0xc8] sm:$0xff]
    %v2428 = vld [vmem:[%s2401 + $0xd0] sm:$0xff]
    %v2429 = vld [vmem:[%s2401 + $0xd8] sm:$0xff]
    %v2430 = vld [vmem:[%s2401 + $0xe0] sm:$0xff]
    %v2431 = vld [vmem:[%s2401 + $0xe8] sm:$0xff]
    %v2432 = vld [vmem:[%s2401 + $0xf0] sm:$0xff]
    %v2433 = vld [vmem:[%s2401 + $0xf8] sm:$0xff]
    %v2434 = vunpack.c.l.b16 %v2340
    %v2435 = vunpack.c.h.b16 %v2340
    %v2436 = vunpack.c.l.b16 %v2344
    %v2437 = vunpack.c.h.b16 %v2344
    %v2438 = vunpack.c.l.b16 %v2348
    %v2439 = vunpack.c.h.b16 %v2348
    %v2440 = vunpack.c.l.b16 %v2352
    %v2441 = vunpack.c.h.b16 %v2352
    %v2442 = vunpack.c.l.b16 %v2356
    %v2443 = vunpack.c.h.b16 %v2356
    %v2444 = vunpack.c.l.b16 %v2360
    %v2445 = vunpack.c.h.b16 %v2360
    %v2446 = vunpack.c.l.b16 %v2364
    %v2447 = vunpack.c.h.b16 %v2364
    %v2448 = vunpack.c.l.b16 %v2368
    %v2449 = vunpack.c.h.b16 %v2368
    %v2450 = vunpack.c.l.b16 %v2372
    %v2451 = vunpack.c.h.b16 %v2372
    %v2452 = vunpack.c.l.b16 %v2376
    %v2453 = vunpack.c.h.b16 %v2376
    %v2454 = vunpack.c.l.b16 %v2380
    %v2455 = vunpack.c.h.b16 %v2380
    %v2456 = vunpack.c.l.b16 %v2384
    %v2457 = vunpack.c.h.b16 %v2384
    %v2458 = vunpack.c.l.b16 %v2388
    %v2459 = vunpack.c.h.b16 %v2388
    %v2460 = vunpack.c.l.b16 %v2392
    %v2461 = vunpack.c.h.b16 %v2392
    %v2462 = vunpack.c.l.b16 %v2396
    %v2463 = vunpack.c.h.b16 %v2396
    %v2464 = vunpack.c.l.b16 %v2400
    %v2465 = vunpack.c.h.b16 %v2400
    %v2466 = vpack.c.b16 %v2436, %v2434
    %v2467 = vpack.c.b16 %v2437, %v2435
    %v2468 = vpack.c.b16 %v2440, %v2438
    %v2469 = vpack.c.b16 %v2441, %v2439
    %v2470 = vpack.c.b16 %v2444, %v2442
    %v2471 = vpack.c.b16 %v2445, %v2443
    %v2472 = vpack.c.b16 %v2448, %v2446
    %v2473 = vpack.c.b16 %v2449, %v2447
    %v2474 = vpack.c.b16 %v2452, %v2450
    %v2475 = vpack.c.b16 %v2453, %v2451
    %v2476 = vpack.c.b16 %v2456, %v2454
    %v2477 = vpack.c.b16 %v2457, %v2455
    %v2478 = vpack.c.b16 %v2460, %v2458
    %v2479 = vpack.c.b16 %v2461, %v2459
    %v2480 = vpack.c.b16 %v2464, %v2462
    %v2481 = vpack.c.b16 %v2465, %v2463
    %2498 = vmatprep.subr.bf16.mxu0 %v2403
    %2499 = vmatpush1.bf16.msra.mxu0 %v2402
    %2500 = vmatprep.subr.bf16.mxu0 %v2405
    %2501 = vmatpush1.bf16.msra.mxu0 %v2404
    %2502 = vmatprep.subr.bf16.mxu0 %v2407
    %2503 = vmatpush1.bf16.msra.mxu0 %v2406
    %2504 = vmatprep.subr.bf16.mxu0 %v2409
    %2505 = vmatpush1.bf16.msra.mxu0 %v2408
    %2506 = vmatprep.subr.bf16.mxu0 %v2411
    %2507 = vmatpush1.bf16.msra.mxu0 %v2410
    %2508 = vmatprep.subr.bf16.mxu0 %v2413
    %2509 = vmatpush1.bf16.msra.mxu0 %v2412
    %2510 = vmatprep.subr.bf16.mxu0 %v2415
    %2511 = vmatpush1.bf16.msra.mxu0 %v2414
    %2512 = vmatprep.subr.bf16.mxu0 %v2417
    %2513 = vmatpush1.bf16.msra.mxu0 %v2416
    %2514 = vmatprep.subr.bf16.mxu0 %v2419
    %2515 = vmatpush1.bf16.msra.mxu0 %v2418
    %2516 = vmatprep.subr.bf16.mxu0 %v2421
    %2517 = vmatpush1.bf16.msra.mxu0 %v2420
    %2518 = vmatprep.subr.bf16.mxu0 %v2423
    %2519 = vmatpush1.bf16.msra.mxu0 %v2422
    %2520 = vmatprep.subr.bf16.mxu0 %v2425
    %2521 = vmatpush1.bf16.msra.mxu0 %v2424
    %2522 = vmatprep.subr.bf16.mxu0 %v2427
    %2523 = vmatpush1.bf16.msra.mxu0 %v2426
    %2524 = vmatprep.subr.bf16.mxu0 %v2429
    %2525 = vmatpush1.bf16.msra.mxu0 %v2428
    %2526 = vmatprep.subr.bf16.mxu0 %v2431
    %2527 = vmatpush1.bf16.msra.mxu0 %v2430
    %2528 = vmatprep.subr.bf16.mxu0 %v2433
    %2529 = vmatpush1.bf16.msra.mxu0 %v2432
    %2530 = vmatprep.mubr.bf16.mxu0 %v2467
    %2531 = vmatmul.mubr.bf16.gmra.mrb[0].mxu0 %v2466
    %v2532 = vpop.f32.mrb[0].mxu0
    %v2533 = vadd.f32 0.0, %v2532
    %v2534 = vpop.f32.mrb[0].mxu0
    %v2535 = vadd.f32 0.0, %v2534
    %v2536 = vpop.f32.mrb[0].mxu0
    %v2537 = vadd.f32 0.0, %v2536
    %v2538 = vpop.f32.mrb[0].mxu0
    %v2539 = vadd.f32 0.0, %v2538
    %2540 = vmatprep.mubr.bf16.mxu0 %v2469
    %2541 = vmatmul.mubr.bf16.gmra.mrb[0].mxu0 %v2468
    %v2542 = vpop.f32.mrb[0].mxu0
    %v2543 = vadd.f32 0.0, %v2542
    %v2544 = vpop.f32.mrb[0].mxu0
    %v2545 = vadd.f32 0.0, %v2544
    %v2546 = vpop.f32.mrb[0].mxu0
    %v2547 = vadd.f32 0.0, %v2546
    %v2548 = vpop.f32.mrb[0].mxu0
    %v2549 = vadd.f32 0.0, %v2548
    %2550 = vmatprep.mubr.bf16.mxu0 %v2471
    %2551 = vmatmul.mubr.bf16.gmra.mrb[0].mxu0 %v2470
    %v2552 = vpop.f32.mrb[0].mxu0
    %v2553 = vadd.f32 0.0, %v2552
    %v2554 = vpop.f32.mrb[0].mxu0
    %v2555 = vadd.f32 0.0, %v2554
    %v2556 = vpop.f32.mrb[0].mxu0
    %v2557 = vadd.f32 0.0, %v2556
    %v2558 = vpop.f32.mrb[0].mxu0
    %v2559 = vadd.f32 0.0, %v2558
    %2560 = vmatprep.mubr.bf16.mxu0 %v2473
    %2561 = vmatmul.mubr.bf16.gmra.mrb[0].mxu0 %v2472
    %v2562 = vpop.f32.mrb[0].mxu0
    %v2563 = vadd.f32 0.0, %v2562
    %v2564 = vpop.f32.mrb[0].mxu0
    %v2565 = vadd.f32 0.0, %v2564
    %v2566 = vpop.f32.mrb[0].mxu0
    %v2567 = vadd.f32 0.0, %v2566
    %v2568 = vpop.f32.mrb[0].mxu0
    %v2569 = vadd.f32 0.0, %v2568
    %2570 = vmatprep.mubr.bf16.mxu0 %v2475
    %2571 = vmatmul.mubr.bf16.gmra.mrb[0].mxu0 %v2474
    %v2572 = vpop.f32.mrb[0].mxu0
    %v2573 = vadd.f32 0.0, %v2572
    %v2574 = vpop.f32.mrb[0].mxu0
    %v2575 = vadd.f32 0.0, %v2574
    %v2576 = vpop.f32.mrb[0].mxu0
    %v2577 = vadd.f32 0.0, %v2576
    %v2578 = vpop.f32.mrb[0].mxu0
    %v2579 = vadd.f32 0.0, %v2578
    %2580 = vmatprep.mubr.bf16.mxu0 %v2477
    %2581 = vmatmul.mubr.bf16.gmra.mrb[0].mxu0 %v2476
    %v2582 = vpop.f32.mrb[0].mxu0
    %v2583 = vadd.f32 0.0, %v2582
    %v2584 = vpop.f32.mrb[0].mxu0
    %v2585 = vadd.f32 0.0, %v2584
    %v2586 = vpop.f32.mrb[0].mxu0
    %v2587 = vadd.f32 0.0, %v2586
    %v2588 = vpop.f32.mrb[0].mxu0
    %v2589 = vadd.f32 0.0, %v2588
    %2590 = vmatprep.mubr.bf16.mxu0 %v2479
    %2591 = vmatmul.mubr.bf16.gmra.mrb[0].mxu0 %v2478
    %v2592 = vpop.f32.mrb[0].mxu0
    %v2593 = vadd.f32 0.0, %v2592
    %v2594 = vpop.f32.mrb[0].mxu0
    %v2595 = vadd.f32 0.0, %v2594
    %v2596 = vpop.f32.mrb[0].mxu0
    %v2597 = vadd.f32 0.0, %v2596
    %v2598 = vpop.f32.mrb[0].mxu0
    %v2599 = vadd.f32 0.0, %v2598
    %2600 = vmatprep.mubr.bf16.mxu0 %v2481
    %2601 = vmatmul.mubr.bf16.gmra.mrb[0].mxu0 %v2480
    %v2602 = vpop.f32.mrb[0].mxu0
    %v2603 = vadd.f32 0.0, %v2602
    %v2604 = vpop.f32.mrb[0].mxu0
    %v2605 = vadd.f32 0.0, %v2604
    %v2606 = vpop.f32.mrb[0].mxu0
    %v2607 = vadd.f32 0.0, %v2606
    %v2608 = vpop.f32.mrb[0].mxu0
    %v2609 = vadd.f32 0.0, %v2608
    %2610 = vdwg.mxu0
    %v2611 = vadd.f32 %v2257, %v2533
    %v2612 = vadd.f32 %v2258, %v2535
    %v2613 = vadd.f32 %v2259, %v2537
    %v2614 = vadd.f32 %v2260, %v2539
    %v2615 = vadd.f32 %v2261, %v2543
    %v2616 = vadd.f32 %v2262, %v2545
    %v2617 = vadd.f32 %v2263, %v2547
    %v2618 = vadd.f32 %v2264, %v2549
    %v2619 = vadd.f32 %v2265, %v2553
    %v2620 = vadd.f32 %v2266, %v2555
    %v2621 = vadd.f32 %v2267, %v2557
    %v2622 = vadd.f32 %v2268, %v2559
    %v2623 = vadd.f32 %v2269, %v2563
    %v2624 = vadd.f32 %v2270, %v2565
    %v2625 = vadd.f32 %v2271, %v2567
    %v2626 = vadd.f32 %v2272, %v2569
    %v2627 = vadd.f32 %v2273, %v2573
    %v2628 = vadd.f32 %v2274, %v2575
    %v2629 = vadd.f32 %v2275, %v2577
    %v2630 = vadd.f32 %v2276, %v2579
    %v2631 = vadd.f32 %v2277, %v2583
    %v2632 = vadd.f32 %v2278, %v2585
    %v2633 = vadd.f32 %v2279, %v2587
    %v2634 = vadd.f32 %v2280, %v2589
    %v2635 = vadd.f32 %v2281, %v2593
    %v2636 = vadd.f32 %v2282, %v2595
    %v2637 = vadd.f32 %v2283, %v2597
    %v2638 = vadd.f32 %v2284, %v2599
    %v2639 = vadd.f32 %v2285, %v2603
    %v2640 = vadd.f32 %v2286, %v2605
    %v2641 = vadd.f32 %v2287, %v2607
    %v2642 = vadd.f32 %v2288, %v2609
    %v2643 = vld [vmem:[%s411 + $0x8] sm:$0x33]
    %v2644 = vld [vmem:[%s411 + $0x18] sm:$0x33]
    %v2645 = vld [vmem:[%s411 + $0x28] sm:$0x33]
    %v2646 = vld [vmem:[%s411 + $0x38] sm:$0x33]
    %v2647 = vld [vmem:[%s411 + $0x48] sm:$0x33]
    %v2648 = vld [vmem:[%s411 + $0x58] sm:$0x33]
    %v2649 = vld [vmem:[%s411 + $0x68] sm:$0x33]
    %v2650 = vld [vmem:[%s411 + $0x78] sm:$0x33]
    %v2651 = vld [vmem:[%s411 + $0xa8] sm:$0x33]
    %v2652 = vld [vmem:[%s411 + $0xb8] sm:$0x33]
    %v2653 = vld [vmem:[%s411 + $0xc8] sm:$0x33]
    %v2654 = vld [vmem:[%s411 + $0xd8] sm:$0x33]
    %v2655 = vld [vmem:[%s411 + $0xe8] sm:$0x33]
    %v2656 = vld [vmem:[%s411 + $0xf8] sm:$0x33]
    %v2657 = vld [vmem:[%s411 + $0x108] sm:$0x33]
    %v2658 = vld [vmem:[%s411 + $0x118] sm:$0x33]
    %v2660 = vshrl.u32 %v2289, 16
    %v2662 = vrot.slane %v2660, 5
    %v2663 = vshll.u32 %v2289, 16
    %v2665 = vrot.slane %v2663, 6
    %v2666 = vor.u32 %v2662, %v2665
    %v2667 = vrot.slane %v2666, 4
    %v2669 = vshrl.u32 %v2643, 16
    %v2671 = vrot.slane %v2669, 5
    %v2672 = vshll.u32 %v2643, 16
    %v2674 = vrot.slane %v2672, 6
    %v2675 = vor.u32 %v2671, %v2674
    %v2676 = vsel %vm1260, %v2667, %v2675
    %v2678 = vshrl.u32 %v2290, 16
    %v2680 = vrot.slane %v2678, 5
    %v2681 = vshll.u32 %v2290, 16
    %v2683 = vrot.slane %v2681, 6
    %v2684 = vor.u32 %v2680, %v2683
    %v2685 = vrot.slane %v2684, 4
    %v2687 = vshrl.u32 %v2644, 16
    %v2689 = vrot.slane %v2687, 5
    %v2690 = vshll.u32 %v2644, 16
    %v2692 = vrot.slane %v2690, 6
    %v2693 = vor.u32 %v2689, %v2692
    %v2694 = vsel %vm1260, %v2685, %v2693
    %v2696 = vshrl.u32 %v2291, 16
    %v2698 = vrot.slane %v2696, 5
    %v2699 = vshll.u32 %v2291, 16
    %v2701 = vrot.slane %v2699, 6
    %v2702 = vor.u32 %v2698, %v2701
    %v2703 = vrot.slane %v2702, 4
    %v2705 = vshrl.u32 %v2645, 16
    %v2707 = vrot.slane %v2705, 5
    %v2708 = vshll.u32 %v2645, 16
    %v2710 = vrot.slane %v2708, 6
    %v2711 = vor.u32 %v2707, %v2710
    %v2712 = vsel %vm1260, %v2703, %v2711
    %v2714 = vshrl.u32 %v2292, 16
    %v2716 = vrot.slane %v2714, 5
    %v2717 = vshll.u32 %v2292, 16
    %v2719 = vrot.slane %v2717, 6
    %v2720 = vor.u32 %v2716, %v2719
    %v2721 = vrot.slane %v2720, 4
    %v2723 = vshrl.u32 %v2646, 16
    %v2725 = vrot.slane %v2723, 5
    %v2726 = vshll.u32 %v2646, 16
    %v2728 = vrot.slane %v2726, 6
    %v2729 = vor.u32 %v2725, %v2728
    %v2730 = vsel %vm1260, %v2721, %v2729
    %v2732 = vshrl.u32 %v2293, 16
    %v2734 = vrot.slane %v2732, 5
    %v2735 = vshll.u32 %v2293, 16
    %v2737 = vrot.slane %v2735, 6
    %v2738 = vor.u32 %v2734, %v2737
    %v2739 = vrot.slane %v2738, 4
    %v2741 = vshrl.u32 %v2647, 16
    %v2743 = vrot.slane %v2741, 5
    %v2744 = vshll.u32 %v2647, 16
    %v2746 = vrot.slane %v2744, 6
    %v2747 = vor.u32 %v2743, %v2746
    %v2748 = vsel %vm1260, %v2739, %v2747
    %v2750 = vshrl.u32 %v2294, 16
    %v2752 = vrot.slane %v2750, 5
    %v2753 = vshll.u32 %v2294, 16
    %v2755 = vrot.slane %v2753, 6
    %v2756 = vor.u32 %v2752, %v2755
    %v2757 = vrot.slane %v2756, 4
    %v2759 = vshrl.u32 %v2648, 16
    %v2761 = vrot.slane %v2759, 5
    %v2762 = vshll.u32 %v2648, 16
    %v2764 = vrot.slane %v2762, 6
    %v2765 = vor.u32 %v2761, %v2764
    %v2766 = vsel %vm1260, %v2757, %v2765
    %v2768 = vshrl.u32 %v2295, 16
    %v2770 = vrot.slane %v2768, 5
    %v2771 = vshll.u32 %v2295, 16
    %v2773 = vrot.slane %v2771, 6
    %v2774 = vor.u32 %v2770, %v2773
    %v2775 = vrot.slane %v2774, 4
    %v2777 = vshrl.u32 %v2649, 16
    %v2779 = vrot.slane %v2777, 5
    %v2780 = vshll.u32 %v2649, 16
    %v2782 = vrot.slane %v2780, 6
    %v2783 = vor.u32 %v2779, %v2782
    %v2784 = vsel %vm1260, %v2775, %v2783
    %v2786 = vshrl.u32 %v2296, 16
    %v2788 = vrot.slane %v2786, 5
    %v2789 = vshll.u32 %v2296, 16
    %v2791 = vrot.slane %v2789, 6
    %v2792 = vor.u32 %v2788, %v2791
    %v2793 = vrot.slane %v2792, 4
    %v2795 = vshrl.u32 %v2650, 16
    %v2797 = vrot.slane %v2795, 5
    %v2798 = vshll.u32 %v2650, 16
    %v2800 = vrot.slane %v2798, 6
    %v2801 = vor.u32 %v2797, %v2800
    %v2802 = vsel %vm1260, %v2793, %v2801
    %v2804 = vshrl.u32 %v2297, 16
    %v2806 = vrot.slane %v2804, 5
    %v2807 = vshll.u32 %v2297, 16
    %v2809 = vrot.slane %v2807, 6
    %v2810 = vor.u32 %v2806, %v2809
    %v2811 = vrot.slane %v2810, 4
    %v2813 = vshrl.u32 %v2651, 16
    %v2815 = vrot.slane %v2813, 5
    %v2816 = vshll.u32 %v2651, 16
    %v2818 = vrot.slane %v2816, 6
    %v2819 = vor.u32 %v2815, %v2818
    %v2820 = vsel %vm1260, %v2811, %v2819
    %v2822 = vshrl.u32 %v2298, 16
    %v2824 = vrot.slane %v2822, 5
    %v2825 = vshll.u32 %v2298, 16
    %v2827 = vrot.slane %v2825, 6
    %v2828 = vor.u32 %v2824, %v2827
    %v2829 = vrot.slane %v2828, 4
    %v2831 = vshrl.u32 %v2652, 16
    %v2833 = vrot.slane %v2831, 5
    %v2834 = vshll.u32 %v2652, 16
    %v2836 = vrot.slane %v2834, 6
    %v2837 = vor.u32 %v2833, %v2836
    %v2838 = vsel %vm1260, %v2829, %v2837
    %v2840 = vshrl.u32 %v2299, 16
    %v2842 = vrot.slane %v2840, 5
    %v2843 = vshll.u32 %v2299, 16
    %v2845 = vrot.slane %v2843, 6
    %v2846 = vor.u32 %v2842, %v2845
    %v2847 = vrot.slane %v2846, 4
    %v2849 = vshrl.u32 %v2653, 16
    %v2851 = vrot.slane %v2849, 5
    %v2852 = vshll.u32 %v2653, 16
    %v2854 = vrot.slane %v2852, 6
    %v2855 = vor.u32 %v2851, %v2854
    %v2856 = vsel %vm1260, %v2847, %v2855
    %v2858 = vshrl.u32 %v2300, 16
    %v2860 = vrot.slane %v2858, 5
    %v2861 = vshll.u32 %v2300, 16
    %v2863 = vrot.slane %v2861, 6
    %v2864 = vor.u32 %v2860, %v2863
    %v2865 = vrot.slane %v2864, 4
    %v2867 = vshrl.u32 %v2654, 16
    %v2869 = vrot.slane %v2867, 5
    %v2870 = vshll.u32 %v2654, 16
    %v2872 = vrot.slane %v2870, 6
    %v2873 = vor.u32 %v2869, %v2872
    %v2874 = vsel %vm1260, %v2865, %v2873
    %v2876 = vshrl.u32 %v2301, 16
    %v2878 = vrot.slane %v2876, 5
    %v2879 = vshll.u32 %v2301, 16
    %v2881 = vrot.slane %v2879, 6
    %v2882 = vor.u32 %v2878, %v2881
    %v2883 = vrot.slane %v2882, 4
    %v2885 = vshrl.u32 %v2655, 16
    %v2887 = vrot.slane %v2885, 5
    %v2888 = vshll.u32 %v2655, 16
    %v2890 = vrot.slane %v2888, 6
    %v2891 = vor.u32 %v2887, %v2890
    %v2892 = vsel %vm1260, %v2883, %v2891
    %v2894 = vshrl.u32 %v2302, 16
    %v2896 = vrot.slane %v2894, 5
    %v2897 = vshll.u32 %v2302, 16
    %v2899 = vrot.slane %v2897, 6
    %v2900 = vor.u32 %v2896, %v2899
    %v2901 = vrot.slane %v2900, 4
    %v2903 = vshrl.u32 %v2656, 16
    %v2905 = vrot.slane %v2903, 5
    %v2906 = vshll.u32 %v2656, 16
    %v2908 = vrot.slane %v2906, 6
    %v2909 = vor.u32 %v2905, %v2908
    %v2910 = vsel %vm1260, %v2901, %v2909
    %v2912 = vshrl.u32 %v2303, 16
    %v2914 = vrot.slane %v2912, 5
    %v2915 = vshll.u32 %v2303, 16
    %v2917 = vrot.slane %v2915, 6
    %v2918 = vor.u32 %v2914, %v2917
    %v2919 = vrot.slane %v2918, 4
    %v2921 = vshrl.u32 %v2657, 16
    %v2923 = vrot.slane %v2921, 5
    %v2924 = vshll.u32 %v2657, 16
    %v2926 = vrot.slane %v2924, 6
    %v2927 = vor.u32 %v2923, %v2926
    %v2928 = vsel %vm1260, %v2919, %v2927
    %v2930 = vshrl.u32 %v2304, 16
    %v2932 = vrot.slane %v2930, 5
    %v2933 = vshll.u32 %v2304, 16
    %v2935 = vrot.slane %v2933, 6
    %v2936 = vor.u32 %v2932, %v2935
    %v2937 = vrot.slane %v2936, 4
    %v2939 = vshrl.u32 %v2658, 16
    %v2941 = vrot.slane %v2939, 5
    %v2942 = vshll.u32 %v2658, 16
    %v2944 = vrot.slane %v2942, 6
    %v2945 = vor.u32 %v2941, %v2944
    %v2946 = vsel %vm1260, %v2937, %v2945
    %s2947 = scalar_lea.vmem [#allocation2], 1280
    %v2948 = vld [vmem:[%s2947] sm:$0xff]
    %v2949 = vld [vmem:[%s2947 + $0x8] sm:$0xff]
    %v2950 = vld [vmem:[%s2947 + $0x10] sm:$0xff]
    %v2951 = vld [vmem:[%s2947 + $0x18] sm:$0xff]
    %v2952 = vld [vmem:[%s2947 + $0x20] sm:$0xff]
    %v2953 = vld [vmem:[%s2947 + $0x28] sm:$0xff]
    %v2954 = vld [vmem:[%s2947 + $0x30] sm:$0xff]
    %v2955 = vld [vmem:[%s2947 + $0x38] sm:$0xff]
    %v2956 = vld [vmem:[%s2947 + $0x40] sm:$0xff]
    %v2957 = vld [vmem:[%s2947 + $0x48] sm:$0xff]
    %v2958 = vld [vmem:[%s2947 + $0x50] sm:$0xff]
    %v2959 = vld [vmem:[%s2947 + $0x58] sm:$0xff]
    %v2960 = vld [vmem:[%s2947 + $0x60] sm:$0xff]
    %v2961 = vld [vmem:[%s2947 + $0x68] sm:$0xff]
    %v2962 = vld [vmem:[%s2947 + $0x70] sm:$0xff]
    %v2963 = vld [vmem:[%s2947 + $0x78] sm:$0xff]
    %v2964 = vld [vmem:[%s2947 + $0x80] sm:$0xff]
    %v2965 = vld [vmem:[%s2947 + $0x88] sm:$0xff]
    %v2966 = vld [vmem:[%s2947 + $0x90] sm:$0xff]
    %v2967 = vld [vmem:[%s2947 + $0x98] sm:$0xff]
    %v2968 = vld [vmem:[%s2947 + $0xa0] sm:$0xff]
    %v2969 = vld [vmem:[%s2947 + $0xa8] sm:$0xff]
    %v2970 = vld [vmem:[%s2947 + $0xb0] sm:$0xff]
    %v2971 = vld [vmem:[%s2947 + $0xb8] sm:$0xff]
    %v2972 = vld [vmem:[%s2947 + $0xc0] sm:$0xff]
    %v2973 = vld [vmem:[%s2947 + $0xc8] sm:$0xff]
    %v2974 = vld [vmem:[%s2947 + $0xd0] sm:$0xff]
    %v2975 = vld [vmem:[%s2947 + $0xd8] sm:$0xff]
    %v2976 = vld [vmem:[%s2947 + $0xe0] sm:$0xff]
    %v2977 = vld [vmem:[%s2947 + $0xe8] sm:$0xff]
    %v2978 = vld [vmem:[%s2947 + $0xf0] sm:$0xff]
    %v2979 = vld [vmem:[%s2947 + $0xf8] sm:$0xff]
    %v2980 = vunpack.c.l.b16 %v2676
    %v2981 = vunpack.c.h.b16 %v2676
    %v2982 = vunpack.c.l.b16 %v2694
    %v2983 = vunpack.c.h.b16 %v2694
    %v2984 = vunpack.c.l.b16 %v2712
    %v2985 = vunpack.c.h.b16 %v2712
    %v2986 = vunpack.c.l.b16 %v2730
    %v2987 = vunpack.c.h.b16 %v2730
    %v2988 = vunpack.c.l.b16 %v2748
    %v2989 = vunpack.c.h.b16 %v2748
    %v2990 = vunpack.c.l.b16 %v2766
    %v2991 = vunpack.c.h.b16 %v2766
    %v2992 = vunpack.c.l.b16 %v2784
    %v2993 = vunpack.c.h.b16 %v2784
    %v2994 = vunpack.c.l.b16 %v2802
    %v2995 = vunpack.c.h.b16 %v2802
    %v2996 = vunpack.c.l.b16 %v2820
    %v2997 = vunpack.c.h.b16 %v2820
    %v2998 = vunpack.c.l.b16 %v2838
    %v2999 = vunpack.c.h.b16 %v2838
    %v3000 = vunpack.c.l.b16 %v2856
    %v3001 = vunpack.c.h.b16 %v2856
    %v3002 = vunpack.c.l.b16 %v2874
    %v3003 = vunpack.c.h.b16 %v2874
    %v3004 = vunpack.c.l.b16 %v2892
    %v3005 = vunpack.c.h.b16 %v2892
    %v3006 = vunpack.c.l.b16 %v2910
    %v3007 = vunpack.c.h.b16 %v2910
    %v3008 = vunpack.c.l.b16 %v2928
    %v3009 = vunpack.c.h.b16 %v2928
    %v3010 = vunpack.c.l.b16 %v2946
    %v3011 = vunpack.c.h.b16 %v2946
    %v3012 = vpack.c.b16 %v2982, %v2980
    %v3013 = vpack.c.b16 %v2983, %v2981
    %v3014 = vpack.c.b16 %v2986, %v2984
    %v3015 = vpack.c.b16 %v2987, %v2985
    %v3016 = vpack.c.b16 %v2990, %v2988
    %v3017 = vpack.c.b16 %v2991, %v2989
    %v3018 = vpack.c.b16 %v2994, %v2992
    %v3019 = vpack.c.b16 %v2995, %v2993
    %v3020 = vpack.c.b16 %v2998, %v2996
    %v3021 = vpack.c.b16 %v2999, %v2997
    %v3022 = vpack.c.b16 %v3002, %v3000
    %v3023 = vpack.c.b16 %v3003, %v3001
    %v3024 = vpack.c.b16 %v3006, %v3004
    %v3025 = vpack.c.b16 %v3007, %v3005
    %v3026 = vpack.c.b16 %v3010, %v3008
    %v3027 = vpack.c.b16 %v3011, %v3009
    %3044 = vmatprep.subr.bf16.mxu0 %v2949
    %3045 = vmatpush1.bf16.msra.mxu0 %v2948
    %3046 = vmatprep.subr.bf16.mxu0 %v2951
    %3047 = vmatpush1.bf16.msra.mxu0 %v2950
    %3048 = vmatprep.subr.bf16.mxu0 %v2953
    %3049 = vmatpush1.bf16.msra.mxu0 %v2952
    %3050 = vmatprep.subr.bf16.mxu0 %v2955
    %3051 = vmatpush1.bf16.msra.mxu0 %v2954
    %3052 = vmatprep.subr.bf16.mxu0 %v2957
    %3053 = vmatpush1.bf16.msra.mxu0 %v2956
    %3054 = vmatprep.subr.bf16.mxu0 %v2959
    %3055 = vmatpush1.bf16.msra.mxu0 %v2958
    %3056 = vmatprep.subr.bf16.mxu0 %v2961
    %3057 = vmatpush1.bf16.msra.mxu0 %v2960
    %3058 = vmatprep.subr.bf16.mxu0 %v2963
    %3059 = vmatpush1.bf16.msra.mxu0 %v2962
    %3060 = vmatprep.subr.bf16.mxu0 %v2965
    %3061 = vmatpush1.bf16.msra.mxu0 %v2964
    %3062 = vmatprep.subr.bf16.mxu0 %v2967
    %3063 = vmatpush1.bf16.msra.mxu0 %v2966
    %3064 = vmatprep.subr.bf16.mxu0 %v2969
    %3065 = vmatpush1.bf16.msra.mxu0 %v2968
    %3066 = vmatprep.subr.bf16.mxu0 %v2971
    %3067 = vmatpush1.bf16.msra.mxu0 %v2970
    %3068 = vmatprep.subr.bf16.mxu0 %v2973
    %3069 = vmatpush1.bf16.msra.mxu0 %v2972
    %3070 = vmatprep.subr.bf16.mxu0 %v2975
    %3071 = vmatpush1.bf16.msra.mxu0 %v2974
    %3072 = vmatprep.subr.bf16.mxu0 %v2977
    %3073 = vmatpush1.bf16.msra.mxu0 %v2976
    %3074 = vmatprep.subr.bf16.mxu0 %v2979
    %3075 = vmatpush1.bf16.msra.mxu0 %v2978
    %3076 = vmatprep.mubr.bf16.mxu0 %v3013
    %3077 = vmatmul.mubr.bf16.gmra.mrb[0].mxu0 %v3012
    %v3078 = vpop.f32.mrb[0].mxu0
    %v3079 = vadd.f32 0.0, %v3078
    %v3080 = vpop.f32.mrb[0].mxu0
    %v3081 = vadd.f32 0.0, %v3080
    %v3082 = vpop.f32.mrb[0].mxu0
    %v3083 = vadd.f32 0.0, %v3082
    %v3084 = vpop.f32.mrb[0].mxu0
    %v3085 = vadd.f32 0.0, %v3084
    %3086 = vmatprep.mubr.bf16.mxu0 %v3015
    %3087 = vmatmul.mubr.bf16.gmra.mrb[0].mxu0 %v3014
    %v3088 = vpop.f32.mrb[0].mxu0
    %v3089 = vadd.f32 0.0, %v3088
    %v3090 = vpop.f32.mrb[0].mxu0
    %v3091 = vadd.f32 0.0, %v3090
    %v3092 = vpop.f32.mrb[0].mxu0
    %v3093 = vadd.f32 0.0, %v3092
    %v3094 = vpop.f32.mrb[0].mxu0
    %v3095 = vadd.f32 0.0, %v3094
    %3096 = vmatprep.mubr.bf16.mxu0 %v3017
    %3097 = vmatmul.mubr.bf16.gmra.mrb[0].mxu0 %v3016
    %v3098 = vpop.f32.mrb[0].mxu0
    %v3099 = vadd.f32 0.0, %v3098
    %v3100 = vpop.f32.mrb[0].mxu0
    %v3101 = vadd.f32 0.0, %v3100
    %v3102 = vpop.f32.mrb[0].mxu0
    %v3103 = vadd.f32 0.0, %v3102
    %v3104 = vpop.f32.mrb[0].mxu0
    %v3105 = vadd.f32 0.0, %v3104
    %3106 = vmatprep.mubr.bf16.mxu0 %v3019
    %3107 = vmatmul.mubr.bf16.gmra.mrb[0].mxu0 %v3018
    %v3108 = vpop.f32.mrb[0].mxu0
    %v3109 = vadd.f32 0.0, %v3108
    %v3110 = vpop.f32.mrb[0].mxu0
    %v3111 = vadd.f32 0.0, %v3110
    %v3112 = vpop.f32.mrb[0].mxu0
    %v3113 = vadd.f32 0.0, %v3112
    %v3114 = vpop.f32.mrb[0].mxu0
    %v3115 = vadd.f32 0.0, %v3114
    %3116 = vmatprep.mubr.bf16.mxu0 %v3021
    %3117 = vmatmul.mubr.bf16.gmra.mrb[0].mxu0 %v3020
    %v3118 = vpop.f32.mrb[0].mxu0
    %v3119 = vadd.f32 0.0, %v3118
    %v3120 = vpop.f32.mrb[0].mxu0
    %v3121 = vadd.f32 0.0, %v3120
    %v3122 = vpop.f32.mrb[0].mxu0
    %v3123 = vadd.f32 0.0, %v3122
    %v3124 = vpop.f32.mrb[0].mxu0
    %v3125 = vadd.f32 0.0, %v3124
    %3126 = vmatprep.mubr.bf16.mxu0 %v3023
    %3127 = vmatmul.mubr.bf16.gmra.mrb[0].mxu0 %v3022
    %v3128 = vpop.f32.mrb[0].mxu0
    %v3129 = vadd.f32 0.0, %v3128
    %v3130 = vpop.f32.mrb[0].mxu0
    %v3131 = vadd.f32 0.0, %v3130
    %v3132 = vpop.f32.mrb[0].mxu0
    %v3133 = vadd.f32 0.0, %v3132
    %v3134 = vpop.f32.mrb[0].mxu0
    %v3135 = vadd.f32 0.0, %v3134
    %3136 = vmatprep.mubr.bf16.mxu0 %v3025
    %3137 = vmatmul.mubr.bf16.gmra.mrb[0].mxu0 %v3024
    %v3138 = vpop.f32.mrb[0].mxu0
    %v3139 = vadd.f32 0.0, %v3138
    %v3140 = vpop.f32.mrb[0].mxu0
    %v3141 = vadd.f32 0.0, %v3140
    %v3142 = vpop.f32.mrb[0].mxu0
    %v3143 = vadd.f32 0.0, %v3142
    %v3144 = vpop.f32.mrb[0].mxu0
    %v3145 = vadd.f32 0.0, %v3144
    %3146 = vmatprep.mubr.bf16.mxu0 %v3027
    %3147 = vmatmul.mubr.bf16.gmra.mrb[0].mxu0 %v3026
    %v3148 = vpop.f32.mrb[0].mxu0
    %v3149 = vadd.f32 0.0, %v3148
    %v3150 = vpop.f32.mrb[0].mxu0
    %v3151 = vadd.f32 0.0, %v3150
    %v3152 = vpop.f32.mrb[0].mxu0
    %v3153 = vadd.f32 0.0, %v3152
    %v3154 = vpop.f32.mrb[0].mxu0
    %v3155 = vadd.f32 0.0, %v3154
    %3156 = vdwg.mxu0
    %v3157 = vadd.f32 %v2611, %v3079
    %v3158 = vadd.f32 %v2612, %v3081
    %v3159 = vadd.f32 %v2613, %v3083
    %v3160 = vadd.f32 %v2614, %v3085
    %v3161 = vadd.f32 %v2615, %v3089
    %v3162 = vadd.f32 %v2616, %v3091
    %v3163 = vadd.f32 %v2617, %v3093
    %v3164 = vadd.f32 %v2618, %v3095
    %v3165 = vadd.f32 %v2619, %v3099
    %v3166 = vadd.f32 %v2620, %v3101
    %v3167 = vadd.f32 %v2621, %v3103
    %v3168 = vadd.f32 %v2622, %v3105
    %v3169 = vadd.f32 %v2623, %v3109
    %v3170 = vadd.f32 %v2624, %v3111
    %v3171 = vadd.f32 %v2625, %v3113
    %v3172 = vadd.f32 %v2626, %v3115
    %v3173 = vadd.f32 %v2627, %v3119
    %v3174 = vadd.f32 %v2628, %v3121
    %v3175 = vadd.f32 %v2629, %v3123
    %v3176 = vadd.f32 %v2630, %v3125
    %v3177 = vadd.f32 %v2631, %v3129
    %v3178 = vadd.f32 %v2632, %v3131
    %v3179 = vadd.f32 %v2633, %v3133
    %v3180 = vadd.f32 %v2634, %v3135
    %v3181 = vadd.f32 %v2635, %v3139
    %v3182 = vadd.f32 %v2636, %v3141
    %v3183 = vadd.f32 %v2637, %v3143
    %v3184 = vadd.f32 %v2638, %v3145
    %v3185 = vadd.f32 %v2639, %v3149
    %v3186 = vadd.f32 %v2640, %v3151
    %v3187 = vadd.f32 %v2641, %v3153
    %v3188 = vadd.f32 %v2642, %v3155
    %s3189 = scalar_lea.vmem [#allocation4], 32
    %v3190 = vld [vmem:[%s3189] sm:$0xff]
    %v3191 = vld [vmem:[%s3189 + $0x8] sm:$0x11]
    %v3192 = vld [vmem:[%s3189 + $0x10] sm:$0xff]
    %v3193 = vld [vmem:[%s3189 + $0x18] sm:$0x11]
    %v3194 = vld [vmem:[%s3189 + $0x20] sm:$0xff]
    %v3195 = vld [vmem:[%s3189 + $0x28] sm:$0x11]
    %v3196 = vld [vmem:[%s3189 + $0x30] sm:$0xff]
    %v3197 = vld [vmem:[%s3189 + $0x38] sm:$0x11]
    %v3198 = vld [vmem:[%s3189 + $0x40] sm:$0xff]
    %v3199 = vld [vmem:[%s3189 + $0x48] sm:$0x11]
    %v3200 = vld [vmem:[%s3189 + $0x50] sm:$0xff]
    %v3201 = vld [vmem:[%s3189 + $0x58] sm:$0x11]
    %v3202 = vld [vmem:[%s3189 + $0x60] sm:$0xff]
    %v3203 = vld [vmem:[%s3189 + $0x68] sm:$0x11]
    %v3204 = vld [vmem:[%s3189 + $0x70] sm:$0xff]
    %v3205 = vld [vmem:[%s3189 + $0x78] sm:$0x11]
    %v3206 = vld [vmem:[%s3189 + $0xa0] sm:$0xff]
    %v3207 = vld [vmem:[%s3189 + $0xa8] sm:$0x11]
    %v3208 = vld [vmem:[%s3189 + $0xb0] sm:$0xff]
    %v3209 = vld [vmem:[%s3189 + $0xb8] sm:$0x11]
    %v3210 = vld [vmem:[%s3189 + $0xc0] sm:$0xff]
    %v3211 = vld [vmem:[%s3189 + $0xc8] sm:$0x11]
    %v3212 = vld [vmem:[%s3189 + $0xd0] sm:$0xff]
    %v3213 = vld [vmem:[%s3189 + $0xd8] sm:$0x11]
    %v3214 = vld [vmem:[%s3189 + $0xe0] sm:$0xff]
    %v3215 = vld [vmem:[%s3189 + $0xe8] sm:$0x11]
    %v3216 = vld [vmem:[%s3189 + $0xf0] sm:$0xff]
    %v3217 = vld [vmem:[%s3189 + $0xf8] sm:$0x11]
    %v3218 = vld [vmem:[%s3189 + $0x100] sm:$0xff]
    %v3219 = vld [vmem:[%s3189 + $0x108] sm:$0x11]
    %v3220 = vld [vmem:[%s3189 + $0x110] sm:$0xff]
    %v3221 = vld [vmem:[%s3189 + $0x118] sm:$0x11]
    %v3223 = vshrl.u32 %v3190, 16
    %v3225 = vrot.slane %v3223, 4
    %v3226 = vshll.u32 %v3190, 16
    %v3228 = vrot.slane %v3226, 5
    %v3229 = vor.u32 %v3225, %v3228
    %v3230 = vrot.slane %v3229, 4
    %v3232 = vshll.u32 %v3191, 16
    %v3234 = vrot.slane %v3232, 5
    %v3235 = vsel %vm483, %v3230, %v3234
    %v3237 = vshrl.u32 %v3192, 16
    %v3239 = vrot.slane %v3237, 4
    %v3240 = vshll.u32 %v3192, 16
    %v3242 = vrot.slane %v3240, 5
    %v3243 = vor.u32 %v3239, %v3242
    %v3244 = vrot.slane %v3243, 4
    %v3246 = vshll.u32 %v3193, 16
    %v3248 = vrot.slane %v3246, 5
    %v3249 = vsel %vm483, %v3244, %v3248
    %v3251 = vshrl.u32 %v3194, 16
    %v3253 = vrot.slane %v3251, 4
    %v3254 = vshll.u32 %v3194, 16
    %v3256 = vrot.slane %v3254, 5
    %v3257 = vor.u32 %v3253, %v3256
    %v3258 = vrot.slane %v3257, 4
    %v3260 = vshll.u32 %v3195, 16
    %v3262 = vrot.slane %v3260, 5
    %v3263 = vsel %vm483, %v3258, %v3262
    %v3265 = vshrl.u32 %v3196, 16
    %v3267 = vrot.slane %v3265, 4
    %v3268 = vshll.u32 %v3196, 16
    %v3270 = vrot.slane %v3268, 5
    %v3271 = vor.u32 %v3267, %v3270
    %v3272 = vrot.slane %v3271, 4
    %v3274 = vshll.u32 %v3197, 16
    %v3276 = vrot.slane %v3274, 5
    %v3277 = vsel %vm483, %v3272, %v3276
    %v3279 = vshrl.u32 %v3198, 16
    %v3281 = vrot.slane %v3279, 4
    %v3282 = vshll.u32 %v3198, 16
    %v3284 = vrot.slane %v3282, 5
    %v3285 = vor.u32 %v3281, %v3284
    %v3286 = vrot.slane %v3285, 4
    %v3288 = vshll.u32 %v3199, 16
    %v3290 = vrot.slane %v3288, 5
    %v3291 = vsel %vm483, %v3286, %v3290
    %v3293 = vshrl.u32 %v3200, 16
    %v3295 = vrot.slane %v3293, 4
    %v3296 = vshll.u32 %v3200, 16
    %v3298 = vrot.slane %v3296, 5
    %v3299 = vor.u32 %v3295, %v3298
    %v3300 = vrot.slane %v3299, 4
    %v3302 = vshll.u32 %v3201, 16
    %v3304 = vrot.slane %v3302, 5
    %v3305 = vsel %vm483, %v3300, %v3304
    %v3307 = vshrl.u32 %v3202, 16
    %v3309 = vrot.slane %v3307, 4
    %v3310 = vshll.u32 %v3202, 16
    %v3312 = vrot.slane %v3310, 5
    %v3313 = vor.u32 %v3309, %v3312
    %v3314 = vrot.slane %v3313, 4
    %v3316 = vshll.u32 %v3203, 16
    %v3318 = vrot.slane %v3316, 5
    %v3319 = vsel %vm483, %v3314, %v3318
    %v3321 = vshrl.u32 %v3204, 16
    %v3323 = vrot.slane %v3321, 4
    %v3324 = vshll.u32 %v3204, 16
    %v3326 = vrot.slane %v3324, 5
    %v3327 = vor.u32 %v3323, %v3326
    %v3328 = vrot.slane %v3327, 4
    %v3330 = vshll.u32 %v3205, 16
    %v3332 = vrot.slane %v3330, 5
    %v3333 = vsel %vm483, %v3328, %v3332
    %v3335 = vshrl.u32 %v3206, 16
    %v3337 = vrot.slane %v3335, 4
    %v3338 = vshll.u32 %v3206, 16
    %v3340 = vrot.slane %v3338, 5
    %v3341 = vor.u32 %v3337, %v3340
    %v3342 = vrot.slane %v3341, 4
    %v3344 = vshll.u32 %v3207, 16
    %v3346 = vrot.slane %v3344, 5
    %v3347 = vsel %vm483, %v3342, %v3346
    %v3349 = vshrl.u32 %v3208, 16
    %v3351 = vrot.slane %v3349, 4
    %v3352 = vshll.u32 %v3208, 16
    %v3354 = vrot.slane %v3352, 5
    %v3355 = vor.u32 %v3351, %v3354
    %v3356 = vrot.slane %v3355, 4
    %v3358 = vshll.u32 %v3209, 16
    %v3360 = vrot.slane %v3358, 5
    %v3361 = vsel %vm483, %v3356, %v3360
    %v3363 = vshrl.u32 %v3210, 16
    %v3365 = vrot.slane %v3363, 4
    %v3366 = vshll.u32 %v3210, 16
    %v3368 = vrot.slane %v3366, 5
    %v3369 = vor.u32 %v3365, %v3368
    %v3370 = vrot.slane %v3369, 4
    %v3372 = vshll.u32 %v3211, 16
    %v3374 = vrot.slane %v3372, 5
    %v3375 = vsel %vm483, %v3370, %v3374
    %v3377 = vshrl.u32 %v3212, 16
    %v3379 = vrot.slane %v3377, 4
    %v3380 = vshll.u32 %v3212, 16
    %v3382 = vrot.slane %v3380, 5
    %v3383 = vor.u32 %v3379, %v3382
    %v3384 = vrot.slane %v3383, 4
    %v3386 = vshll.u32 %v3213, 16
    %v3388 = vrot.slane %v3386, 5
    %v3389 = vsel %vm483, %v3384, %v3388
    %v3391 = vshrl.u32 %v3214, 16
    %v3393 = vrot.slane %v3391, 4
    %v3394 = vshll.u32 %v3214, 16
    %v3396 = vrot.slane %v3394, 5
    %v3397 = vor.u32 %v3393, %v3396
    %v3398 = vrot.slane %v3397, 4
    %v3400 = vshll.u32 %v3215, 16
    %v3402 = vrot.slane %v3400, 5
    %v3403 = vsel %vm483, %v3398, %v3402
    %v3405 = vshrl.u32 %v3216, 16
    %v3407 = vrot.slane %v3405, 4
    %v3408 = vshll.u32 %v3216, 16
    %v3410 = vrot.slane %v3408, 5
    %v3411 = vor.u32 %v3407, %v3410
    %v3412 = vrot.slane %v3411, 4
    %v3414 = vshll.u32 %v3217, 16
    %v3416 = vrot.slane %v3414, 5
    %v3417 = vsel %vm483, %v3412, %v3416
    %v3419 = vshrl.u32 %v3218, 16
    %v3421 = vrot.slane %v3419, 4
    %v3422 = vshll.u32 %v3218, 16
    %v3424 = vrot.slane %v3422, 5
    %v3425 = vor.u32 %v3421, %v3424
    %v3426 = vrot.slane %v3425, 4
    %v3428 = vshll.u32 %v3219, 16
    %v3430 = vrot.slane %v3428, 5
    %v3431 = vsel %vm483, %v3426, %v3430
    %v3433 = vshrl.u32 %v3220, 16
    %v3435 = vrot.slane %v3433, 4
    %v3436 = vshll.u32 %v3220, 16
    %v3438 = vrot.slane %v3436, 5
    %v3439 = vor.u32 %v3435, %v3438
    %v3440 = vrot.slane %v3439, 4
    %v3442 = vshll.u32 %v3221, 16
    %v3444 = vrot.slane %v3442, 5
    %v3445 = vsel %vm483, %v3440, %v3444
    %s3446 = scalar_lea.vmem [#allocation2], 1536
    %v3447 = vld [vmem:[%s3446] sm:$0xff]
    %v3448 = vld [vmem:[%s3446 + $0x8] sm:$0xff]
    %v3449 = vld [vmem:[%s3446 + $0x10] sm:$0xff]
    %v3450 = vld [vmem:[%s3446 + $0x18] sm:$0xff]
    %v3451 = vld [vmem:[%s3446 + $0x20] sm:$0xff]
    %v3452 = vld [vmem:[%s3446 + $0x28] sm:$0xff]
    %v3453 = vld [vmem:[%s3446 + $0x30] sm:$0xff]
    %v3454 = vld [vmem:[%s3446 + $0x38] sm:$0xff]
    %v3455 = vld [vmem:[%s3446 + $0x40] sm:$0xff]
    %v3456 = vld [vmem:[%s3446 + $0x48] sm:$0xff]
    %v3457 = vld [vmem:[%s3446 + $0x50] sm:$0xff]
    %v3458 = vld [vmem:[%s3446 + $0x58] sm:$0xff]
    %v3459 = vld [vmem:[%s3446 + $0x60] sm:$0xff]
    %v3460 = vld [vmem:[%s3446 + $0x68] sm:$0xff]
    %v3461 = vld [vmem:[%s3446 + $0x70] sm:$0xff]
    %v3462 = vld [vmem:[%s3446 + $0x78] sm:$0xff]
    %v3463 = vld [vmem:[%s3446 + $0x80] sm:$0xff]
    %v3464 = vld [vmem:[%s3446 + $0x88] sm:$0xff]
    %v3465 = vld [vmem:[%s3446 + $0x90] sm:$0xff]
    %v3466 = vld [vmem:[%s3446 + $0x98] sm:$0xff]
    %v3467 = vld [vmem:[%s3446 + $0xa0] sm:$0xff]
    %v3468 = vld [vmem:[%s3446 + $0xa8] sm:$0xff]
    %v3469 = vld [vmem:[%s3446 + $0xb0] sm:$0xff]
    %v3470 = vld [vmem:[%s3446 + $0xb8] sm:$0xff]
    %v3471 = vld [vmem:[%s3446 + $0xc0] sm:$0xff]
    %v3472 = vld [vmem:[%s3446 + $0xc8] sm:$0xff]
    %v3473 = vld [vmem:[%s3446 + $0xd0] sm:$0xff]
    %v3474 = vld [vmem:[%s3446 + $0xd8] sm:$0xff]
    %v3475 = vld [vmem:[%s3446 + $0xe0] sm:$0xff]
    %v3476 = vld [vmem:[%s3446 + $0xe8] sm:$0xff]
    %v3477 = vld [vmem:[%s3446 + $0xf0] sm:$0xff]
    %v3478 = vld [vmem:[%s3446 + $0xf8] sm:$0xff]
    %v3479 = vunpack.c.l.b16 %v3235
    %v3480 = vunpack.c.h.b16 %v3235
    %v3481 = vunpack.c.l.b16 %v3249
    %v3482 = vunpack.c.h.b16 %v3249
    %v3483 = vunpack.c.l.b16 %v3263
    %v3484 = vunpack.c.h.b16 %v3263
    %v3485 = vunpack.c.l.b16 %v3277
    %v3486 = vunpack.c.h.b16 %v3277
    %v3487 = vunpack.c.l.b16 %v3291
    %v3488 = vunpack.c.h.b16 %v3291
    %v3489 = vunpack.c.l.b16 %v3305
    %v3490 = vunpack.c.h.b16 %v3305
    %v3491 = vunpack.c.l.b16 %v3319
    %v3492 = vunpack.c.h.b16 %v3319
    %v3493 = vunpack.c.l.b16 %v3333
    %v3494 = vunpack.c.h.b16 %v3333
    %v3495 = vunpack.c.l.b16 %v3347
    %v3496 = vunpack.c.h.b16 %v3347
    %v3497 = vunpack.c.l.b16 %v3361
    %v3498 = vunpack.c.h.b16 %v3361
    %v3499 = vunpack.c.l.b16 %v3375
    %v3500 = vunpack.c.h.b16 %v3375
    %v3501 = vunpack.c.l.b16 %v3389
    %v3502 = vunpack.c.h.b16 %v3389
    %v3503 = vunpack.c.l.b16 %v3403
    %v3504 = vunpack.c.h.b16 %v3403
    %v3505 = vunpack.c.l.b16 %v3417
    %v3506 = vunpack.c.h.b16 %v3417
    %v3507 = vunpack.c.l.b16 %v3431
    %v3508 = vunpack.c.h.b16 %v3431
    %v3509 = vunpack.c.l.b16 %v3445
    %v3510 = vunpack.c.h.b16 %v3445
    %v3511 = vpack.c.b16 %v3481, %v3479
    %v3512 = vpack.c.b16 %v3482, %v3480
    %v3513 = vpack.c.b16 %v3485, %v3483
    %v3514 = vpack.c.b16 %v3486, %v3484
    %v3515 = vpack.c.b16 %v3489, %v3487
    %v3516 = vpack.c.b16 %v3490, %v3488
    %v3517 = vpack.c.b16 %v3493, %v3491
    %v3518 = vpack.c.b16 %v3494, %v3492
    %v3519 = vpack.c.b16 %v3497, %v3495
    %v3520 = vpack.c.b16 %v3498, %v3496
    %v3521 = vpack.c.b16 %v3501, %v3499
    %v3522 = vpack.c.b16 %v3502, %v3500
    %v3523 = vpack.c.b16 %v3505, %v3503
    %v3524 = vpack.c.b16 %v3506, %v3504
    %v3525 = vpack.c.b16 %v3509, %v3507
    %v3526 = vpack.c.b16 %v3510, %v3508
    %3543 = vmatprep.subr.bf16.mxu0 %v3448
    %3544 = vmatpush1.bf16.msra.mxu0 %v3447
    %3545 = vmatprep.subr.bf16.mxu0 %v3450
    %3546 = vmatpush1.bf16.msra.mxu0 %v3449
    %3547 = vmatprep.subr.bf16.mxu0 %v3452
    %3548 = vmatpush1.bf16.msra.mxu0 %v3451
    %3549 = vmatprep.subr.bf16.mxu0 %v3454
    %3550 = vmatpush1.bf16.msra.mxu0 %v3453
    %3551 = vmatprep.subr.bf16.mxu0 %v3456
    %3552 = vmatpush1.bf16.msra.mxu0 %v3455
    %3553 = vmatprep.subr.bf16.mxu0 %v3458
    %3554 = vmatpush1.bf16.msra.mxu0 %v3457
    %3555 = vmatprep.subr.bf16.mxu0 %v3460
    %3556 = vmatpush1.bf16.msra.mxu0 %v3459
    %3557 = vmatprep.subr.bf16.mxu0 %v3462
    %3558 = vmatpush1.bf16.msra.mxu0 %v3461
    %3559 = vmatprep.subr.bf16.mxu0 %v3464
    %3560 = vmatpush1.bf16.msra.mxu0 %v3463
    %3561 = vmatprep.subr.bf16.mxu0 %v3466
    %3562 = vmatpush1.bf16.msra.mxu0 %v3465
    %3563 = vmatprep.subr.bf16.mxu0 %v3468
    %3564 = vmatpush1.bf16.msra.mxu0 %v3467
    %3565 = vmatprep.subr.bf16.mxu0 %v3470
    %3566 = vmatpush1.bf16.msra.mxu0 %v3469
    %3567 = vmatprep.subr.bf16.mxu0 %v3472
    %3568 = vmatpush1.bf16.msra.mxu0 %v3471
    %3569 = vmatprep.subr.bf16.mxu0 %v3474
    %3570 = vmatpush1.bf16.msra.mxu0 %v3473
    %3571 = vmatprep.subr.bf16.mxu0 %v3476
    %3572 = vmatpush1.bf16.msra.mxu0 %v3475
    %3573 = vmatprep.subr.bf16.mxu0 %v3478
    %3574 = vmatpush1.bf16.msra.mxu0 %v3477
    %3575 = vmatprep.mubr.bf16.mxu0 %v3512
    %3576 = vmatmul.mubr.bf16.gmra.mrb[0].mxu0 %v3511
    %v3577 = vpop.f32.mrb[0].mxu0
    %v3578 = vadd.f32 0.0, %v3577
    %v3579 = vpop.f32.mrb[0].mxu0
    %v3580 = vadd.f32 0.0, %v3579
    %v3581 = vpop.f32.mrb[0].mxu0
    %v3582 = vadd.f32 0.0, %v3581
    %v3583 = vpop.f32.mrb[0].mxu0
    %v3584 = vadd.f32 0.0, %v3583
    %3585 = vmatprep.mubr.bf16.mxu0 %v3514
    %3586 = vmatmul.mubr.bf16.gmra.mrb[0].mxu0 %v3513
    %v3587 = vpop.f32.mrb[0].mxu0
    %v3588 = vadd.f32 0.0, %v3587
    %v3589 = vpop.f32.mrb[0].mxu0
    %v3590 = vadd.f32 0.0, %v3589
    %v3591 = vpop.f32.mrb[0].mxu0
    %v3592 = vadd.f32 0.0, %v3591
    %v3593 = vpop.f32.mrb[0].mxu0
    %v3594 = vadd.f32 0.0, %v3593
    %3595 = vmatprep.mubr.bf16.mxu0 %v3516
    %3596 = vmatmul.mubr.bf16.gmra.mrb[0].mxu0 %v3515
    %v3597 = vpop.f32.mrb[0].mxu0
    %v3598 = vadd.f32 0.0, %v3597
    %v3599 = vpop.f32.mrb[0].mxu0
    %v3600 = vadd.f32 0.0, %v3599
    %v3601 = vpop.f32.mrb[0].mxu0
    %v3602 = vadd.f32 0.0, %v3601
    %v3603 = vpop.f32.mrb[0].mxu0
    %v3604 = vadd.f32 0.0, %v3603
    %3605 = vmatprep.mubr.bf16.mxu0 %v3518
    %3606 = vmatmul.mubr.bf16.gmra.mrb[0].mxu0 %v3517
    %v3607 = vpop.f32.mrb[0].mxu0
    %v3608 = vadd.f32 0.0, %v3607
    %v3609 = vpop.f32.mrb[0].mxu0
    %v3610 = vadd.f32 0.0, %v3609
    %v3611 = vpop.f32.mrb[0].mxu0
    %v3612 = vadd.f32 0.0, %v3611
    %v3613 = vpop.f32.mrb[0].mxu0
    %v3614 = vadd.f32 0.0, %v3613
    %3615 = vmatprep.mubr.bf16.mxu0 %v3520
    %3616 = vmatmul.mubr.bf16.gmra.mrb[0].mxu0 %v3519
    %v3617 = vpop.f32.mrb[0].mxu0
    %v3618 = vadd.f32 0.0, %v3617
    %v3619 = vpop.f32.mrb[0].mxu0
    %v3620 = vadd.f32 0.0, %v3619
    %v3621 = vpop.f32.mrb[0].mxu0
    %v3622 = vadd.f32 0.0, %v3621
    %v3623 = vpop.f32.mrb[0].mxu0
    %v3624 = vadd.f32 0.0, %v3623
    %3625 = vmatprep.mubr.bf16.mxu0 %v3522
    %3626 = vmatmul.mubr.bf16.gmra.mrb[0].mxu0 %v3521
    %v3627 = vpop.f32.mrb[0].mxu0
    %v3628 = vadd.f32 0.0, %v3627
    %v3629 = vpop.f32.mrb[0].mxu0
    %v3630 = vadd.f32 0.0, %v3629
    %v3631 = vpop.f32.mrb[0].mxu0
    %v3632 = vadd.f32 0.0, %v3631
    %v3633 = vpop.f32.mrb[0].mxu0
    %v3634 = vadd.f32 0.0, %v3633
    %3635 = vmatprep.mubr.bf16.mxu0 %v3524
    %3636 = vmatmul.mubr.bf16.gmra.mrb[0].mxu0 %v3523
    %v3637 = vpop.f32.mrb[0].mxu0
    %v3638 = vadd.f32 0.0, %v3637
    %v3639 = vpop.f32.mrb[0].mxu0
    %v3640 = vadd.f32 0.0, %v3639
    %v3641 = vpop.f32.mrb[0].mxu0
    %v3642 = vadd.f32 0.0, %v3641
    %v3643 = vpop.f32.mrb[0].mxu0
    %v3644 = vadd.f32 0.0, %v3643
    %3645 = vmatprep.mubr.bf16.mxu0 %v3526
    %3646 = vmatmul.mubr.bf16.gmra.mrb[0].mxu0 %v3525
    %v3647 = vpop.f32.mrb[0].mxu0
    %v3648 = vadd.f32 0.0, %v3647
    %v3649 = vpop.f32.mrb[0].mxu0
    %v3650 = vadd.f32 0.0, %v3649
    %v3651 = vpop.f32.mrb[0].mxu0
    %v3652 = vadd.f32 0.0, %v3651
    %v3653 = vpop.f32.mrb[0].mxu0
    %v3654 = vadd.f32 0.0, %v3653
    %3655 = vdwg.mxu0
    %v3656 = vadd.f32 %v3157, %v3578
    %v3657 = vadd.f32 %v3158, %v3580
    %v3658 = vadd.f32 %v3159, %v3582
    %v3659 = vadd.f32 %v3160, %v3584
    %v3660 = vadd.f32 %v3161, %v3588
    %v3661 = vadd.f32 %v3162, %v3590
    %v3662 = vadd.f32 %v3163, %v3592
    %v3663 = vadd.f32 %v3164, %v3594
    %v3664 = vadd.f32 %v3165, %v3598
    %v3665 = vadd.f32 %v3166, %v3600
    %v3666 = vadd.f32 %v3167, %v3602
    %v3667 = vadd.f32 %v3168, %v3604
    %v3668 = vadd.f32 %v3169, %v3608
    %v3669 = vadd.f32 %v3170, %v3610
    %v3670 = vadd.f32 %v3171, %v3612
    %v3671 = vadd.f32 %v3172, %v3614
    %v3672 = vadd.f32 %v3173, %v3618
    %v3673 = vadd.f32 %v3174, %v3620
    %v3674 = vadd.f32 %v3175, %v3622
    %v3675 = vadd.f32 %v3176, %v3624
    %v3676 = vadd.f32 %v3177, %v3628
    %v3677 = vadd.f32 %v3178, %v3630
    %v3678 = vadd.f32 %v3179, %v3632
    %v3679 = vadd.f32 %v3180, %v3634
    %v3680 = vadd.f32 %v3181, %v3638
    %v3681 = vadd.f32 %v3182, %v3640
    %v3682 = vadd.f32 %v3183, %v3642
    %v3683 = vadd.f32 %v3184, %v3644
    %v3684 = vadd.f32 %v3185, %v3648
    %v3685 = vadd.f32 %v3186, %v3650
    %v3686 = vadd.f32 %v3187, %v3652
    %v3687 = vadd.f32 %v3188, %v3654
    %v3688 = vld [vmem:[%s3189] sm:$0xee]
    %v3689 = vld [vmem:[%s3189 + $0x10] sm:$0xee]
    %v3690 = vld [vmem:[%s3189 + $0x20] sm:$0xee]
    %v3691 = vld [vmem:[%s3189 + $0x30] sm:$0xee]
    %v3692 = vld [vmem:[%s3189 + $0x40] sm:$0xee]
    %v3693 = vld [vmem:[%s3189 + $0x50] sm:$0xee]
    %v3694 = vld [vmem:[%s3189 + $0x60] sm:$0xee]
    %v3695 = vld [vmem:[%s3189 + $0x70] sm:$0xee]
    %v3696 = vld [vmem:[%s3189 + $0xa0] sm:$0xee]
    %v3697 = vld [vmem:[%s3189 + $0xb0] sm:$0xee]
    %v3698 = vld [vmem:[%s3189 + $0xc0] sm:$0xee]
    %v3699 = vld [vmem:[%s3189 + $0xd0] sm:$0xee]
    %v3700 = vld [vmem:[%s3189 + $0xe0] sm:$0xee]
    %v3701 = vld [vmem:[%s3189 + $0xf0] sm:$0xee]
    %v3702 = vld [vmem:[%s3189 + $0x100] sm:$0xee]
    %v3703 = vld [vmem:[%s3189 + $0x110] sm:$0xee]
    %v3736 = vrot.slane %v3688, 5
    %v3737 = vrot.slane %v3736, 4
    %v3738 = vrot.slane %v3191, 5
    %v3739 = vsel %vm790, %v3737, %v3738
    %v3740 = vrot.slane %v3689, 5
    %v3741 = vrot.slane %v3740, 4
    %v3742 = vrot.slane %v3193, 5
    %v3743 = vsel %vm790, %v3741, %v3742
    %v3744 = vrot.slane %v3690, 5
    %v3745 = vrot.slane %v3744, 4
    %v3746 = vrot.slane %v3195, 5
    %v3747 = vsel %vm790, %v3745, %v3746
    %v3748 = vrot.slane %v3691, 5
    %v3749 = vrot.slane %v3748, 4
    %v3750 = vrot.slane %v3197, 5
    %v3751 = vsel %vm790, %v3749, %v3750
    %v3752 = vrot.slane %v3692, 5
    %v3753 = vrot.slane %v3752, 4
    %v3754 = vrot.slane %v3199, 5
    %v3755 = vsel %vm790, %v3753, %v3754
    %v3756 = vrot.slane %v3693, 5
    %v3757 = vrot.slane %v3756, 4
    %v3758 = vrot.slane %v3201, 5
    %v3759 = vsel %vm790, %v3757, %v3758
    %v3760 = vrot.slane %v3694, 5
    %v3761 = vrot.slane %v3760, 4
    %v3762 = vrot.slane %v3203, 5
    %v3763 = vsel %vm790, %v3761, %v3762
    %v3764 = vrot.slane %v3695, 5
    %v3765 = vrot.slane %v3764, 4
    %v3766 = vrot.slane %v3205, 5
    %v3767 = vsel %vm790, %v3765, %v3766
    %v3768 = vrot.slane %v3696, 5
    %v3769 = vrot.slane %v3768, 4
    %v3770 = vrot.slane %v3207, 5
    %v3771 = vsel %vm790, %v3769, %v3770
    %v3772 = vrot.slane %v3697, 5
    %v3773 = vrot.slane %v3772, 4
    %v3774 = vrot.slane %v3209, 5
    %v3775 = vsel %vm790, %v3773, %v3774
    %v3776 = vrot.slane %v3698, 5
    %v3777 = vrot.slane %v3776, 4
    %v3778 = vrot.slane %v3211, 5
    %v3779 = vsel %vm790, %v3777, %v3778
    %v3780 = vrot.slane %v3699, 5
    %v3781 = vrot.slane %v3780, 4
    %v3782 = vrot.slane %v3213, 5
    %v3783 = vsel %vm790, %v3781, %v3782
    %v3784 = vrot.slane %v3700, 5
    %v3785 = vrot.slane %v3784, 4
    %v3786 = vrot.slane %v3215, 5
    %v3787 = vsel %vm790, %v3785, %v3786
    %v3788 = vrot.slane %v3701, 5
    %v3789 = vrot.slane %v3788, 4
    %v3790 = vrot.slane %v3217, 5
    %v3791 = vsel %vm790, %v3789, %v3790
    %v3792 = vrot.slane %v3702, 5
    %v3793 = vrot.slane %v3792, 4
    %v3794 = vrot.slane %v3219, 5
    %v3795 = vsel %vm790, %v3793, %v3794
    %v3796 = vrot.slane %v3703, 5
    %v3797 = vrot.slane %v3796, 4
    %v3798 = vrot.slane %v3221, 5
    %v3799 = vsel %vm790, %v3797, %v3798
    %s3800 = scalar_lea.vmem [#allocation2], 1792
    %v3801 = vld [vmem:[%s3800] sm:$0xff]
    %v3802 = vld [vmem:[%s3800 + $0x8] sm:$0xff]
    %v3803 = vld [vmem:[%s3800 + $0x10] sm:$0xff]
    %v3804 = vld [vmem:[%s3800 + $0x18] sm:$0xff]
    %v3805 = vld [vmem:[%s3800 + $0x20] sm:$0xff]
    %v3806 = vld [vmem:[%s3800 + $0x28] sm:$0xff]
    %v3807 = vld [vmem:[%s3800 + $0x30] sm:$0xff]
    %v3808 = vld [vmem:[%s3800 + $0x38] sm:$0xff]
    %v3809 = vld [vmem:[%s3800 + $0x40] sm:$0xff]
    %v3810 = vld [vmem:[%s3800 + $0x48] sm:$0xff]
    %v3811 = vld [vmem:[%s3800 + $0x50] sm:$0xff]
    %v3812 = vld [vmem:[%s3800 + $0x58] sm:$0xff]
    %v3813 = vld [vmem:[%s3800 + $0x60] sm:$0xff]
    %v3814 = vld [vmem:[%s3800 + $0x68] sm:$0xff]
    %v3815 = vld [vmem:[%s3800 + $0x70] sm:$0xff]
    %v3816 = vld [vmem:[%s3800 + $0x78] sm:$0xff]
    %v3817 = vld [vmem:[%s3800 + $0x80] sm:$0xff]
    %v3818 = vld [vmem:[%s3800 + $0x88] sm:$0xff]
    %v3819 = vld [vmem:[%s3800 + $0x90] sm:$0xff]
    %v3820 = vld [vmem:[%s3800 + $0x98] sm:$0xff]
    %v3821 = vld [vmem:[%s3800 + $0xa0] sm:$0xff]
    %v3822 = vld [vmem:[%s3800 + $0xa8] sm:$0xff]
    %v3823 = vld [vmem:[%s3800 + $0xb0] sm:$0xff]
    %v3824 = vld [vmem:[%s3800 + $0xb8] sm:$0xff]
    %v3825 = vld [vmem:[%s3800 + $0xc0] sm:$0xff]
    %v3826 = vld [vmem:[%s3800 + $0xc8] sm:$0xff]
    %v3827 = vld [vmem:[%s3800 + $0xd0] sm:$0xff]
    %v3828 = vld [vmem:[%s3800 + $0xd8] sm:$0xff]
    %v3829 = vld [vmem:[%s3800 + $0xe0] sm:$0xff]
    %v3830 = vld [vmem:[%s3800 + $0xe8] sm:$0xff]
    %v3831 = vld [vmem:[%s3800 + $0xf0] sm:$0xff]
    %v3832 = vld [vmem:[%s3800 + $0xf8] sm:$0xff]
    %v3833 = vunpack.c.l.b16 %v3739
    %v3834 = vunpack.c.h.b16 %v3739
    %v3835 = vunpack.c.l.b16 %v3743
    %v3836 = vunpack.c.h.b16 %v3743
    %v3837 = vunpack.c.l.b16 %v3747
    %v3838 = vunpack.c.h.b16 %v3747
    %v3839 = vunpack.c.l.b16 %v3751
    %v3840 = vunpack.c.h.b16 %v3751
    %v3841 = vunpack.c.l.b16 %v3755
    %v3842 = vunpack.c.h.b16 %v3755
    %v3843 = vunpack.c.l.b16 %v3759
    %v3844 = vunpack.c.h.b16 %v3759
    %v3845 = vunpack.c.l.b16 %v3763
    %v3846 = vunpack.c.h.b16 %v3763
    %v3847 = vunpack.c.l.b16 %v3767
    %v3848 = vunpack.c.h.b16 %v3767
    %v3849 = vunpack.c.l.b16 %v3771
    %v3850 = vunpack.c.h.b16 %v3771
    %v3851 = vunpack.c.l.b16 %v3775
    %v3852 = vunpack.c.h.b16 %v3775
    %v3853 = vunpack.c.l.b16 %v3779
    %v3854 = vunpack.c.h.b16 %v3779
    %v3855 = vunpack.c.l.b16 %v3783
    %v3856 = vunpack.c.h.b16 %v3783
    %v3857 = vunpack.c.l.b16 %v3787
    %v3858 = vunpack.c.h.b16 %v3787
    %v3859 = vunpack.c.l.b16 %v3791
    %v3860 = vunpack.c.h.b16 %v3791
    %v3861 = vunpack.c.l.b16 %v3795
    %v3862 = vunpack.c.h.b16 %v3795
    %v3863 = vunpack.c.l.b16 %v3799
    %v3864 = vunpack.c.h.b16 %v3799
    %v3865 = vpack.c.b16 %v3835, %v3833
    %v3866 = vpack.c.b16 %v3836, %v3834
    %v3867 = vpack.c.b16 %v3839, %v3837
    %v3868 = vpack.c.b16 %v3840, %v3838
    %v3869 = vpack.c.b16 %v3843, %v3841
    %v3870 = vpack.c.b16 %v3844, %v3842
    %v3871 = vpack.c.b16 %v3847, %v3845
    %v3872 = vpack.c.b16 %v3848, %v3846
    %v3873 = vpack.c.b16 %v3851, %v3849
    %v3874 = vpack.c.b16 %v3852, %v3850
    %v3875 = vpack.c.b16 %v3855, %v3853
    %v3876 = vpack.c.b16 %v3856, %v3854
    %v3877 = vpack.c.b16 %v3859, %v3857
    %v3878 = vpack.c.b16 %v3860, %v3858
    %v3879 = vpack.c.b16 %v3863, %v3861
    %v3880 = vpack.c.b16 %v3864, %v3862
    %3897 = vmatprep.subr.bf16.mxu0 %v3802
    %3898 = vmatpush1.bf16.msra.mxu0 %v3801
    %3899 = vmatprep.subr.bf16.mxu0 %v3804
    %3900 = vmatpush1.bf16.msra.mxu0 %v3803
    %3901 = vmatprep.subr.bf16.mxu0 %v3806
    %3902 = vmatpush1.bf16.msra.mxu0 %v3805
    %3903 = vmatprep.subr.bf16.mxu0 %v3808
    %3904 = vmatpush1.bf16.msra.mxu0 %v3807
    %3905 = vmatprep.subr.bf16.mxu0 %v3810
    %3906 = vmatpush1.bf16.msra.mxu0 %v3809
    %3907 = vmatprep.subr.bf16.mxu0 %v3812
    %3908 = vmatpush1.bf16.msra.mxu0 %v3811
    %3909 = vmatprep.subr.bf16.mxu0 %v3814
    %3910 = vmatpush1.bf16.msra.mxu0 %v3813
    %3911 = vmatprep.subr.bf16.mxu0 %v3816
    %3912 = vmatpush1.bf16.msra.mxu0 %v3815
    %3913 = vmatprep.subr.bf16.mxu0 %v3818
    %3914 = vmatpush1.bf16.msra.mxu0 %v3817
    %3915 = vmatprep.subr.bf16.mxu0 %v3820
    %3916 = vmatpush1.bf16.msra.mxu0 %v3819
    %3917 = vmatprep.subr.bf16.mxu0 %v3822
    %3918 = vmatpush1.bf16.msra.mxu0 %v3821
    %3919 = vmatprep.subr.bf16.mxu0 %v3824
    %3920 = vmatpush1.bf16.msra.mxu0 %v3823
    %3921 = vmatprep.subr.bf16.mxu0 %v3826
    %3922 = vmatpush1.bf16.msra.mxu0 %v3825
    %3923 = vmatprep.subr.bf16.mxu0 %v3828
    %3924 = vmatpush1.bf16.msra.mxu0 %v3827
    %3925 = vmatprep.subr.bf16.mxu0 %v3830
    %3926 = vmatpush1.bf16.msra.mxu0 %v3829
    %3927 = vmatprep.subr.bf16.mxu0 %v3832
    %3928 = vmatpush1.bf16.msra.mxu0 %v3831
    %3929 = vmatprep.mubr.bf16.mxu0 %v3866
    %3930 = vmatmul.mubr.bf16.gmra.mrb[0].mxu0 %v3865
    %v3931 = vpop.f32.mrb[0].mxu0
    %v3932 = vadd.f32 0.0, %v3931
    %v3933 = vpop.f32.mrb[0].mxu0
    %v3934 = vadd.f32 0.0, %v3933
    %v3935 = vpop.f32.mrb[0].mxu0
    %v3936 = vadd.f32 0.0, %v3935
    %v3937 = vpop.f32.mrb[0].mxu0
    %v3938 = vadd.f32 0.0, %v3937
    %3939 = vmatprep.mubr.bf16.mxu0 %v3868
    %3940 = vmatmul.mubr.bf16.gmra.mrb[0].mxu0 %v3867
    %v3941 = vpop.f32.mrb[0].mxu0
    %v3942 = vadd.f32 0.0, %v3941
    %v3943 = vpop.f32.mrb[0].mxu0
    %v3944 = vadd.f32 0.0, %v3943
    %v3945 = vpop.f32.mrb[0].mxu0
    %v3946 = vadd.f32 0.0, %v3945
    %v3947 = vpop.f32.mrb[0].mxu0
    %v3948 = vadd.f32 0.0, %v3947
    %3949 = vmatprep.mubr.bf16.mxu0 %v3870
    %3950 = vmatmul.mubr.bf16.gmra.mrb[0].mxu0 %v3869
    %v3951 = vpop.f32.mrb[0].mxu0
    %v3952 = vadd.f32 0.0, %v3951
    %v3953 = vpop.f32.mrb[0].mxu0
    %v3954 = vadd.f32 0.0, %v3953
    %v3955 = vpop.f32.mrb[0].mxu0
    %v3956 = vadd.f32 0.0, %v3955
    %v3957 = vpop.f32.mrb[0].mxu0
    %v3958 = vadd.f32 0.0, %v3957
    %3959 = vmatprep.mubr.bf16.mxu0 %v3872
    %3960 = vmatmul.mubr.bf16.gmra.mrb[0].mxu0 %v3871
    %v3961 = vpop.f32.mrb[0].mxu0
    %v3962 = vadd.f32 0.0, %v3961
    %v3963 = vpop.f32.mrb[0].mxu0
    %v3964 = vadd.f32 0.0, %v3963
    %v3965 = vpop.f32.mrb[0].mxu0
    %v3966 = vadd.f32 0.0, %v3965
    %v3967 = vpop.f32.mrb[0].mxu0
    %v3968 = vadd.f32 0.0, %v3967
    %3969 = vmatprep.mubr.bf16.mxu0 %v3874
    %3970 = vmatmul.mubr.bf16.gmra.mrb[0].mxu0 %v3873
    %v3971 = vpop.f32.mrb[0].mxu0
    %v3972 = vadd.f32 0.0, %v3971
    %v3973 = vpop.f32.mrb[0].mxu0
    %v3974 = vadd.f32 0.0, %v3973
    %v3975 = vpop.f32.mrb[0].mxu0
    %v3976 = vadd.f32 0.0, %v3975
    %v3977 = vpop.f32.mrb[0].mxu0
    %v3978 = vadd.f32 0.0, %v3977
    %3979 = vmatprep.mubr.bf16.mxu0 %v3876
    %3980 = vmatmul.mubr.bf16.gmra.mrb[0].mxu0 %v3875
    %v3981 = vpop.f32.mrb[0].mxu0
    %v3982 = vadd.f32 0.0, %v3981
    %v3983 = vpop.f32.mrb[0].mxu0
    %v3984 = vadd.f32 0.0, %v3983
    %v3985 = vpop.f32.mrb[0].mxu0
    %v3986 = vadd.f32 0.0, %v3985
    %v3987 = vpop.f32.mrb[0].mxu0
    %v3988 = vadd.f32 0.0, %v3987
    %3989 = vmatprep.mubr.bf16.mxu0 %v3878
    %3990 = vmatmul.mubr.bf16.gmra.mrb[0].mxu0 %v3877
    %v3991 = vpop.f32.mrb[0].mxu0
    %v3992 = vadd.f32 0.0, %v3991
    %v3993 = vpop.f32.mrb[0].mxu0
    %v3994 = vadd.f32 0.0, %v3993
    %v3995 = vpop.f32.mrb[0].mxu0
    %v3996 = vadd.f32 0.0, %v3995
    %v3997 = vpop.f32.mrb[0].mxu0
    %v3998 = vadd.f32 0.0, %v3997
    %3999 = vmatprep.mubr.bf16.mxu0 %v3880
    %4000 = vmatmul.mubr.bf16.gmra.mrb[0].mxu0 %v3879
    %v4001 = vpop.f32.mrb[0].mxu0
    %v4002 = vadd.f32 0.0, %v4001
    %v4003 = vpop.f32.mrb[0].mxu0
    %v4004 = vadd.f32 0.0, %v4003
    %v4005 = vpop.f32.mrb[0].mxu0
    %v4006 = vadd.f32 0.0, %v4005
    %v4007 = vpop.f32.mrb[0].mxu0
    %v4008 = vadd.f32 0.0, %v4007
    %4009 = vdwg.mxu0
    %v4010 = vadd.f32 %v3656, %v3932
    %v4011 = vadd.f32 %v3657, %v3934
    %v4012 = vadd.f32 %v3658, %v3936
    %v4013 = vadd.f32 %v3659, %v3938
    %v4014 = vadd.f32 %v3660, %v3942
    %v4015 = vadd.f32 %v3661, %v3944
    %v4016 = vadd.f32 %v3662, %v3946
    %v4017 = vadd.f32 %v3663, %v3948
    %v4018 = vadd.f32 %v3664, %v3952
    %v4019 = vadd.f32 %v3665, %v3954
    %v4020 = vadd.f32 %v3666, %v3956
    %v4021 = vadd.f32 %v3667, %v3958
    %v4022 = vadd.f32 %v3668, %v3962
    %v4023 = vadd.f32 %v3669, %v3964
    %v4024 = vadd.f32 %v3670, %v3966
    %v4025 = vadd.f32 %v3671, %v3968
    %v4026 = vadd.f32 %v3672, %v3972
    %v4027 = vadd.f32 %v3673, %v3974
    %v4028 = vadd.f32 %v3674, %v3976
    %v4029 = vadd.f32 %v3675, %v3978
    %v4030 = vadd.f32 %v3676, %v3982
    %v4031 = vadd.f32 %v3677, %v3984
    %v4032 = vadd.f32 %v3678, %v3986
    %v4033 = vadd.f32 %v3679, %v3988
    %v4034 = vadd.f32 %v3680, %v3992
    %v4035 = vadd.f32 %v3681, %v3994
    %v4036 = vadd.f32 %v3682, %v3996
    %v4037 = vadd.f32 %v3683, %v3998
    %v4038 = vadd.f32 %v3684, %v4002
    %v4039 = vadd.f32 %v3685, %v4004
    %v4040 = vadd.f32 %v3686, %v4006
    %v4041 = vadd.f32 %v3687, %v4008
    %v4042 = vld [vmem:[%s3189 + $0x8] sm:$0x33]
    %v4043 = vld [vmem:[%s3189 + $0x18] sm:$0x33]
    %v4044 = vld [vmem:[%s3189 + $0x28] sm:$0x33]
    %v4045 = vld [vmem:[%s3189 + $0x38] sm:$0x33]
    %v4046 = vld [vmem:[%s3189 + $0x48] sm:$0x33]
    %v4047 = vld [vmem:[%s3189 + $0x58] sm:$0x33]
    %v4048 = vld [vmem:[%s3189 + $0x68] sm:$0x33]
    %v4049 = vld [vmem:[%s3189 + $0x78] sm:$0x33]
    %v4050 = vld [vmem:[%s3189 + $0xa8] sm:$0x33]
    %v4051 = vld [vmem:[%s3189 + $0xb8] sm:$0x33]
    %v4052 = vld [vmem:[%s3189 + $0xc8] sm:$0x33]
    %v4053 = vld [vmem:[%s3189 + $0xd8] sm:$0x33]
    %v4054 = vld [vmem:[%s3189 + $0xe8] sm:$0x33]
    %v4055 = vld [vmem:[%s3189 + $0xf8] sm:$0x33]
    %v4056 = vld [vmem:[%s3189 + $0x108] sm:$0x33]
    %v4057 = vld [vmem:[%s3189 + $0x118] sm:$0x33]
    %v4059 = vshrl.u32 %v3688, 16
    %v4061 = vrot.slane %v4059, 5
    %v4062 = vshll.u32 %v3688, 16
    %v4064 = vrot.slane %v4062, 6
    %v4065 = vor.u32 %v4061, %v4064
    %v4066 = vrot.slane %v4065, 4
    %v4068 = vshrl.u32 %v4042, 16
    %v4070 = vrot.slane %v4068, 5
    %v4071 = vshll.u32 %v4042, 16
    %v4073 = vrot.slane %v4071, 6
    %v4074 = vor.u32 %v4070, %v4073
    %v4075 = vsel %vm1260, %v4066, %v4074
    %v4077 = vshrl.u32 %v3689, 16
    %v4079 = vrot.slane %v4077, 5
    %v4080 = vshll.u32 %v3689, 16
    %v4082 = vrot.slane %v4080, 6
    %v4083 = vor.u32 %v4079, %v4082
    %v4084 = vrot.slane %v4083, 4
    %v4086 = vshrl.u32 %v4043, 16
    %v4088 = vrot.slane %v4086, 5
    %v4089 = vshll.u32 %v4043, 16
    %v4091 = vrot.slane %v4089, 6
    %v4092 = vor.u32 %v4088, %v4091
    %v4093 = vsel %vm1260, %v4084, %v4092
    %v4095 = vshrl.u32 %v3690, 16
    %v4097 = vrot.slane %v4095, 5
    %v4098 = vshll.u32 %v3690, 16
    %v4100 = vrot.slane %v4098, 6
    %v4101 = vor.u32 %v4097, %v4100
    %v4102 = vrot.slane %v4101, 4
    %v4104 = vshrl.u32 %v4044, 16
    %v4106 = vrot.slane %v4104, 5
    %v4107 = vshll.u32 %v4044, 16
    %v4109 = vrot.slane %v4107, 6
    %v4110 = vor.u32 %v4106, %v4109
    %v4111 = vsel %vm1260, %v4102, %v4110
    %v4113 = vshrl.u32 %v3691, 16
    %v4115 = vrot.slane %v4113, 5
    %v4116 = vshll.u32 %v3691, 16
    %v4118 = vrot.slane %v4116, 6
    %v4119 = vor.u32 %v4115, %v4118
    %v4120 = vrot.slane %v4119, 4
    %v4122 = vshrl.u32 %v4045, 16
    %v4124 = vrot.slane %v4122, 5
    %v4125 = vshll.u32 %v4045, 16
    %v4127 = vrot.slane %v4125, 6
    %v4128 = vor.u32 %v4124, %v4127
    %v4129 = vsel %vm1260, %v4120, %v4128
    %v4131 = vshrl.u32 %v3692, 16
    %v4133 = vrot.slane %v4131, 5
    %v4134 = vshll.u32 %v3692, 16
    %v4136 = vrot.slane %v4134, 6
    %v4137 = vor.u32 %v4133, %v4136
    %v4138 = vrot.slane %v4137, 4
    %v4140 = vshrl.u32 %v4046, 16
    %v4142 = vrot.slane %v4140, 5
    %v4143 = vshll.u32 %v4046, 16
    %v4145 = vrot.slane %v4143, 6
    %v4146 = vor.u32 %v4142, %v4145
    %v4147 = vsel %vm1260, %v4138, %v4146
    %v4149 = vshrl.u32 %v3693, 16
    %v4151 = vrot.slane %v4149, 5
    %v4152 = vshll.u32 %v3693, 16
    %v4154 = vrot.slane %v4152, 6
    %v4155 = vor.u32 %v4151, %v4154
    %v4156 = vrot.slane %v4155, 4
    %v4158 = vshrl.u32 %v4047, 16
    %v4160 = vrot.slane %v4158, 5
    %v4161 = vshll.u32 %v4047, 16
    %v4163 = vrot.slane %v4161, 6
    %v4164 = vor.u32 %v4160, %v4163
    %v4165 = vsel %vm1260, %v4156, %v4164
    %v4167 = vshrl.u32 %v3694, 16
    %v4169 = vrot.slane %v4167, 5
    %v4170 = vshll.u32 %v3694, 16
    %v4172 = vrot.slane %v4170, 6
    %v4173 = vor.u32 %v4169, %v4172
    %v4174 = vrot.slane %v4173, 4
    %v4176 = vshrl.u32 %v4048, 16
    %v4178 = vrot.slane %v4176, 5
    %v4179 = vshll.u32 %v4048, 16
    %v4181 = vrot.slane %v4179, 6
    %v4182 = vor.u32 %v4178, %v4181
    %v4183 = vsel %vm1260, %v4174, %v4182
    %v4185 = vshrl.u32 %v3695, 16
    %v4187 = vrot.slane %v4185, 5
    %v4188 = vshll.u32 %v3695, 16
    %v4190 = vrot.slane %v4188, 6
    %v4191 = vor.u32 %v4187, %v4190
    %v4192 = vrot.slane %v4191, 4
    %v4194 = vshrl.u32 %v4049, 16
    %v4196 = vrot.slane %v4194, 5
    %v4197 = vshll.u32 %v4049, 16
    %v4199 = vrot.slane %v4197, 6
    %v4200 = vor.u32 %v4196, %v4199
    %v4201 = vsel %vm1260, %v4192, %v4200
    %v4203 = vshrl.u32 %v3696, 16
    %v4205 = vrot.slane %v4203, 5
    %v4206 = vshll.u32 %v3696, 16
    %v4208 = vrot.slane %v4206, 6
    %v4209 = vor.u32 %v4205, %v4208
    %v4210 = vrot.slane %v4209, 4
    %v4212 = vshrl.u32 %v4050, 16
    %v4214 = vrot.slane %v4212, 5
    %v4215 = vshll.u32 %v4050, 16
    %v4217 = vrot.slane %v4215, 6
    %v4218 = vor.u32 %v4214, %v4217
    %v4219 = vsel %vm1260, %v4210, %v4218
    %v4221 = vshrl.u32 %v3697, 16
    %v4223 = vrot.slane %v4221, 5
    %v4224 = vshll.u32 %v3697, 16
    %v4226 = vrot.slane %v4224, 6
    %v4227 = vor.u32 %v4223, %v4226
    %v4228 = vrot.slane %v4227, 4
    %v4230 = vshrl.u32 %v4051, 16
    %v4232 = vrot.slane %v4230, 5
    %v4233 = vshll.u32 %v4051, 16
    %v4235 = vrot.slane %v4233, 6
    %v4236 = vor.u32 %v4232, %v4235
    %v4237 = vsel %vm1260, %v4228, %v4236
    %v4239 = vshrl.u32 %v3698, 16
    %v4241 = vrot.slane %v4239, 5
    %v4242 = vshll.u32 %v3698, 16
    %v4244 = vrot.slane %v4242, 6
    %v4245 = vor.u32 %v4241, %v4244
    %v4246 = vrot.slane %v4245, 4
    %v4248 = vshrl.u32 %v4052, 16
    %v4250 = vrot.slane %v4248, 5
    %v4251 = vshll.u32 %v4052, 16
    %v4253 = vrot.slane %v4251, 6
    %v4254 = vor.u32 %v4250, %v4253
    %v4255 = vsel %vm1260, %v4246, %v4254
    %v4257 = vshrl.u32 %v3699, 16
    %v4259 = vrot.slane %v4257, 5
    %v4260 = vshll.u32 %v3699, 16
    %v4262 = vrot.slane %v4260, 6
    %v4263 = vor.u32 %v4259, %v4262
    %v4264 = vrot.slane %v4263, 4
    %v4266 = vshrl.u32 %v4053, 16
    %v4268 = vrot.slane %v4266, 5
    %v4269 = vshll.u32 %v4053, 16
    %v4271 = vrot.slane %v4269, 6
    %v4272 = vor.u32 %v4268, %v4271
    %v4273 = vsel %vm1260, %v4264, %v4272
    %v4275 = vshrl.u32 %v3700, 16
    %v4277 = vrot.slane %v4275, 5
    %v4278 = vshll.u32 %v3700, 16
    %v4280 = vrot.slane %v4278, 6
    %v4281 = vor.u32 %v4277, %v4280
    %v4282 = vrot.slane %v4281, 4
    %v4284 = vshrl.u32 %v4054, 16
    %v4286 = vrot.slane %v4284, 5
    %v4287 = vshll.u32 %v4054, 16
    %v4289 = vrot.slane %v4287, 6
    %v4290 = vor.u32 %v4286, %v4289
    %v4291 = vsel %vm1260, %v4282, %v4290
    %v4293 = vshrl.u32 %v3701, 16
    %v4295 = vrot.slane %v4293, 5
    %v4296 = vshll.u32 %v3701, 16
    %v4298 = vrot.slane %v4296, 6
    %v4299 = vor.u32 %v4295, %v4298
    %v4300 = vrot.slane %v4299, 4
    %v4302 = vshrl.u32 %v4055, 16
    %v4304 = vrot.slane %v4302, 5
    %v4305 = vshll.u32 %v4055, 16
    %v4307 = vrot.slane %v4305, 6
    %v4308 = vor.u32 %v4304, %v4307
    %v4309 = vsel %vm1260, %v4300, %v4308
    %v4311 = vshrl.u32 %v3702, 16
    %v4313 = vrot.slane %v4311, 5
    %v4314 = vshll.u32 %v3702, 16
    %v4316 = vrot.slane %v4314, 6
    %v4317 = vor.u32 %v4313, %v4316
    %v4318 = vrot.slane %v4317, 4
    %v4320 = vshrl.u32 %v4056, 16
    %v4322 = vrot.slane %v4320, 5
    %v4323 = vshll.u32 %v4056, 16
    %v4325 = vrot.slane %v4323, 6
    %v4326 = vor.u32 %v4322, %v4325
    %v4327 = vsel %vm1260, %v4318, %v4326
    %v4329 = vshrl.u32 %v3703, 16
    %v4331 = vrot.slane %v4329, 5
    %v4332 = vshll.u32 %v3703, 16
    %v4334 = vrot.slane %v4332, 6
    %v4335 = vor.u32 %v4331, %v4334
    %v4336 = vrot.slane %v4335, 4
    %v4338 = vshrl.u32 %v4057, 16
    %v4340 = vrot.slane %v4338, 5
    %v4341 = vshll.u32 %v4057, 16
    %v4343 = vrot.slane %v4341, 6
    %v4344 = vor.u32 %v4340, %v4343
    %v4345 = vsel %vm1260, %v4336, %v4344
    %s4346 = scalar_lea.vmem [#allocation2], 2048
    %v4347 = vld [vmem:[%s4346] sm:$0xff]
    %v4348 = vld [vmem:[%s4346 + $0x8] sm:$0xff]
    %v4349 = vld [vmem:[%s4346 + $0x10] sm:$0xff]
    %v4350 = vld [vmem:[%s4346 + $0x18] sm:$0xff]
    %v4351 = vld [vmem:[%s4346 + $0x20] sm:$0xff]
    %v4352 = vld [vmem:[%s4346 + $0x28] sm:$0xff]
    %v4353 = vld [vmem:[%s4346 + $0x30] sm:$0xff]
    %v4354 = vld [vmem:[%s4346 + $0x38] sm:$0xff]
    %v4355 = vld [vmem:[%s4346 + $0x40] sm:$0xff]
    %v4356 = vld [vmem:[%s4346 + $0x48] sm:$0xff]
    %v4357 = vld [vmem:[%s4346 + $0x50] sm:$0xff]
    %v4358 = vld [vmem:[%s4346 + $0x58] sm:$0xff]
    %v4359 = vld [vmem:[%s4346 + $0x60] sm:$0xff]
    %v4360 = vld [vmem:[%s4346 + $0x68] sm:$0xff]
    %v4361 = vld [vmem:[%s4346 + $0x70] sm:$0xff]
    %v4362 = vld [vmem:[%s4346 + $0x78] sm:$0xff]
    %v4363 = vld [vmem:[%s4346 + $0x80] sm:$0xff]
    %v4364 = vld [vmem:[%s4346 + $0x88] sm:$0xff]
    %v4365 = vld [vmem:[%s4346 + $0x90] sm:$0xff]
    %v4366 = vld [vmem:[%s4346 + $0x98] sm:$0xff]
    %v4367 = vld [vmem:[%s4346 + $0xa0] sm:$0xff]
    %v4368 = vld [vmem:[%s4346 + $0xa8] sm:$0xff]
    %v4369 = vld [vmem:[%s4346 + $0xb0] sm:$0xff]
    %v4370 = vld [vmem:[%s4346 + $0xb8] sm:$0xff]
    %v4371 = vld [vmem:[%s4346 + $0xc0] sm:$0xff]
    %v4372 = vld [vmem:[%s4346 + $0xc8] sm:$0xff]
    %v4373 = vld [vmem:[%s4346 + $0xd0] sm:$0xff]
    %v4374 = vld [vmem:[%s4346 + $0xd8] sm:$0xff]
    %v4375 = vld [vmem:[%s4346 + $0xe0] sm:$0xff]
    %v4376 = vld [vmem:[%s4346 + $0xe8] sm:$0xff]
    %v4377 = vld [vmem:[%s4346 + $0xf0] sm:$0xff]
    %v4378 = vld [vmem:[%s4346 + $0xf8] sm:$0xff]
    %v4379 = vunpack.c.l.b16 %v4075
    %v4380 = vunpack.c.h.b16 %v4075
    %v4381 = vunpack.c.l.b16 %v4093
    %v4382 = vunpack.c.h.b16 %v4093
    %v4383 = vunpack.c.l.b16 %v4111
    %v4384 = vunpack.c.h.b16 %v4111
    %v4385 = vunpack.c.l.b16 %v4129
    %v4386 = vunpack.c.h.b16 %v4129
    %v4387 = vunpack.c.l.b16 %v4147
    %v4388 = vunpack.c.h.b16 %v4147
    %v4389 = vunpack.c.l.b16 %v4165
    %v4390 = vunpack.c.h.b16 %v4165
    %v4391 = vunpack.c.l.b16 %v4183
    %v4392 = vunpack.c.h.b16 %v4183
    %v4393 = vunpack.c.l.b16 %v4201
    %v4394 = vunpack.c.h.b16 %v4201
    %v4395 = vunpack.c.l.b16 %v4219
    %v4396 = vunpack.c.h.b16 %v4219
    %v4397 = vunpack.c.l.b16 %v4237
    %v4398 = vunpack.c.h.b16 %v4237
    %v4399 = vunpack.c.l.b16 %v4255
    %v4400 = vunpack.c.h.b16 %v4255
    %v4401 = vunpack.c.l.b16 %v4273
    %v4402 = vunpack.c.h.b16 %v4273
    %v4403 = vunpack.c.l.b16 %v4291
    %v4404 = vunpack.c.h.b16 %v4291
    %v4405 = vunpack.c.l.b16 %v4309
    %v4406 = vunpack.c.h.b16 %v4309
    %v4407 = vunpack.c.l.b16 %v4327
    %v4408 = vunpack.c.h.b16 %v4327
    %v4409 = vunpack.c.l.b16 %v4345
    %v4410 = vunpack.c.h.b16 %v4345
    %v4411 = vpack.c.b16 %v4381, %v4379
    %v4412 = vpack.c.b16 %v4382, %v4380
    %v4413 = vpack.c.b16 %v4385, %v4383
    %v4414 = vpack.c.b16 %v4386, %v4384
    %v4415 = vpack.c.b16 %v4389, %v4387
    %v4416 = vpack.c.b16 %v4390, %v4388
    %v4417 = vpack.c.b16 %v4393, %v4391
    %v4418 = vpack.c.b16 %v4394, %v4392
    %v4419 = vpack.c.b16 %v4397, %v4395
    %v4420 = vpack.c.b16 %v4398, %v4396
    %v4421 = vpack.c.b16 %v4401, %v4399
    %v4422 = vpack.c.b16 %v4402, %v4400
    %v4423 = vpack.c.b16 %v4405, %v4403
    %v4424 = vpack.c.b16 %v4406, %v4404
    %v4425 = vpack.c.b16 %v4409, %v4407
    %v4426 = vpack.c.b16 %v4410, %v4408
    %4443 = vmatprep.subr.bf16.mxu0 %v4348
    %4444 = vmatpush1.bf16.msra.mxu0 %v4347
    %4445 = vmatprep.subr.bf16.mxu0 %v4350
    %4446 = vmatpush1.bf16.msra.mxu0 %v4349
    %4447 = vmatprep.subr.bf16.mxu0 %v4352
    %4448 = vmatpush1.bf16.msra.mxu0 %v4351
    %4449 = vmatprep.subr.bf16.mxu0 %v4354
    %4450 = vmatpush1.bf16.msra.mxu0 %v4353
    %4451 = vmatprep.subr.bf16.mxu0 %v4356
    %4452 = vmatpush1.bf16.msra.mxu0 %v4355
    %4453 = vmatprep.subr.bf16.mxu0 %v4358
    %4454 = vmatpush1.bf16.msra.mxu0 %v4357
    %4455 = vmatprep.subr.bf16.mxu0 %v4360
    %4456 = vmatpush1.bf16.msra.mxu0 %v4359
    %4457 = vmatprep.subr.bf16.mxu0 %v4362
    %4458 = vmatpush1.bf16.msra.mxu0 %v4361
    %4459 = vmatprep.subr.bf16.mxu0 %v4364
    %4460 = vmatpush1.bf16.msra.mxu0 %v4363
    %4461 = vmatprep.subr.bf16.mxu0 %v4366
    %4462 = vmatpush1.bf16.msra.mxu0 %v4365
    %4463 = vmatprep.subr.bf16.mxu0 %v4368
    %4464 = vmatpush1.bf16.msra.mxu0 %v4367
    %4465 = vmatprep.subr.bf16.mxu0 %v4370
    %4466 = vmatpush1.bf16.msra.mxu0 %v4369
    %4467 = vmatprep.subr.bf16.mxu0 %v4372
    %4468 = vmatpush1.bf16.msra.mxu0 %v4371
    %4469 = vmatprep.subr.bf16.mxu0 %v4374
    %4470 = vmatpush1.bf16.msra.mxu0 %v4373
    %4471 = vmatprep.subr.bf16.mxu0 %v4376
    %4472 = vmatpush1.bf16.msra.mxu0 %v4375
    %4473 = vmatprep.subr.bf16.mxu0 %v4378
    %4474 = vmatpush1.bf16.msra.mxu0 %v4377
    %4475 = vmatprep.mubr.bf16.mxu0 %v4412
    %4476 = vmatmul.mubr.bf16.gmra.mrb[0].mxu0 %v4411
    %v4477 = vpop.f32.mrb[0].mxu0
    %v4478 = vadd.f32 0.0, %v4477
    %v4479 = vpop.f32.mrb[0].mxu0
    %v4480 = vadd.f32 0.0, %v4479
    %v4481 = vpop.f32.mrb[0].mxu0
    %v4482 = vadd.f32 0.0, %v4481
    %v4483 = vpop.f32.mrb[0].mxu0
    %v4484 = vadd.f32 0.0, %v4483
    %4485 = vmatprep.mubr.bf16.mxu0 %v4414
    %4486 = vmatmul.mubr.bf16.gmra.mrb[0].mxu0 %v4413
    %v4487 = vpop.f32.mrb[0].mxu0
    %v4488 = vadd.f32 0.0, %v4487
    %v4489 = vpop.f32.mrb[0].mxu0
    %v4490 = vadd.f32 0.0, %v4489
    %v4491 = vpop.f32.mrb[0].mxu0
    %v4492 = vadd.f32 0.0, %v4491
    %v4493 = vpop.f32.mrb[0].mxu0
    %v4494 = vadd.f32 0.0, %v4493
    %4495 = vmatprep.mubr.bf16.mxu0 %v4416
    %4496 = vmatmul.mubr.bf16.gmra.mrb[0].mxu0 %v4415
    %v4497 = vpop.f32.mrb[0].mxu0
    %v4498 = vadd.f32 0.0, %v4497
    %v4499 = vpop.f32.mrb[0].mxu0
    %v4500 = vadd.f32 0.0, %v4499
    %v4501 = vpop.f32.mrb[0].mxu0
    %v4502 = vadd.f32 0.0, %v4501
    %v4503 = vpop.f32.mrb[0].mxu0
    %v4504 = vadd.f32 0.0, %v4503
    %4505 = vmatprep.mubr.bf16.mxu0 %v4418
    %4506 = vmatmul.mubr.bf16.gmra.mrb[0].mxu0 %v4417
    %v4507 = vpop.f32.mrb[0].mxu0
    %v4508 = vadd.f32 0.0, %v4507
    %v4509 = vpop.f32.mrb[0].mxu0
    %v4510 = vadd.f32 0.0, %v4509
    %v4511 = vpop.f32.mrb[0].mxu0
    %v4512 = vadd.f32 0.0, %v4511
    %v4513 = vpop.f32.mrb[0].mxu0
    %v4514 = vadd.f32 0.0, %v4513
    %4515 = vmatprep.mubr.bf16.mxu0 %v4420
    %4516 = vmatmul.mubr.bf16.gmra.mrb[0].mxu0 %v4419
    %v4517 = vpop.f32.mrb[0].mxu0
    %v4518 = vadd.f32 0.0, %v4517
    %v4519 = vpop.f32.mrb[0].mxu0
    %v4520 = vadd.f32 0.0, %v4519
    %v4521 = vpop.f32.mrb[0].mxu0
    %v4522 = vadd.f32 0.0, %v4521
    %v4523 = vpop.f32.mrb[0].mxu0
    %v4524 = vadd.f32 0.0, %v4523
    %4525 = vmatprep.mubr.bf16.mxu0 %v4422
    %4526 = vmatmul.mubr.bf16.gmra.mrb[0].mxu0 %v4421
    %v4527 = vpop.f32.mrb[0].mxu0
    %v4528 = vadd.f32 0.0, %v4527
    %v4529 = vpop.f32.mrb[0].mxu0
    %v4530 = vadd.f32 0.0, %v4529
    %v4531 = vpop.f32.mrb[0].mxu0
    %v4532 = vadd.f32 0.0, %v4531
    %v4533 = vpop.f32.mrb[0].mxu0
    %v4534 = vadd.f32 0.0, %v4533
    %4535 = vmatprep.mubr.bf16.mxu0 %v4424
    %4536 = vmatmul.mubr.bf16.gmra.mrb[0].mxu0 %v4423
    %v4537 = vpop.f32.mrb[0].mxu0
    %v4538 = vadd.f32 0.0, %v4537
    %v4539 = vpop.f32.mrb[0].mxu0
    %v4540 = vadd.f32 0.0, %v4539
    %v4541 = vpop.f32.mrb[0].mxu0
    %v4542 = vadd.f32 0.0, %v4541
    %v4543 = vpop.f32.mrb[0].mxu0
    %v4544 = vadd.f32 0.0, %v4543
    %4545 = vmatprep.mubr.bf16.mxu0 %v4426
    %4546 = vmatmul.mubr.bf16.gmra.mrb[0].mxu0 %v4425
    %v4547 = vpop.f32.mrb[0].mxu0
    %v4548 = vadd.f32 0.0, %v4547
    %v4549 = vpop.f32.mrb[0].mxu0
    %v4550 = vadd.f32 0.0, %v4549
    %v4551 = vpop.f32.mrb[0].mxu0
    %v4552 = vadd.f32 0.0, %v4551
    %v4553 = vpop.f32.mrb[0].mxu0
    %v4554 = vadd.f32 0.0, %v4553
    %4555 = vdwg.mxu0
    %v4556 = vadd.f32 %v4010, %v4478
    %v4557 = vadd.f32 %v4011, %v4480
    %v4558 = vadd.f32 %v4012, %v4482
    %v4559 = vadd.f32 %v4013, %v4484
    %v4560 = vadd.f32 %v4014, %v4488
    %v4561 = vadd.f32 %v4015, %v4490
    %v4562 = vadd.f32 %v4016, %v4492
    %v4563 = vadd.f32 %v4017, %v4494
    %v4564 = vadd.f32 %v4018, %v4498
    %v4565 = vadd.f32 %v4019, %v4500
    %v4566 = vadd.f32 %v4020, %v4502
    %v4567 = vadd.f32 %v4021, %v4504
    %v4568 = vadd.f32 %v4022, %v4508
    %v4569 = vadd.f32 %v4023, %v4510
    %v4570 = vadd.f32 %v4024, %v4512
    %v4571 = vadd.f32 %v4025, %v4514
    %v4572 = vadd.f32 %v4026, %v4518
    %v4573 = vadd.f32 %v4027, %v4520
    %v4574 = vadd.f32 %v4028, %v4522
    %v4575 = vadd.f32 %v4029, %v4524
    %v4576 = vadd.f32 %v4030, %v4528
    %v4577 = vadd.f32 %v4031, %v4530
    %v4578 = vadd.f32 %v4032, %v4532
    %v4579 = vadd.f32 %v4033, %v4534
    %v4580 = vadd.f32 %v4034, %v4538
    %v4581 = vadd.f32 %v4035, %v4540
    %v4582 = vadd.f32 %v4036, %v4542
    %v4583 = vadd.f32 %v4037, %v4544
    %v4584 = vadd.f32 %v4038, %v4548
    %v4585 = vadd.f32 %v4039, %v4550
    %v4586 = vadd.f32 %v4040, %v4552
    %v4587 = vadd.f32 %v4041, %v4554
    %v4588 = vadd.f32 %v4556, %v4558
    %v4589 = vadd.f32 %v4588, %v4560
    %v4590 = vadd.f32 %v4589, %v4562
    %v4591 = vadd.f32 %v4590, %v4564
    %v4592 = vadd.f32 %v4591, %v4566
    %v4593 = vadd.f32 %v4592, %v4568
    %v4594 = vadd.f32 %v4593, %v4570
    %v4595 = vadd.f32 %v4594, %v4572
    %v4596 = vadd.f32 %v4595, %v4574
    %v4597 = vadd.f32 %v4596, %v4576
    %v4598 = vadd.f32 %v4597, %v4578
    %v4599 = vadd.f32 %v4598, %v4580
    %v4600 = vadd.f32 %v4599, %v4582
    %v4601 = vadd.f32 %v4600, %v4584
    %v4602 = vadd.f32 %v4601, %v4586
    %v4603 = vrot.slane %v4602, 4
    %v4604 = vadd.f32 %v4602, %v4603
    %v4605 = vrot.slane %v4604, 2
    %v4606 = vadd.f32 %v4604, %v4605
    %v4607 = vrot.slane %v4606, 1
    %v4608 = vadd.f32 %v4606, %v4607
    %v4609 = vadd.f32 %v4557, %v4559
    %v4610 = vadd.f32 %v4609, %v4561
    %v4611 = vadd.f32 %v4610, %v4563
    %v4612 = vadd.f32 %v4611, %v4565
    %v4613 = vadd.f32 %v4612, %v4567
    %v4614 = vadd.f32 %v4613, %v4569
    %v4615 = vadd.f32 %v4614, %v4571
    %v4616 = vadd.f32 %v4615, %v4573
    %v4617 = vadd.f32 %v4616, %v4575
    %v4618 = vadd.f32 %v4617, %v4577
    %v4619 = vadd.f32 %v4618, %v4579
    %v4620 = vadd.f32 %v4619, %v4581
    %v4621 = vadd.f32 %v4620, %v4583
    %v4622 = vadd.f32 %v4621, %v4585
    %v4623 = vadd.f32 %v4622, %v4587
    %v4624 = vrot.slane %v4623, 4
    %v4625 = vadd.f32 %v4623, %v4624
    %v4626 = vrot.slane %v4625, 2
    %v4627 = vadd.f32 %v4625, %v4626
    %v4628 = vrot.slane %v4627, 1
    %v4629 = vadd.f32 %v4627, %v4628
    %v4630 = vmul.f32 %v4556, %v4556
    %v4631 = vmul.f32 %v4557, %v4557
    %v4632 = vmul.f32 %v4558, %v4558
    %v4633 = vmul.f32 %v4559, %v4559
    %v4634 = vmul.f32 %v4560, %v4560
    %v4635 = vmul.f32 %v4561, %v4561
    %v4636 = vmul.f32 %v4562, %v4562
    %v4637 = vmul.f32 %v4563, %v4563
    %v4638 = vmul.f32 %v4564, %v4564
    %v4639 = vmul.f32 %v4565, %v4565
    %v4640 = vmul.f32 %v4566, %v4566
    %v4641 = vmul.f32 %v4567, %v4567
    %v4642 = vmul.f32 %v4568, %v4568
    %v4643 = vmul.f32 %v4569, %v4569
    %v4644 = vmul.f32 %v4570, %v4570
    %v4645 = vmul.f32 %v4571, %v4571
    %v4646 = vmul.f32 %v4572, %v4572
    %v4647 = vmul.f32 %v4573, %v4573
    %v4648 = vmul.f32 %v4574, %v4574
    %v4649 = vmul.f32 %v4575, %v4575
    %v4650 = vmul.f32 %v4576, %v4576
    %v4651 = vmul.f32 %v4577, %v4577
    %v4652 = vmul.f32 %v4578, %v4578
    %v4653 = vmul.f32 %v4579, %v4579
    %v4654 = vmul.f32 %v4580, %v4580
    %v4655 = vmul.f32 %v4581, %v4581
    %v4656 = vmul.f32 %v4582, %v4582
    %v4657 = vmul.f32 %v4583, %v4583
    %v4658 = vmul.f32 %v4584, %v4584
    %v4659 = vmul.f32 %v4585, %v4585
    %v4660 = vmul.f32 %v4586, %v4586
    %v4661 = vmul.f32 %v4587, %v4587
    %v4662 = vadd.f32 %v4630, %v4632
    %v4663 = vadd.f32 %v4662, %v4634
    %v4664 = vadd.f32 %v4663, %v4636
    %v4665 = vadd.f32 %v4664, %v4638
    %v4666 = vadd.f32 %v4665, %v4640
    %v4667 = vadd.f32 %v4666, %v4642
    %v4668 = vadd.f32 %v4667, %v4644
    %v4669 = vadd.f32 %v4668, %v4646
    %v4670 = vadd.f32 %v4669, %v4648
    %v4671 = vadd.f32 %v4670, %v4650
    %v4672 = vadd.f32 %v4671, %v4652
    %v4673 = vadd.f32 %v4672, %v4654
    %v4674 = vadd.f32 %v4673, %v4656
    %v4675 = vadd.f32 %v4674, %v4658
    %v4676 = vadd.f32 %v4675, %v4660
    %v4677 = vrot.slane %v4676, 4
    %v4678 = vadd.f32 %v4676, %v4677
    %v4679 = vrot.slane %v4678, 2
    %v4680 = vadd.f32 %v4678, %v4679
    %v4681 = vrot.slane %v4680, 1
    %v4682 = vadd.f32 %v4680, %v4681
    %v4683 = vadd.f32 %v4631, %v4633
    %v4684 = vadd.f32 %v4683, %v4635
    %v4685 = vadd.f32 %v4684, %v4637
    %v4686 = vadd.f32 %v4685, %v4639
    %v4687 = vadd.f32 %v4686, %v4641
    %v4688 = vadd.f32 %v4687, %v4643
    %v4689 = vadd.f32 %v4688, %v4645
    %v4690 = vadd.f32 %v4689, %v4647
    %v4691 = vadd.f32 %v4690, %v4649
    %v4692 = vadd.f32 %v4691, %v4651
    %v4693 = vadd.f32 %v4692, %v4653
    %v4694 = vadd.f32 %v4693, %v4655
    %v4695 = vadd.f32 %v4694, %v4657
    %v4696 = vadd.f32 %v4695, %v4659
    %v4697 = vadd.f32 %v4696, %v4661
    %v4698 = vrot.slane %v4697, 4
    %v4699 = vadd.f32 %v4697, %v4698
    %v4700 = vrot.slane %v4699, 2
    %v4701 = vadd.f32 %v4699, %v4700
    %v4702 = vrot.slane %v4701, 1
    %v4703 = vadd.f32 %v4701, %v4702
    %v4704 = vmul.f32 %v4608, 0.0078125
    %v4705 = vmul.f32 %v4629, 0.0078125
    %v4706 = vmul.f32 %v4682, 0.0078125
    %v4707 = vmul.f32 %v4703, 0.0078125
    %v4708 = vmul.f32 %v4704, %v4704
    %v4709 = vmul.f32 %v4705, %v4705
    %v4710 = vsub.f32 %v4706, %v4708
    %v4711 = vsub.f32 %v4707, %v4709
    %v4712 = vmax.f32 %v4710, 0.0
    %v4713 = vmax.f32 %v4711, 0.0
    %v4714 = vadd.f32 %v4712, 1e-05
    %v4715 = vadd.f32 %v4713, 1e-05
    %v4716 = vrsqrt.pop %v4714
    %v4717 = vrsqrt.pop %v4715
    %v4718 = vld [vmem:[#allocation9] sm:$0x3]
    %v4720 = vlaneseq
    %v4721 = vshrl.u32 %v4720, 7
    %v4722 = vsub.s32 0, %v4721
    %v4723 = vrot.slane %v4718, %v4722
    %v4724 = vlaneseq
    %v4725 = vshrl.u32 %v4724, 7
    %v4726 = vsub.s32 1, %v4725
    %v4727 = vrot.slane %v4718, %v4726
    %v4730 = vmul.f32 %v4716, %v4723
    %v4731 = vmul.f32 %v4717, %v4727
    %v4732 = vld [vmem:[#allocation11] sm:$0x3]
    %v4733 = vmul.f32 %v4704, %v4730
    %v4734 = vmul.f32 %v4705, %v4731
    %v4737 = vcombine.low %v4733, %v4734
    %v4739 = vunpack.c.l.s4 1966171168
    %v4740 = vunpack.c.0.s8 %v4739
    %v4741 = vlaneseq
    %v4742 = vshrl.u32 %v4741, 7
    %v4743 = vsub.s32 %v4740, %v4742
    %v4744 = vrot.slane %v4737, %v4743
    %v4746 = vunpack.c.l.s4 1966171168
    %v4747 = vunpack.c.0.s8 %v4746
    %v4748 = vlaneseq
    %v4749 = vshrl.u32 %v4748, 7
    %v4750 = vsub.s32 %v4747, %v4749
    %v4751 = vrot.slane %v4744, %v4750
    %v4753 = vsub.f32 %v4732, %v4751
    %v4754 = vlaneseq
    %v4755 = vshrl.u32 %v4754, 7
    %v4756 = vsub.s32 0, %v4755
    %v4757 = vrot.slane %v4730, %v4756
    %v4758 = vlaneseq
    %v4759 = vshrl.u32 %v4758, 7
    %v4760 = vsub.s32 0, %v4759
    %v4761 = vrot.slane %v4731, %v4760
    %v4762 = vmul.f32 %v4556, %v4757
    %v4763 = vmul.f32 %v4557, %v4761
    %v4764 = vmul.f32 %v4558, %v4757
    %v4765 = vmul.f32 %v4559, %v4761
    %v4766 = vmul.f32 %v4560, %v4757
    %v4767 = vmul.f32 %v4561, %v4761
    %v4768 = vmul.f32 %v4562, %v4757
    %v4769 = vmul.f32 %v4563, %v4761
    %v4770 = vmul.f32 %v4564, %v4757
    %v4771 = vmul.f32 %v4565, %v4761
    %v4772 = vmul.f32 %v4566, %v4757
    %v4773 = vmul.f32 %v4567, %v4761
    %v4774 = vmul.f32 %v4568, %v4757
    %v4775 = vmul.f32 %v4569, %v4761
    %v4776 = vmul.f32 %v4570, %v4757
    %v4777 = vmul.f32 %v4571, %v4761
    %v4778 = vmul.f32 %v4572, %v4757
    %v4779 = vmul.f32 %v4573, %v4761
    %v4780 = vmul.f32 %v4574, %v4757
    %v4781 = vmul.f32 %v4575, %v4761
    %v4782 = vmul.f32 %v4576, %v4757
    %v4783 = vmul.f32 %v4577, %v4761
    %v4784 = vmul.f32 %v4578, %v4757
    %v4785 = vmul.f32 %v4579, %v4761
    %v4786 = vmul.f32 %v4580, %v4757
    %v4787 = vmul.f32 %v4581, %v4761
    %v4788 = vmul.f32 %v4582, %v4757
    %v4789 = vmul.f32 %v4583, %v4761
    %v4790 = vmul.f32 %v4584, %v4757
    %v4791 = vmul.f32 %v4585, %v4761
    %v4792 = vmul.f32 %v4586, %v4757
    %v4793 = vmul.f32 %v4587, %v4761
    %v4795 = vlaneseq
    %v4796 = vshrl.u32 %v4795, 7
    %v4797 = vsub.s32 0, %v4796
    %v4798 = vrot.slane %v4753, %v4797
    %v4799 = vlaneseq
    %v4800 = vshrl.u32 %v4799, 7
    %v4801 = vsub.s32 1, %v4800
    %v4802 = vrot.slane %v4753, %v4801
    %v4805 = vadd.f32 %v4762, %v4798
    %v4806 = vadd.f32 %v4763, %v4802
    %v4807 = vadd.f32 %v4764, %v4798
    %v4808 = vadd.f32 %v4765, %v4802
    %v4809 = vadd.f32 %v4766, %v4798
    %v4810 = vadd.f32 %v4767, %v4802
    %v4811 = vadd.f32 %v4768, %v4798
    %v4812 = vadd.f32 %v4769, %v4802
    %v4813 = vadd.f32 %v4770, %v4798
    %v4814 = vadd.f32 %v4771, %v4802
    %v4815 = vadd.f32 %v4772, %v4798
    %v4816 = vadd.f32 %v4773, %v4802
    %v4817 = vadd.f32 %v4774, %v4798
    %v4818 = vadd.f32 %v4775, %v4802
    %v4819 = vadd.f32 %v4776, %v4798
    %v4820 = vadd.f32 %v4777, %v4802
    %v4821 = vadd.f32 %v4778, %v4798
    %v4822 = vadd.f32 %v4779, %v4802
    %v4823 = vadd.f32 %v4780, %v4798
    %v4824 = vadd.f32 %v4781, %v4802
    %v4825 = vadd.f32 %v4782, %v4798
    %v4826 = vadd.f32 %v4783, %v4802
    %v4827 = vadd.f32 %v4784, %v4798
    %v4828 = vadd.f32 %v4785, %v4802
    %v4829 = vadd.f32 %v4786, %v4798
    %v4830 = vadd.f32 %v4787, %v4802
    %v4831 = vadd.f32 %v4788, %v4798
    %v4832 = vadd.f32 %v4789, %v4802
    %v4833 = vadd.f32 %v4790, %v4798
    %v4834 = vadd.f32 %v4791, %v4802
    %v4835 = vadd.f32 %v4792, %v4798
    %v4836 = vadd.f32 %v4793, %v4802
    %v4837 = vmax.f32 %v4805, 0.0
    %v4838 = vmax.f32 %v4806, 0.0
    %v4839 = vmax.f32 %v4807, 0.0
    %v4840 = vmax.f32 %v4808, 0.0
    %v4841 = vmax.f32 %v4809, 0.0
    %v4842 = vmax.f32 %v4810, 0.0
    %v4843 = vmax.f32 %v4811, 0.0
    %v4844 = vmax.f32 %v4812, 0.0
    %v4845 = vmax.f32 %v4813, 0.0
    %v4846 = vmax.f32 %v4814, 0.0
    %v4847 = vmax.f32 %v4815, 0.0
    %v4848 = vmax.f32 %v4816, 0.0
    %v4849 = vmax.f32 %v4817, 0.0
    %v4850 = vmax.f32 %v4818, 0.0
    %v4851 = vmax.f32 %v4819, 0.0
    %v4852 = vmax.f32 %v4820, 0.0
    %v4853 = vmax.f32 %v4821, 0.0
    %v4854 = vmax.f32 %v4822, 0.0
    %v4855 = vmax.f32 %v4823, 0.0
    %v4856 = vmax.f32 %v4824, 0.0
    %v4857 = vmax.f32 %v4825, 0.0
    %v4858 = vmax.f32 %v4826, 0.0
    %v4859 = vmax.f32 %v4827, 0.0
    %v4860 = vmax.f32 %v4828, 0.0
    %v4861 = vmax.f32 %v4829, 0.0
    %v4862 = vmax.f32 %v4830, 0.0
    %v4863 = vmax.f32 %v4831, 0.0
    %v4864 = vmax.f32 %v4832, 0.0
    %v4865 = vmax.f32 %v4833, 0.0
    %v4866 = vmax.f32 %v4834, 0.0
    %v4867 = vmax.f32 %v4835, 0.0
    %v4868 = vmax.f32 %v4836, 0.0
    %v4869 = vpack.c.bf16 %v4837, %v4837
    %v4870 = vpack.c.bf16 %v4838, %v4838
    %v4871 = vpack.c.bf16 %v4839, %v4839
    %v4872 = vpack.c.bf16 %v4840, %v4840
    %v4873 = vpack.c.bf16 %v4841, %v4841
    %v4874 = vpack.c.bf16 %v4842, %v4842
    %v4875 = vpack.c.bf16 %v4843, %v4843
    %v4876 = vpack.c.bf16 %v4844, %v4844
    %v4877 = vpack.c.bf16 %v4845, %v4845
    %v4878 = vpack.c.bf16 %v4846, %v4846
    %v4879 = vpack.c.bf16 %v4847, %v4847
    %v4880 = vpack.c.bf16 %v4848, %v4848
    %v4881 = vpack.c.bf16 %v4849, %v4849
    %v4882 = vpack.c.bf16 %v4850, %v4850
    %v4883 = vpack.c.bf16 %v4851, %v4851
    %v4884 = vpack.c.bf16 %v4852, %v4852
    %v4885 = vpack.c.bf16 %v4853, %v4853
    %v4886 = vpack.c.bf16 %v4854, %v4854
    %v4887 = vpack.c.bf16 %v4855, %v4855
    %v4888 = vpack.c.bf16 %v4856, %v4856
    %v4889 = vpack.c.bf16 %v4857, %v4857
    %v4890 = vpack.c.bf16 %v4858, %v4858
    %v4891 = vpack.c.bf16 %v4859, %v4859
    %v4892 = vpack.c.bf16 %v4860, %v4860
    %v4893 = vpack.c.bf16 %v4861, %v4861
    %v4894 = vpack.c.bf16 %v4862, %v4862
    %v4895 = vpack.c.bf16 %v4863, %v4863
    %v4896 = vpack.c.bf16 %v4864, %v4864
    %v4897 = vpack.c.bf16 %v4865, %v4865
    %v4898 = vpack.c.bf16 %v4866, %v4866
    %v4899 = vpack.c.bf16 %v4867, %v4867
    %v4900 = vpack.c.bf16 %v4868, %v4868
    %v4933 = vunpack.c.l.b16 %v4869
    %v4934 = vunpack.c.l.b16 %v4870
    %v4935 = vunpack.c.l.b16 %v4871
    %v4936 = vunpack.c.l.b16 %v4872
    %v4937 = vunpack.c.l.b16 %v4873
    %v4938 = vunpack.c.l.b16 %v4874
    %v4939 = vunpack.c.l.b16 %v4875
    %v4940 = vunpack.c.l.b16 %v4876
    %v4941 = vunpack.c.l.b16 %v4877
    %v4942 = vunpack.c.l.b16 %v4878
    %v4943 = vunpack.c.l.b16 %v4879
    %v4944 = vunpack.c.l.b16 %v4880
    %v4945 = vunpack.c.l.b16 %v4881
    %v4946 = vunpack.c.l.b16 %v4882
    %v4947 = vunpack.c.l.b16 %v4883
    %v4948 = vunpack.c.l.b16 %v4884
    %v4949 = vunpack.c.l.b16 %v4885
    %v4950 = vunpack.c.l.b16 %v4886
    %v4951 = vunpack.c.l.b16 %v4887
    %v4952 = vunpack.c.l.b16 %v4888
    %v4953 = vunpack.c.l.b16 %v4889
    %v4954 = vunpack.c.l.b16 %v4890
    %v4955 = vunpack.c.l.b16 %v4891
    %v4956 = vunpack.c.l.b16 %v4892
    %v4957 = vunpack.c.l.b16 %v4893
    %v4958 = vunpack.c.l.b16 %v4894
    %v4959 = vunpack.c.l.b16 %v4895
    %v4960 = vunpack.c.l.b16 %v4896
    %v4961 = vunpack.c.l.b16 %v4897
    %v4962 = vunpack.c.l.b16 %v4898
    %v4963 = vunpack.c.l.b16 %v4899
    %v4964 = vunpack.c.l.b16 %v4900
    %v4965 = vpack.c.b16 %v4934, %v4933
    %v4966 = vpack.c.b16 %v4936, %v4935
    %v4967 = vpack.c.b16 %v4938, %v4937
    %v4968 = vpack.c.b16 %v4940, %v4939
    %v4969 = vpack.c.b16 %v4942, %v4941
    %v4970 = vpack.c.b16 %v4944, %v4943
    %v4971 = vpack.c.b16 %v4946, %v4945
    %v4972 = vpack.c.b16 %v4948, %v4947
    %v4973 = vpack.c.b16 %v4950, %v4949
    %v4974 = vpack.c.b16 %v4952, %v4951
    %v4975 = vpack.c.b16 %v4954, %v4953
    %v4976 = vpack.c.b16 %v4956, %v4955
    %v4977 = vpack.c.b16 %v4958, %v4957
    %v4978 = vpack.c.b16 %v4960, %v4959
    %v4979 = vpack.c.b16 %v4962, %v4961
    %v4980 = vpack.c.b16 %v4964, %v4963
    %v4981 = vrot.slane %v4965, 7
    %v4982 = vrot.slane %v4981, 4
    %v4983 = vrot.slane %v4966, 7
    %v4984 = vrot.slane %v4983, 4
    %v4985 = vrot.slane %v4967, 7
    %v4986 = vrot.slane %v4985, 4
    %v4987 = vrot.slane %v4968, 7
    %v4988 = vrot.slane %v4987, 4
    %v4989 = vrot.slane %v4969, 7
    %v4990 = vrot.slane %v4989, 4
    %v4991 = vrot.slane %v4970, 7
    %v4992 = vrot.slane %v4991, 4
    %v4993 = vrot.slane %v4971, 7
    %v4994 = vrot.slane %v4993, 4
    %v4995 = vrot.slane %v4972, 7
    %v4996 = vrot.slane %v4995, 4
    %v4997 = vrot.slane %v4973, 7
    %v4998 = vrot.slane %v4997, 4
    %v4999 = vrot.slane %v4974, 7
    %v5000 = vrot.slane %v4999, 4
    %v5001 = vrot.slane %v4975, 7
    %v5002 = vrot.slane %v5001, 4
    %v5003 = vrot.slane %v4976, 7
    %v5004 = vrot.slane %v5003, 4
    %v5005 = vrot.slane %v4977, 7
    %v5006 = vrot.slane %v5005, 4
    %v5007 = vrot.slane %v4978, 7
    %v5008 = vrot.slane %v5007, 4
    %v5009 = vrot.slane %v4979, 7
    %v5010 = vrot.slane %v5009, 4
    %v5011 = vrot.slane %v4980, 7
    %v5012 = vrot.slane %v5011, 4
    %5045 = vst [vmem:[%s411] sm:$0xee] %v4981
    %5046 = vst [vmem:[%s411 + $0x8] sm:$0x11] %v4982
    %5047 = vst [vmem:[%s411 + $0x10] sm:$0xee] %v4983
    %5048 = vst [vmem:[%s411 + $0x18] sm:$0x11] %v4984
    %5049 = vst [vmem:[%s411 + $0x20] sm:$0xee] %v4985
    %5050 = vst [vmem:[%s411 + $0x28] sm:$0x11] %v4986
    %5051 = vst [vmem:[%s411 + $0x30] sm:$0xee] %v4987
    %5052 = vst [vmem:[%s411 + $0x38] sm:$0x11] %v4988
    %5053 = vst [vmem:[%s411 + $0x40] sm:$0xee] %v4989
    %5054 = vst [vmem:[%s411 + $0x48] sm:$0x11] %v4990
    %5055 = vst [vmem:[%s411 + $0x50] sm:$0xee] %v4991
    %5056 = vst [vmem:[%s411 + $0x58] sm:$0x11] %v4992
    %5057 = vst [vmem:[%s411 + $0x60] sm:$0xee] %v4993
    %5058 = vst [vmem:[%s411 + $0x68] sm:$0x11] %v4994
    %5059 = vst [vmem:[%s411 + $0x70] sm:$0xee] %v4995
    %5060 = vst [vmem:[%s411 + $0x78] sm:$0x11] %v4996
    %5061 = vst [vmem:[%s411 + $0xa0] sm:$0xee] %v4997
    %5062 = vst [vmem:[%s411 + $0xa8] sm:$0x11] %v4998
    %5063 = vst [vmem:[%s411 + $0xb0] sm:$0xee] %v4999
    %5064 = vst [vmem:[%s411 + $0xb8] sm:$0x11] %v5000
    %5065 = vst [vmem:[%s411 + $0xc0] sm:$0xee] %v5001
    %5066 = vst [vmem:[%s411 + $0xc8] sm:$0x11] %v5002
    %5067 = vst [vmem:[%s411 + $0xd0] sm:$0xee] %v5003
    %5068 = vst [vmem:[%s411 + $0xd8] sm:$0x11] %v5004
    %5069 = vst [vmem:[%s411 + $0xe0] sm:$0xee] %v5005
    %5070 = vst [vmem:[%s411 + $0xe8] sm:$0x11] %v5006
    %5071 = vst [vmem:[%s411 + $0xf0] sm:$0xee] %v5007
    %5072 = vst [vmem:[%s411 + $0xf8] sm:$0x11] %v5008
    %5073 = vst [vmem:[%s411 + $0x100] sm:$0xee] %v5009
    %5074 = vst [vmem:[%s411 + $0x108] sm:$0x11] %v5010
    %5075 = vst [vmem:[%s411 + $0x110] sm:$0xee] %v5011
    %5076 = vst [vmem:[%s411 + $0x118] sm:$0x11] %v5012
    %s5077 = sshll.u32 %s446, 4
    %5078 = dma.done %s119, %s5077
    %v5079 = vld [vmem:[#allocation4] sm:$0xff]
    %v5080 = vld [vmem:[#allocation4 + $0x8] sm:$0x11]
    %v5081 = vld [vmem:[#allocation4 + $0x10] sm:$0xff]
    %v5082 = vld [vmem:[#allocation4 + $0x18] sm:$0x11]
    %v5083 = vld [vmem:[#allocation4 + $0x20] sm:$0xff]
    %v5084 = vld [vmem:[#allocation4 + $0x28] sm:$0x11]
    %v5085 = vld [vmem:[#allocation4 + $0x30] sm:$0xff]
    %v5086 = vld [vmem:[#allocation4 + $0x38] sm:$0x11]
    %v5087 = vld [vmem:[#allocation4 + $0x40] sm:$0xff]
    %v5088 = vld [vmem:[#allocation4 + $0x48] sm:$0x11]
    %v5089 = vld [vmem:[#allocation4 + $0x50] sm:$0xff]
    %v5090 = vld [vmem:[#allocation4 + $0x58] sm:$0x11]
    %v5091 = vld [vmem:[#allocation4 + $0x60] sm:$0xff]
    %v5092 = vld [vmem:[#allocation4 + $0x68] sm:$0x11]
    %v5093 = vld [vmem:[#allocation4 + $0x70] sm:$0xff]
    %v5094 = vld [vmem:[#allocation4 + $0x78] sm:$0x11]
    %v5095 = vld [vmem:[#allocation4 + $0xa0] sm:$0xff]
    %v5096 = vld [vmem:[#allocation4 + $0xa8] sm:$0x11]
    %v5097 = vld [vmem:[#allocation4 + $0xb0] sm:$0xff]
    %v5098 = vld [vmem:[#allocation4 + $0xb8] sm:$0x11]
    %v5099 = vld [vmem:[#allocation4 + $0xc0] sm:$0xff]
    %v5100 = vld [vmem:[#allocation4 + $0xc8] sm:$0x11]
    %v5101 = vld [vmem:[#allocation4 + $0xd0] sm:$0xff]
    %v5102 = vld [vmem:[#allocation4 + $0xd8] sm:$0x11]
    %v5103 = vld [vmem:[#allocation4 + $0xe0] sm:$0xff]
    %v5104 = vld [vmem:[#allocation4 + $0xe8] sm:$0x11]
    %v5105 = vld [vmem:[#allocation4 + $0xf0] sm:$0xff]
    %v5106 = vld [vmem:[#allocation4 + $0xf8] sm:$0x11]
    %v5107 = vld [vmem:[#allocation4 + $0x100] sm:$0xff]
    %v5108 = vld [vmem:[#allocation4 + $0x108] sm:$0x11]
    %v5109 = vld [vmem:[#allocation4 + $0x110] sm:$0xff]
    %v5110 = vld [vmem:[#allocation4 + $0x118] sm:$0x11]
    %v5112 = vshrl.u32 %v5079, 16
    %v5114 = vrot.slane %v5112, 4
    %v5115 = vshll.u32 %v5079, 16
    %v5117 = vrot.slane %v5115, 5
    %v5118 = vor.u32 %v5114, %v5117
    %v5119 = vrot.slane %v5118, 4
    %v5121 = vshll.u32 %v5080, 16
    %v5123 = vrot.slane %v5121, 5
    %v5124 = vsel %vm483, %v5119, %v5123
    %v5126 = vshrl.u32 %v5081, 16
    %v5128 = vrot.slane %v5126, 4
    %v5129 = vshll.u32 %v5081, 16
    %v5131 = vrot.slane %v5129, 5
    %v5132 = vor.u32 %v5128, %v5131
    %v5133 = vrot.slane %v5132, 4
    %v5135 = vshll.u32 %v5082, 16
    %v5137 = vrot.slane %v5135, 5
    %v5138 = vsel %vm483, %v5133, %v5137
    %v5140 = vshrl.u32 %v5083, 16
    %v5142 = vrot.slane %v5140, 4
    %v5143 = vshll.u32 %v5083, 16
    %v5145 = vrot.slane %v5143, 5
    %v5146 = vor.u32 %v5142, %v5145
    %v5147 = vrot.slane %v5146, 4
    %v5149 = vshll.u32 %v5084, 16
    %v5151 = vrot.slane %v5149, 5
    %v5152 = vsel %vm483, %v5147, %v5151
    %v5154 = vshrl.u32 %v5085, 16
    %v5156 = vrot.slane %v5154, 4
    %v5157 = vshll.u32 %v5085, 16
    %v5159 = vrot.slane %v5157, 5
    %v5160 = vor.u32 %v5156, %v5159
    %v5161 = vrot.slane %v5160, 4
    %v5163 = vshll.u32 %v5086, 16
    %v5165 = vrot.slane %v5163, 5
    %v5166 = vsel %vm483, %v5161, %v5165
    %v5168 = vshrl.u32 %v5087, 16
    %v5170 = vrot.slane %v5168, 4
    %v5171 = vshll.u32 %v5087, 16
    %v5173 = vrot.slane %v5171, 5
    %v5174 = vor.u32 %v5170, %v5173
    %v5175 = vrot.slane %v5174, 4
    %v5177 = vshll.u32 %v5088, 16
    %v5179 = vrot.slane %v5177, 5
    %v5180 = vsel %vm483, %v5175, %v5179
    %v5182 = vshrl.u32 %v5089, 16
    %v5184 = vrot.slane %v5182, 4
    %v5185 = vshll.u32 %v5089, 16
    %v5187 = vrot.slane %v5185, 5
    %v5188 = vor.u32 %v5184, %v5187
    %v5189 = vrot.slane %v5188, 4
    %v5191 = vshll.u32 %v5090, 16
    %v5193 = vrot.slane %v5191, 5
    %v5194 = vsel %vm483, %v5189, %v5193
    %v5196 = vshrl.u32 %v5091, 16
    %v5198 = vrot.slane %v5196, 4
    %v5199 = vshll.u32 %v5091, 16
    %v5201 = vrot.slane %v5199, 5
    %v5202 = vor.u32 %v5198, %v5201
    %v5203 = vrot.slane %v5202, 4
    %v5205 = vshll.u32 %v5092, 16
    %v5207 = vrot.slane %v5205, 5
    %v5208 = vsel %vm483, %v5203, %v5207
    %v5210 = vshrl.u32 %v5093, 16
    %v5212 = vrot.slane %v5210, 4
    %v5213 = vshll.u32 %v5093, 16
    %v5215 = vrot.slane %v5213, 5
    %v5216 = vor.u32 %v5212, %v5215
    %v5217 = vrot.slane %v5216, 4
    %v5219 = vshll.u32 %v5094, 16
    %v5221 = vrot.slane %v5219, 5
    %v5222 = vsel %vm483, %v5217, %v5221
    %v5224 = vshrl.u32 %v5095, 16
    %v5226 = vrot.slane %v5224, 4
    %v5227 = vshll.u32 %v5095, 16
    %v5229 = vrot.slane %v5227, 5
    %v5230 = vor.u32 %v5226, %v5229
    %v5231 = vrot.slane %v5230, 4
    %v5233 = vshll.u32 %v5096, 16
    %v5235 = vrot.slane %v5233, 5
    %v5236 = vsel %vm483, %v5231, %v5235
    %v5238 = vshrl.u32 %v5097, 16
    %v5240 = vrot.slane %v5238, 4
    %v5241 = vshll.u32 %v5097, 16
    %v5243 = vrot.slane %v5241, 5
    %v5244 = vor.u32 %v5240, %v5243
    %v5245 = vrot.slane %v5244, 4
    %v5247 = vshll.u32 %v5098, 16
    %v5249 = vrot.slane %v5247, 5
    %v5250 = vsel %vm483, %v5245, %v5249
    %v5252 = vshrl.u32 %v5099, 16
    %v5254 = vrot.slane %v5252, 4
    %v5255 = vshll.u32 %v5099, 16
    %v5257 = vrot.slane %v5255, 5
    %v5258 = vor.u32 %v5254, %v5257
    %v5259 = vrot.slane %v5258, 4
    %v5261 = vshll.u32 %v5100, 16
    %v5263 = vrot.slane %v5261, 5
    %v5264 = vsel %vm483, %v5259, %v5263
    %v5266 = vshrl.u32 %v5101, 16
    %v5268 = vrot.slane %v5266, 4
    %v5269 = vshll.u32 %v5101, 16
    %v5271 = vrot.slane %v5269, 5
    %v5272 = vor.u32 %v5268, %v5271
    %v5273 = vrot.slane %v5272, 4
    %v5275 = vshll.u32 %v5102, 16
    %v5277 = vrot.slane %v5275, 5
    %v5278 = vsel %vm483, %v5273, %v5277
    %v5280 = vshrl.u32 %v5103, 16
    %v5282 = vrot.slane %v5280, 4
    %v5283 = vshll.u32 %v5103, 16
    %v5285 = vrot.slane %v5283, 5
    %v5286 = vor.u32 %v5282, %v5285
    %v5287 = vrot.slane %v5286, 4
    %v5289 = vshll.u32 %v5104, 16
    %v5291 = vrot.slane %v5289, 5
    %v5292 = vsel %vm483, %v5287, %v5291
    %v5294 = vshrl.u32 %v5105, 16
    %v5296 = vrot.slane %v5294, 4
    %v5297 = vshll.u32 %v5105, 16
    %v5299 = vrot.slane %v5297, 5
    %v5300 = vor.u32 %v5296, %v5299
    %v5301 = vrot.slane %v5300, 4
    %v5303 = vshll.u32 %v5106, 16
    %v5305 = vrot.slane %v5303, 5
    %v5306 = vsel %vm483, %v5301, %v5305
    %v5308 = vshrl.u32 %v5107, 16
    %v5310 = vrot.slane %v5308, 4
    %v5311 = vshll.u32 %v5107, 16
    %v5313 = vrot.slane %v5311, 5
    %v5314 = vor.u32 %v5310, %v5313
    %v5315 = vrot.slane %v5314, 4
    %v5317 = vshll.u32 %v5108, 16
    %v5319 = vrot.slane %v5317, 5
    %v5320 = vsel %vm483, %v5315, %v5319
    %v5322 = vshrl.u32 %v5109, 16
    %v5324 = vrot.slane %v5322, 4
    %v5325 = vshll.u32 %v5109, 16
    %v5327 = vrot.slane %v5325, 5
    %v5328 = vor.u32 %v5324, %v5327
    %v5329 = vrot.slane %v5328, 4
    %v5331 = vshll.u32 %v5110, 16
    %v5333 = vrot.slane %v5331, 5
    %v5334 = vsel %vm483, %v5329, %v5333
    %v5335 = vld [vmem:[#allocation3] sm:$0xff]
    %v5336 = vld [vmem:[#allocation3 + $0x8] sm:$0xff]
    %v5337 = vld [vmem:[#allocation3 + $0x10] sm:$0xff]
    %v5338 = vld [vmem:[#allocation3 + $0x18] sm:$0xff]
    %v5339 = vld [vmem:[#allocation3 + $0x20] sm:$0xff]
    %v5340 = vld [vmem:[#allocation3 + $0x28] sm:$0xff]
    %v5341 = vld [vmem:[#allocation3 + $0x30] sm:$0xff]
    %v5342 = vld [vmem:[#allocation3 + $0x38] sm:$0xff]
    %v5343 = vld [vmem:[#allocation3 + $0x40] sm:$0xff]
    %v5344 = vld [vmem:[#allocation3 + $0x48] sm:$0xff]
    %v5345 = vld [vmem:[#allocation3 + $0x50] sm:$0xff]
    %v5346 = vld [vmem:[#allocation3 + $0x58] sm:$0xff]
    %v5347 = vld [vmem:[#allocation3 + $0x60] sm:$0xff]
    %v5348 = vld [vmem:[#allocation3 + $0x68] sm:$0xff]
    %v5349 = vld [vmem:[#allocation3 + $0x70] sm:$0xff]
    %v5350 = vld [vmem:[#allocation3 + $0x78] sm:$0xff]
    %v5351 = vld [vmem:[#allocation3 + $0x80] sm:$0xff]
    %v5352 = vld [vmem:[#allocation3 + $0x88] sm:$0xff]
    %v5353 = vld [vmem:[#allocation3 + $0x90] sm:$0xff]
    %v5354 = vld [vmem:[#allocation3 + $0x98] sm:$0xff]
    %v5355 = vld [vmem:[#allocation3 + $0xa0] sm:$0xff]
    %v5356 = vld [vmem:[#allocation3 + $0xa8] sm:$0xff]
    %v5357 = vld [vmem:[#allocation3 + $0xb0] sm:$0xff]
    %v5358 = vld [vmem:[#allocation3 + $0xb8] sm:$0xff]
    %v5359 = vld [vmem:[#allocation3 + $0xc0] sm:$0xff]
    %v5360 = vld [vmem:[#allocation3 + $0xc8] sm:$0xff]
    %v5361 = vld [vmem:[#allocation3 + $0xd0] sm:$0xff]
    %v5362 = vld [vmem:[#allocation3 + $0xd8] sm:$0xff]
    %v5363 = vld [vmem:[#allocation3 + $0xe0] sm:$0xff]
    %v5364 = vld [vmem:[#allocation3 + $0xe8] sm:$0xff]
    %v5365 = vld [vmem:[#allocation3 + $0xf0] sm:$0xff]
    %v5366 = vld [vmem:[#allocation3 + $0xf8] sm:$0xff]
    %v5367 = vld [vmem:[#allocation4] sm:$0xee]
    %v5368 = vld [vmem:[#allocation4 + $0x10] sm:$0xee]
    %v5369 = vld [vmem:[#allocation4 + $0x20] sm:$0xee]
    %v5370 = vld [vmem:[#allocation4 + $0x30] sm:$0xee]
    %v5371 = vld [vmem:[#allocation4 + $0x40] sm:$0xee]
    %v5372 = vld [vmem:[#allocation4 + $0x50] sm:$0xee]
    %v5373 = vld [vmem:[#allocation4 + $0x60] sm:$0xee]
    %v5374 = vld [vmem:[#allocation4 + $0x70] sm:$0xee]
    %v5375 = vld [vmem:[#allocation4 + $0xa0] sm:$0xee]
    %v5376 = vld [vmem:[#allocation4 + $0xb0] sm:$0xee]
    %v5377 = vld [vmem:[#allocation4 + $0xc0] sm:$0xee]
    %v5378 = vld [vmem:[#allocation4 + $0xd0] sm:$0xee]
    %v5379 = vld [vmem:[#allocation4 + $0xe0] sm:$0xee]
    %v5380 = vld [vmem:[#allocation4 + $0xf0] sm:$0xee]
    %v5381 = vld [vmem:[#allocation4 + $0x100] sm:$0xee]
    %v5382 = vld [vmem:[#allocation4 + $0x110] sm:$0xee]
    %v5415 = vrot.slane %v5367, 5
    %v5416 = vrot.slane %v5415, 4
    %v5417 = vrot.slane %v5080, 5
    %v5418 = vsel %vm790, %v5416, %v5417
    %v5419 = vrot.slane %v5368, 5
    %v5420 = vrot.slane %v5419, 4
    %v5421 = vrot.slane %v5082, 5
    %v5422 = vsel %vm790, %v5420, %v5421
    %v5423 = vrot.slane %v5369, 5
    %v5424 = vrot.slane %v5423, 4
    %v5425 = vrot.slane %v5084, 5
    %v5426 = vsel %vm790, %v5424, %v5425
    %v5427 = vrot.slane %v5370, 5
    %v5428 = vrot.slane %v5427, 4
    %v5429 = vrot.slane %v5086, 5
    %v5430 = vsel %vm790, %v5428, %v5429
    %v5431 = vrot.slane %v5371, 5
    %v5432 = vrot.slane %v5431, 4
    %v5433 = vrot.slane %v5088, 5
    %v5434 = vsel %vm790, %v5432, %v5433
    %v5435 = vrot.slane %v5372, 5
    %v5436 = vrot.slane %v5435, 4
    %v5437 = vrot.slane %v5090, 5
    %v5438 = vsel %vm790, %v5436, %v5437
    %v5439 = vrot.slane %v5373, 5
    %v5440 = vrot.slane %v5439, 4
    %v5441 = vrot.slane %v5092, 5
    %v5442 = vsel %vm790, %v5440, %v5441
    %v5443 = vrot.slane %v5374, 5
    %v5444 = vrot.slane %v5443, 4
    %v5445 = vrot.slane %v5094, 5
    %v5446 = vsel %vm790, %v5444, %v5445
    %v5447 = vrot.slane %v5375, 5
    %v5448 = vrot.slane %v5447, 4
    %v5449 = vrot.slane %v5096, 5
    %v5450 = vsel %vm790, %v5448, %v5449
    %v5451 = vrot.slane %v5376, 5
    %v5452 = vrot.slane %v5451, 4
    %v5453 = vrot.slane %v5098, 5
    %v5454 = vsel %vm790, %v5452, %v5453
    %v5455 = vrot.slane %v5377, 5
    %v5456 = vrot.slane %v5455, 4
    %v5457 = vrot.slane %v5100, 5
    %v5458 = vsel %vm790, %v5456, %v5457
    %v5459 = vrot.slane %v5378, 5
    %v5460 = vrot.slane %v5459, 4
    %v5461 = vrot.slane %v5102, 5
    %v5462 = vsel %vm790, %v5460, %v5461
    %v5463 = vrot.slane %v5379, 5
    %v5464 = vrot.slane %v5463, 4
    %v5465 = vrot.slane %v5104, 5
    %v5466 = vsel %vm790, %v5464, %v5465
    %v5467 = vrot.slane %v5380, 5
    %v5468 = vrot.slane %v5467, 4
    %v5469 = vrot.slane %v5106, 5
    %v5470 = vsel %vm790, %v5468, %v5469
    %v5471 = vrot.slane %v5381, 5
    %v5472 = vrot.slane %v5471, 4
    %v5473 = vrot.slane %v5108, 5
    %v5474 = vsel %vm790, %v5472, %v5473
    %v5475 = vrot.slane %v5382, 5
    %v5476 = vrot.slane %v5475, 4
    %v5477 = vrot.slane %v5110, 5
    %v5478 = vsel %vm790, %v5476, %v5477
    %s5479 = scalar_lea.vmem [#allocation3], 256
    %v5480 = vld [vmem:[%s5479] sm:$0xff]
    %v5481 = vld [vmem:[%s5479 + $0x8] sm:$0xff]
    %v5482 = vld [vmem:[%s5479 + $0x10] sm:$0xff]
    %v5483 = vld [vmem:[%s5479 + $0x18] sm:$0xff]
    %v5484 = vld [vmem:[%s5479 + $0x20] sm:$0xff]
    %v5485 = vld [vmem:[%s5479 + $0x28] sm:$0xff]
    %v5486 = vld [vmem:[%s5479 + $0x30] sm:$0xff]
    %v5487 = vld [vmem:[%s5479 + $0x38] sm:$0xff]
    %v5488 = vld [vmem:[%s5479 + $0x40] sm:$0xff]
    %v5489 = vld [vmem:[%s5479 + $0x48] sm:$0xff]
    %v5490 = vld [vmem:[%s5479 + $0x50] sm:$0xff]
    %v5491 = vld [vmem:[%s5479 + $0x58] sm:$0xff]
    %v5492 = vld [vmem:[%s5479 + $0x60] sm:$0xff]
    %v5493 = vld [vmem:[%s5479 + $0x68] sm:$0xff]
    %v5494 = vld [vmem:[%s5479 + $0x70] sm:$0xff]
    %v5495 = vld [vmem:[%s5479 + $0x78] sm:$0xff]
    %v5496 = vld [vmem:[%s5479 + $0x80] sm:$0xff]
    %v5497 = vld [vmem:[%s5479 + $0x88] sm:$0xff]
    %v5498 = vld [vmem:[%s5479 + $0x90] sm:$0xff]
    %v5499 = vld [vmem:[%s5479 + $0x98] sm:$0xff]
    %v5500 = vld [vmem:[%s5479 + $0xa0] sm:$0xff]
    %v5501 = vld [vmem:[%s5479 + $0xa8] sm:$0xff]
    %v5502 = vld [vmem:[%s5479 + $0xb0] sm:$0xff]
    %v5503 = vld [vmem:[%s5479 + $0xb8] sm:$0xff]
    %v5504 = vld [vmem:[%s5479 + $0xc0] sm:$0xff]
    %v5505 = vld [vmem:[%s5479 + $0xc8] sm:$0xff]
    %v5506 = vld [vmem:[%s5479 + $0xd0] sm:$0xff]
    %v5507 = vld [vmem:[%s5479 + $0xd8] sm:$0xff]
    %v5508 = vld [vmem:[%s5479 + $0xe0] sm:$0xff]
    %v5509 = vld [vmem:[%s5479 + $0xe8] sm:$0xff]
    %v5510 = vld [vmem:[%s5479 + $0xf0] sm:$0xff]
    %v5511 = vld [vmem:[%s5479 + $0xf8] sm:$0xff]
    %v5512 = vunpack.c.l.b16 %v5418
    %v5513 = vunpack.c.h.b16 %v5418
    %v5514 = vunpack.c.l.b16 %v5422
    %v5515 = vunpack.c.h.b16 %v5422
    %v5516 = vunpack.c.l.b16 %v5426
    %v5517 = vunpack.c.h.b16 %v5426
    %v5518 = vunpack.c.l.b16 %v5430
    %v5519 = vunpack.c.h.b16 %v5430
    %v5520 = vunpack.c.l.b16 %v5434
    %v5521 = vunpack.c.h.b16 %v5434
    %v5522 = vunpack.c.l.b16 %v5438
    %v5523 = vunpack.c.h.b16 %v5438
    %v5524 = vunpack.c.l.b16 %v5442
    %v5525 = vunpack.c.h.b16 %v5442
    %v5526 = vunpack.c.l.b16 %v5446
    %v5527 = vunpack.c.h.b16 %v5446
    %v5528 = vunpack.c.l.b16 %v5450
    %v5529 = vunpack.c.h.b16 %v5450
    %v5530 = vunpack.c.l.b16 %v5454
    %v5531 = vunpack.c.h.b16 %v5454
    %v5532 = vunpack.c.l.b16 %v5458
    %v5533 = vunpack.c.h.b16 %v5458
    %v5534 = vunpack.c.l.b16 %v5462
    %v5535 = vunpack.c.h.b16 %v5462
    %v5536 = vunpack.c.l.b16 %v5466
    %v5537 = vunpack.c.h.b16 %v5466
    %v5538 = vunpack.c.l.b16 %v5470
    %v5539 = vunpack.c.h.b16 %v5470
    %v5540 = vunpack.c.l.b16 %v5474
    %v5541 = vunpack.c.h.b16 %v5474
    %v5542 = vunpack.c.l.b16 %v5478
    %v5543 = vunpack.c.h.b16 %v5478
    %v5544 = vpack.c.b16 %v5514, %v5512
    %v5545 = vpack.c.b16 %v5515, %v5513
    %v5546 = vpack.c.b16 %v5518, %v5516
    %v5547 = vpack.c.b16 %v5519, %v5517
    %v5548 = vpack.c.b16 %v5522, %v5520
    %v5549 = vpack.c.b16 %v5523, %v5521
    %v5550 = vpack.c.b16 %v5526, %v5524
    %v5551 = vpack.c.b16 %v5527, %v5525
    %v5552 = vpack.c.b16 %v5530, %v5528
    %v5553 = vpack.c.b16 %v5531, %v5529
    %v5554 = vpack.c.b16 %v5534, %v5532
    %v5555 = vpack.c.b16 %v5535, %v5533
    %v5556 = vpack.c.b16 %v5538, %v5536
    %v5557 = vpack.c.b16 %v5539, %v5537
    %v5558 = vpack.c.b16 %v5542, %v5540
    %v5559 = vpack.c.b16 %v5543, %v5541
    %5576 = vmatprep.subr.bf16.mxu0 %v5481
    %5577 = vmatpush1.bf16.msra.mxu0 %v5480
    %5578 = vmatprep.subr.bf16.mxu0 %v5483
    %5579 = vmatpush1.bf16.msra.mxu0 %v5482
    %5580 = vmatprep.subr.bf16.mxu0 %v5485
    %5581 = vmatpush1.bf16.msra.mxu0 %v5484
    %5582 = vmatprep.subr.bf16.mxu0 %v5487
    %5583 = vmatpush1.bf16.msra.mxu0 %v5486
    %5584 = vmatprep.subr.bf16.mxu0 %v5489
    %5585 = vmatpush1.bf16.msra.mxu0 %v5488
    %5586 = vmatprep.subr.bf16.mxu0 %v5491
    %5587 = vmatpush1.bf16.msra.mxu0 %v5490
    %5588 = vmatprep.subr.bf16.mxu0 %v5493
    %5589 = vmatpush1.bf16.msra.mxu0 %v5492
    %5590 = vmatprep.subr.bf16.mxu0 %v5495
    %5591 = vmatpush1.bf16.msra.mxu0 %v5494
    %5592 = vmatprep.subr.bf16.mxu0 %v5497
    %5593 = vmatpush1.bf16.msra.mxu0 %v5496
    %5594 = vmatprep.subr.bf16.mxu0 %v5499
    %5595 = vmatpush1.bf16.msra.mxu0 %v5498
    %5596 = vmatprep.subr.bf16.mxu0 %v5501
    %5597 = vmatpush1.bf16.msra.mxu0 %v5500
    %5598 = vmatprep.subr.bf16.mxu0 %v5503
    %5599 = vmatpush1.bf16.msra.mxu0 %v5502
    %5600 = vmatprep.subr.bf16.mxu0 %v5505
    %5601 = vmatpush1.bf16.msra.mxu0 %v5504
    %5602 = vmatprep.subr.bf16.mxu0 %v5507
    %5603 = vmatpush1.bf16.msra.mxu0 %v5506
    %5604 = vmatprep.subr.bf16.mxu0 %v5509
    %5605 = vmatpush1.bf16.msra.mxu0 %v5508
    %5606 = vmatprep.subr.bf16.mxu0 %v5511
    %5607 = vmatpush1.bf16.msra.mxu0 %v5510
    %5608 = vmatprep.mubr.bf16.mxu0 %v5545
    %5609 = vmatmul.mubr.bf16.gmra.mrb[0].mxu0 %v5544
    %v5610 = vpop.f32.mrb[0].mxu0
    %v5611 = vadd.f32 0.0, %v5610
    %v5612 = vpop.f32.mrb[0].mxu0
    %v5613 = vadd.f32 0.0, %v5612
    %v5614 = vpop.f32.mrb[0].mxu0
    %v5615 = vadd.f32 0.0, %v5614
    %v5616 = vpop.f32.mrb[0].mxu0
    %v5617 = vadd.f32 0.0, %v5616
    %5618 = vmatprep.mubr.bf16.mxu0 %v5547
    %5619 = vmatmul.mubr.bf16.gmra.mrb[0].mxu0 %v5546
    %v5620 = vpop.f32.mrb[0].mxu0
    %v5621 = vadd.f32 0.0, %v5620
    %v5622 = vpop.f32.mrb[0].mxu0
    %v5623 = vadd.f32 0.0, %v5622
    %v5624 = vpop.f32.mrb[0].mxu0
    %v5625 = vadd.f32 0.0, %v5624
    %v5626 = vpop.f32.mrb[0].mxu0
    %v5627 = vadd.f32 0.0, %v5626
    %5628 = vmatprep.mubr.bf16.mxu0 %v5549
    %5629 = vmatmul.mubr.bf16.gmra.mrb[0].mxu0 %v5548
    %v5630 = vpop.f32.mrb[0].mxu0
    %v5631 = vadd.f32 0.0, %v5630
    %v5632 = vpop.f32.mrb[0].mxu0
    %v5633 = vadd.f32 0.0, %v5632
    %v5634 = vpop.f32.mrb[0].mxu0
    %v5635 = vadd.f32 0.0, %v5634
    %v5636 = vpop.f32.mrb[0].mxu0
    %v5637 = vadd.f32 0.0, %v5636
    %5638 = vmatprep.mubr.bf16.mxu0 %v5551
    %5639 = vmatmul.mubr.bf16.gmra.mrb[0].mxu0 %v5550
    %v5640 = vpop.f32.mrb[0].mxu0
    %v5641 = vadd.f32 0.0, %v5640
    %v5642 = vpop.f32.mrb[0].mxu0
    %v5643 = vadd.f32 0.0, %v5642
    %v5644 = vpop.f32.mrb[0].mxu0
    %v5645 = vadd.f32 0.0, %v5644
    %v5646 = vpop.f32.mrb[0].mxu0
    %v5647 = vadd.f32 0.0, %v5646
    %5648 = vmatprep.mubr.bf16.mxu0 %v5553
    %5649 = vmatmul.mubr.bf16.gmra.mrb[0].mxu0 %v5552
    %v5650 = vpop.f32.mrb[0].mxu0
    %v5651 = vadd.f32 0.0, %v5650
    %v5652 = vpop.f32.mrb[0].mxu0
    %v5653 = vadd.f32 0.0, %v5652
    %v5654 = vpop.f32.mrb[0].mxu0
    %v5655 = vadd.f32 0.0, %v5654
    %v5656 = vpop.f32.mrb[0].mxu0
    %v5657 = vadd.f32 0.0, %v5656
    %5658 = vmatprep.mubr.bf16.mxu0 %v5555
    %5659 = vmatmul.mubr.bf16.gmra.mrb[0].mxu0 %v5554
    %v5660 = vpop.f32.mrb[0].mxu0
    %v5661 = vadd.f32 0.0, %v5660
    %v5662 = vpop.f32.mrb[0].mxu0
    %v5663 = vadd.f32 0.0, %v5662
    %v5664 = vpop.f32.mrb[0].mxu0
    %v5665 = vadd.f32 0.0, %v5664
    %v5666 = vpop.f32.mrb[0].mxu0
    %v5667 = vadd.f32 0.0, %v5666
    %5668 = vmatprep.mubr.bf16.mxu0 %v5557
    %5669 = vmatmul.mubr.bf16.gmra.mrb[0].mxu0 %v5556
    %v5670 = vpop.f32.mrb[0].mxu0
    %v5671 = vadd.f32 0.0, %v5670
    %v5672 = vpop.f32.mrb[0].mxu0
    %v5673 = vadd.f32 0.0, %v5672
    %v5674 = vpop.f32.mrb[0].mxu0
    %v5675 = vadd.f32 0.0, %v5674
    %v5676 = vpop.f32.mrb[0].mxu0
    %v5677 = vadd.f32 0.0, %v5676
    %5678 = vmatprep.mubr.bf16.mxu0 %v5559
    %5679 = vmatmul.mubr.bf16.gmra.mrb[0].mxu0 %v5558
    %v5680 = vpop.f32.mrb[0].mxu0
    %v5681 = vadd.f32 0.0, %v5680
    %v5682 = vpop.f32.mrb[0].mxu0
    %v5683 = vadd.f32 0.0, %v5682
    %v5684 = vpop.f32.mrb[0].mxu0
    %v5685 = vadd.f32 0.0, %v5684
    %v5686 = vpop.f32.mrb[0].mxu0
    %v5687 = vadd.f32 0.0, %v5686
    %5688 = vdwg.mxu0
    %v5689 = vunpack.c.l.b16 %v5124
    %v5690 = vunpack.c.h.b16 %v5124
    %v5691 = vunpack.c.l.b16 %v5138
    %v5692 = vunpack.c.h.b16 %v5138
    %v5693 = vunpack.c.l.b16 %v5152
    %v5694 = vunpack.c.h.b16 %v5152
    %v5695 = vunpack.c.l.b16 %v5166
    %v5696 = vunpack.c.h.b16 %v5166
    %v5697 = vunpack.c.l.b16 %v5180
    %v5698 = vunpack.c.h.b16 %v5180
    %v5699 = vunpack.c.l.b16 %v5194
    %v5700 = vunpack.c.h.b16 %v5194
    %v5701 = vunpack.c.l.b16 %v5208
    %v5702 = vunpack.c.h.b16 %v5208
    %v5703 = vunpack.c.l.b16 %v5222
    %v5704 = vunpack.c.h.b16 %v5222
    %v5705 = vunpack.c.l.b16 %v5236
    %v5706 = vunpack.c.h.b16 %v5236
    %v5707 = vunpack.c.l.b16 %v5250
    %v5708 = vunpack.c.h.b16 %v5250
    %v5709 = vunpack.c.l.b16 %v5264
    %v5710 = vunpack.c.h.b16 %v5264
    %v5711 = vunpack.c.l.b16 %v5278
    %v5712 = vunpack.c.h.b16 %v5278
    %v5713 = vunpack.c.l.b16 %v5292
    %v5714 = vunpack.c.h.b16 %v5292
    %v5715 = vunpack.c.l.b16 %v5306
    %v5716 = vunpack.c.h.b16 %v5306
    %v5717 = vunpack.c.l.b16 %v5320
    %v5718 = vunpack.c.h.b16 %v5320
    %v5719 = vunpack.c.l.b16 %v5334
    %v5720 = vunpack.c.h.b16 %v5334
    %v5721 = vpack.c.b16 %v5691, %v5689
    %v5722 = vpack.c.b16 %v5692, %v5690
    %v5723 = vpack.c.b16 %v5695, %v5693
    %v5724 = vpack.c.b16 %v5696, %v5694
    %v5725 = vpack.c.b16 %v5699, %v5697
    %v5726 = vpack.c.b16 %v5700, %v5698
    %v5727 = vpack.c.b16 %v5703, %v5701
    %v5728 = vpack.c.b16 %v5704, %v5702
    %v5729 = vpack.c.b16 %v5707, %v5705
    %v5730 = vpack.c.b16 %v5708, %v5706
    %v5731 = vpack.c.b16 %v5711, %v5709
    %v5732 = vpack.c.b16 %v5712, %v5710
    %v5733 = vpack.c.b16 %v5715, %v5713
    %v5734 = vpack.c.b16 %v5716, %v5714
    %v5735 = vpack.c.b16 %v5719, %v5717
    %v5736 = vpack.c.b16 %v5720, %v5718
    %5753 = vmatprep.subr.bf16.mxu0 %v5336
    %5754 = vmatpush1.bf16.msra.mxu0 %v5335
    %5755 = vmatprep.subr.bf16.mxu0 %v5338
    %5756 = vmatpush1.bf16.msra.mxu0 %v5337
    %5757 = vmatprep.subr.bf16.mxu0 %v5340
    %5758 = vmatpush1.bf16.msra.mxu0 %v5339
    %5759 = vmatprep.subr.bf16.mxu0 %v5342
    %5760 = vmatpush1.bf16.msra.mxu0 %v5341
    %5761 = vmatprep.subr.bf16.mxu0 %v5344
    %5762 = vmatpush1.bf16.msra.mxu0 %v5343
    %5763 = vmatprep.subr.bf16.mxu0 %v5346
    %5764 = vmatpush1.bf16.msra.mxu0 %v5345
    %5765 = vmatprep.subr.bf16.mxu0 %v5348
    %5766 = vmatpush1.bf16.msra.mxu0 %v5347
    %5767 = vmatprep.subr.bf16.mxu0 %v5350
    %5768 = vmatpush1.bf16.msra.mxu0 %v5349
    %5769 = vmatprep.subr.bf16.mxu0 %v5352
    %5770 = vmatpush1.bf16.msra.mxu0 %v5351
    %5771 = vmatprep.subr.bf16.mxu0 %v5354
    %5772 = vmatpush1.bf16.msra.mxu0 %v5353
    %5773 = vmatprep.subr.bf16.mxu0 %v5356
    %5774 = vmatpush1.bf16.msra.mxu0 %v5355
    %5775 = vmatprep.subr.bf16.mxu0 %v5358
    %5776 = vmatpush1.bf16.msra.mxu0 %v5357
    %5777 = vmatprep.subr.bf16.mxu0 %v5360
    %5778 = vmatpush1.bf16.msra.mxu0 %v5359
    %5779 = vmatprep.subr.bf16.mxu0 %v5362
    %5780 = vmatpush1.bf16.msra.mxu0 %v5361
    %5781 = vmatprep.subr.bf16.mxu0 %v5364
    %5782 = vmatpush1.bf16.msra.mxu0 %v5363
    %5783 = vmatprep.subr.bf16.mxu0 %v5366
    %5784 = vmatpush1.bf16.msra.mxu0 %v5365
    %5785 = vmatprep.mubr.bf16.mxu0 %v5722
    %5786 = vmatmul.mubr.bf16.gmra.mrb[0].mxu0 %v5721
    %v5787 = vpop.f32.mrb[0].mxu0
    %v5788 = vadd.f32 %v5611, %v5787
    %v5789 = vpop.f32.mrb[0].mxu0
    %v5790 = vadd.f32 %v5613, %v5789
    %v5791 = vpop.f32.mrb[0].mxu0
    %v5792 = vadd.f32 %v5615, %v5791
    %v5793 = vpop.f32.mrb[0].mxu0
    %v5794 = vadd.f32 %v5617, %v5793
    %5795 = vmatprep.mubr.bf16.mxu0 %v5724
    %5796 = vmatmul.mubr.bf16.gmra.mrb[0].mxu0 %v5723
    %v5797 = vpop.f32.mrb[0].mxu0
    %v5798 = vadd.f32 %v5621, %v5797
    %v5799 = vpop.f32.mrb[0].mxu0
    %v5800 = vadd.f32 %v5623, %v5799
    %v5801 = vpop.f32.mrb[0].mxu0
    %v5802 = vadd.f32 %v5625, %v5801
    %v5803 = vpop.f32.mrb[0].mxu0
    %v5804 = vadd.f32 %v5627, %v5803
    %5805 = vmatprep.mubr.bf16.mxu0 %v5726
    %5806 = vmatmul.mubr.bf16.gmra.mrb[0].mxu0 %v5725
    %v5807 = vpop.f32.mrb[0].mxu0
    %v5808 = vadd.f32 %v5631, %v5807
    %v5809 = vpop.f32.mrb[0].mxu0
    %v5810 = vadd.f32 %v5633, %v5809
    %v5811 = vpop.f32.mrb[0].mxu0
    %v5812 = vadd.f32 %v5635, %v5811
    %v5813 = vpop.f32.mrb[0].mxu0
    %v5814 = vadd.f32 %v5637, %v5813
    %5815 = vmatprep.mubr.bf16.mxu0 %v5728
    %5816 = vmatmul.mubr.bf16.gmra.mrb[0].mxu0 %v5727
    %v5817 = vpop.f32.mrb[0].mxu0
    %v5818 = vadd.f32 %v5641, %v5817
    %v5819 = vpop.f32.mrb[0].mxu0
    %v5820 = vadd.f32 %v5643, %v5819
    %v5821 = vpop.f32.mrb[0].mxu0
    %v5822 = vadd.f32 %v5645, %v5821
    %v5823 = vpop.f32.mrb[0].mxu0
    %v5824 = vadd.f32 %v5647, %v5823
    %5825 = vmatprep.mubr.bf16.mxu0 %v5730
    %5826 = vmatmul.mubr.bf16.gmra.mrb[0].mxu0 %v5729
    %v5827 = vpop.f32.mrb[0].mxu0
    %v5828 = vadd.f32 %v5651, %v5827
    %v5829 = vpop.f32.mrb[0].mxu0
    %v5830 = vadd.f32 %v5653, %v5829
    %v5831 = vpop.f32.mrb[0].mxu0
    %v5832 = vadd.f32 %v5655, %v5831
    %v5833 = vpop.f32.mrb[0].mxu0
    %v5834 = vadd.f32 %v5657, %v5833
    %5835 = vmatprep.mubr.bf16.mxu0 %v5732
    %5836 = vmatmul.mubr.bf16.gmra.mrb[0].mxu0 %v5731
    %v5837 = vpop.f32.mrb[0].mxu0
    %v5838 = vadd.f32 %v5661, %v5837
    %v5839 = vpop.f32.mrb[0].mxu0
    %v5840 = vadd.f32 %v5663, %v5839
    %v5841 = vpop.f32.mrb[0].mxu0
    %v5842 = vadd.f32 %v5665, %v5841
    %v5843 = vpop.f32.mrb[0].mxu0
    %v5844 = vadd.f32 %v5667, %v5843
    %5845 = vmatprep.mubr.bf16.mxu0 %v5734
    %5846 = vmatmul.mubr.bf16.gmra.mrb[0].mxu0 %v5733
    %v5847 = vpop.f32.mrb[0].mxu0
    %v5848 = vadd.f32 %v5671, %v5847
    %v5849 = vpop.f32.mrb[0].mxu0
    %v5850 = vadd.f32 %v5673, %v5849
    %v5851 = vpop.f32.mrb[0].mxu0
    %v5852 = vadd.f32 %v5675, %v5851
    %v5853 = vpop.f32.mrb[0].mxu0
    %v5854 = vadd.f32 %v5677, %v5853
    %5855 = vmatprep.mubr.bf16.mxu0 %v5736
    %5856 = vmatmul.mubr.bf16.gmra.mrb[0].mxu0 %v5735
    %v5857 = vpop.f32.mrb[0].mxu0
    %v5858 = vadd.f32 %v5681, %v5857
    %v5859 = vpop.f32.mrb[0].mxu0
    %v5860 = vadd.f32 %v5683, %v5859
    %v5861 = vpop.f32.mrb[0].mxu0
    %v5862 = vadd.f32 %v5685, %v5861
    %v5863 = vpop.f32.mrb[0].mxu0
    %v5864 = vadd.f32 %v5687, %v5863
    %5865 = vdwg.mxu0
    %v5866 = vld [vmem:[#allocation4 + $0x8] sm:$0x33]
    %v5867 = vld [vmem:[#allocation4 + $0x18] sm:$0x33]
    %v5868 = vld [vmem:[#allocation4 + $0x28] sm:$0x33]
    %v5869 = vld [vmem:[#allocation4 + $0x38] sm:$0x33]
    %v5870 = vld [vmem:[#allocation4 + $0x48] sm:$0x33]
    %v5871 = vld [vmem:[#allocation4 + $0x58] sm:$0x33]
    %v5872 = vld [vmem:[#allocation4 + $0x68] sm:$0x33]
    %v5873 = vld [vmem:[#allocation4 + $0x78] sm:$0x33]
    %v5874 = vld [vmem:[#allocation4 + $0xa8] sm:$0x33]
    %v5875 = vld [vmem:[#allocation4 + $0xb8] sm:$0x33]
    %v5876 = vld [vmem:[#allocation4 + $0xc8] sm:$0x33]
    %v5877 = vld [vmem:[#allocation4 + $0xd8] sm:$0x33]
    %v5878 = vld [vmem:[#allocation4 + $0xe8] sm:$0x33]
    %v5879 = vld [vmem:[#allocation4 + $0xf8] sm:$0x33]
    %v5880 = vld [vmem:[#allocation4 + $0x108] sm:$0x33]
    %v5881 = vld [vmem:[#allocation4 + $0x118] sm:$0x33]
    %v5883 = vshrl.u32 %v5367, 16
    %v5885 = vrot.slane %v5883, 5
    %v5886 = vshll.u32 %v5367, 16
    %v5888 = vrot.slane %v5886, 6
    %v5889 = vor.u32 %v5885, %v5888
    %v5890 = vrot.slane %v5889, 4
    %v5892 = vshrl.u32 %v5866, 16
    %v5894 = vrot.slane %v5892, 5
    %v5895 = vshll.u32 %v5866, 16
    %v5897 = vrot.slane %v5895, 6
    %v5898 = vor.u32 %v5894, %v5897
    %v5899 = vsel %vm1260, %v5890, %v5898
    %v5901 = vshrl.u32 %v5368, 16
    %v5903 = vrot.slane %v5901, 5
    %v5904 = vshll.u32 %v5368, 16
    %v5906 = vrot.slane %v5904, 6
    %v5907 = vor.u32 %v5903, %v5906
    %v5908 = vrot.slane %v5907, 4
    %v5910 = vshrl.u32 %v5867, 16
    %v5912 = vrot.slane %v5910, 5
    %v5913 = vshll.u32 %v5867, 16
    %v5915 = vrot.slane %v5913, 6
    %v5916 = vor.u32 %v5912, %v5915
    %v5917 = vsel %vm1260, %v5908, %v5916
    %v5919 = vshrl.u32 %v5369, 16
    %v5921 = vrot.slane %v5919, 5
    %v5922 = vshll.u32 %v5369, 16
    %v5924 = vrot.slane %v5922, 6
    %v5925 = vor.u32 %v5921, %v5924
    %v5926 = vrot.slane %v5925, 4
    %v5928 = vshrl.u32 %v5868, 16
    %v5930 = vrot.slane %v5928, 5
    %v5931 = vshll.u32 %v5868, 16
    %v5933 = vrot.slane %v5931, 6
    %v5934 = vor.u32 %v5930, %v5933
    %v5935 = vsel %vm1260, %v5926, %v5934
    %v5937 = vshrl.u32 %v5370, 16
    %v5939 = vrot.slane %v5937, 5
    %v5940 = vshll.u32 %v5370, 16
    %v5942 = vrot.slane %v5940, 6
    %v5943 = vor.u32 %v5939, %v5942
    %v5944 = vrot.slane %v5943, 4
    %v5946 = vshrl.u32 %v5869, 16
    %v5948 = vrot.slane %v5946, 5
    %v5949 = vshll.u32 %v5869, 16
    %v5951 = vrot.slane %v5949, 6
    %v5952 = vor.u32 %v5948, %v5951
    %v5953 = vsel %vm1260, %v5944, %v5952
    %v5955 = vshrl.u32 %v5371, 16
    %v5957 = vrot.slane %v5955, 5
    %v5958 = vshll.u32 %v5371, 16
    %v5960 = vrot.slane %v5958, 6
    %v5961 = vor.u32 %v5957, %v5960
    %v5962 = vrot.slane %v5961, 4
    %v5964 = vshrl.u32 %v5870, 16
    %v5966 = vrot.slane %v5964, 5
    %v5967 = vshll.u32 %v5870, 16
    %v5969 = vrot.slane %v5967, 6
    %v5970 = vor.u32 %v5966, %v5969
    %v5971 = vsel %vm1260, %v5962, %v5970
    %v5973 = vshrl.u32 %v5372, 16
    %v5975 = vrot.slane %v5973, 5
    %v5976 = vshll.u32 %v5372, 16
    %v5978 = vrot.slane %v5976, 6
    %v5979 = vor.u32 %v5975, %v5978
    %v5980 = vrot.slane %v5979, 4
    %v5982 = vshrl.u32 %v5871, 16
    %v5984 = vrot.slane %v5982, 5
    %v5985 = vshll.u32 %v5871, 16
    %v5987 = vrot.slane %v5985, 6
    %v5988 = vor.u32 %v5984, %v5987
    %v5989 = vsel %vm1260, %v5980, %v5988
    %v5991 = vshrl.u32 %v5373, 16
    %v5993 = vrot.slane %v5991, 5
    %v5994 = vshll.u32 %v5373, 16
    %v5996 = vrot.slane %v5994, 6
    %v5997 = vor.u32 %v5993, %v5996
    %v5998 = vrot.slane %v5997, 4
    %v6000 = vshrl.u32 %v5872, 16
    %v6002 = vrot.slane %v6000, 5
    %v6003 = vshll.u32 %v5872, 16
    %v6005 = vrot.slane %v6003, 6
    %v6006 = vor.u32 %v6002, %v6005
    %v6007 = vsel %vm1260, %v5998, %v6006
    %v6009 = vshrl.u32 %v5374, 16
    %v6011 = vrot.slane %v6009, 5
    %v6012 = vshll.u32 %v5374, 16
    %v6014 = vrot.slane %v6012, 6
    %v6015 = vor.u32 %v6011, %v6014
    %v6016 = vrot.slane %v6015, 4
    %v6018 = vshrl.u32 %v5873, 16
    %v6020 = vrot.slane %v6018, 5
    %v6021 = vshll.u32 %v5873, 16
    %v6023 = vrot.slane %v6021, 6
    %v6024 = vor.u32 %v6020, %v6023
    %v6025 = vsel %vm1260, %v6016, %v6024
    %v6027 = vshrl.u32 %v5375, 16
    %v6029 = vrot.slane %v6027, 5
    %v6030 = vshll.u32 %v5375, 16
    %v6032 = vrot.slane %v6030, 6
    %v6033 = vor.u32 %v6029, %v6032
    %v6034 = vrot.slane %v6033, 4
    %v6036 = vshrl.u32 %v5874, 16
    %v6038 = vrot.slane %v6036, 5
    %v6039 = vshll.u32 %v5874, 16
    %v6041 = vrot.slane %v6039, 6
    %v6042 = vor.u32 %v6038, %v6041
    %v6043 = vsel %vm1260, %v6034, %v6042
    %v6045 = vshrl.u32 %v5376, 16
    %v6047 = vrot.slane %v6045, 5
    %v6048 = vshll.u32 %v5376, 16
    %v6050 = vrot.slane %v6048, 6
    %v6051 = vor.u32 %v6047, %v6050
    %v6052 = vrot.slane %v6051, 4
    %v6054 = vshrl.u32 %v5875, 16
    %v6056 = vrot.slane %v6054, 5
    %v6057 = vshll.u32 %v5875, 16
    %v6059 = vrot.slane %v6057, 6
    %v6060 = vor.u32 %v6056, %v6059
    %v6061 = vsel %vm1260, %v6052, %v6060
    %v6063 = vshrl.u32 %v5377, 16
    %v6065 = vrot.slane %v6063, 5
    %v6066 = vshll.u32 %v5377, 16
    %v6068 = vrot.slane %v6066, 6
    %v6069 = vor.u32 %v6065, %v6068
    %v6070 = vrot.slane %v6069, 4
    %v6072 = vshrl.u32 %v5876, 16
    %v6074 = vrot.slane %v6072, 5
    %v6075 = vshll.u32 %v5876, 16
    %v6077 = vrot.slane %v6075, 6
    %v6078 = vor.u32 %v6074, %v6077
    %v6079 = vsel %vm1260, %v6070, %v6078
    %v6081 = vshrl.u32 %v5378, 16
    %v6083 = vrot.slane %v6081, 5
    %v6084 = vshll.u32 %v5378, 16
    %v6086 = vrot.slane %v6084, 6
    %v6087 = vor.u32 %v6083, %v6086
    %v6088 = vrot.slane %v6087, 4
    %v6090 = vshrl.u32 %v5877, 16
    %v6092 = vrot.slane %v6090, 5
    %v6093 = vshll.u32 %v5877, 16
    %v6095 = vrot.slane %v6093, 6
    %v6096 = vor.u32 %v6092, %v6095
    %v6097 = vsel %vm1260, %v6088, %v6096
    %v6099 = vshrl.u32 %v5379, 16
    %v6101 = vrot.slane %v6099, 5
    %v6102 = vshll.u32 %v5379, 16
    %v6104 = vrot.slane %v6102, 6
    %v6105 = vor.u32 %v6101, %v6104
    %v6106 = vrot.slane %v6105, 4
    %v6108 = vshrl.u32 %v5878, 16
    %v6110 = vrot.slane %v6108, 5
    %v6111 = vshll.u32 %v5878, 16
    %v6113 = vrot.slane %v6111, 6
    %v6114 = vor.u32 %v6110, %v6113
    %v6115 = vsel %vm1260, %v6106, %v6114
    %v6117 = vshrl.u32 %v5380, 16
    %v6119 = vrot.slane %v6117, 5
    %v6120 = vshll.u32 %v5380, 16
    %v6122 = vrot.slane %v6120, 6
    %v6123 = vor.u32 %v6119, %v6122
    %v6124 = vrot.slane %v6123, 4
    %v6126 = vshrl.u32 %v5879, 16
    %v6128 = vrot.slane %v6126, 5
    %v6129 = vshll.u32 %v5879, 16
    %v6131 = vrot.slane %v6129, 6
    %v6132 = vor.u32 %v6128, %v6131
    %v6133 = vsel %vm1260, %v6124, %v6132
    %v6135 = vshrl.u32 %v5381, 16
    %v6137 = vrot.slane %v6135, 5
    %v6138 = vshll.u32 %v5381, 16
    %v6140 = vrot.slane %v6138, 6
    %v6141 = vor.u32 %v6137, %v6140
    %v6142 = vrot.slane %v6141, 4
    %v6144 = vshrl.u32 %v5880, 16
    %v6146 = vrot.slane %v6144, 5
    %v6147 = vshll.u32 %v5880, 16
    %v6149 = vrot.slane %v6147, 6
    %v6150 = vor.u32 %v6146, %v6149
    %v6151 = vsel %vm1260, %v6142, %v6150
    %v6153 = vshrl.u32 %v5382, 16
    %v6155 = vrot.slane %v6153, 5
    %v6156 = vshll.u32 %v5382, 16
    %v6158 = vrot.slane %v6156, 6
    %v6159 = vor.u32 %v6155, %v6158
    %v6160 = vrot.slane %v6159, 4
    %v6162 = vshrl.u32 %v5881, 16
    %v6164 = vrot.slane %v6162, 5
    %v6165 = vshll.u32 %v5881, 16
    %v6167 = vrot.slane %v6165, 6
    %v6168 = vor.u32 %v6164, %v6167
    %v6169 = vsel %vm1260, %v6160, %v6168
    %s6170 = scalar_lea.vmem [#allocation3], 512
    %v6171 = vld [vmem:[%s6170] sm:$0xff]
    %v6172 = vld [vmem:[%s6170 + $0x8] sm:$0xff]
    %v6173 = vld [vmem:[%s6170 + $0x10] sm:$0xff]
    %v6174 = vld [vmem:[%s6170 + $0x18] sm:$0xff]
    %v6175 = vld [vmem:[%s6170 + $0x20] sm:$0xff]
    %v6176 = vld [vmem:[%s6170 + $0x28] sm:$0xff]
    %v6177 = vld [vmem:[%s6170 + $0x30] sm:$0xff]
    %v6178 = vld [vmem:[%s6170 + $0x38] sm:$0xff]
    %v6179 = vld [vmem:[%s6170 + $0x40] sm:$0xff]
    %v6180 = vld [vmem:[%s6170 + $0x48] sm:$0xff]
    %v6181 = vld [vmem:[%s6170 + $0x50] sm:$0xff]
    %v6182 = vld [vmem:[%s6170 + $0x58] sm:$0xff]
    %v6183 = vld [vmem:[%s6170 + $0x60] sm:$0xff]
    %v6184 = vld [vmem:[%s6170 + $0x68] sm:$0xff]
    %v6185 = vld [vmem:[%s6170 + $0x70] sm:$0xff]
    %v6186 = vld [vmem:[%s6170 + $0x78] sm:$0xff]
    %v6187 = vld [vmem:[%s6170 + $0x80] sm:$0xff]
    %v6188 = vld [vmem:[%s6170 + $0x88] sm:$0xff]
    %v6189 = vld [vmem:[%s6170 + $0x90] sm:$0xff]
    %v6190 = vld [vmem:[%s6170 + $0x98] sm:$0xff]
    %v6191 = vld [vmem:[%s6170 + $0xa0] sm:$0xff]
    %v6192 = vld [vmem:[%s6170 + $0xa8] sm:$0xff]
    %v6193 = vld [vmem:[%s6170 + $0xb0] sm:$0xff]
    %v6194 = vld [vmem:[%s6170 + $0xb8] sm:$0xff]
    %v6195 = vld [vmem:[%s6170 + $0xc0] sm:$0xff]
    %v6196 = vld [vmem:[%s6170 + $0xc8] sm:$0xff]
    %v6197 = vld [vmem:[%s6170 + $0xd0] sm:$0xff]
    %v6198 = vld [vmem:[%s6170 + $0xd8] sm:$0xff]
    %v6199 = vld [vmem:[%s6170 + $0xe0] sm:$0xff]
    %v6200 = vld [vmem:[%s6170 + $0xe8] sm:$0xff]
    %v6201 = vld [vmem:[%s6170 + $0xf0] sm:$0xff]
    %v6202 = vld [vmem:[%s6170 + $0xf8] sm:$0xff]
    %v6203 = vunpack.c.l.b16 %v5899
    %v6204 = vunpack.c.h.b16 %v5899
    %v6205 = vunpack.c.l.b16 %v5917
    %v6206 = vunpack.c.h.b16 %v5917
    %v6207 = vunpack.c.l.b16 %v5935
    %v6208 = vunpack.c.h.b16 %v5935
    %v6209 = vunpack.c.l.b16 %v5953
    %v6210 = vunpack.c.h.b16 %v5953
    %v6211 = vunpack.c.l.b16 %v5971
    %v6212 = vunpack.c.h.b16 %v5971
    %v6213 = vunpack.c.l.b16 %v5989
    %v6214 = vunpack.c.h.b16 %v5989
    %v6215 = vunpack.c.l.b16 %v6007
    %v6216 = vunpack.c.h.b16 %v6007
    %v6217 = vunpack.c.l.b16 %v6025
    %v6218 = vunpack.c.h.b16 %v6025
    %v6219 = vunpack.c.l.b16 %v6043
    %v6220 = vunpack.c.h.b16 %v6043
    %v6221 = vunpack.c.l.b16 %v6061
    %v6222 = vunpack.c.h.b16 %v6061
    %v6223 = vunpack.c.l.b16 %v6079
    %v6224 = vunpack.c.h.b16 %v6079
    %v6225 = vunpack.c.l.b16 %v6097
    %v6226 = vunpack.c.h.b16 %v6097
    %v6227 = vunpack.c.l.b16 %v6115
    %v6228 = vunpack.c.h.b16 %v6115
    %v6229 = vunpack.c.l.b16 %v6133
    %v6230 = vunpack.c.h.b16 %v6133
    %v6231 = vunpack.c.l.b16 %v6151
    %v6232 = vunpack.c.h.b16 %v6151
    %v6233 = vunpack.c.l.b16 %v6169
    %v6234 = vunpack.c.h.b16 %v6169
    %v6235 = vpack.c.b16 %v6205, %v6203
    %v6236 = vpack.c.b16 %v6206, %v6204
    %v6237 = vpack.c.b16 %v6209, %v6207
    %v6238 = vpack.c.b16 %v6210, %v6208
    %v6239 = vpack.c.b16 %v6213, %v6211
    %v6240 = vpack.c.b16 %v6214, %v6212
    %v6241 = vpack.c.b16 %v6217, %v6215
    %v6242 = vpack.c.b16 %v6218, %v6216
    %v6243 = vpack.c.b16 %v6221, %v6219
    %v6244 = vpack.c.b16 %v6222, %v6220
    %v6245 = vpack.c.b16 %v6225, %v6223
    %v6246 = vpack.c.b16 %v6226, %v6224
    %v6247 = vpack.c.b16 %v6229, %v6227
    %v6248 = vpack.c.b16 %v6230, %v6228
    %v6249 = vpack.c.b16 %v6233, %v6231
    %v6250 = vpack.c.b16 %v6234, %v6232
    %6267 = vmatprep.subr.bf16.mxu0 %v6172
    %6268 = vmatpush1.bf16.msra.mxu0 %v6171
    %6269 = vmatprep.subr.bf16.mxu0 %v6174
    %6270 = vmatpush1.bf16.msra.mxu0 %v6173
    %6271 = vmatprep.subr.bf16.mxu0 %v6176
    %6272 = vmatpush1.bf16.msra.mxu0 %v6175
    %6273 = vmatprep.subr.bf16.mxu0 %v6178
    %6274 = vmatpush1.bf16.msra.mxu0 %v6177
    %6275 = vmatprep.subr.bf16.mxu0 %v6180
    %6276 = vmatpush1.bf16.msra.mxu0 %v6179
    %6277 = vmatprep.subr.bf16.mxu0 %v6182
    %6278 = vmatpush1.bf16.msra.mxu0 %v6181
    %6279 = vmatprep.subr.bf16.mxu0 %v6184
    %6280 = vmatpush1.bf16.msra.mxu0 %v6183
    %6281 = vmatprep.subr.bf16.mxu0 %v6186
    %6282 = vmatpush1.bf16.msra.mxu0 %v6185
    %6283 = vmatprep.subr.bf16.mxu0 %v6188
    %6284 = vmatpush1.bf16.msra.mxu0 %v6187
    %6285 = vmatprep.subr.bf16.mxu0 %v6190
    %6286 = vmatpush1.bf16.msra.mxu0 %v6189
    %6287 = vmatprep.subr.bf16.mxu0 %v6192
    %6288 = vmatpush1.bf16.msra.mxu0 %v6191
    %6289 = vmatprep.subr.bf16.mxu0 %v6194
    %6290 = vmatpush1.bf16.msra.mxu0 %v6193
    %6291 = vmatprep.subr.bf16.mxu0 %v6196
    %6292 = vmatpush1.bf16.msra.mxu0 %v6195
    %6293 = vmatprep.subr.bf16.mxu0 %v6198
    %6294 = vmatpush1.bf16.msra.mxu0 %v6197
    %6295 = vmatprep.subr.bf16.mxu0 %v6200
    %6296 = vmatpush1.bf16.msra.mxu0 %v6199
    %6297 = vmatprep.subr.bf16.mxu0 %v6202
    %6298 = vmatpush1.bf16.msra.mxu0 %v6201
    %6299 = vmatprep.mubr.bf16.mxu0 %v6236
    %6300 = vmatmul.mubr.bf16.gmra.mrb[0].mxu0 %v6235
    %v6301 = vpop.f32.mrb[0].mxu0
    %v6302 = vadd.f32 0.0, %v6301
    %v6303 = vpop.f32.mrb[0].mxu0
    %v6304 = vadd.f32 0.0, %v6303
    %v6305 = vpop.f32.mrb[0].mxu0
    %v6306 = vadd.f32 0.0, %v6305
    %v6307 = vpop.f32.mrb[0].mxu0
    %v6308 = vadd.f32 0.0, %v6307
    %6309 = vmatprep.mubr.bf16.mxu0 %v6238
    %6310 = vmatmul.mubr.bf16.gmra.mrb[0].mxu0 %v6237
    %v6311 = vpop.f32.mrb[0].mxu0
    %v6312 = vadd.f32 0.0, %v6311
    %v6313 = vpop.f32.mrb[0].mxu0
    %v6314 = vadd.f32 0.0, %v6313
    %v6315 = vpop.f32.mrb[0].mxu0
    %v6316 = vadd.f32 0.0, %v6315
    %v6317 = vpop.f32.mrb[0].mxu0
    %v6318 = vadd.f32 0.0, %v6317
    %6319 = vmatprep.mubr.bf16.mxu0 %v6240
    %6320 = vmatmul.mubr.bf16.gmra.mrb[0].mxu0 %v6239
    %v6321 = vpop.f32.mrb[0].mxu0
    %v6322 = vadd.f32 0.0, %v6321
    %v6323 = vpop.f32.mrb[0].mxu0
    %v6324 = vadd.f32 0.0, %v6323
    %v6325 = vpop.f32.mrb[0].mxu0
    %v6326 = vadd.f32 0.0, %v6325
    %v6327 = vpop.f32.mrb[0].mxu0
    %v6328 = vadd.f32 0.0, %v6327
    %6329 = vmatprep.mubr.bf16.mxu0 %v6242
    %6330 = vmatmul.mubr.bf16.gmra.mrb[0].mxu0 %v6241
    %v6331 = vpop.f32.mrb[0].mxu0
    %v6332 = vadd.f32 0.0, %v6331
    %v6333 = vpop.f32.mrb[0].mxu0
    %v6334 = vadd.f32 0.0, %v6333
    %v6335 = vpop.f32.mrb[0].mxu0
    %v6336 = vadd.f32 0.0, %v6335
    %v6337 = vpop.f32.mrb[0].mxu0
    %v6338 = vadd.f32 0.0, %v6337
    %6339 = vmatprep.mubr.bf16.mxu0 %v6244
    %6340 = vmatmul.mubr.bf16.gmra.mrb[0].mxu0 %v6243
    %v6341 = vpop.f32.mrb[0].mxu0
    %v6342 = vadd.f32 0.0, %v6341
    %v6343 = vpop.f32.mrb[0].mxu0
    %v6344 = vadd.f32 0.0, %v6343
    %v6345 = vpop.f32.mrb[0].mxu0
    %v6346 = vadd.f32 0.0, %v6345
    %v6347 = vpop.f32.mrb[0].mxu0
    %v6348 = vadd.f32 0.0, %v6347
    %6349 = vmatprep.mubr.bf16.mxu0 %v6246
    %6350 = vmatmul.mubr.bf16.gmra.mrb[0].mxu0 %v6245
    %v6351 = vpop.f32.mrb[0].mxu0
    %v6352 = vadd.f32 0.0, %v6351
    %v6353 = vpop.f32.mrb[0].mxu0
    %v6354 = vadd.f32 0.0, %v6353
    %v6355 = vpop.f32.mrb[0].mxu0
    %v6356 = vadd.f32 0.0, %v6355
    %v6357 = vpop.f32.mrb[0].mxu0
    %v6358 = vadd.f32 0.0, %v6357
    %6359 = vmatprep.mubr.bf16.mxu0 %v6248
    %6360 = vmatmul.mubr.bf16.gmra.mrb[0].mxu0 %v6247
    %v6361 = vpop.f32.mrb[0].mxu0
    %v6362 = vadd.f32 0.0, %v6361
    %v6363 = vpop.f32.mrb[0].mxu0
    %v6364 = vadd.f32 0.0, %v6363
    %v6365 = vpop.f32.mrb[0].mxu0
    %v6366 = vadd.f32 0.0, %v6365
    %v6367 = vpop.f32.mrb[0].mxu0
    %v6368 = vadd.f32 0.0, %v6367
    %6369 = vmatprep.mubr.bf16.mxu0 %v6250
    %6370 = vmatmul.mubr.bf16.gmra.mrb[0].mxu0 %v6249
    %v6371 = vpop.f32.mrb[0].mxu0
    %v6372 = vadd.f32 0.0, %v6371
    %v6373 = vpop.f32.mrb[0].mxu0
    %v6374 = vadd.f32 0.0, %v6373
    %v6375 = vpop.f32.mrb[0].mxu0
    %v6376 = vadd.f32 0.0, %v6375
    %v6377 = vpop.f32.mrb[0].mxu0
    %v6378 = vadd.f32 0.0, %v6377
    %6379 = vdwg.mxu0
    %v6380 = vadd.f32 %v5788, %v6302
    %v6381 = vadd.f32 %v5790, %v6304
    %v6382 = vadd.f32 %v5792, %v6306
    %v6383 = vadd.f32 %v5794, %v6308
    %v6384 = vadd.f32 %v5798, %v6312
    %v6385 = vadd.f32 %v5800, %v6314
    %v6386 = vadd.f32 %v5802, %v6316
    %v6387 = vadd.f32 %v5804, %v6318
    %v6388 = vadd.f32 %v5808, %v6322
    %v6389 = vadd.f32 %v5810, %v6324
    %v6390 = vadd.f32 %v5812, %v6326
    %v6391 = vadd.f32 %v5814, %v6328
    %v6392 = vadd.f32 %v5818, %v6332
    %v6393 = vadd.f32 %v5820, %v6334
    %v6394 = vadd.f32 %v5822, %v6336
    %v6395 = vadd.f32 %v5824, %v6338
    %v6396 = vadd.f32 %v5828, %v6342
    %v6397 = vadd.f32 %v5830, %v6344
    %v6398 = vadd.f32 %v5832, %v6346
    %v6399 = vadd.f32 %v5834, %v6348
    %v6400 = vadd.f32 %v5838, %v6352
    %v6401 = vadd.f32 %v5840, %v6354
    %v6402 = vadd.f32 %v5842, %v6356
    %v6403 = vadd.f32 %v5844, %v6358
    %v6404 = vadd.f32 %v5848, %v6362
    %v6405 = vadd.f32 %v5850, %v6364
    %v6406 = vadd.f32 %v5852, %v6366
    %v6407 = vadd.f32 %v5854, %v6368
    %v6408 = vadd.f32 %v5858, %v6372
    %v6409 = vadd.f32 %v5860, %v6374
    %v6410 = vadd.f32 %v5862, %v6376
    %v6411 = vadd.f32 %v5864, %v6378
    %v6412 = vld [vmem:[%s411] sm:$0xff]
    %v6413 = vld [vmem:[%s411 + $0x8] sm:$0x11]
    %v6414 = vld [vmem:[%s411 + $0x10] sm:$0xff]
    %v6415 = vld [vmem:[%s411 + $0x18] sm:$0x11]
    %v6416 = vld [vmem:[%s411 + $0x20] sm:$0xff]
    %v6417 = vld [vmem:[%s411 + $0x28] sm:$0x11]
    %v6418 = vld [vmem:[%s411 + $0x30] sm:$0xff]
    %v6419 = vld [vmem:[%s411 + $0x38] sm:$0x11]
    %v6420 = vld [vmem:[%s411 + $0x40] sm:$0xff]
    %v6421 = vld [vmem:[%s411 + $0x48] sm:$0x11]
    %v6422 = vld [vmem:[%s411 + $0x50] sm:$0xff]
    %v6423 = vld [vmem:[%s411 + $0x58] sm:$0x11]
    %v6424 = vld [vmem:[%s411 + $0x60] sm:$0xff]
    %v6425 = vld [vmem:[%s411 + $0x68] sm:$0x11]
    %v6426 = vld [vmem:[%s411 + $0x70] sm:$0xff]
    %v6427 = vld [vmem:[%s411 + $0x78] sm:$0x11]
    %v6428 = vld [vmem:[%s411 + $0xa0] sm:$0xff]
    %v6429 = vld [vmem:[%s411 + $0xa8] sm:$0x11]
    %v6430 = vld [vmem:[%s411 + $0xb0] sm:$0xff]
    %v6431 = vld [vmem:[%s411 + $0xb8] sm:$0x11]
    %v6432 = vld [vmem:[%s411 + $0xc0] sm:$0xff]
    %v6433 = vld [vmem:[%s411 + $0xc8] sm:$0x11]
    %v6434 = vld [vmem:[%s411 + $0xd0] sm:$0xff]
    %v6435 = vld [vmem:[%s411 + $0xd8] sm:$0x11]
    %v6436 = vld [vmem:[%s411 + $0xe0] sm:$0xff]
    %v6437 = vld [vmem:[%s411 + $0xe8] sm:$0x11]
    %v6438 = vld [vmem:[%s411 + $0xf0] sm:$0xff]
    %v6439 = vld [vmem:[%s411 + $0xf8] sm:$0x11]
    %v6440 = vld [vmem:[%s411 + $0x100] sm:$0xff]
    %v6441 = vld [vmem:[%s411 + $0x108] sm:$0x11]
    %v6442 = vld [vmem:[%s411 + $0x110] sm:$0xff]
    %v6443 = vld [vmem:[%s411 + $0x118] sm:$0x11]
    %v6445 = vshrl.u32 %v6412, 16
    %v6447 = vrot.slane %v6445, 4
    %v6448 = vshll.u32 %v6412, 16
    %v6450 = vrot.slane %v6448, 5
    %v6451 = vor.u32 %v6447, %v6450
    %v6452 = vrot.slane %v6451, 4
    %v6454 = vshll.u32 %v6413, 16
    %v6456 = vrot.slane %v6454, 5
    %v6457 = vsel %vm483, %v6452, %v6456
    %v6459 = vshrl.u32 %v6414, 16
    %v6461 = vrot.slane %v6459, 4
    %v6462 = vshll.u32 %v6414, 16
    %v6464 = vrot.slane %v6462, 5
    %v6465 = vor.u32 %v6461, %v6464
    %v6466 = vrot.slane %v6465, 4
    %v6468 = vshll.u32 %v6415, 16
    %v6470 = vrot.slane %v6468, 5
    %v6471 = vsel %vm483, %v6466, %v6470
    %v6473 = vshrl.u32 %v6416, 16
    %v6475 = vrot.slane %v6473, 4
    %v6476 = vshll.u32 %v6416, 16
    %v6478 = vrot.slane %v6476, 5
    %v6479 = vor.u32 %v6475, %v6478
    %v6480 = vrot.slane %v6479, 4
    %v6482 = vshll.u32 %v6417, 16
    %v6484 = vrot.slane %v6482, 5
    %v6485 = vsel %vm483, %v6480, %v6484
    %v6487 = vshrl.u32 %v6418, 16
    %v6489 = vrot.slane %v6487, 4
    %v6490 = vshll.u32 %v6418, 16
    %v6492 = vrot.slane %v6490, 5
    %v6493 = vor.u32 %v6489, %v6492
    %v6494 = vrot.slane %v6493, 4
    %v6496 = vshll.u32 %v6419, 16
    %v6498 = vrot.slane %v6496, 5
    %v6499 = vsel %vm483, %v6494, %v6498
    %v6501 = vshrl.u32 %v6420, 16
    %v6503 = vrot.slane %v6501, 4
    %v6504 = vshll.u32 %v6420, 16
    %v6506 = vrot.slane %v6504, 5
    %v6507 = vor.u32 %v6503, %v6506
    %v6508 = vrot.slane %v6507, 4
    %v6510 = vshll.u32 %v6421, 16
    %v6512 = vrot.slane %v6510, 5
    %v6513 = vsel %vm483, %v6508, %v6512
    %v6515 = vshrl.u32 %v6422, 16
    %v6517 = vrot.slane %v6515, 4
    %v6518 = vshll.u32 %v6422, 16
    %v6520 = vrot.slane %v6518, 5
    %v6521 = vor.u32 %v6517, %v6520
    %v6522 = vrot.slane %v6521, 4
    %v6524 = vshll.u32 %v6423, 16
    %v6526 = vrot.slane %v6524, 5
    %v6527 = vsel %vm483, %v6522, %v6526
    %v6529 = vshrl.u32 %v6424, 16
    %v6531 = vrot.slane %v6529, 4
    %v6532 = vshll.u32 %v6424, 16
    %v6534 = vrot.slane %v6532, 5
    %v6535 = vor.u32 %v6531, %v6534
    %v6536 = vrot.slane %v6535, 4
    %v6538 = vshll.u32 %v6425, 16
    %v6540 = vrot.slane %v6538, 5
    %v6541 = vsel %vm483, %v6536, %v6540
    %v6543 = vshrl.u32 %v6426, 16
    %v6545 = vrot.slane %v6543, 4
    %v6546 = vshll.u32 %v6426, 16
    %v6548 = vrot.slane %v6546, 5
    %v6549 = vor.u32 %v6545, %v6548
    %v6550 = vrot.slane %v6549, 4
    %v6552 = vshll.u32 %v6427, 16
    %v6554 = vrot.slane %v6552, 5
    %v6555 = vsel %vm483, %v6550, %v6554
    %v6557 = vshrl.u32 %v6428, 16
    %v6559 = vrot.slane %v6557, 4
    %v6560 = vshll.u32 %v6428, 16
    %v6562 = vrot.slane %v6560, 5
    %v6563 = vor.u32 %v6559, %v6562
    %v6564 = vrot.slane %v6563, 4
    %v6566 = vshll.u32 %v6429, 16
    %v6568 = vrot.slane %v6566, 5
    %v6569 = vsel %vm483, %v6564, %v6568
    %v6571 = vshrl.u32 %v6430, 16
    %v6573 = vrot.slane %v6571, 4
    %v6574 = vshll.u32 %v6430, 16
    %v6576 = vrot.slane %v6574, 5
    %v6577 = vor.u32 %v6573, %v6576
    %v6578 = vrot.slane %v6577, 4
    %v6580 = vshll.u32 %v6431, 16
    %v6582 = vrot.slane %v6580, 5
    %v6583 = vsel %vm483, %v6578, %v6582
    %v6585 = vshrl.u32 %v6432, 16
    %v6587 = vrot.slane %v6585, 4
    %v6588 = vshll.u32 %v6432, 16
    %v6590 = vrot.slane %v6588, 5
    %v6591 = vor.u32 %v6587, %v6590
    %v6592 = vrot.slane %v6591, 4
    %v6594 = vshll.u32 %v6433, 16
    %v6596 = vrot.slane %v6594, 5
    %v6597 = vsel %vm483, %v6592, %v6596
    %v6599 = vshrl.u32 %v6434, 16
    %v6601 = vrot.slane %v6599, 4
    %v6602 = vshll.u32 %v6434, 16
    %v6604 = vrot.slane %v6602, 5
    %v6605 = vor.u32 %v6601, %v6604
    %v6606 = vrot.slane %v6605, 4
    %v6608 = vshll.u32 %v6435, 16
    %v6610 = vrot.slane %v6608, 5
    %v6611 = vsel %vm483, %v6606, %v6610
    %v6613 = vshrl.u32 %v6436, 16
    %v6615 = vrot.slane %v6613, 4
    %v6616 = vshll.u32 %v6436, 16
    %v6618 = vrot.slane %v6616, 5
    %v6619 = vor.u32 %v6615, %v6618
    %v6620 = vrot.slane %v6619, 4
    %v6622 = vshll.u32 %v6437, 16
    %v6624 = vrot.slane %v6622, 5
    %v6625 = vsel %vm483, %v6620, %v6624
    %v6627 = vshrl.u32 %v6438, 16
    %v6629 = vrot.slane %v6627, 4
    %v6630 = vshll.u32 %v6438, 16
    %v6632 = vrot.slane %v6630, 5
    %v6633 = vor.u32 %v6629, %v6632
    %v6634 = vrot.slane %v6633, 4
    %v6636 = vshll.u32 %v6439, 16
    %v6638 = vrot.slane %v6636, 5
    %v6639 = vsel %vm483, %v6634, %v6638
    %v6641 = vshrl.u32 %v6440, 16
    %v6643 = vrot.slane %v6641, 4
    %v6644 = vshll.u32 %v6440, 16
    %v6646 = vrot.slane %v6644, 5
    %v6647 = vor.u32 %v6643, %v6646
    %v6648 = vrot.slane %v6647, 4
    %v6650 = vshll.u32 %v6441, 16
    %v6652 = vrot.slane %v6650, 5
    %v6653 = vsel %vm483, %v6648, %v6652
    %v6655 = vshrl.u32 %v6442, 16
    %v6657 = vrot.slane %v6655, 4
    %v6658 = vshll.u32 %v6442, 16
    %v6660 = vrot.slane %v6658, 5
    %v6661 = vor.u32 %v6657, %v6660
    %v6662 = vrot.slane %v6661, 4
    %v6664 = vshll.u32 %v6443, 16
    %v6666 = vrot.slane %v6664, 5
    %v6667 = vsel %vm483, %v6662, %v6666
    %s6668 = scalar_lea.vmem [#allocation3], 768
    %v6669 = vld [vmem:[%s6668] sm:$0xff]
    %v6670 = vld [vmem:[%s6668 + $0x8] sm:$0xff]
    %v6671 = vld [vmem:[%s6668 + $0x10] sm:$0xff]
    %v6672 = vld [vmem:[%s6668 + $0x18] sm:$0xff]
    %v6673 = vld [vmem:[%s6668 + $0x20] sm:$0xff]
    %v6674 = vld [vmem:[%s6668 + $0x28] sm:$0xff]
    %v6675 = vld [vmem:[%s6668 + $0x30] sm:$0xff]
    %v6676 = vld [vmem:[%s6668 + $0x38] sm:$0xff]
    %v6677 = vld [vmem:[%s6668 + $0x40] sm:$0xff]
    %v6678 = vld [vmem:[%s6668 + $0x48] sm:$0xff]
    %v6679 = vld [vmem:[%s6668 + $0x50] sm:$0xff]
    %v6680 = vld [vmem:[%s6668 + $0x58] sm:$0xff]
    %v6681 = vld [vmem:[%s6668 + $0x60] sm:$0xff]
    %v6682 = vld [vmem:[%s6668 + $0x68] sm:$0xff]
    %v6683 = vld [vmem:[%s6668 + $0x70] sm:$0xff]
    %v6684 = vld [vmem:[%s6668 + $0x78] sm:$0xff]
    %v6685 = vld [vmem:[%s6668 + $0x80] sm:$0xff]
    %v6686 = vld [vmem:[%s6668 + $0x88] sm:$0xff]
    %v6687 = vld [vmem:[%s6668 + $0x90] sm:$0xff]
    %v6688 = vld [vmem:[%s6668 + $0x98] sm:$0xff]
    %v6689 = vld [vmem:[%s6668 + $0xa0] sm:$0xff]
    %v6690 = vld [vmem:[%s6668 + $0xa8] sm:$0xff]
    %v6691 = vld [vmem:[%s6668 + $0xb0] sm:$0xff]
    %v6692 = vld [vmem:[%s6668 + $0xb8] sm:$0xff]
    %v6693 = vld [vmem:[%s6668 + $0xc0] sm:$0xff]
    %v6694 = vld [vmem:[%s6668 + $0xc8] sm:$0xff]
    %v6695 = vld [vmem:[%s6668 + $0xd0] sm:$0xff]
    %v6696 = vld [vmem:[%s6668 + $0xd8] sm:$0xff]
    %v6697 = vld [vmem:[%s6668 + $0xe0] sm:$0xff]
    %v6698 = vld [vmem:[%s6668 + $0xe8] sm:$0xff]
    %v6699 = vld [vmem:[%s6668 + $0xf0] sm:$0xff]
    %v6700 = vld [vmem:[%s6668 + $0xf8] sm:$0xff]
    %v6701 = vunpack.c.l.b16 %v6457
    %v6702 = vunpack.c.h.b16 %v6457
    %v6703 = vunpack.c.l.b16 %v6471
    %v6704 = vunpack.c.h.b16 %v6471
    %v6705 = vunpack.c.l.b16 %v6485
    %v6706 = vunpack.c.h.b16 %v6485
    %v6707 = vunpack.c.l.b16 %v6499
    %v6708 = vunpack.c.h.b16 %v6499
    %v6709 = vunpack.c.l.b16 %v6513
    %v6710 = vunpack.c.h.b16 %v6513
    %v6711 = vunpack.c.l.b16 %v6527
    %v6712 = vunpack.c.h.b16 %v6527
    %v6713 = vunpack.c.l.b16 %v6541
    %v6714 = vunpack.c.h.b16 %v6541
    %v6715 = vunpack.c.l.b16 %v6555
    %v6716 = vunpack.c.h.b16 %v6555
    %v6717 = vunpack.c.l.b16 %v6569
    %v6718 = vunpack.c.h.b16 %v6569
    %v6719 = vunpack.c.l.b16 %v6583
    %v6720 = vunpack.c.h.b16 %v6583
    %v6721 = vunpack.c.l.b16 %v6597
    %v6722 = vunpack.c.h.b16 %v6597
    %v6723 = vunpack.c.l.b16 %v6611
    %v6724 = vunpack.c.h.b16 %v6611
    %v6725 = vunpack.c.l.b16 %v6625
    %v6726 = vunpack.c.h.b16 %v6625
    %v6727 = vunpack.c.l.b16 %v6639
    %v6728 = vunpack.c.h.b16 %v6639
    %v6729 = vunpack.c.l.b16 %v6653
    %v6730 = vunpack.c.h.b16 %v6653
    %v6731 = vunpack.c.l.b16 %v6667
    %v6732 = vunpack.c.h.b16 %v6667
    %v6733 = vpack.c.b16 %v6703, %v6701
    %v6734 = vpack.c.b16 %v6704, %v6702
    %v6735 = vpack.c.b16 %v6707, %v6705
    %v6736 = vpack.c.b16 %v6708, %v6706
    %v6737 = vpack.c.b16 %v6711, %v6709
    %v6738 = vpack.c.b16 %v6712, %v6710
    %v6739 = vpack.c.b16 %v6715, %v6713
    %v6740 = vpack.c.b16 %v6716, %v6714
    %v6741 = vpack.c.b16 %v6719, %v6717
    %v6742 = vpack.c.b16 %v6720, %v6718
    %v6743 = vpack.c.b16 %v6723, %v6721
    %v6744 = vpack.c.b16 %v6724, %v6722
    %v6745 = vpack.c.b16 %v6727, %v6725
    %v6746 = vpack.c.b16 %v6728, %v6726
    %v6747 = vpack.c.b16 %v6731, %v6729
    %v6748 = vpack.c.b16 %v6732, %v6730
    %6765 = vmatprep.subr.bf16.mxu0 %v6670
    %6766 = vmatpush1.bf16.msra.mxu0 %v6669
    %6767 = vmatprep.subr.bf16.mxu0 %v6672
    %6768 = vmatpush1.bf16.msra.mxu0 %v6671
    %6769 = vmatprep.subr.bf16.mxu0 %v6674
    %6770 = vmatpush1.bf16.msra.mxu0 %v6673
    %6771 = vmatprep.subr.bf16.mxu0 %v6676
    %6772 = vmatpush1.bf16.msra.mxu0 %v6675
    %6773 = vmatprep.subr.bf16.mxu0 %v6678
    %6774 = vmatpush1.bf16.msra.mxu0 %v6677
    %6775 = vmatprep.subr.bf16.mxu0 %v6680
    %6776 = vmatpush1.bf16.msra.mxu0 %v6679
    %6777 = vmatprep.subr.bf16.mxu0 %v6682
    %6778 = vmatpush1.bf16.msra.mxu0 %v6681
    %6779 = vmatprep.subr.bf16.mxu0 %v6684
    %6780 = vmatpush1.bf16.msra.mxu0 %v6683
    %6781 = vmatprep.subr.bf16.mxu0 %v6686
    %6782 = vmatpush1.bf16.msra.mxu0 %v6685
    %6783 = vmatprep.subr.bf16.mxu0 %v6688
    %6784 = vmatpush1.bf16.msra.mxu0 %v6687
    %6785 = vmatprep.subr.bf16.mxu0 %v6690
    %6786 = vmatpush1.bf16.msra.mxu0 %v6689
    %6787 = vmatprep.subr.bf16.mxu0 %v6692
    %6788 = vmatpush1.bf16.msra.mxu0 %v6691
    %6789 = vmatprep.subr.bf16.mxu0 %v6694
    %6790 = vmatpush1.bf16.msra.mxu0 %v6693
    %6791 = vmatprep.subr.bf16.mxu0 %v6696
    %6792 = vmatpush1.bf16.msra.mxu0 %v6695
    %6793 = vmatprep.subr.bf16.mxu0 %v6698
    %6794 = vmatpush1.bf16.msra.mxu0 %v6697
    %6795 = vmatprep.subr.bf16.mxu0 %v6700
    %6796 = vmatpush1.bf16.msra.mxu0 %v6699
    %6797 = vmatprep.mubr.bf16.mxu0 %v6734
    %6798 = vmatmul.mubr.bf16.gmra.mrb[0].mxu0 %v6733
    %v6799 = vpop.f32.mrb[0].mxu0
    %v6800 = vadd.f32 0.0, %v6799
    %v6801 = vpop.f32.mrb[0].mxu0
    %v6802 = vadd.f32 0.0, %v6801
    %v6803 = vpop.f32.mrb[0].mxu0
    %v6804 = vadd.f32 0.0, %v6803
    %v6805 = vpop.f32.mrb[0].mxu0
    %v6806 = vadd.f32 0.0, %v6805
    %6807 = vmatprep.mubr.bf16.mxu0 %v6736
    %6808 = vmatmul.mubr.bf16.gmra.mrb[0].mxu0 %v6735
    %v6809 = vpop.f32.mrb[0].mxu0
    %v6810 = vadd.f32 0.0, %v6809
    %v6811 = vpop.f32.mrb[0].mxu0
    %v6812 = vadd.f32 0.0, %v6811
    %v6813 = vpop.f32.mrb[0].mxu0
    %v6814 = vadd.f32 0.0, %v6813
    %v6815 = vpop.f32.mrb[0].mxu0
    %v6816 = vadd.f32 0.0, %v6815
    %6817 = vmatprep.mubr.bf16.mxu0 %v6738
    %6818 = vmatmul.mubr.bf16.gmra.mrb[0].mxu0 %v6737
    %v6819 = vpop.f32.mrb[0].mxu0
    %v6820 = vadd.f32 0.0, %v6819
    %v6821 = vpop.f32.mrb[0].mxu0
    %v6822 = vadd.f32 0.0, %v6821
    %v6823 = vpop.f32.mrb[0].mxu0
    %v6824 = vadd.f32 0.0, %v6823
    %v6825 = vpop.f32.mrb[0].mxu0
    %v6826 = vadd.f32 0.0, %v6825
    %6827 = vmatprep.mubr.bf16.mxu0 %v6740
    %6828 = vmatmul.mubr.bf16.gmra.mrb[0].mxu0 %v6739
    %v6829 = vpop.f32.mrb[0].mxu0
    %v6830 = vadd.f32 0.0, %v6829
    %v6831 = vpop.f32.mrb[0].mxu0
    %v6832 = vadd.f32 0.0, %v6831
    %v6833 = vpop.f32.mrb[0].mxu0
    %v6834 = vadd.f32 0.0, %v6833
    %v6835 = vpop.f32.mrb[0].mxu0
    %v6836 = vadd.f32 0.0, %v6835
    %6837 = vmatprep.mubr.bf16.mxu0 %v6742
    %6838 = vmatmul.mubr.bf16.gmra.mrb[0].mxu0 %v6741
    %v6839 = vpop.f32.mrb[0].mxu0
    %v6840 = vadd.f32 0.0, %v6839
    %v6841 = vpop.f32.mrb[0].mxu0
    %v6842 = vadd.f32 0.0, %v6841
    %v6843 = vpop.f32.mrb[0].mxu0
    %v6844 = vadd.f32 0.0, %v6843
    %v6845 = vpop.f32.mrb[0].mxu0
    %v6846 = vadd.f32 0.0, %v6845
    %6847 = vmatprep.mubr.bf16.mxu0 %v6744
    %6848 = vmatmul.mubr.bf16.gmra.mrb[0].mxu0 %v6743
    %v6849 = vpop.f32.mrb[0].mxu0
    %v6850 = vadd.f32 0.0, %v6849
    %v6851 = vpop.f32.mrb[0].mxu0
    %v6852 = vadd.f32 0.0, %v6851
    %v6853 = vpop.f32.mrb[0].mxu0
    %v6854 = vadd.f32 0.0, %v6853
    %v6855 = vpop.f32.mrb[0].mxu0
    %v6856 = vadd.f32 0.0, %v6855
    %6857 = vmatprep.mubr.bf16.mxu0 %v6746
    %6858 = vmatmul.mubr.bf16.gmra.mrb[0].mxu0 %v6745
    %v6859 = vpop.f32.mrb[0].mxu0
    %v6860 = vadd.f32 0.0, %v6859
    %v6861 = vpop.f32.mrb[0].mxu0
    %v6862 = vadd.f32 0.0, %v6861
    %v6863 = vpop.f32.mrb[0].mxu0
    %v6864 = vadd.f32 0.0, %v6863
    %v6865 = vpop.f32.mrb[0].mxu0
    %v6866 = vadd.f32 0.0, %v6865
    %6867 = vmatprep.mubr.bf16.mxu0 %v6748
    %6868 = vmatmul.mubr.bf16.gmra.mrb[0].mxu0 %v6747
    %v6869 = vpop.f32.mrb[0].mxu0
    %v6870 = vadd.f32 0.0, %v6869
    %v6871 = vpop.f32.mrb[0].mxu0
    %v6872 = vadd.f32 0.0, %v6871
    %v6873 = vpop.f32.mrb[0].mxu0
    %v6874 = vadd.f32 0.0, %v6873
    %v6875 = vpop.f32.mrb[0].mxu0
    %v6876 = vadd.f32 0.0, %v6875
    %6877 = vdwg.mxu0
    %v6878 = vadd.f32 %v6380, %v6800
    %v6879 = vadd.f32 %v6381, %v6802
    %v6880 = vadd.f32 %v6382, %v6804
    %v6881 = vadd.f32 %v6383, %v6806
    %v6882 = vadd.f32 %v6384, %v6810
    %v6883 = vadd.f32 %v6385, %v6812
    %v6884 = vadd.f32 %v6386, %v6814
    %v6885 = vadd.f32 %v6387, %v6816
    %v6886 = vadd.f32 %v6388, %v6820
    %v6887 = vadd.f32 %v6389, %v6822
    %v6888 = vadd.f32 %v6390, %v6824
    %v6889 = vadd.f32 %v6391, %v6826
    %v6890 = vadd.f32 %v6392, %v6830
    %v6891 = vadd.f32 %v6393, %v6832
    %v6892 = vadd.f32 %v6394, %v6834
    %v6893 = vadd.f32 %v6395, %v6836
    %v6894 = vadd.f32 %v6396, %v6840
    %v6895 = vadd.f32 %v6397, %v6842
    %v6896 = vadd.f32 %v6398, %v6844
    %v6897 = vadd.f32 %v6399, %v6846
    %v6898 = vadd.f32 %v6400, %v6850
    %v6899 = vadd.f32 %v6401, %v6852
    %v6900 = vadd.f32 %v6402, %v6854
    %v6901 = vadd.f32 %v6403, %v6856
    %v6902 = vadd.f32 %v6404, %v6860
    %v6903 = vadd.f32 %v6405, %v6862
    %v6904 = vadd.f32 %v6406, %v6864
    %v6905 = vadd.f32 %v6407, %v6866
    %v6906 = vadd.f32 %v6408, %v6870
    %v6907 = vadd.f32 %v6409, %v6872
    %v6908 = vadd.f32 %v6410, %v6874
    %v6909 = vadd.f32 %v6411, %v6876
    %v6910 = vld [vmem:[%s411] sm:$0xee]
    %v6911 = vld [vmem:[%s411 + $0x10] sm:$0xee]
    %v6912 = vld [vmem:[%s411 + $0x20] sm:$0xee]
    %v6913 = vld [vmem:[%s411 + $0x30] sm:$0xee]
    %v6914 = vld [vmem:[%s411 + $0x40] sm:$0xee]
    %v6915 = vld [vmem:[%s411 + $0x50] sm:$0xee]
    %v6916 = vld [vmem:[%s411 + $0x60] sm:$0xee]
    %v6917 = vld [vmem:[%s411 + $0x70] sm:$0xee]
    %v6918 = vld [vmem:[%s411 + $0xa0] sm:$0xee]
    %v6919 = vld [vmem:[%s411 + $0xb0] sm:$0xee]
    %v6920 = vld [vmem:[%s411 + $0xc0] sm:$0xee]
    %v6921 = vld [vmem:[%s411 + $0xd0] sm:$0xee]
    %v6922 = vld [vmem:[%s411 + $0xe0] sm:$0xee]
    %v6923 = vld [vmem:[%s411 + $0xf0] sm:$0xee]
    %v6924 = vld [vmem:[%s411 + $0x100] sm:$0xee]
    %v6925 = vld [vmem:[%s411 + $0x110] sm:$0xee]
    %v6958 = vrot.slane %v6910, 5
    %v6959 = vrot.slane %v6958, 4
    %v6960 = vrot.slane %v6413, 5
    %v6961 = vsel %vm790, %v6959, %v6960
    %v6962 = vrot.slane %v6911, 5
    %v6963 = vrot.slane %v6962, 4
    %v6964 = vrot.slane %v6415, 5
    %v6965 = vsel %vm790, %v6963, %v6964
    %v6966 = vrot.slane %v6912, 5
    %v6967 = vrot.slane %v6966, 4
    %v6968 = vrot.slane %v6417, 5
    %v6969 = vsel %vm790, %v6967, %v6968
    %v6970 = vrot.slane %v6913, 5
    %v6971 = vrot.slane %v6970, 4
    %v6972 = vrot.slane %v6419, 5
    %v6973 = vsel %vm790, %v6971, %v6972
    %v6974 = vrot.slane %v6914, 5
    %v6975 = vrot.slane %v6974, 4
    %v6976 = vrot.slane %v6421, 5
    %v6977 = vsel %vm790, %v6975, %v6976
    %v6978 = vrot.slane %v6915, 5
    %v6979 = vrot.slane %v6978, 4
    %v6980 = vrot.slane %v6423, 5
    %v6981 = vsel %vm790, %v6979, %v6980
    %v6982 = vrot.slane %v6916, 5
    %v6983 = vrot.slane %v6982, 4
    %v6984 = vrot.slane %v6425, 5
    %v6985 = vsel %vm790, %v6983, %v6984
    %v6986 = vrot.slane %v6917, 5
    %v6987 = vrot.slane %v6986, 4
    %v6988 = vrot.slane %v6427, 5
    %v6989 = vsel %vm790, %v6987, %v6988
    %v6990 = vrot.slane %v6918, 5
    %v6991 = vrot.slane %v6990, 4
    %v6992 = vrot.slane %v6429, 5
    %v6993 = vsel %vm790, %v6991, %v6992
    %v6994 = vrot.slane %v6919, 5
    %v6995 = vrot.slane %v6994, 4
    %v6996 = vrot.slane %v6431, 5
    %v6997 = vsel %vm790, %v6995, %v6996
    %v6998 = vrot.slane %v6920, 5
    %v6999 = vrot.slane %v6998, 4
    %v7000 = vrot.slane %v6433, 5
    %v7001 = vsel %vm790, %v6999, %v7000
    %v7002 = vrot.slane %v6921, 5
    %v7003 = vrot.slane %v7002, 4
    %v7004 = vrot.slane %v6435, 5
    %v7005 = vsel %vm790, %v7003, %v7004
    %v7006 = vrot.slane %v6922, 5
    %v7007 = vrot.slane %v7006, 4
    %v7008 = vrot.slane %v6437, 5
    %v7009 = vsel %vm790, %v7007, %v7008
    %v7010 = vrot.slane %v6923, 5
    %v7011 = vrot.slane %v7010, 4
    %v7012 = vrot.slane %v6439, 5
    %v7013 = vsel %vm790, %v7011, %v7012
    %v7014 = vrot.slane %v6924, 5
    %v7015 = vrot.slane %v7014, 4
    %v7016 = vrot.slane %v6441, 5
    %v7017 = vsel %vm790, %v7015, %v7016
    %v7018 = vrot.slane %v6925, 5
    %v7019 = vrot.slane %v7018, 4
    %v7020 = vrot.slane %v6443, 5
    %v7021 = vsel %vm790, %v7019, %v7020
    %s7022 = scalar_lea.vmem [#allocation3], 1024
    %v7023 = vld [vmem:[%s7022] sm:$0xff]
    %v7024 = vld [vmem:[%s7022 + $0x8] sm:$0xff]
    %v7025 = vld [vmem:[%s7022 + $0x10] sm:$0xff]
    %v7026 = vld [vmem:[%s7022 + $0x18] sm:$0xff]
    %v7027 = vld [vmem:[%s7022 + $0x20] sm:$0xff]
    %v7028 = vld [vmem:[%s7022 + $0x28] sm:$0xff]
    %v7029 = vld [vmem:[%s7022 + $0x30] sm:$0xff]
    %v7030 = vld [vmem:[%s7022 + $0x38] sm:$0xff]
    %v7031 = vld [vmem:[%s7022 + $0x40] sm:$0xff]
    %v7032 = vld [vmem:[%s7022 + $0x48] sm:$0xff]
    %v7033 = vld [vmem:[%s7022 + $0x50] sm:$0xff]
    %v7034 = vld [vmem:[%s7022 + $0x58] sm:$0xff]
    %v7035 = vld [vmem:[%s7022 + $0x60] sm:$0xff]
    %v7036 = vld [vmem:[%s7022 + $0x68] sm:$0xff]
    %v7037 = vld [vmem:[%s7022 + $0x70] sm:$0xff]
    %v7038 = vld [vmem:[%s7022 + $0x78] sm:$0xff]
    %v7039 = vld [vmem:[%s7022 + $0x80] sm:$0xff]
    %v7040 = vld [vmem:[%s7022 + $0x88] sm:$0xff]
    %v7041 = vld [vmem:[%s7022 + $0x90] sm:$0xff]
    %v7042 = vld [vmem:[%s7022 + $0x98] sm:$0xff]
    %v7043 = vld [vmem:[%s7022 + $0xa0] sm:$0xff]
    %v7044 = vld [vmem:[%s7022 + $0xa8] sm:$0xff]
    %v7045 = vld [vmem:[%s7022 + $0xb0] sm:$0xff]
    %v7046 = vld [vmem:[%s7022 + $0xb8] sm:$0xff]
    %v7047 = vld [vmem:[%s7022 + $0xc0] sm:$0xff]
    %v7048 = vld [vmem:[%s7022 + $0xc8] sm:$0xff]
    %v7049 = vld [vmem:[%s7022 + $0xd0] sm:$0xff]
    %v7050 = vld [vmem:[%s7022 + $0xd8] sm:$0xff]
    %v7051 = vld [vmem:[%s7022 + $0xe0] sm:$0xff]
    %v7052 = vld [vmem:[%s7022 + $0xe8] sm:$0xff]
    %v7053 = vld [vmem:[%s7022 + $0xf0] sm:$0xff]
    %v7054 = vld [vmem:[%s7022 + $0xf8] sm:$0xff]
    %v7055 = vunpack.c.l.b16 %v6961
    %v7056 = vunpack.c.h.b16 %v6961
    %v7057 = vunpack.c.l.b16 %v6965
    %v7058 = vunpack.c.h.b16 %v6965
    %v7059 = vunpack.c.l.b16 %v6969
    %v7060 = vunpack.c.h.b16 %v6969
    %v7061 = vunpack.c.l.b16 %v6973
    %v7062 = vunpack.c.h.b16 %v6973
    %v7063 = vunpack.c.l.b16 %v6977
    %v7064 = vunpack.c.h.b16 %v6977
    %v7065 = vunpack.c.l.b16 %v6981
    %v7066 = vunpack.c.h.b16 %v6981
    %v7067 = vunpack.c.l.b16 %v6985
    %v7068 = vunpack.c.h.b16 %v6985
    %v7069 = vunpack.c.l.b16 %v6989
    %v7070 = vunpack.c.h.b16 %v6989
    %v7071 = vunpack.c.l.b16 %v6993
    %v7072 = vunpack.c.h.b16 %v6993
    %v7073 = vunpack.c.l.b16 %v6997
    %v7074 = vunpack.c.h.b16 %v6997
    %v7075 = vunpack.c.l.b16 %v7001
    %v7076 = vunpack.c.h.b16 %v7001
    %v7077 = vunpack.c.l.b16 %v7005
    %v7078 = vunpack.c.h.b16 %v7005
    %v7079 = vunpack.c.l.b16 %v7009
    %v7080 = vunpack.c.h.b16 %v7009
    %v7081 = vunpack.c.l.b16 %v7013
    %v7082 = vunpack.c.h.b16 %v7013
    %v7083 = vunpack.c.l.b16 %v7017
    %v7084 = vunpack.c.h.b16 %v7017
    %v7085 = vunpack.c.l.b16 %v7021
    %v7086 = vunpack.c.h.b16 %v7021
    %v7087 = vpack.c.b16 %v7057, %v7055
    %v7088 = vpack.c.b16 %v7058, %v7056
    %v7089 = vpack.c.b16 %v7061, %v7059
    %v7090 = vpack.c.b16 %v7062, %v7060
    %v7091 = vpack.c.b16 %v7065, %v7063
    %v7092 = vpack.c.b16 %v7066, %v7064
    %v7093 = vpack.c.b16 %v7069, %v7067
    %v7094 = vpack.c.b16 %v7070, %v7068
    %v7095 = vpack.c.b16 %v7073, %v7071
    %v7096 = vpack.c.b16 %v7074, %v7072
    %v7097 = vpack.c.b16 %v7077, %v7075
    %v7098 = vpack.c.b16 %v7078, %v7076
    %v7099 = vpack.c.b16 %v7081, %v7079
    %v7100 = vpack.c.b16 %v7082, %v7080
    %v7101 = vpack.c.b16 %v7085, %v7083
    %v7102 = vpack.c.b16 %v7086, %v7084
    %7119 = vmatprep.subr.bf16.mxu0 %v7024
    %7120 = vmatpush1.bf16.msra.mxu0 %v7023
    %7121 = vmatprep.subr.bf16.mxu0 %v7026
    %7122 = vmatpush1.bf16.msra.mxu0 %v7025
    %7123 = vmatprep.subr.bf16.mxu0 %v7028
    %7124 = vmatpush1.bf16.msra.mxu0 %v7027
    %7125 = vmatprep.subr.bf16.mxu0 %v7030
    %7126 = vmatpush1.bf16.msra.mxu0 %v7029
    %7127 = vmatprep.subr.bf16.mxu0 %v7032
    %7128 = vmatpush1.bf16.msra.mxu0 %v7031
    %7129 = vmatprep.subr.bf16.mxu0 %v7034
    %7130 = vmatpush1.bf16.msra.mxu0 %v7033
    %7131 = vmatprep.subr.bf16.mxu0 %v7036
    %7132 = vmatpush1.bf16.msra.mxu0 %v7035
    %7133 = vmatprep.subr.bf16.mxu0 %v7038
    %7134 = vmatpush1.bf16.msra.mxu0 %v7037
    %7135 = vmatprep.subr.bf16.mxu0 %v7040
    %7136 = vmatpush1.bf16.msra.mxu0 %v7039
    %7137 = vmatprep.subr.bf16.mxu0 %v7042
    %7138 = vmatpush1.bf16.msra.mxu0 %v7041
    %7139 = vmatprep.subr.bf16.mxu0 %v7044
    %7140 = vmatpush1.bf16.msra.mxu0 %v7043
    %7141 = vmatprep.subr.bf16.mxu0 %v7046
    %7142 = vmatpush1.bf16.msra.mxu0 %v7045
    %7143 = vmatprep.subr.bf16.mxu0 %v7048
    %7144 = vmatpush1.bf16.msra.mxu0 %v7047
    %7145 = vmatprep.subr.bf16.mxu0 %v7050
    %7146 = vmatpush1.bf16.msra.mxu0 %v7049
    %7147 = vmatprep.subr.bf16.mxu0 %v7052
    %7148 = vmatpush1.bf16.msra.mxu0 %v7051
    %7149 = vmatprep.subr.bf16.mxu0 %v7054
    %7150 = vmatpush1.bf16.msra.mxu0 %v7053
    %7151 = vmatprep.mubr.bf16.mxu0 %v7088
    %7152 = vmatmul.mubr.bf16.gmra.mrb[0].mxu0 %v7087
    %v7153 = vpop.f32.mrb[0].mxu0
    %v7154 = vadd.f32 0.0, %v7153
    %v7155 = vpop.f32.mrb[0].mxu0
    %v7156 = vadd.f32 0.0, %v7155
    %v7157 = vpop.f32.mrb[0].mxu0
    %v7158 = vadd.f32 0.0, %v7157
    %v7159 = vpop.f32.mrb[0].mxu0
    %v7160 = vadd.f32 0.0, %v7159
    %7161 = vmatprep.mubr.bf16.mxu0 %v7090
    %7162 = vmatmul.mubr.bf16.gmra.mrb[0].mxu0 %v7089
    %v7163 = vpop.f32.mrb[0].mxu0
    %v7164 = vadd.f32 0.0, %v7163
    %v7165 = vpop.f32.mrb[0].mxu0
    %v7166 = vadd.f32 0.0, %v7165
    %v7167 = vpop.f32.mrb[0].mxu0
    %v7168 = vadd.f32 0.0, %v7167
    %v7169 = vpop.f32.mrb[0].mxu0
    %v7170 = vadd.f32 0.0, %v7169
    %7171 = vmatprep.mubr.bf16.mxu0 %v7092
    %7172 = vmatmul.mubr.bf16.gmra.mrb[0].mxu0 %v7091
    %v7173 = vpop.f32.mrb[0].mxu0
    %v7174 = vadd.f32 0.0, %v7173
    %v7175 = vpop.f32.mrb[0].mxu0
    %v7176 = vadd.f32 0.0, %v7175
    %v7177 = vpop.f32.mrb[0].mxu0
    %v7178 = vadd.f32 0.0, %v7177
    %v7179 = vpop.f32.mrb[0].mxu0
    %v7180 = vadd.f32 0.0, %v7179
    %7181 = vmatprep.mubr.bf16.mxu0 %v7094
    %7182 = vmatmul.mubr.bf16.gmra.mrb[0].mxu0 %v7093
    %v7183 = vpop.f32.mrb[0].mxu0
    %v7184 = vadd.f32 0.0, %v7183
    %v7185 = vpop.f32.mrb[0].mxu0
    %v7186 = vadd.f32 0.0, %v7185
    %v7187 = vpop.f32.mrb[0].mxu0
    %v7188 = vadd.f32 0.0, %v7187
    %v7189 = vpop.f32.mrb[0].mxu0
    %v7190 = vadd.f32 0.0, %v7189
    %7191 = vmatprep.mubr.bf16.mxu0 %v7096
    %7192 = vmatmul.mubr.bf16.gmra.mrb[0].mxu0 %v7095
    %v7193 = vpop.f32.mrb[0].mxu0
    %v7194 = vadd.f32 0.0, %v7193
    %v7195 = vpop.f32.mrb[0].mxu0
    %v7196 = vadd.f32 0.0, %v7195
    %v7197 = vpop.f32.mrb[0].mxu0
    %v7198 = vadd.f32 0.0, %v7197
    %v7199 = vpop.f32.mrb[0].mxu0
    %v7200 = vadd.f32 0.0, %v7199
    %7201 = vmatprep.mubr.bf16.mxu0 %v7098
    %7202 = vmatmul.mubr.bf16.gmra.mrb[0].mxu0 %v7097
    %v7203 = vpop.f32.mrb[0].mxu0
    %v7204 = vadd.f32 0.0, %v7203
    %v7205 = vpop.f32.mrb[0].mxu0
    %v7206 = vadd.f32 0.0, %v7205
    %v7207 = vpop.f32.mrb[0].mxu0
    %v7208 = vadd.f32 0.0, %v7207
    %v7209 = vpop.f32.mrb[0].mxu0
    %v7210 = vadd.f32 0.0, %v7209
    %7211 = vmatprep.mubr.bf16.mxu0 %v7100
    %7212 = vmatmul.mubr.bf16.gmra.mrb[0].mxu0 %v7099
    %v7213 = vpop.f32.mrb[0].mxu0
    %v7214 = vadd.f32 0.0, %v7213
    %v7215 = vpop.f32.mrb[0].mxu0
    %v7216 = vadd.f32 0.0, %v7215
    %v7217 = vpop.f32.mrb[0].mxu0
    %v7218 = vadd.f32 0.0, %v7217
    %v7219 = vpop.f32.mrb[0].mxu0
    %v7220 = vadd.f32 0.0, %v7219
    %7221 = vmatprep.mubr.bf16.mxu0 %v7102
    %7222 = vmatmul.mubr.bf16.gmra.mrb[0].mxu0 %v7101
    %v7223 = vpop.f32.mrb[0].mxu0
    %v7224 = vadd.f32 0.0, %v7223
    %v7225 = vpop.f32.mrb[0].mxu0
    %v7226 = vadd.f32 0.0, %v7225
    %v7227 = vpop.f32.mrb[0].mxu0
    %v7228 = vadd.f32 0.0, %v7227
    %v7229 = vpop.f32.mrb[0].mxu0
    %v7230 = vadd.f32 0.0, %v7229
    %7231 = vdwg.mxu0
    %v7232 = vadd.f32 %v6878, %v7154
    %v7233 = vadd.f32 %v6879, %v7156
    %v7234 = vadd.f32 %v6880, %v7158
    %v7235 = vadd.f32 %v6881, %v7160
    %v7236 = vadd.f32 %v6882, %v7164
    %v7237 = vadd.f32 %v6883, %v7166
    %v7238 = vadd.f32 %v6884, %v7168
    %v7239 = vadd.f32 %v6885, %v7170
    %v7240 = vadd.f32 %v6886, %v7174
    %v7241 = vadd.f32 %v6887, %v7176
    %v7242 = vadd.f32 %v6888, %v7178
    %v7243 = vadd.f32 %v6889, %v7180
    %v7244 = vadd.f32 %v6890, %v7184
    %v7245 = vadd.f32 %v6891, %v7186
    %v7246 = vadd.f32 %v6892, %v7188
    %v7247 = vadd.f32 %v6893, %v7190
    %v7248 = vadd.f32 %v6894, %v7194
    %v7249 = vadd.f32 %v6895, %v7196
    %v7250 = vadd.f32 %v6896, %v7198
    %v7251 = vadd.f32 %v6897, %v7200
    %v7252 = vadd.f32 %v6898, %v7204
    %v7253 = vadd.f32 %v6899, %v7206
    %v7254 = vadd.f32 %v6900, %v7208
    %v7255 = vadd.f32 %v6901, %v7210
    %v7256 = vadd.f32 %v6902, %v7214
    %v7257 = vadd.f32 %v6903, %v7216
    %v7258 = vadd.f32 %v6904, %v7218
    %v7259 = vadd.f32 %v6905, %v7220
    %v7260 = vadd.f32 %v6906, %v7224
    %v7261 = vadd.f32 %v6907, %v7226
    %v7262 = vadd.f32 %v6908, %v7228
    %v7263 = vadd.f32 %v6909, %v7230
    %v7264 = vld [vmem:[%s411 + $0x8] sm:$0x33]
    %v7265 = vld [vmem:[%s411 + $0x18] sm:$0x33]
    %v7266 = vld [vmem:[%s411 + $0x28] sm:$0x33]
    %v7267 = vld [vmem:[%s411 + $0x38] sm:$0x33]
    %v7268 = vld [vmem:[%s411 + $0x48] sm:$0x33]
    %v7269 = vld [vmem:[%s411 + $0x58] sm:$0x33]
    %v7270 = vld [vmem:[%s411 + $0x68] sm:$0x33]
    %v7271 = vld [vmem:[%s411 + $0x78] sm:$0x33]
    %v7272 = vld [vmem:[%s411 + $0xa8] sm:$0x33]
    %v7273 = vld [vmem:[%s411 + $0xb8] sm:$0x33]
    %v7274 = vld [vmem:[%s411 + $0xc8] sm:$0x33]
    %v7275 = vld [vmem:[%s411 + $0xd8] sm:$0x33]
    %v7276 = vld [vmem:[%s411 + $0xe8] sm:$0x33]
    %v7277 = vld [vmem:[%s411 + $0xf8] sm:$0x33]
    %v7278 = vld [vmem:[%s411 + $0x108] sm:$0x33]
    %v7279 = vld [vmem:[%s411 + $0x118] sm:$0x33]
    %v7281 = vshrl.u32 %v6910, 16
    %v7283 = vrot.slane %v7281, 5
    %v7284 = vshll.u32 %v6910, 16
    %v7286 = vrot.slane %v7284, 6
    %v7287 = vor.u32 %v7283, %v7286
    %v7288 = vrot.slane %v7287, 4
    %v7290 = vshrl.u32 %v7264, 16
    %v7292 = vrot.slane %v7290, 5
    %v7293 = vshll.u32 %v7264, 16
    %v7295 = vrot.slane %v7293, 6
    %v7296 = vor.u32 %v7292, %v7295
    %v7297 = vsel %vm1260, %v7288, %v7296
    %v7299 = vshrl.u32 %v6911, 16
    %v7301 = vrot.slane %v7299, 5
    %v7302 = vshll.u32 %v6911, 16
    %v7304 = vrot.slane %v7302, 6
    %v7305 = vor.u32 %v7301, %v7304
    %v7306 = vrot.slane %v7305, 4
    %v7308 = vshrl.u32 %v7265, 16
    %v7310 = vrot.slane %v7308, 5
    %v7311 = vshll.u32 %v7265, 16
    %v7313 = vrot.slane %v7311, 6
    %v7314 = vor.u32 %v7310, %v7313
    %v7315 = vsel %vm1260, %v7306, %v7314
    %v7317 = vshrl.u32 %v6912, 16
    %v7319 = vrot.slane %v7317, 5
    %v7320 = vshll.u32 %v6912, 16
    %v7322 = vrot.slane %v7320, 6
    %v7323 = vor.u32 %v7319, %v7322
    %v7324 = vrot.slane %v7323, 4
    %v7326 = vshrl.u32 %v7266, 16
    %v7328 = vrot.slane %v7326, 5
    %v7329 = vshll.u32 %v7266, 16
    %v7331 = vrot.slane %v7329, 6
    %v7332 = vor.u32 %v7328, %v7331
    %v7333 = vsel %vm1260, %v7324, %v7332
    %v7335 = vshrl.u32 %v6913, 16
    %v7337 = vrot.slane %v7335, 5
    %v7338 = vshll.u32 %v6913, 16
    %v7340 = vrot.slane %v7338, 6
    %v7341 = vor.u32 %v7337, %v7340
    %v7342 = vrot.slane %v7341, 4
    %v7344 = vshrl.u32 %v7267, 16
    %v7346 = vrot.slane %v7344, 5
    %v7347 = vshll.u32 %v7267, 16
    %v7349 = vrot.slane %v7347, 6
    %v7350 = vor.u32 %v7346, %v7349
    %v7351 = vsel %vm1260, %v7342, %v7350
    %v7353 = vshrl.u32 %v6914, 16
    %v7355 = vrot.slane %v7353, 5
    %v7356 = vshll.u32 %v6914, 16
    %v7358 = vrot.slane %v7356, 6
    %v7359 = vor.u32 %v7355, %v7358
    %v7360 = vrot.slane %v7359, 4
    %v7362 = vshrl.u32 %v7268, 16
    %v7364 = vrot.slane %v7362, 5
    %v7365 = vshll.u32 %v7268, 16
    %v7367 = vrot.slane %v7365, 6
    %v7368 = vor.u32 %v7364, %v7367
    %v7369 = vsel %vm1260, %v7360, %v7368
    %v7371 = vshrl.u32 %v6915, 16
    %v7373 = vrot.slane %v7371, 5
    %v7374 = vshll.u32 %v6915, 16
    %v7376 = vrot.slane %v7374, 6
    %v7377 = vor.u32 %v7373, %v7376
    %v7378 = vrot.slane %v7377, 4
    %v7380 = vshrl.u32 %v7269, 16
    %v7382 = vrot.slane %v7380, 5
    %v7383 = vshll.u32 %v7269, 16
    %v7385 = vrot.slane %v7383, 6
    %v7386 = vor.u32 %v7382, %v7385
    %v7387 = vsel %vm1260, %v7378, %v7386
    %v7389 = vshrl.u32 %v6916, 16
    %v7391 = vrot.slane %v7389, 5
    %v7392 = vshll.u32 %v6916, 16
    %v7394 = vrot.slane %v7392, 6
    %v7395 = vor.u32 %v7391, %v7394
    %v7396 = vrot.slane %v7395, 4
    %v7398 = vshrl.u32 %v7270, 16
    %v7400 = vrot.slane %v7398, 5
    %v7401 = vshll.u32 %v7270, 16
    %v7403 = vrot.slane %v7401, 6
    %v7404 = vor.u32 %v7400, %v7403
    %v7405 = vsel %vm1260, %v7396, %v7404
    %v7407 = vshrl.u32 %v6917, 16
    %v7409 = vrot.slane %v7407, 5
    %v7410 = vshll.u32 %v6917, 16
    %v7412 = vrot.slane %v7410, 6
    %v7413 = vor.u32 %v7409, %v7412
    %v7414 = vrot.slane %v7413, 4
    %v7416 = vshrl.u32 %v7271, 16
    %v7418 = vrot.slane %v7416, 5
    %v7419 = vshll.u32 %v7271, 16
    %v7421 = vrot.slane %v7419, 6
    %v7422 = vor.u32 %v7418, %v7421
    %v7423 = vsel %vm1260, %v7414, %v7422
    %v7425 = vshrl.u32 %v6918, 16
    %v7427 = vrot.slane %v7425, 5
    %v7428 = vshll.u32 %v6918, 16
    %v7430 = vrot.slane %v7428, 6
    %v7431 = vor.u32 %v7427, %v7430
    %v7432 = vrot.slane %v7431, 4
    %v7434 = vshrl.u32 %v7272, 16
    %v7436 = vrot.slane %v7434, 5
    %v7437 = vshll.u32 %v7272, 16
    %v7439 = vrot.slane %v7437, 6
    %v7440 = vor.u32 %v7436, %v7439
    %v7441 = vsel %vm1260, %v7432, %v7440
    %v7443 = vshrl.u32 %v6919, 16
    %v7445 = vrot.slane %v7443, 5
    %v7446 = vshll.u32 %v6919, 16
    %v7448 = vrot.slane %v7446, 6
    %v7449 = vor.u32 %v7445, %v7448
    %v7450 = vrot.slane %v7449, 4
    %v7452 = vshrl.u32 %v7273, 16
    %v7454 = vrot.slane %v7452, 5
    %v7455 = vshll.u32 %v7273, 16
    %v7457 = vrot.slane %v7455, 6
    %v7458 = vor.u32 %v7454, %v7457
    %v7459 = vsel %vm1260, %v7450, %v7458
    %v7461 = vshrl.u32 %v6920, 16
    %v7463 = vrot.slane %v7461, 5
    %v7464 = vshll.u32 %v6920, 16
    %v7466 = vrot.slane %v7464, 6
    %v7467 = vor.u32 %v7463, %v7466
    %v7468 = vrot.slane %v7467, 4
    %v7470 = vshrl.u32 %v7274, 16
    %v7472 = vrot.slane %v7470, 5
    %v7473 = vshll.u32 %v7274, 16
    %v7475 = vrot.slane %v7473, 6
    %v7476 = vor.u32 %v7472, %v7475
    %v7477 = vsel %vm1260, %v7468, %v7476
    %v7479 = vshrl.u32 %v6921, 16
    %v7481 = vrot.slane %v7479, 5
    %v7482 = vshll.u32 %v6921, 16
    %v7484 = vrot.slane %v7482, 6
    %v7485 = vor.u32 %v7481, %v7484
    %v7486 = vrot.slane %v7485, 4
    %v7488 = vshrl.u32 %v7275, 16
    %v7490 = vrot.slane %v7488, 5
    %v7491 = vshll.u32 %v7275, 16
    %v7493 = vrot.slane %v7491, 6
    %v7494 = vor.u32 %v7490, %v7493
    %v7495 = vsel %vm1260, %v7486, %v7494
    %v7497 = vshrl.u32 %v6922, 16
    %v7499 = vrot.slane %v7497, 5
    %v7500 = vshll.u32 %v6922, 16
    %v7502 = vrot.slane %v7500, 6
    %v7503 = vor.u32 %v7499, %v7502
    %v7504 = vrot.slane %v7503, 4
    %v7506 = vshrl.u32 %v7276, 16
    %v7508 = vrot.slane %v7506, 5
    %v7509 = vshll.u32 %v7276, 16
    %v7511 = vrot.slane %v7509, 6
    %v7512 = vor.u32 %v7508, %v7511
    %v7513 = vsel %vm1260, %v7504, %v7512
    %v7515 = vshrl.u32 %v6923, 16
    %v7517 = vrot.slane %v7515, 5
    %v7518 = vshll.u32 %v6923, 16
    %v7520 = vrot.slane %v7518, 6
    %v7521 = vor.u32 %v7517, %v7520
    %v7522 = vrot.slane %v7521, 4
    %v7524 = vshrl.u32 %v7277, 16
    %v7526 = vrot.slane %v7524, 5
    %v7527 = vshll.u32 %v7277, 16
    %v7529 = vrot.slane %v7527, 6
    %v7530 = vor.u32 %v7526, %v7529
    %v7531 = vsel %vm1260, %v7522, %v7530
    %v7533 = vshrl.u32 %v6924, 16
    %v7535 = vrot.slane %v7533, 5
    %v7536 = vshll.u32 %v6924, 16
    %v7538 = vrot.slane %v7536, 6
    %v7539 = vor.u32 %v7535, %v7538
    %v7540 = vrot.slane %v7539, 4
    %v7542 = vshrl.u32 %v7278, 16
    %v7544 = vrot.slane %v7542, 5
    %v7545 = vshll.u32 %v7278, 16
    %v7547 = vrot.slane %v7545, 6
    %v7548 = vor.u32 %v7544, %v7547
    %v7549 = vsel %vm1260, %v7540, %v7548
    %v7551 = vshrl.u32 %v6925, 16
    %v7553 = vrot.slane %v7551, 5
    %v7554 = vshll.u32 %v6925, 16
    %v7556 = vrot.slane %v7554, 6
    %v7557 = vor.u32 %v7553, %v7556
    %v7558 = vrot.slane %v7557, 4
    %v7560 = vshrl.u32 %v7279, 16
    %v7562 = vrot.slane %v7560, 5
    %v7563 = vshll.u32 %v7279, 16
    %v7565 = vrot.slane %v7563, 6
    %v7566 = vor.u32 %v7562, %v7565
    %v7567 = vsel %vm1260, %v7558, %v7566
    %s7568 = scalar_lea.vmem [#allocation3], 1280
    %v7569 = vld [vmem:[%s7568] sm:$0xff]
    %v7570 = vld [vmem:[%s7568 + $0x8] sm:$0xff]
    %v7571 = vld [vmem:[%s7568 + $0x10] sm:$0xff]
    %v7572 = vld [vmem:[%s7568 + $0x18] sm:$0xff]
    %v7573 = vld [vmem:[%s7568 + $0x20] sm:$0xff]
    %v7574 = vld [vmem:[%s7568 + $0x28] sm:$0xff]
    %v7575 = vld [vmem:[%s7568 + $0x30] sm:$0xff]
    %v7576 = vld [vmem:[%s7568 + $0x38] sm:$0xff]
    %v7577 = vld [vmem:[%s7568 + $0x40] sm:$0xff]
    %v7578 = vld [vmem:[%s7568 + $0x48] sm:$0xff]
    %v7579 = vld [vmem:[%s7568 + $0x50] sm:$0xff]
    %v7580 = vld [vmem:[%s7568 + $0x58] sm:$0xff]
    %v7581 = vld [vmem:[%s7568 + $0x60] sm:$0xff]
    %v7582 = vld [vmem:[%s7568 + $0x68] sm:$0xff]
    %v7583 = vld [vmem:[%s7568 + $0x70] sm:$0xff]
    %v7584 = vld [vmem:[%s7568 + $0x78] sm:$0xff]
    %v7585 = vld [vmem:[%s7568 + $0x80] sm:$0xff]
    %v7586 = vld [vmem:[%s7568 + $0x88] sm:$0xff]
    %v7587 = vld [vmem:[%s7568 + $0x90] sm:$0xff]
    %v7588 = vld [vmem:[%s7568 + $0x98] sm:$0xff]
    %v7589 = vld [vmem:[%s7568 + $0xa0] sm:$0xff]
    %v7590 = vld [vmem:[%s7568 + $0xa8] sm:$0xff]
    %v7591 = vld [vmem:[%s7568 + $0xb0] sm:$0xff]
    %v7592 = vld [vmem:[%s7568 + $0xb8] sm:$0xff]
    %v7593 = vld [vmem:[%s7568 + $0xc0] sm:$0xff]
    %v7594 = vld [vmem:[%s7568 + $0xc8] sm:$0xff]
    %v7595 = vld [vmem:[%s7568 + $0xd0] sm:$0xff]
    %v7596 = vld [vmem:[%s7568 + $0xd8] sm:$0xff]
    %v7597 = vld [vmem:[%s7568 + $0xe0] sm:$0xff]
    %v7598 = vld [vmem:[%s7568 + $0xe8] sm:$0xff]
    %v7599 = vld [vmem:[%s7568 + $0xf0] sm:$0xff]
    %v7600 = vld [vmem:[%s7568 + $0xf8] sm:$0xff]
    %v7601 = vunpack.c.l.b16 %v7297
    %v7602 = vunpack.c.h.b16 %v7297
    %v7603 = vunpack.c.l.b16 %v7315
    %v7604 = vunpack.c.h.b16 %v7315
    %v7605 = vunpack.c.l.b16 %v7333
    %v7606 = vunpack.c.h.b16 %v7333
    %v7607 = vunpack.c.l.b16 %v7351
    %v7608 = vunpack.c.h.b16 %v7351
    %v7609 = vunpack.c.l.b16 %v7369
    %v7610 = vunpack.c.h.b16 %v7369
    %v7611 = vunpack.c.l.b16 %v7387
    %v7612 = vunpack.c.h.b16 %v7387
    %v7613 = vunpack.c.l.b16 %v7405
    %v7614 = vunpack.c.h.b16 %v7405
    %v7615 = vunpack.c.l.b16 %v7423
    %v7616 = vunpack.c.h.b16 %v7423
    %v7617 = vunpack.c.l.b16 %v7441
    %v7618 = vunpack.c.h.b16 %v7441
    %v7619 = vunpack.c.l.b16 %v7459
    %v7620 = vunpack.c.h.b16 %v7459
    %v7621 = vunpack.c.l.b16 %v7477
    %v7622 = vunpack.c.h.b16 %v7477
    %v7623 = vunpack.c.l.b16 %v7495
    %v7624 = vunpack.c.h.b16 %v7495
    %v7625 = vunpack.c.l.b16 %v7513
    %v7626 = vunpack.c.h.b16 %v7513
    %v7627 = vunpack.c.l.b16 %v7531
    %v7628 = vunpack.c.h.b16 %v7531
    %v7629 = vunpack.c.l.b16 %v7549
    %v7630 = vunpack.c.h.b16 %v7549
    %v7631 = vunpack.c.l.b16 %v7567
    %v7632 = vunpack.c.h.b16 %v7567
    %v7633 = vpack.c.b16 %v7603, %v7601
    %v7634 = vpack.c.b16 %v7604, %v7602
    %v7635 = vpack.c.b16 %v7607, %v7605
    %v7636 = vpack.c.b16 %v7608, %v7606
    %v7637 = vpack.c.b16 %v7611, %v7609
    %v7638 = vpack.c.b16 %v7612, %v7610
    %v7639 = vpack.c.b16 %v7615, %v7613
    %v7640 = vpack.c.b16 %v7616, %v7614
    %v7641 = vpack.c.b16 %v7619, %v7617
    %v7642 = vpack.c.b16 %v7620, %v7618
    %v7643 = vpack.c.b16 %v7623, %v7621
    %v7644 = vpack.c.b16 %v7624, %v7622
    %v7645 = vpack.c.b16 %v7627, %v7625
    %v7646 = vpack.c.b16 %v7628, %v7626
    %v7647 = vpack.c.b16 %v7631, %v7629
    %v7648 = vpack.c.b16 %v7632, %v7630
    %7665 = vmatprep.subr.bf16.mxu0 %v7570
    %7666 = vmatpush1.bf16.msra.mxu0 %v7569
    %7667 = vmatprep.subr.bf16.mxu0 %v7572
    %7668 = vmatpush1.bf16.msra.mxu0 %v7571
    %7669 = vmatprep.subr.bf16.mxu0 %v7574
    %7670 = vmatpush1.bf16.msra.mxu0 %v7573
    %7671 = vmatprep.subr.bf16.mxu0 %v7576
    %7672 = vmatpush1.bf16.msra.mxu0 %v7575
    %7673 = vmatprep.subr.bf16.mxu0 %v7578
    %7674 = vmatpush1.bf16.msra.mxu0 %v7577
    %7675 = vmatprep.subr.bf16.mxu0 %v7580
    %7676 = vmatpush1.bf16.msra.mxu0 %v7579
    %7677 = vmatprep.subr.bf16.mxu0 %v7582
    %7678 = vmatpush1.bf16.msra.mxu0 %v7581
    %7679 = vmatprep.subr.bf16.mxu0 %v7584
    %7680 = vmatpush1.bf16.msra.mxu0 %v7583
    %7681 = vmatprep.subr.bf16.mxu0 %v7586
    %7682 = vmatpush1.bf16.msra.mxu0 %v7585
    %7683 = vmatprep.subr.bf16.mxu0 %v7588
    %7684 = vmatpush1.bf16.msra.mxu0 %v7587
    %7685 = vmatprep.subr.bf16.mxu0 %v7590
    %7686 = vmatpush1.bf16.msra.mxu0 %v7589
    %7687 = vmatprep.subr.bf16.mxu0 %v7592
    %7688 = vmatpush1.bf16.msra.mxu0 %v7591
    %7689 = vmatprep.subr.bf16.mxu0 %v7594
    %7690 = vmatpush1.bf16.msra.mxu0 %v7593
    %7691 = vmatprep.subr.bf16.mxu0 %v7596
    %7692 = vmatpush1.bf16.msra.mxu0 %v7595
    %7693 = vmatprep.subr.bf16.mxu0 %v7598
    %7694 = vmatpush1.bf16.msra.mxu0 %v7597
    %7695 = vmatprep.subr.bf16.mxu0 %v7600
    %7696 = vmatpush1.bf16.msra.mxu0 %v7599
    %7697 = vmatprep.mubr.bf16.mxu0 %v7634
    %7698 = vmatmul.mubr.bf16.gmra.mrb[0].mxu0 %v7633
    %v7699 = vpop.f32.mrb[0].mxu0
    %v7700 = vadd.f32 0.0, %v7699
    %v7701 = vpop.f32.mrb[0].mxu0
    %v7702 = vadd.f32 0.0, %v7701
    %v7703 = vpop.f32.mrb[0].mxu0
    %v7704 = vadd.f32 0.0, %v7703
    %v7705 = vpop.f32.mrb[0].mxu0
    %v7706 = vadd.f32 0.0, %v7705
    %7707 = vmatprep.mubr.bf16.mxu0 %v7636
    %7708 = vmatmul.mubr.bf16.gmra.mrb[0].mxu0 %v7635
    %v7709 = vpop.f32.mrb[0].mxu0
    %v7710 = vadd.f32 0.0, %v7709
    %v7711 = vpop.f32.mrb[0].mxu0
    %v7712 = vadd.f32 0.0, %v7711
    %v7713 = vpop.f32.mrb[0].mxu0
    %v7714 = vadd.f32 0.0, %v7713
    %v7715 = vpop.f32.mrb[0].mxu0
    %v7716 = vadd.f32 0.0, %v7715
    %7717 = vmatprep.mubr.bf16.mxu0 %v7638
    %7718 = vmatmul.mubr.bf16.gmra.mrb[0].mxu0 %v7637
    %v7719 = vpop.f32.mrb[0].mxu0
    %v7720 = vadd.f32 0.0, %v7719
    %v7721 = vpop.f32.mrb[0].mxu0
    %v7722 = vadd.f32 0.0, %v7721
    %v7723 = vpop.f32.mrb[0].mxu0
    %v7724 = vadd.f32 0.0, %v7723
    %v7725 = vpop.f32.mrb[0].mxu0
    %v7726 = vadd.f32 0.0, %v7725
    %7727 = vmatprep.mubr.bf16.mxu0 %v7640
    %7728 = vmatmul.mubr.bf16.gmra.mrb[0].mxu0 %v7639
    %v7729 = vpop.f32.mrb[0].mxu0
    %v7730 = vadd.f32 0.0, %v7729
    %v7731 = vpop.f32.mrb[0].mxu0
    %v7732 = vadd.f32 0.0, %v7731
    %v7733 = vpop.f32.mrb[0].mxu0
    %v7734 = vadd.f32 0.0, %v7733
    %v7735 = vpop.f32.mrb[0].mxu0
    %v7736 = vadd.f32 0.0, %v7735
    %7737 = vmatprep.mubr.bf16.mxu0 %v7642
    %7738 = vmatmul.mubr.bf16.gmra.mrb[0].mxu0 %v7641
    %v7739 = vpop.f32.mrb[0].mxu0
    %v7740 = vadd.f32 0.0, %v7739
    %v7741 = vpop.f32.mrb[0].mxu0
    %v7742 = vadd.f32 0.0, %v7741
    %v7743 = vpop.f32.mrb[0].mxu0
    %v7744 = vadd.f32 0.0, %v7743
    %v7745 = vpop.f32.mrb[0].mxu0
    %v7746 = vadd.f32 0.0, %v7745
    %7747 = vmatprep.mubr.bf16.mxu0 %v7644
    %7748 = vmatmul.mubr.bf16.gmra.mrb[0].mxu0 %v7643
    %v7749 = vpop.f32.mrb[0].mxu0
    %v7750 = vadd.f32 0.0, %v7749
    %v7751 = vpop.f32.mrb[0].mxu0
    %v7752 = vadd.f32 0.0, %v7751
    %v7753 = vpop.f32.mrb[0].mxu0
    %v7754 = vadd.f32 0.0, %v7753
    %v7755 = vpop.f32.mrb[0].mxu0
    %v7756 = vadd.f32 0.0, %v7755
    %7757 = vmatprep.mubr.bf16.mxu0 %v7646
    %7758 = vmatmul.mubr.bf16.gmra.mrb[0].mxu0 %v7645
    %v7759 = vpop.f32.mrb[0].mxu0
    %v7760 = vadd.f32 0.0, %v7759
    %v7761 = vpop.f32.mrb[0].mxu0
    %v7762 = vadd.f32 0.0, %v7761
    %v7763 = vpop.f32.mrb[0].mxu0
    %v7764 = vadd.f32 0.0, %v7763
    %v7765 = vpop.f32.mrb[0].mxu0
    %v7766 = vadd.f32 0.0, %v7765
    %7767 = vmatprep.mubr.bf16.mxu0 %v7648
    %7768 = vmatmul.mubr.bf16.gmra.mrb[0].mxu0 %v7647
    %v7769 = vpop.f32.mrb[0].mxu0
    %v7770 = vadd.f32 0.0, %v7769
    %v7771 = vpop.f32.mrb[0].mxu0
    %v7772 = vadd.f32 0.0, %v7771
    %v7773 = vpop.f32.mrb[0].mxu0
    %v7774 = vadd.f32 0.0, %v7773
    %v7775 = vpop.f32.mrb[0].mxu0
    %v7776 = vadd.f32 0.0, %v7775
    %7777 = vdwg.mxu0
    %v7778 = vadd.f32 %v7232, %v7700
    %v7779 = vadd.f32 %v7233, %v7702
    %v7780 = vadd.f32 %v7234, %v7704
    %v7781 = vadd.f32 %v7235, %v7706
    %v7782 = vadd.f32 %v7236, %v7710
    %v7783 = vadd.f32 %v7237, %v7712
    %v7784 = vadd.f32 %v7238, %v7714
    %v7785 = vadd.f32 %v7239, %v7716
    %v7786 = vadd.f32 %v7240, %v7720
    %v7787 = vadd.f32 %v7241, %v7722
    %v7788 = vadd.f32 %v7242, %v7724
    %v7789 = vadd.f32 %v7243, %v7726
    %v7790 = vadd.f32 %v7244, %v7730
    %v7791 = vadd.f32 %v7245, %v7732
    %v7792 = vadd.f32 %v7246, %v7734
    %v7793 = vadd.f32 %v7247, %v7736
    %v7794 = vadd.f32 %v7248, %v7740
    %v7795 = vadd.f32 %v7249, %v7742
    %v7796 = vadd.f32 %v7250, %v7744
    %v7797 = vadd.f32 %v7251, %v7746
    %v7798 = vadd.f32 %v7252, %v7750
    %v7799 = vadd.f32 %v7253, %v7752
    %v7800 = vadd.f32 %v7254, %v7754
    %v7801 = vadd.f32 %v7255, %v7756
    %v7802 = vadd.f32 %v7256, %v7760
    %v7803 = vadd.f32 %v7257, %v7762
    %v7804 = vadd.f32 %v7258, %v7764
    %v7805 = vadd.f32 %v7259, %v7766
    %v7806 = vadd.f32 %v7260, %v7770
    %v7807 = vadd.f32 %v7261, %v7772
    %v7808 = vadd.f32 %v7262, %v7774
    %v7809 = vadd.f32 %v7263, %v7776
    %v7810 = vld [vmem:[%s3189] sm:$0xff]
    %v7811 = vld [vmem:[%s3189 + $0x8] sm:$0x11]
    %v7812 = vld [vmem:[%s3189 + $0x10] sm:$0xff]
    %v7813 = vld [vmem:[%s3189 + $0x18] sm:$0x11]
    %v7814 = vld [vmem:[%s3189 + $0x20] sm:$0xff]
    %v7815 = vld [vmem:[%s3189 + $0x28] sm:$0x11]
    %v7816 = vld [vmem:[%s3189 + $0x30] sm:$0xff]
    %v7817 = vld [vmem:[%s3189 + $0x38] sm:$0x11]
    %v7818 = vld [vmem:[%s3189 + $0x40] sm:$0xff]
    %v7819 = vld [vmem:[%s3189 + $0x48] sm:$0x11]
    %v7820 = vld [vmem:[%s3189 + $0x50] sm:$0xff]
    %v7821 = vld [vmem:[%s3189 + $0x58] sm:$0x11]
    %v7822 = vld [vmem:[%s3189 + $0x60] sm:$0xff]
    %v7823 = vld [vmem:[%s3189 + $0x68] sm:$0x11]
    %v7824 = vld [vmem:[%s3189 + $0x70] sm:$0xff]
    %v7825 = vld [vmem:[%s3189 + $0x78] sm:$0x11]
    %v7826 = vld [vmem:[%s3189 + $0xa0] sm:$0xff]
    %v7827 = vld [vmem:[%s3189 + $0xa8] sm:$0x11]
    %v7828 = vld [vmem:[%s3189 + $0xb0] sm:$0xff]
    %v7829 = vld [vmem:[%s3189 + $0xb8] sm:$0x11]
    %v7830 = vld [vmem:[%s3189 + $0xc0] sm:$0xff]
    %v7831 = vld [vmem:[%s3189 + $0xc8] sm:$0x11]
    %v7832 = vld [vmem:[%s3189 + $0xd0] sm:$0xff]
    %v7833 = vld [vmem:[%s3189 + $0xd8] sm:$0x11]
    %v7834 = vld [vmem:[%s3189 + $0xe0] sm:$0xff]
    %v7835 = vld [vmem:[%s3189 + $0xe8] sm:$0x11]
    %v7836 = vld [vmem:[%s3189 + $0xf0] sm:$0xff]
    %v7837 = vld [vmem:[%s3189 + $0xf8] sm:$0x11]
    %v7838 = vld [vmem:[%s3189 + $0x100] sm:$0xff]
    %v7839 = vld [vmem:[%s3189 + $0x108] sm:$0x11]
    %v7840 = vld [vmem:[%s3189 + $0x110] sm:$0xff]
    %v7841 = vld [vmem:[%s3189 + $0x118] sm:$0x11]
    %v7843 = vshrl.u32 %v7810, 16
    %v7845 = vrot.slane %v7843, 4
    %v7846 = vshll.u32 %v7810, 16
    %v7848 = vrot.slane %v7846, 5
    %v7849 = vor.u32 %v7845, %v7848
    %v7850 = vrot.slane %v7849, 4
    %v7852 = vshll.u32 %v7811, 16
    %v7854 = vrot.slane %v7852, 5
    %v7855 = vsel %vm483, %v7850, %v7854
    %v7857 = vshrl.u32 %v7812, 16
    %v7859 = vrot.slane %v7857, 4
    %v7860 = vshll.u32 %v7812, 16
    %v7862 = vrot.slane %v7860, 5
    %v7863 = vor.u32 %v7859, %v7862
    %v7864 = vrot.slane %v7863, 4
    %v7866 = vshll.u32 %v7813, 16
    %v7868 = vrot.slane %v7866, 5
    %v7869 = vsel %vm483, %v7864, %v7868
    %v7871 = vshrl.u32 %v7814, 16
    %v7873 = vrot.slane %v7871, 4
    %v7874 = vshll.u32 %v7814, 16
    %v7876 = vrot.slane %v7874, 5
    %v7877 = vor.u32 %v7873, %v7876
    %v7878 = vrot.slane %v7877, 4
    %v7880 = vshll.u32 %v7815, 16
    %v7882 = vrot.slane %v7880, 5
    %v7883 = vsel %vm483, %v7878, %v7882
    %v7885 = vshrl.u32 %v7816, 16
    %v7887 = vrot.slane %v7885, 4
    %v7888 = vshll.u32 %v7816, 16
    %v7890 = vrot.slane %v7888, 5
    %v7891 = vor.u32 %v7887, %v7890
    %v7892 = vrot.slane %v7891, 4
    %v7894 = vshll.u32 %v7817, 16
    %v7896 = vrot.slane %v7894, 5
    %v7897 = vsel %vm483, %v7892, %v7896
    %v7899 = vshrl.u32 %v7818, 16
    %v7901 = vrot.slane %v7899, 4
    %v7902 = vshll.u32 %v7818, 16
    %v7904 = vrot.slane %v7902, 5
    %v7905 = vor.u32 %v7901, %v7904
    %v7906 = vrot.slane %v7905, 4
    %v7908 = vshll.u32 %v7819, 16
    %v7910 = vrot.slane %v7908, 5
    %v7911 = vsel %vm483, %v7906, %v7910
    %v7913 = vshrl.u32 %v7820, 16
    %v7915 = vrot.slane %v7913, 4
    %v7916 = vshll.u32 %v7820, 16
    %v7918 = vrot.slane %v7916, 5
    %v7919 = vor.u32 %v7915, %v7918
    %v7920 = vrot.slane %v7919, 4
    %v7922 = vshll.u32 %v7821, 16
    %v7924 = vrot.slane %v7922, 5
    %v7925 = vsel %vm483, %v7920, %v7924
    %v7927 = vshrl.u32 %v7822, 16
    %v7929 = vrot.slane %v7927, 4
    %v7930 = vshll.u32 %v7822, 16
    %v7932 = vrot.slane %v7930, 5
    %v7933 = vor.u32 %v7929, %v7932
    %v7934 = vrot.slane %v7933, 4
    %v7936 = vshll.u32 %v7823, 16
    %v7938 = vrot.slane %v7936, 5
    %v7939 = vsel %vm483, %v7934, %v7938
    %v7941 = vshrl.u32 %v7824, 16
    %v7943 = vrot.slane %v7941, 4
    %v7944 = vshll.u32 %v7824, 16
    %v7946 = vrot.slane %v7944, 5
    %v7947 = vor.u32 %v7943, %v7946
    %v7948 = vrot.slane %v7947, 4
    %v7950 = vshll.u32 %v7825, 16
    %v7952 = vrot.slane %v7950, 5
    %v7953 = vsel %vm483, %v7948, %v7952
    %v7955 = vshrl.u32 %v7826, 16
    %v7957 = vrot.slane %v7955, 4
    %v7958 = vshll.u32 %v7826, 16
    %v7960 = vrot.slane %v7958, 5
    %v7961 = vor.u32 %v7957, %v7960
    %v7962 = vrot.slane %v7961, 4
    %v7964 = vshll.u32 %v7827, 16
    %v7966 = vrot.slane %v7964, 5
    %v7967 = vsel %vm483, %v7962, %v7966
    %v7969 = vshrl.u32 %v7828, 16
    %v7971 = vrot.slane %v7969, 4
    %v7972 = vshll.u32 %v7828, 16
    %v7974 = vrot.slane %v7972, 5
    %v7975 = vor.u32 %v7971, %v7974
    %v7976 = vrot.slane %v7975, 4
    %v7978 = vshll.u32 %v7829, 16
    %v7980 = vrot.slane %v7978, 5
    %v7981 = vsel %vm483, %v7976, %v7980
    %v7983 = vshrl.u32 %v7830, 16
    %v7985 = vrot.slane %v7983, 4
    %v7986 = vshll.u32 %v7830, 16
    %v7988 = vrot.slane %v7986, 5
    %v7989 = vor.u32 %v7985, %v7988
    %v7990 = vrot.slane %v7989, 4
    %v7992 = vshll.u32 %v7831, 16
    %v7994 = vrot.slane %v7992, 5
    %v7995 = vsel %vm483, %v7990, %v7994
    %v7997 = vshrl.u32 %v7832, 16
    %v7999 = vrot.slane %v7997, 4
    %v8000 = vshll.u32 %v7832, 16
    %v8002 = vrot.slane %v8000, 5
    %v8003 = vor.u32 %v7999, %v8002
    %v8004 = vrot.slane %v8003, 4
    %v8006 = vshll.u32 %v7833, 16
    %v8008 = vrot.slane %v8006, 5
    %v8009 = vsel %vm483, %v8004, %v8008
    %v8011 = vshrl.u32 %v7834, 16
    %v8013 = vrot.slane %v8011, 4
    %v8014 = vshll.u32 %v7834, 16
    %v8016 = vrot.slane %v8014, 5
    %v8017 = vor.u32 %v8013, %v8016
    %v8018 = vrot.slane %v8017, 4
    %v8020 = vshll.u32 %v7835, 16
    %v8022 = vrot.slane %v8020, 5
    %v8023 = vsel %vm483, %v8018, %v8022
    %v8025 = vshrl.u32 %v7836, 16
    %v8027 = vrot.slane %v8025, 4
    %v8028 = vshll.u32 %v7836, 16
    %v8030 = vrot.slane %v8028, 5
    %v8031 = vor.u32 %v8027, %v8030
    %v8032 = vrot.slane %v8031, 4
    %v8034 = vshll.u32 %v7837, 16
    %v8036 = vrot.slane %v8034, 5
    %v8037 = vsel %vm483, %v8032, %v8036
    %v8039 = vshrl.u32 %v7838, 16
    %v8041 = vrot.slane %v8039, 4
    %v8042 = vshll.u32 %v7838, 16
    %v8044 = vrot.slane %v8042, 5
    %v8045 = vor.u32 %v8041, %v8044
    %v8046 = vrot.slane %v8045, 4
    %v8048 = vshll.u32 %v7839, 16
    %v8050 = vrot.slane %v8048, 5
    %v8051 = vsel %vm483, %v8046, %v8050
    %v8053 = vshrl.u32 %v7840, 16
    %v8055 = vrot.slane %v8053, 4
    %v8056 = vshll.u32 %v7840, 16
    %v8058 = vrot.slane %v8056, 5
    %v8059 = vor.u32 %v8055, %v8058
    %v8060 = vrot.slane %v8059, 4
    %v8062 = vshll.u32 %v7841, 16
    %v8064 = vrot.slane %v8062, 5
    %v8065 = vsel %vm483, %v8060, %v8064
    %s8066 = scalar_lea.vmem [#allocation3], 1536
    %v8067 = vld [vmem:[%s8066] sm:$0xff]
    %v8068 = vld [vmem:[%s8066 + $0x8] sm:$0xff]
    %v8069 = vld [vmem:[%s8066 + $0x10] sm:$0xff]
    %v8070 = vld [vmem:[%s8066 + $0x18] sm:$0xff]
    %v8071 = vld [vmem:[%s8066 + $0x20] sm:$0xff]
    %v8072 = vld [vmem:[%s8066 + $0x28] sm:$0xff]
    %v8073 = vld [vmem:[%s8066 + $0x30] sm:$0xff]
    %v8074 = vld [vmem:[%s8066 + $0x38] sm:$0xff]
    %v8075 = vld [vmem:[%s8066 + $0x40] sm:$0xff]
    %v8076 = vld [vmem:[%s8066 + $0x48] sm:$0xff]
    %v8077 = vld [vmem:[%s8066 + $0x50] sm:$0xff]
    %v8078 = vld [vmem:[%s8066 + $0x58] sm:$0xff]
    %v8079 = vld [vmem:[%s8066 + $0x60] sm:$0xff]
    %v8080 = vld [vmem:[%s8066 + $0x68] sm:$0xff]
    %v8081 = vld [vmem:[%s8066 + $0x70] sm:$0xff]
    %v8082 = vld [vmem:[%s8066 + $0x78] sm:$0xff]
    %v8083 = vld [vmem:[%s8066 + $0x80] sm:$0xff]
    %v8084 = vld [vmem:[%s8066 + $0x88] sm:$0xff]
    %v8085 = vld [vmem:[%s8066 + $0x90] sm:$0xff]
    %v8086 = vld [vmem:[%s8066 + $0x98] sm:$0xff]
    %v8087 = vld [vmem:[%s8066 + $0xa0] sm:$0xff]
    %v8088 = vld [vmem:[%s8066 + $0xa8] sm:$0xff]
    %v8089 = vld [vmem:[%s8066 + $0xb0] sm:$0xff]
    %v8090 = vld [vmem:[%s8066 + $0xb8] sm:$0xff]
    %v8091 = vld [vmem:[%s8066 + $0xc0] sm:$0xff]
    %v8092 = vld [vmem:[%s8066 + $0xc8] sm:$0xff]
    %v8093 = vld [vmem:[%s8066 + $0xd0] sm:$0xff]
    %v8094 = vld [vmem:[%s8066 + $0xd8] sm:$0xff]
    %v8095 = vld [vmem:[%s8066 + $0xe0] sm:$0xff]
    %v8096 = vld [vmem:[%s8066 + $0xe8] sm:$0xff]
    %v8097 = vld [vmem:[%s8066 + $0xf0] sm:$0xff]
    %v8098 = vld [vmem:[%s8066 + $0xf8] sm:$0xff]
    %v8099 = vunpack.c.l.b16 %v7855
    %v8100 = vunpack.c.h.b16 %v7855
    %v8101 = vunpack.c.l.b16 %v7869
    %v8102 = vunpack.c.h.b16 %v7869
    %v8103 = vunpack.c.l.b16 %v7883
    %v8104 = vunpack.c.h.b16 %v7883
    %v8105 = vunpack.c.l.b16 %v7897
    %v8106 = vunpack.c.h.b16 %v7897
    %v8107 = vunpack.c.l.b16 %v7911
    %v8108 = vunpack.c.h.b16 %v7911
    %v8109 = vunpack.c.l.b16 %v7925
    %v8110 = vunpack.c.h.b16 %v7925
    %v8111 = vunpack.c.l.b16 %v7939
    %v8112 = vunpack.c.h.b16 %v7939
    %v8113 = vunpack.c.l.b16 %v7953
    %v8114 = vunpack.c.h.b16 %v7953
    %v8115 = vunpack.c.l.b16 %v7967
    %v8116 = vunpack.c.h.b16 %v7967
    %v8117 = vunpack.c.l.b16 %v7981
    %v8118 = vunpack.c.h.b16 %v7981
    %v8119 = vunpack.c.l.b16 %v7995
    %v8120 = vunpack.c.h.b16 %v7995
    %v8121 = vunpack.c.l.b16 %v8009
    %v8122 = vunpack.c.h.b16 %v8009
    %v8123 = vunpack.c.l.b16 %v8023
    %v8124 = vunpack.c.h.b16 %v8023
    %v8125 = vunpack.c.l.b16 %v8037
    %v8126 = vunpack.c.h.b16 %v8037
    %v8127 = vunpack.c.l.b16 %v8051
    %v8128 = vunpack.c.h.b16 %v8051
    %v8129 = vunpack.c.l.b16 %v8065
    %v8130 = vunpack.c.h.b16 %v8065
    %v8131 = vpack.c.b16 %v8101, %v8099
    %v8132 = vpack.c.b16 %v8102, %v8100
    %v8133 = vpack.c.b16 %v8105, %v8103
    %v8134 = vpack.c.b16 %v8106, %v8104
    %v8135 = vpack.c.b16 %v8109, %v8107
    %v8136 = vpack.c.b16 %v8110, %v8108
    %v8137 = vpack.c.b16 %v8113, %v8111
    %v8138 = vpack.c.b16 %v8114, %v8112
    %v8139 = vpack.c.b16 %v8117, %v8115
    %v8140 = vpack.c.b16 %v8118, %v8116
    %v8141 = vpack.c.b16 %v8121, %v8119
    %v8142 = vpack.c.b16 %v8122, %v8120
    %v8143 = vpack.c.b16 %v8125, %v8123
    %v8144 = vpack.c.b16 %v8126, %v8124
    %v8145 = vpack.c.b16 %v8129, %v8127
    %v8146 = vpack.c.b16 %v8130, %v8128
    %8163 = vmatprep.subr.bf16.mxu0 %v8068
    %8164 = vmatpush1.bf16.msra.mxu0 %v8067
    %8165 = vmatprep.subr.bf16.mxu0 %v8070
    %8166 = vmatpush1.bf16.msra.mxu0 %v8069
    %8167 = vmatprep.subr.bf16.mxu0 %v8072
    %8168 = vmatpush1.bf16.msra.mxu0 %v8071
    %8169 = vmatprep.subr.bf16.mxu0 %v8074
    %8170 = vmatpush1.bf16.msra.mxu0 %v8073
    %8171 = vmatprep.subr.bf16.mxu0 %v8076
    %8172 = vmatpush1.bf16.msra.mxu0 %v8075
    %8173 = vmatprep.subr.bf16.mxu0 %v8078
    %8174 = vmatpush1.bf16.msra.mxu0 %v8077
    %8175 = vmatprep.subr.bf16.mxu0 %v8080
    %8176 = vmatpush1.bf16.msra.mxu0 %v8079
    %8177 = vmatprep.subr.bf16.mxu0 %v8082
    %8178 = vmatpush1.bf16.msra.mxu0 %v8081
    %8179 = vmatprep.subr.bf16.mxu0 %v8084
    %8180 = vmatpush1.bf16.msra.mxu0 %v8083
    %8181 = vmatprep.subr.bf16.mxu0 %v8086
    %8182 = vmatpush1.bf16.msra.mxu0 %v8085
    %8183 = vmatprep.subr.bf16.mxu0 %v8088
    %8184 = vmatpush1.bf16.msra.mxu0 %v8087
    %8185 = vmatprep.subr.bf16.mxu0 %v8090
    %8186 = vmatpush1.bf16.msra.mxu0 %v8089
    %8187 = vmatprep.subr.bf16.mxu0 %v8092
    %8188 = vmatpush1.bf16.msra.mxu0 %v8091
    %8189 = vmatprep.subr.bf16.mxu0 %v8094
    %8190 = vmatpush1.bf16.msra.mxu0 %v8093
    %8191 = vmatprep.subr.bf16.mxu0 %v8096
    %8192 = vmatpush1.bf16.msra.mxu0 %v8095
    %8193 = vmatprep.subr.bf16.mxu0 %v8098
    %8194 = vmatpush1.bf16.msra.mxu0 %v8097
    %8195 = vmatprep.mubr.bf16.mxu0 %v8132
    %8196 = vmatmul.mubr.bf16.gmra.mrb[0].mxu0 %v8131
    %v8197 = vpop.f32.mrb[0].mxu0
    %v8198 = vadd.f32 0.0, %v8197
    %v8199 = vpop.f32.mrb[0].mxu0
    %v8200 = vadd.f32 0.0, %v8199
    %v8201 = vpop.f32.mrb[0].mxu0
    %v8202 = vadd.f32 0.0, %v8201
    %v8203 = vpop.f32.mrb[0].mxu0
    %v8204 = vadd.f32 0.0, %v8203
    %8205 = vmatprep.mubr.bf16.mxu0 %v8134
    %8206 = vmatmul.mubr.bf16.gmra.mrb[0].mxu0 %v8133
    %v8207 = vpop.f32.mrb[0].mxu0
    %v8208 = vadd.f32 0.0, %v8207
    %v8209 = vpop.f32.mrb[0].mxu0
    %v8210 = vadd.f32 0.0, %v8209
    %v8211 = vpop.f32.mrb[0].mxu0
    %v8212 = vadd.f32 0.0, %v8211
    %v8213 = vpop.f32.mrb[0].mxu0
    %v8214 = vadd.f32 0.0, %v8213
    %8215 = vmatprep.mubr.bf16.mxu0 %v8136
    %8216 = vmatmul.mubr.bf16.gmra.mrb[0].mxu0 %v8135
    %v8217 = vpop.f32.mrb[0].mxu0
    %v8218 = vadd.f32 0.0, %v8217
    %v8219 = vpop.f32.mrb[0].mxu0
    %v8220 = vadd.f32 0.0, %v8219
    %v8221 = vpop.f32.mrb[0].mxu0
    %v8222 = vadd.f32 0.0, %v8221
    %v8223 = vpop.f32.mrb[0].mxu0
    %v8224 = vadd.f32 0.0, %v8223
    %8225 = vmatprep.mubr.bf16.mxu0 %v8138
    %8226 = vmatmul.mubr.bf16.gmra.mrb[0].mxu0 %v8137
    %v8227 = vpop.f32.mrb[0].mxu0
    %v8228 = vadd.f32 0.0, %v8227
    %v8229 = vpop.f32.mrb[0].mxu0
    %v8230 = vadd.f32 0.0, %v8229
    %v8231 = vpop.f32.mrb[0].mxu0
    %v8232 = vadd.f32 0.0, %v8231
    %v8233 = vpop.f32.mrb[0].mxu0
    %v8234 = vadd.f32 0.0, %v8233
    %8235 = vmatprep.mubr.bf16.mxu0 %v8140
    %8236 = vmatmul.mubr.bf16.gmra.mrb[0].mxu0 %v8139
    %v8237 = vpop.f32.mrb[0].mxu0
    %v8238 = vadd.f32 0.0, %v8237
    %v8239 = vpop.f32.mrb[0].mxu0
    %v8240 = vadd.f32 0.0, %v8239
    %v8241 = vpop.f32.mrb[0].mxu0
    %v8242 = vadd.f32 0.0, %v8241
    %v8243 = vpop.f32.mrb[0].mxu0
    %v8244 = vadd.f32 0.0, %v8243
    %8245 = vmatprep.mubr.bf16.mxu0 %v8142
    %8246 = vmatmul.mubr.bf16.gmra.mrb[0].mxu0 %v8141
    %v8247 = vpop.f32.mrb[0].mxu0
    %v8248 = vadd.f32 0.0, %v8247
    %v8249 = vpop.f32.mrb[0].mxu0
    %v8250 = vadd.f32 0.0, %v8249
    %v8251 = vpop.f32.mrb[0].mxu0
    %v8252 = vadd.f32 0.0, %v8251
    %v8253 = vpop.f32.mrb[0].mxu0
    %v8254 = vadd.f32 0.0, %v8253
    %8255 = vmatprep.mubr.bf16.mxu0 %v8144
    %8256 = vmatmul.mubr.bf16.gmra.mrb[0].mxu0 %v8143
    %v8257 = vpop.f32.mrb[0].mxu0
    %v8258 = vadd.f32 0.0, %v8257
    %v8259 = vpop.f32.mrb[0].mxu0
    %v8260 = vadd.f32 0.0, %v8259
    %v8261 = vpop.f32.mrb[0].mxu0
    %v8262 = vadd.f32 0.0, %v8261
    %v8263 = vpop.f32.mrb[0].mxu0
    %v8264 = vadd.f32 0.0, %v8263
    %8265 = vmatprep.mubr.bf16.mxu0 %v8146
    %8266 = vmatmul.mubr.bf16.gmra.mrb[0].mxu0 %v8145
    %v8267 = vpop.f32.mrb[0].mxu0
    %v8268 = vadd.f32 0.0, %v8267
    %v8269 = vpop.f32.mrb[0].mxu0
    %v8270 = vadd.f32 0.0, %v8269
    %v8271 = vpop.f32.mrb[0].mxu0
    %v8272 = vadd.f32 0.0, %v8271
    %v8273 = vpop.f32.mrb[0].mxu0
    %v8274 = vadd.f32 0.0, %v8273
    %8275 = vdwg.mxu0
    %v8276 = vadd.f32 %v7778, %v8198
    %v8277 = vadd.f32 %v7779, %v8200
    %v8278 = vadd.f32 %v7780, %v8202
    %v8279 = vadd.f32 %v7781, %v8204
    %v8280 = vadd.f32 %v7782, %v8208
    %v8281 = vadd.f32 %v7783, %v8210
    %v8282 = vadd.f32 %v7784, %v8212
    %v8283 = vadd.f32 %v7785, %v8214
    %v8284 = vadd.f32 %v7786, %v8218
    %v8285 = vadd.f32 %v7787, %v8220
    %v8286 = vadd.f32 %v7788, %v8222
    %v8287 = vadd.f32 %v7789, %v8224
    %v8288 = vadd.f32 %v7790, %v8228
    %v8289 = vadd.f32 %v7791, %v8230
    %v8290 = vadd.f32 %v7792, %v8232
    %v8291 = vadd.f32 %v7793, %v8234
    %v8292 = vadd.f32 %v7794, %v8238
    %v8293 = vadd.f32 %v7795, %v8240
    %v8294 = vadd.f32 %v7796, %v8242
    %v8295 = vadd.f32 %v7797, %v8244
    %v8296 = vadd.f32 %v7798, %v8248
    %v8297 = vadd.f32 %v7799, %v8250
    %v8298 = vadd.f32 %v7800, %v8252
    %v8299 = vadd.f32 %v7801, %v8254
    %v8300 = vadd.f32 %v7802, %v8258
    %v8301 = vadd.f32 %v7803, %v8260
    %v8302 = vadd.f32 %v7804, %v8262
    %v8303 = vadd.f32 %v7805, %v8264
    %v8304 = vadd.f32 %v7806, %v8268
    %v8305 = vadd.f32 %v7807, %v8270
    %v8306 = vadd.f32 %v7808, %v8272
    %v8307 = vadd.f32 %v7809, %v8274
    %v8308 = vld [vmem:[%s3189] sm:$0xee]
    %v8309 = vld [vmem:[%s3189 + $0x10] sm:$0xee]
    %v8310 = vld [vmem:[%s3189 + $0x20] sm:$0xee]
    %v8311 = vld [vmem:[%s3189 + $0x30] sm:$0xee]
    %v8312 = vld [vmem:[%s3189 + $0x40] sm:$0xee]
    %v8313 = vld [vmem:[%s3189 + $0x50] sm:$0xee]
    %v8314 = vld [vmem:[%s3189 + $0x60] sm:$0xee]
    %v8315 = vld [vmem:[%s3189 + $0x70] sm:$0xee]
    %v8316 = vld [vmem:[%s3189 + $0xa0] sm:$0xee]
    %v8317 = vld [vmem:[%s3189 + $0xb0] sm:$0xee]
    %v8318 = vld [vmem:[%s3189 + $0xc0] sm:$0xee]
    %v8319 = vld [vmem:[%s3189 + $0xd0] sm:$0xee]
    %v8320 = vld [vmem:[%s3189 + $0xe0] sm:$0xee]
    %v8321 = vld [vmem:[%s3189 + $0xf0] sm:$0xee]
    %v8322 = vld [vmem:[%s3189 + $0x100] sm:$0xee]
    %v8323 = vld [vmem:[%s3189 + $0x110] sm:$0xee]
    %v8356 = vrot.slane %v8308, 5
    %v8357 = vrot.slane %v8356, 4
    %v8358 = vrot.slane %v7811, 5
    %v8359 = vsel %vm790, %v8357, %v8358
    %v8360 = vrot.slane %v8309, 5
    %v8361 = vrot.slane %v8360, 4
    %v8362 = vrot.slane %v7813, 5
    %v8363 = vsel %vm790, %v8361, %v8362
    %v8364 = vrot.slane %v8310, 5
    %v8365 = vrot.slane %v8364, 4
    %v8366 = vrot.slane %v7815, 5
    %v8367 = vsel %vm790, %v8365, %v8366
    %v8368 = vrot.slane %v8311, 5
    %v8369 = vrot.slane %v8368, 4
    %v8370 = vrot.slane %v7817, 5
    %v8371 = vsel %vm790, %v8369, %v8370
    %v8372 = vrot.slane %v8312, 5
    %v8373 = vrot.slane %v8372, 4
    %v8374 = vrot.slane %v7819, 5
    %v8375 = vsel %vm790, %v8373, %v8374
    %v8376 = vrot.slane %v8313, 5
    %v8377 = vrot.slane %v8376, 4
    %v8378 = vrot.slane %v7821, 5
    %v8379 = vsel %vm790, %v8377, %v8378
    %v8380 = vrot.slane %v8314, 5
    %v8381 = vrot.slane %v8380, 4
    %v8382 = vrot.slane %v7823, 5
    %v8383 = vsel %vm790, %v8381, %v8382
    %v8384 = vrot.slane %v8315, 5
    %v8385 = vrot.slane %v8384, 4
    %v8386 = vrot.slane %v7825, 5
    %v8387 = vsel %vm790, %v8385, %v8386
    %v8388 = vrot.slane %v8316, 5
    %v8389 = vrot.slane %v8388, 4
    %v8390 = vrot.slane %v7827, 5
    %v8391 = vsel %vm790, %v8389, %v8390
    %v8392 = vrot.slane %v8317, 5
    %v8393 = vrot.slane %v8392, 4
    %v8394 = vrot.slane %v7829, 5
    %v8395 = vsel %vm790, %v8393, %v8394
    %v8396 = vrot.slane %v8318, 5
    %v8397 = vrot.slane %v8396, 4
    %v8398 = vrot.slane %v7831, 5
    %v8399 = vsel %vm790, %v8397, %v8398
    %v8400 = vrot.slane %v8319, 5
    %v8401 = vrot.slane %v8400, 4
    %v8402 = vrot.slane %v7833, 5
    %v8403 = vsel %vm790, %v8401, %v8402
    %v8404 = vrot.slane %v8320, 5
    %v8405 = vrot.slane %v8404, 4
    %v8406 = vrot.slane %v7835, 5
    %v8407 = vsel %vm790, %v8405, %v8406
    %v8408 = vrot.slane %v8321, 5
    %v8409 = vrot.slane %v8408, 4
    %v8410 = vrot.slane %v7837, 5
    %v8411 = vsel %vm790, %v8409, %v8410
    %v8412 = vrot.slane %v8322, 5
    %v8413 = vrot.slane %v8412, 4
    %v8414 = vrot.slane %v7839, 5
    %v8415 = vsel %vm790, %v8413, %v8414
    %v8416 = vrot.slane %v8323, 5
    %v8417 = vrot.slane %v8416, 4
    %v8418 = vrot.slane %v7841, 5
    %v8419 = vsel %vm790, %v8417, %v8418
    %s8420 = scalar_lea.vmem [#allocation3], 1792
    %v8421 = vld [vmem:[%s8420] sm:$0xff]
    %v8422 = vld [vmem:[%s8420 + $0x8] sm:$0xff]
    %v8423 = vld [vmem:[%s8420 + $0x10] sm:$0xff]
    %v8424 = vld [vmem:[%s8420 + $0x18] sm:$0xff]
    %v8425 = vld [vmem:[%s8420 + $0x20] sm:$0xff]
    %v8426 = vld [vmem:[%s8420 + $0x28] sm:$0xff]
    %v8427 = vld [vmem:[%s8420 + $0x30] sm:$0xff]
    %v8428 = vld [vmem:[%s8420 + $0x38] sm:$0xff]
    %v8429 = vld [vmem:[%s8420 + $0x40] sm:$0xff]
    %v8430 = vld [vmem:[%s8420 + $0x48] sm:$0xff]
    %v8431 = vld [vmem:[%s8420 + $0x50] sm:$0xff]
    %v8432 = vld [vmem:[%s8420 + $0x58] sm:$0xff]
    %v8433 = vld [vmem:[%s8420 + $0x60] sm:$0xff]
    %v8434 = vld [vmem:[%s8420 + $0x68] sm:$0xff]
    %v8435 = vld [vmem:[%s8420 + $0x70] sm:$0xff]
    %v8436 = vld [vmem:[%s8420 + $0x78] sm:$0xff]
    %v8437 = vld [vmem:[%s8420 + $0x80] sm:$0xff]
    %v8438 = vld [vmem:[%s8420 + $0x88] sm:$0xff]
    %v8439 = vld [vmem:[%s8420 + $0x90] sm:$0xff]
    %v8440 = vld [vmem:[%s8420 + $0x98] sm:$0xff]
    %v8441 = vld [vmem:[%s8420 + $0xa0] sm:$0xff]
    %v8442 = vld [vmem:[%s8420 + $0xa8] sm:$0xff]
    %v8443 = vld [vmem:[%s8420 + $0xb0] sm:$0xff]
    %v8444 = vld [vmem:[%s8420 + $0xb8] sm:$0xff]
    %v8445 = vld [vmem:[%s8420 + $0xc0] sm:$0xff]
    %v8446 = vld [vmem:[%s8420 + $0xc8] sm:$0xff]
    %v8447 = vld [vmem:[%s8420 + $0xd0] sm:$0xff]
    %v8448 = vld [vmem:[%s8420 + $0xd8] sm:$0xff]
    %v8449 = vld [vmem:[%s8420 + $0xe0] sm:$0xff]
    %v8450 = vld [vmem:[%s8420 + $0xe8] sm:$0xff]
    %v8451 = vld [vmem:[%s8420 + $0xf0] sm:$0xff]
    %v8452 = vld [vmem:[%s8420 + $0xf8] sm:$0xff]
    %v8453 = vunpack.c.l.b16 %v8359
    %v8454 = vunpack.c.h.b16 %v8359
    %v8455 = vunpack.c.l.b16 %v8363
    %v8456 = vunpack.c.h.b16 %v8363
    %v8457 = vunpack.c.l.b16 %v8367
    %v8458 = vunpack.c.h.b16 %v8367
    %v8459 = vunpack.c.l.b16 %v8371
    %v8460 = vunpack.c.h.b16 %v8371
    %v8461 = vunpack.c.l.b16 %v8375
    %v8462 = vunpack.c.h.b16 %v8375
    %v8463 = vunpack.c.l.b16 %v8379
    %v8464 = vunpack.c.h.b16 %v8379
    %v8465 = vunpack.c.l.b16 %v8383
    %v8466 = vunpack.c.h.b16 %v8383
    %v8467 = vunpack.c.l.b16 %v8387
    %v8468 = vunpack.c.h.b16 %v8387
    %v8469 = vunpack.c.l.b16 %v8391
    %v8470 = vunpack.c.h.b16 %v8391
    %v8471 = vunpack.c.l.b16 %v8395
    %v8472 = vunpack.c.h.b16 %v8395
    %v8473 = vunpack.c.l.b16 %v8399
    %v8474 = vunpack.c.h.b16 %v8399
    %v8475 = vunpack.c.l.b16 %v8403
    %v8476 = vunpack.c.h.b16 %v8403
    %v8477 = vunpack.c.l.b16 %v8407
    %v8478 = vunpack.c.h.b16 %v8407
    %v8479 = vunpack.c.l.b16 %v8411
    %v8480 = vunpack.c.h.b16 %v8411
    %v8481 = vunpack.c.l.b16 %v8415
    %v8482 = vunpack.c.h.b16 %v8415
    %v8483 = vunpack.c.l.b16 %v8419
    %v8484 = vunpack.c.h.b16 %v8419
    %v8485 = vpack.c.b16 %v8455, %v8453
    %v8486 = vpack.c.b16 %v8456, %v8454
    %v8487 = vpack.c.b16 %v8459, %v8457
    %v8488 = vpack.c.b16 %v8460, %v8458
    %v8489 = vpack.c.b16 %v8463, %v8461
    %v8490 = vpack.c.b16 %v8464, %v8462
    %v8491 = vpack.c.b16 %v8467, %v8465
    %v8492 = vpack.c.b16 %v8468, %v8466
    %v8493 = vpack.c.b16 %v8471, %v8469
    %v8494 = vpack.c.b16 %v8472, %v8470
    %v8495 = vpack.c.b16 %v8475, %v8473
    %v8496 = vpack.c.b16 %v8476, %v8474
    %v8497 = vpack.c.b16 %v8479, %v8477
    %v8498 = vpack.c.b16 %v8480, %v8478
    %v8499 = vpack.c.b16 %v8483, %v8481
    %v8500 = vpack.c.b16 %v8484, %v8482
    %8517 = vmatprep.subr.bf16.mxu0 %v8422
    %8518 = vmatpush1.bf16.msra.mxu0 %v8421
    %8519 = vmatprep.subr.bf16.mxu0 %v8424
    %8520 = vmatpush1.bf16.msra.mxu0 %v8423
    %8521 = vmatprep.subr.bf16.mxu0 %v8426
    %8522 = vmatpush1.bf16.msra.mxu0 %v8425
    %8523 = vmatprep.subr.bf16.mxu0 %v8428
    %8524 = vmatpush1.bf16.msra.mxu0 %v8427
    %8525 = vmatprep.subr.bf16.mxu0 %v8430
    %8526 = vmatpush1.bf16.msra.mxu0 %v8429
    %8527 = vmatprep.subr.bf16.mxu0 %v8432
    %8528 = vmatpush1.bf16.msra.mxu0 %v8431
    %8529 = vmatprep.subr.bf16.mxu0 %v8434
    %8530 = vmatpush1.bf16.msra.mxu0 %v8433
    %8531 = vmatprep.subr.bf16.mxu0 %v8436
    %8532 = vmatpush1.bf16.msra.mxu0 %v8435
    %8533 = vmatprep.subr.bf16.mxu0 %v8438
    %8534 = vmatpush1.bf16.msra.mxu0 %v8437
    %8535 = vmatprep.subr.bf16.mxu0 %v8440
    %8536 = vmatpush1.bf16.msra.mxu0 %v8439
    %8537 = vmatprep.subr.bf16.mxu0 %v8442
    %8538 = vmatpush1.bf16.msra.mxu0 %v8441
    %8539 = vmatprep.subr.bf16.mxu0 %v8444
    %8540 = vmatpush1.bf16.msra.mxu0 %v8443
    %8541 = vmatprep.subr.bf16.mxu0 %v8446
    %8542 = vmatpush1.bf16.msra.mxu0 %v8445
    %8543 = vmatprep.subr.bf16.mxu0 %v8448
    %8544 = vmatpush1.bf16.msra.mxu0 %v8447
    %8545 = vmatprep.subr.bf16.mxu0 %v8450
    %8546 = vmatpush1.bf16.msra.mxu0 %v8449
    %8547 = vmatprep.subr.bf16.mxu0 %v8452
    %8548 = vmatpush1.bf16.msra.mxu0 %v8451
    %8549 = vmatprep.mubr.bf16.mxu0 %v8486
    %8550 = vmatmul.mubr.bf16.gmra.mrb[0].mxu0 %v8485
    %v8551 = vpop.f32.mrb[0].mxu0
    %v8552 = vadd.f32 0.0, %v8551
    %v8553 = vpop.f32.mrb[0].mxu0
    %v8554 = vadd.f32 0.0, %v8553
    %v8555 = vpop.f32.mrb[0].mxu0
    %v8556 = vadd.f32 0.0, %v8555
    %v8557 = vpop.f32.mrb[0].mxu0
    %v8558 = vadd.f32 0.0, %v8557
    %8559 = vmatprep.mubr.bf16.mxu0 %v8488
    %8560 = vmatmul.mubr.bf16.gmra.mrb[0].mxu0 %v8487
    %v8561 = vpop.f32.mrb[0].mxu0
    %v8562 = vadd.f32 0.0, %v8561
    %v8563 = vpop.f32.mrb[0].mxu0
    %v8564 = vadd.f32 0.0, %v8563
    %v8565 = vpop.f32.mrb[0].mxu0
    %v8566 = vadd.f32 0.0, %v8565
    %v8567 = vpop.f32.mrb[0].mxu0
    %v8568 = vadd.f32 0.0, %v8567
    %8569 = vmatprep.mubr.bf16.mxu0 %v8490
    %8570 = vmatmul.mubr.bf16.gmra.mrb[0].mxu0 %v8489
    %v8571 = vpop.f32.mrb[0].mxu0
    %v8572 = vadd.f32 0.0, %v8571
    %v8573 = vpop.f32.mrb[0].mxu0
    %v8574 = vadd.f32 0.0, %v8573
    %v8575 = vpop.f32.mrb[0].mxu0
    %v8576 = vadd.f32 0.0, %v8575
    %v8577 = vpop.f32.mrb[0].mxu0
    %v8578 = vadd.f32 0.0, %v8577
    %8579 = vmatprep.mubr.bf16.mxu0 %v8492
    %8580 = vmatmul.mubr.bf16.gmra.mrb[0].mxu0 %v8491
    %v8581 = vpop.f32.mrb[0].mxu0
    %v8582 = vadd.f32 0.0, %v8581
    %v8583 = vpop.f32.mrb[0].mxu0
    %v8584 = vadd.f32 0.0, %v8583
    %v8585 = vpop.f32.mrb[0].mxu0
    %v8586 = vadd.f32 0.0, %v8585
    %v8587 = vpop.f32.mrb[0].mxu0
    %v8588 = vadd.f32 0.0, %v8587
    %8589 = vmatprep.mubr.bf16.mxu0 %v8494
    %8590 = vmatmul.mubr.bf16.gmra.mrb[0].mxu0 %v8493
    %v8591 = vpop.f32.mrb[0].mxu0
    %v8592 = vadd.f32 0.0, %v8591
    %v8593 = vpop.f32.mrb[0].mxu0
    %v8594 = vadd.f32 0.0, %v8593
    %v8595 = vpop.f32.mrb[0].mxu0
    %v8596 = vadd.f32 0.0, %v8595
    %v8597 = vpop.f32.mrb[0].mxu0
    %v8598 = vadd.f32 0.0, %v8597
    %8599 = vmatprep.mubr.bf16.mxu0 %v8496
    %8600 = vmatmul.mubr.bf16.gmra.mrb[0].mxu0 %v8495
    %v8601 = vpop.f32.mrb[0].mxu0
    %v8602 = vadd.f32 0.0, %v8601
    %v8603 = vpop.f32.mrb[0].mxu0
    %v8604 = vadd.f32 0.0, %v8603
    %v8605 = vpop.f32.mrb[0].mxu0
    %v8606 = vadd.f32 0.0, %v8605
    %v8607 = vpop.f32.mrb[0].mxu0
    %v8608 = vadd.f32 0.0, %v8607
    %8609 = vmatprep.mubr.bf16.mxu0 %v8498
    %8610 = vmatmul.mubr.bf16.gmra.mrb[0].mxu0 %v8497
    %v8611 = vpop.f32.mrb[0].mxu0
    %v8612 = vadd.f32 0.0, %v8611
    %v8613 = vpop.f32.mrb[0].mxu0
    %v8614 = vadd.f32 0.0, %v8613
    %v8615 = vpop.f32.mrb[0].mxu0
    %v8616 = vadd.f32 0.0, %v8615
    %v8617 = vpop.f32.mrb[0].mxu0
    %v8618 = vadd.f32 0.0, %v8617
    %8619 = vmatprep.mubr.bf16.mxu0 %v8500
    %8620 = vmatmul.mubr.bf16.gmra.mrb[0].mxu0 %v8499
    %v8621 = vpop.f32.mrb[0].mxu0
    %v8622 = vadd.f32 0.0, %v8621
    %v8623 = vpop.f32.mrb[0].mxu0
    %v8624 = vadd.f32 0.0, %v8623
    %v8625 = vpop.f32.mrb[0].mxu0
    %v8626 = vadd.f32 0.0, %v8625
    %v8627 = vpop.f32.mrb[0].mxu0
    %v8628 = vadd.f32 0.0, %v8627
    %8629 = vdwg.mxu0
    %v8630 = vadd.f32 %v8276, %v8552
    %v8631 = vadd.f32 %v8277, %v8554
    %v8632 = vadd.f32 %v8278, %v8556
    %v8633 = vadd.f32 %v8279, %v8558
    %v8634 = vadd.f32 %v8280, %v8562
    %v8635 = vadd.f32 %v8281, %v8564
    %v8636 = vadd.f32 %v8282, %v8566
    %v8637 = vadd.f32 %v8283, %v8568
    %v8638 = vadd.f32 %v8284, %v8572
    %v8639 = vadd.f32 %v8285, %v8574
    %v8640 = vadd.f32 %v8286, %v8576
    %v8641 = vadd.f32 %v8287, %v8578
    %v8642 = vadd.f32 %v8288, %v8582
    %v8643 = vadd.f32 %v8289, %v8584
    %v8644 = vadd.f32 %v8290, %v8586
    %v8645 = vadd.f32 %v8291, %v8588
    %v8646 = vadd.f32 %v8292, %v8592
    %v8647 = vadd.f32 %v8293, %v8594
    %v8648 = vadd.f32 %v8294, %v8596
    %v8649 = vadd.f32 %v8295, %v8598
    %v8650 = vadd.f32 %v8296, %v8602
    %v8651 = vadd.f32 %v8297, %v8604
    %v8652 = vadd.f32 %v8298, %v8606
    %v8653 = vadd.f32 %v8299, %v8608
    %v8654 = vadd.f32 %v8300, %v8612
    %v8655 = vadd.f32 %v8301, %v8614
    %v8656 = vadd.f32 %v8302, %v8616
    %v8657 = vadd.f32 %v8303, %v8618
    %v8658 = vadd.f32 %v8304, %v8622
    %v8659 = vadd.f32 %v8305, %v8624
    %v8660 = vadd.f32 %v8306, %v8626
    %v8661 = vadd.f32 %v8307, %v8628
    %v8662 = vld [vmem:[%s3189 + $0x8] sm:$0x33]
    %v8663 = vld [vmem:[%s3189 + $0x18] sm:$0x33]
    %v8664 = vld [vmem:[%s3189 + $0x28] sm:$0x33]
    %v8665 = vld [vmem:[%s3189 + $0x38] sm:$0x33]
    %v8666 = vld [vmem:[%s3189 + $0x48] sm:$0x33]
    %v8667 = vld [vmem:[%s3189 + $0x58] sm:$0x33]
    %v8668 = vld [vmem:[%s3189 + $0x68] sm:$0x33]
    %v8669 = vld [vmem:[%s3189 + $0x78] sm:$0x33]
    %v8670 = vld [vmem:[%s3189 + $0xa8] sm:$0x33]
    %v8671 = vld [vmem:[%s3189 + $0xb8] sm:$0x33]
    %v8672 = vld [vmem:[%s3189 + $0xc8] sm:$0x33]
    %v8673 = vld [vmem:[%s3189 + $0xd8] sm:$0x33]
    %v8674 = vld [vmem:[%s3189 + $0xe8] sm:$0x33]
    %v8675 = vld [vmem:[%s3189 + $0xf8] sm:$0x33]
    %v8676 = vld [vmem:[%s3189 + $0x108] sm:$0x33]
    %v8677 = vld [vmem:[%s3189 + $0x118] sm:$0x33]
    %v8679 = vshrl.u32 %v8308, 16
    %v8681 = vrot.slane %v8679, 5
    %v8682 = vshll.u32 %v8308, 16
    %v8684 = vrot.slane %v8682, 6
    %v8685 = vor.u32 %v8681, %v8684
    %v8686 = vrot.slane %v8685, 4
    %v8688 = vshrl.u32 %v8662, 16
    %v8690 = vrot.slane %v8688, 5
    %v8691 = vshll.u32 %v8662, 16
    %v8693 = vrot.slane %v8691, 6
    %v8694 = vor.u32 %v8690, %v8693
    %v8695 = vsel %vm1260, %v8686, %v8694
    %v8697 = vshrl.u32 %v8309, 16
    %v8699 = vrot.slane %v8697, 5
    %v8700 = vshll.u32 %v8309, 16
    %v8702 = vrot.slane %v8700, 6
    %v8703 = vor.u32 %v8699, %v8702
    %v8704 = vrot.slane %v8703, 4
    %v8706 = vshrl.u32 %v8663, 16
    %v8708 = vrot.slane %v8706, 5
    %v8709 = vshll.u32 %v8663, 16
    %v8711 = vrot.slane %v8709, 6
    %v8712 = vor.u32 %v8708, %v8711
    %v8713 = vsel %vm1260, %v8704, %v8712
    %v8715 = vshrl.u32 %v8310, 16
    %v8717 = vrot.slane %v8715, 5
    %v8718 = vshll.u32 %v8310, 16
    %v8720 = vrot.slane %v8718, 6
    %v8721 = vor.u32 %v8717, %v8720
    %v8722 = vrot.slane %v8721, 4
    %v8724 = vshrl.u32 %v8664, 16
    %v8726 = vrot.slane %v8724, 5
    %v8727 = vshll.u32 %v8664, 16
    %v8729 = vrot.slane %v8727, 6
    %v8730 = vor.u32 %v8726, %v8729
    %v8731 = vsel %vm1260, %v8722, %v8730
    %v8733 = vshrl.u32 %v8311, 16
    %v8735 = vrot.slane %v8733, 5
    %v8736 = vshll.u32 %v8311, 16
    %v8738 = vrot.slane %v8736, 6
    %v8739 = vor.u32 %v8735, %v8738
    %v8740 = vrot.slane %v8739, 4
    %v8742 = vshrl.u32 %v8665, 16
    %v8744 = vrot.slane %v8742, 5
    %v8745 = vshll.u32 %v8665, 16
    %v8747 = vrot.slane %v8745, 6
    %v8748 = vor.u32 %v8744, %v8747
    %v8749 = vsel %vm1260, %v8740, %v8748
    %v8751 = vshrl.u32 %v8312, 16
    %v8753 = vrot.slane %v8751, 5
    %v8754 = vshll.u32 %v8312, 16
    %v8756 = vrot.slane %v8754, 6
    %v8757 = vor.u32 %v8753, %v8756
    %v8758 = vrot.slane %v8757, 4
    %v8760 = vshrl.u32 %v8666, 16
    %v8762 = vrot.slane %v8760, 5
    %v8763 = vshll.u32 %v8666, 16
    %v8765 = vrot.slane %v8763, 6
    %v8766 = vor.u32 %v8762, %v8765
    %v8767 = vsel %vm1260, %v8758, %v8766
    %v8769 = vshrl.u32 %v8313, 16
    %v8771 = vrot.slane %v8769, 5
    %v8772 = vshll.u32 %v8313, 16
    %v8774 = vrot.slane %v8772, 6
    %v8775 = vor.u32 %v8771, %v8774
    %v8776 = vrot.slane %v8775, 4
    %v8778 = vshrl.u32 %v8667, 16
    %v8780 = vrot.slane %v8778, 5
    %v8781 = vshll.u32 %v8667, 16
    %v8783 = vrot.slane %v8781, 6
    %v8784 = vor.u32 %v8780, %v8783
    %v8785 = vsel %vm1260, %v8776, %v8784
    %v8787 = vshrl.u32 %v8314, 16
    %v8789 = vrot.slane %v8787, 5
    %v8790 = vshll.u32 %v8314, 16
    %v8792 = vrot.slane %v8790, 6
    %v8793 = vor.u32 %v8789, %v8792
    %v8794 = vrot.slane %v8793, 4
    %v8796 = vshrl.u32 %v8668, 16
    %v8798 = vrot.slane %v8796, 5
    %v8799 = vshll.u32 %v8668, 16
    %v8801 = vrot.slane %v8799, 6
    %v8802 = vor.u32 %v8798, %v8801
    %v8803 = vsel %vm1260, %v8794, %v8802
    %v8805 = vshrl.u32 %v8315, 16
    %v8807 = vrot.slane %v8805, 5
    %v8808 = vshll.u32 %v8315, 16
    %v8810 = vrot.slane %v8808, 6
    %v8811 = vor.u32 %v8807, %v8810
    %v8812 = vrot.slane %v8811, 4
    %v8814 = vshrl.u32 %v8669, 16
    %v8816 = vrot.slane %v8814, 5
    %v8817 = vshll.u32 %v8669, 16
    %v8819 = vrot.slane %v8817, 6
    %v8820 = vor.u32 %v8816, %v8819
    %v8821 = vsel %vm1260, %v8812, %v8820
    %v8823 = vshrl.u32 %v8316, 16
    %v8825 = vrot.slane %v8823, 5
    %v8826 = vshll.u32 %v8316, 16
    %v8828 = vrot.slane %v8826, 6
    %v8829 = vor.u32 %v8825, %v8828
    %v8830 = vrot.slane %v8829, 4
    %v8832 = vshrl.u32 %v8670, 16
    %v8834 = vrot.slane %v8832, 5
    %v8835 = vshll.u32 %v8670, 16
    %v8837 = vrot.slane %v8835, 6
    %v8838 = vor.u32 %v8834, %v8837
    %v8839 = vsel %vm1260, %v8830, %v8838
    %v8841 = vshrl.u32 %v8317, 16
    %v8843 = vrot.slane %v8841, 5
    %v8844 = vshll.u32 %v8317, 16
    %v8846 = vrot.slane %v8844, 6
    %v8847 = vor.u32 %v8843, %v8846
    %v8848 = vrot.slane %v8847, 4
    %v8850 = vshrl.u32 %v8671, 16
    %v8852 = vrot.slane %v8850, 5
    %v8853 = vshll.u32 %v8671, 16
    %v8855 = vrot.slane %v8853, 6
    %v8856 = vor.u32 %v8852, %v8855
    %v8857 = vsel %vm1260, %v8848, %v8856
    %v8859 = vshrl.u32 %v8318, 16
    %v8861 = vrot.slane %v8859, 5
    %v8862 = vshll.u32 %v8318, 16
    %v8864 = vrot.slane %v8862, 6
    %v8865 = vor.u32 %v8861, %v8864
    %v8866 = vrot.slane %v8865, 4
    %v8868 = vshrl.u32 %v8672, 16
    %v8870 = vrot.slane %v8868, 5
    %v8871 = vshll.u32 %v8672, 16
    %v8873 = vrot.slane %v8871, 6
    %v8874 = vor.u32 %v8870, %v8873
    %v8875 = vsel %vm1260, %v8866, %v8874
    %v8877 = vshrl.u32 %v8319, 16
    %v8879 = vrot.slane %v8877, 5
    %v8880 = vshll.u32 %v8319, 16
    %v8882 = vrot.slane %v8880, 6
    %v8883 = vor.u32 %v8879, %v8882
    %v8884 = vrot.slane %v8883, 4
    %v8886 = vshrl.u32 %v8673, 16
    %v8888 = vrot.slane %v8886, 5
    %v8889 = vshll.u32 %v8673, 16
    %v8891 = vrot.slane %v8889, 6
    %v8892 = vor.u32 %v8888, %v8891
    %v8893 = vsel %vm1260, %v8884, %v8892
    %v8895 = vshrl.u32 %v8320, 16
    %v8897 = vrot.slane %v8895, 5
    %v8898 = vshll.u32 %v8320, 16
    %v8900 = vrot.slane %v8898, 6
    %v8901 = vor.u32 %v8897, %v8900
    %v8902 = vrot.slane %v8901, 4
    %v8904 = vshrl.u32 %v8674, 16
    %v8906 = vrot.slane %v8904, 5
    %v8907 = vshll.u32 %v8674, 16
    %v8909 = vrot.slane %v8907, 6
    %v8910 = vor.u32 %v8906, %v8909
    %v8911 = vsel %vm1260, %v8902, %v8910
    %v8913 = vshrl.u32 %v8321, 16
    %v8915 = vrot.slane %v8913, 5
    %v8916 = vshll.u32 %v8321, 16
    %v8918 = vrot.slane %v8916, 6
    %v8919 = vor.u32 %v8915, %v8918
    %v8920 = vrot.slane %v8919, 4
    %v8922 = vshrl.u32 %v8675, 16
    %v8924 = vrot.slane %v8922, 5
    %v8925 = vshll.u32 %v8675, 16
    %v8927 = vrot.slane %v8925, 6
    %v8928 = vor.u32 %v8924, %v8927
    %v8929 = vsel %vm1260, %v8920, %v8928
    %v8931 = vshrl.u32 %v8322, 16
    %v8933 = vrot.slane %v8931, 5
    %v8934 = vshll.u32 %v8322, 16
    %v8936 = vrot.slane %v8934, 6
    %v8937 = vor.u32 %v8933, %v8936
    %v8938 = vrot.slane %v8937, 4
    %v8940 = vshrl.u32 %v8676, 16
    %v8942 = vrot.slane %v8940, 5
    %v8943 = vshll.u32 %v8676, 16
    %v8945 = vrot.slane %v8943, 6
    %v8946 = vor.u32 %v8942, %v8945
    %v8947 = vsel %vm1260, %v8938, %v8946
    %v8949 = vshrl.u32 %v8323, 16
    %v8951 = vrot.slane %v8949, 5
    %v8952 = vshll.u32 %v8323, 16
    %v8954 = vrot.slane %v8952, 6
    %v8955 = vor.u32 %v8951, %v8954
    %v8956 = vrot.slane %v8955, 4
    %v8958 = vshrl.u32 %v8677, 16
    %v8960 = vrot.slane %v8958, 5
    %v8961 = vshll.u32 %v8677, 16
    %v8963 = vrot.slane %v8961, 6
    %v8964 = vor.u32 %v8960, %v8963
    %v8965 = vsel %vm1260, %v8956, %v8964
    %s8966 = scalar_lea.vmem [#allocation3], 2048
    %v8967 = vld [vmem:[%s8966] sm:$0xff]
    %v8968 = vld [vmem:[%s8966 + $0x8] sm:$0xff]
    %v8969 = vld [vmem:[%s8966 + $0x10] sm:$0xff]
    %v8970 = vld [vmem:[%s8966 + $0x18] sm:$0xff]
    %v8971 = vld [vmem:[%s8966 + $0x20] sm:$0xff]
    %v8972 = vld [vmem:[%s8966 + $0x28] sm:$0xff]
    %v8973 = vld [vmem:[%s8966 + $0x30] sm:$0xff]
    %v8974 = vld [vmem:[%s8966 + $0x38] sm:$0xff]
    %v8975 = vld [vmem:[%s8966 + $0x40] sm:$0xff]
    %v8976 = vld [vmem:[%s8966 + $0x48] sm:$0xff]
    %v8977 = vld [vmem:[%s8966 + $0x50] sm:$0xff]
    %v8978 = vld [vmem:[%s8966 + $0x58] sm:$0xff]
    %v8979 = vld [vmem:[%s8966 + $0x60] sm:$0xff]
    %v8980 = vld [vmem:[%s8966 + $0x68] sm:$0xff]
    %v8981 = vld [vmem:[%s8966 + $0x70] sm:$0xff]
    %v8982 = vld [vmem:[%s8966 + $0x78] sm:$0xff]
    %v8983 = vld [vmem:[%s8966 + $0x80] sm:$0xff]
    %v8984 = vld [vmem:[%s8966 + $0x88] sm:$0xff]
    %v8985 = vld [vmem:[%s8966 + $0x90] sm:$0xff]
    %v8986 = vld [vmem:[%s8966 + $0x98] sm:$0xff]
    %v8987 = vld [vmem:[%s8966 + $0xa0] sm:$0xff]
    %v8988 = vld [vmem:[%s8966 + $0xa8] sm:$0xff]
    %v8989 = vld [vmem:[%s8966 + $0xb0] sm:$0xff]
    %v8990 = vld [vmem:[%s8966 + $0xb8] sm:$0xff]
    %v8991 = vld [vmem:[%s8966 + $0xc0] sm:$0xff]
    %v8992 = vld [vmem:[%s8966 + $0xc8] sm:$0xff]
    %v8993 = vld [vmem:[%s8966 + $0xd0] sm:$0xff]
    %v8994 = vld [vmem:[%s8966 + $0xd8] sm:$0xff]
    %v8995 = vld [vmem:[%s8966 + $0xe0] sm:$0xff]
    %v8996 = vld [vmem:[%s8966 + $0xe8] sm:$0xff]
    %v8997 = vld [vmem:[%s8966 + $0xf0] sm:$0xff]
    %v8998 = vld [vmem:[%s8966 + $0xf8] sm:$0xff]
    %v8999 = vunpack.c.l.b16 %v8695
    %v9000 = vunpack.c.h.b16 %v8695
    %v9001 = vunpack.c.l.b16 %v8713
    %v9002 = vunpack.c.h.b16 %v8713
    %v9003 = vunpack.c.l.b16 %v8731
    %v9004 = vunpack.c.h.b16 %v8731
    %v9005 = vunpack.c.l.b16 %v8749
    %v9006 = vunpack.c.h.b16 %v8749
    %v9007 = vunpack.c.l.b16 %v8767
    %v9008 = vunpack.c.h.b16 %v8767
    %v9009 = vunpack.c.l.b16 %v8785
    %v9010 = vunpack.c.h.b16 %v8785
    %v9011 = vunpack.c.l.b16 %v8803
    %v9012 = vunpack.c.h.b16 %v8803
    %v9013 = vunpack.c.l.b16 %v8821
    %v9014 = vunpack.c.h.b16 %v8821
    %v9015 = vunpack.c.l.b16 %v8839
    %v9016 = vunpack.c.h.b16 %v8839
    %v9017 = vunpack.c.l.b16 %v8857
    %v9018 = vunpack.c.h.b16 %v8857
    %v9019 = vunpack.c.l.b16 %v8875
    %v9020 = vunpack.c.h.b16 %v8875
    %v9021 = vunpack.c.l.b16 %v8893
    %v9022 = vunpack.c.h.b16 %v8893
    %v9023 = vunpack.c.l.b16 %v8911
    %v9024 = vunpack.c.h.b16 %v8911
    %v9025 = vunpack.c.l.b16 %v8929
    %v9026 = vunpack.c.h.b16 %v8929
    %v9027 = vunpack.c.l.b16 %v8947
    %v9028 = vunpack.c.h.b16 %v8947
    %v9029 = vunpack.c.l.b16 %v8965
    %v9030 = vunpack.c.h.b16 %v8965
    %v9031 = vpack.c.b16 %v9001, %v8999
    %v9032 = vpack.c.b16 %v9002, %v9000
    %v9033 = vpack.c.b16 %v9005, %v9003
    %v9034 = vpack.c.b16 %v9006, %v9004
    %v9035 = vpack.c.b16 %v9009, %v9007
    %v9036 = vpack.c.b16 %v9010, %v9008
    %v9037 = vpack.c.b16 %v9013, %v9011
    %v9038 = vpack.c.b16 %v9014, %v9012
    %v9039 = vpack.c.b16 %v9017, %v9015
    %v9040 = vpack.c.b16 %v9018, %v9016
    %v9041 = vpack.c.b16 %v9021, %v9019
    %v9042 = vpack.c.b16 %v9022, %v9020
    %v9043 = vpack.c.b16 %v9025, %v9023
    %v9044 = vpack.c.b16 %v9026, %v9024
    %v9045 = vpack.c.b16 %v9029, %v9027
    %v9046 = vpack.c.b16 %v9030, %v9028
    %9063 = vmatprep.subr.bf16.mxu0 %v8968
    %9064 = vmatpush1.bf16.msra.mxu0 %v8967
    %9065 = vmatprep.subr.bf16.mxu0 %v8970
    %9066 = vmatpush1.bf16.msra.mxu0 %v8969
    %9067 = vmatprep.subr.bf16.mxu0 %v8972
    %9068 = vmatpush1.bf16.msra.mxu0 %v8971
    %9069 = vmatprep.subr.bf16.mxu0 %v8974
    %9070 = vmatpush1.bf16.msra.mxu0 %v8973
    %9071 = vmatprep.subr.bf16.mxu0 %v8976
    %9072 = vmatpush1.bf16.msra.mxu0 %v8975
    %9073 = vmatprep.subr.bf16.mxu0 %v8978
    %9074 = vmatpush1.bf16.msra.mxu0 %v8977
    %9075 = vmatprep.subr.bf16.mxu0 %v8980
    %9076 = vmatpush1.bf16.msra.mxu0 %v8979
    %9077 = vmatprep.subr.bf16.mxu0 %v8982
    %9078 = vmatpush1.bf16.msra.mxu0 %v8981
    %9079 = vmatprep.subr.bf16.mxu0 %v8984
    %9080 = vmatpush1.bf16.msra.mxu0 %v8983
    %9081 = vmatprep.subr.bf16.mxu0 %v8986
    %9082 = vmatpush1.bf16.msra.mxu0 %v8985
    %9083 = vmatprep.subr.bf16.mxu0 %v8988
    %9084 = vmatpush1.bf16.msra.mxu0 %v8987
    %9085 = vmatprep.subr.bf16.mxu0 %v8990
    %9086 = vmatpush1.bf16.msra.mxu0 %v8989
    %9087 = vmatprep.subr.bf16.mxu0 %v8992
    %9088 = vmatpush1.bf16.msra.mxu0 %v8991
    %9089 = vmatprep.subr.bf16.mxu0 %v8994
    %9090 = vmatpush1.bf16.msra.mxu0 %v8993
    %9091 = vmatprep.subr.bf16.mxu0 %v8996
    %9092 = vmatpush1.bf16.msra.mxu0 %v8995
    %9093 = vmatprep.subr.bf16.mxu0 %v8998
    %9094 = vmatpush1.bf16.msra.mxu0 %v8997
    %9095 = vmatprep.mubr.bf16.mxu0 %v9032
    %9096 = vmatmul.mubr.bf16.gmra.mrb[0].mxu0 %v9031
    %v9097 = vpop.f32.mrb[0].mxu0
    %v9098 = vadd.f32 0.0, %v9097
    %v9099 = vpop.f32.mrb[0].mxu0
    %v9100 = vadd.f32 0.0, %v9099
    %v9101 = vpop.f32.mrb[0].mxu0
    %v9102 = vadd.f32 0.0, %v9101
    %v9103 = vpop.f32.mrb[0].mxu0
    %v9104 = vadd.f32 0.0, %v9103
    %9105 = vmatprep.mubr.bf16.mxu0 %v9034
    %9106 = vmatmul.mubr.bf16.gmra.mrb[0].mxu0 %v9033
    %v9107 = vpop.f32.mrb[0].mxu0
    %v9108 = vadd.f32 0.0, %v9107
    %v9109 = vpop.f32.mrb[0].mxu0
    %v9110 = vadd.f32 0.0, %v9109
    %v9111 = vpop.f32.mrb[0].mxu0
    %v9112 = vadd.f32 0.0, %v9111
    %v9113 = vpop.f32.mrb[0].mxu0
    %v9114 = vadd.f32 0.0, %v9113
    %9115 = vmatprep.mubr.bf16.mxu0 %v9036
    %9116 = vmatmul.mubr.bf16.gmra.mrb[0].mxu0 %v9035
    %v9117 = vpop.f32.mrb[0].mxu0
    %v9118 = vadd.f32 0.0, %v9117
    %v9119 = vpop.f32.mrb[0].mxu0
    %v9120 = vadd.f32 0.0, %v9119
    %v9121 = vpop.f32.mrb[0].mxu0
    %v9122 = vadd.f32 0.0, %v9121
    %v9123 = vpop.f32.mrb[0].mxu0
    %v9124 = vadd.f32 0.0, %v9123
    %9125 = vmatprep.mubr.bf16.mxu0 %v9038
    %9126 = vmatmul.mubr.bf16.gmra.mrb[0].mxu0 %v9037
    %v9127 = vpop.f32.mrb[0].mxu0
    %v9128 = vadd.f32 0.0, %v9127
    %v9129 = vpop.f32.mrb[0].mxu0
    %v9130 = vadd.f32 0.0, %v9129
    %v9131 = vpop.f32.mrb[0].mxu0
    %v9132 = vadd.f32 0.0, %v9131
    %v9133 = vpop.f32.mrb[0].mxu0
    %v9134 = vadd.f32 0.0, %v9133
    %9135 = vmatprep.mubr.bf16.mxu0 %v9040
    %9136 = vmatmul.mubr.bf16.gmra.mrb[0].mxu0 %v9039
    %v9137 = vpop.f32.mrb[0].mxu0
    %v9138 = vadd.f32 0.0, %v9137
    %v9139 = vpop.f32.mrb[0].mxu0
    %v9140 = vadd.f32 0.0, %v9139
    %v9141 = vpop.f32.mrb[0].mxu0
    %v9142 = vadd.f32 0.0, %v9141
    %v9143 = vpop.f32.mrb[0].mxu0
    %v9144 = vadd.f32 0.0, %v9143
    %9145 = vmatprep.mubr.bf16.mxu0 %v9042
    %9146 = vmatmul.mubr.bf16.gmra.mrb[0].mxu0 %v9041
    %v9147 = vpop.f32.mrb[0].mxu0
    %v9148 = vadd.f32 0.0, %v9147
    %v9149 = vpop.f32.mrb[0].mxu0
    %v9150 = vadd.f32 0.0, %v9149
    %v9151 = vpop.f32.mrb[0].mxu0
    %v9152 = vadd.f32 0.0, %v9151
    %v9153 = vpop.f32.mrb[0].mxu0
    %v9154 = vadd.f32 0.0, %v9153
    %9155 = vmatprep.mubr.bf16.mxu0 %v9044
    %9156 = vmatmul.mubr.bf16.gmra.mrb[0].mxu0 %v9043
    %v9157 = vpop.f32.mrb[0].mxu0
    %v9158 = vadd.f32 0.0, %v9157
    %v9159 = vpop.f32.mrb[0].mxu0
    %v9160 = vadd.f32 0.0, %v9159
    %v9161 = vpop.f32.mrb[0].mxu0
    %v9162 = vadd.f32 0.0, %v9161
    %v9163 = vpop.f32.mrb[0].mxu0
    %v9164 = vadd.f32 0.0, %v9163
    %9165 = vmatprep.mubr.bf16.mxu0 %v9046
    %9166 = vmatmul.mubr.bf16.gmra.mrb[0].mxu0 %v9045
    %v9167 = vpop.f32.mrb[0].mxu0
    %v9168 = vadd.f32 0.0, %v9167
    %v9169 = vpop.f32.mrb[0].mxu0
    %v9170 = vadd.f32 0.0, %v9169
    %v9171 = vpop.f32.mrb[0].mxu0
    %v9172 = vadd.f32 0.0, %v9171
    %v9173 = vpop.f32.mrb[0].mxu0
    %v9174 = vadd.f32 0.0, %v9173
    %9175 = vdwg.mxu0
    %v9176 = vadd.f32 %v8630, %v9098
    %v9177 = vadd.f32 %v8631, %v9100
    %v9178 = vadd.f32 %v8632, %v9102
    %v9179 = vadd.f32 %v8633, %v9104
    %v9180 = vadd.f32 %v8634, %v9108
    %v9181 = vadd.f32 %v8635, %v9110
    %v9182 = vadd.f32 %v8636, %v9112
    %v9183 = vadd.f32 %v8637, %v9114
    %v9184 = vadd.f32 %v8638, %v9118
    %v9185 = vadd.f32 %v8639, %v9120
    %v9186 = vadd.f32 %v8640, %v9122
    %v9187 = vadd.f32 %v8641, %v9124
    %v9188 = vadd.f32 %v8642, %v9128
    %v9189 = vadd.f32 %v8643, %v9130
    %v9190 = vadd.f32 %v8644, %v9132
    %v9191 = vadd.f32 %v8645, %v9134
    %v9192 = vadd.f32 %v8646, %v9138
    %v9193 = vadd.f32 %v8647, %v9140
    %v9194 = vadd.f32 %v8648, %v9142
    %v9195 = vadd.f32 %v8649, %v9144
    %v9196 = vadd.f32 %v8650, %v9148
    %v9197 = vadd.f32 %v8651, %v9150
    %v9198 = vadd.f32 %v8652, %v9152
    %v9199 = vadd.f32 %v8653, %v9154
    %v9200 = vadd.f32 %v8654, %v9158
    %v9201 = vadd.f32 %v8655, %v9160
    %v9202 = vadd.f32 %v8656, %v9162
    %v9203 = vadd.f32 %v8657, %v9164
    %v9204 = vadd.f32 %v8658, %v9168
    %v9205 = vadd.f32 %v8659, %v9170
    %v9206 = vadd.f32 %v8660, %v9172
    %v9207 = vadd.f32 %v8661, %v9174
    %v9208 = vadd.f32 %v9176, %v9178
    %v9209 = vadd.f32 %v9208, %v9180
    %v9210 = vadd.f32 %v9209, %v9182
    %v9211 = vadd.f32 %v9210, %v9184
    %v9212 = vadd.f32 %v9211, %v9186
    %v9213 = vadd.f32 %v9212, %v9188
    %v9214 = vadd.f32 %v9213, %v9190
    %v9215 = vadd.f32 %v9214, %v9192
    %v9216 = vadd.f32 %v9215, %v9194
    %v9217 = vadd.f32 %v9216, %v9196
    %v9218 = vadd.f32 %v9217, %v9198
    %v9219 = vadd.f32 %v9218, %v9200
    %v9220 = vadd.f32 %v9219, %v9202
    %v9221 = vadd.f32 %v9220, %v9204
    %v9222 = vadd.f32 %v9221, %v9206
    %v9223 = vrot.slane %v9222, 4
    %v9224 = vadd.f32 %v9222, %v9223
    %v9225 = vrot.slane %v9224, 2
    %v9226 = vadd.f32 %v9224, %v9225
    %v9227 = vrot.slane %v9226, 1
    %v9228 = vadd.f32 %v9226, %v9227
    %v9229 = vadd.f32 %v9177, %v9179
    %v9230 = vadd.f32 %v9229, %v9181
    %v9231 = vadd.f32 %v9230, %v9183
    %v9232 = vadd.f32 %v9231, %v9185
    %v9233 = vadd.f32 %v9232, %v9187
    %v9234 = vadd.f32 %v9233, %v9189
    %v9235 = vadd.f32 %v9234, %v9191
    %v9236 = vadd.f32 %v9235, %v9193
    %v9237 = vadd.f32 %v9236, %v9195
    %v9238 = vadd.f32 %v9237, %v9197
    %v9239 = vadd.f32 %v9238, %v9199
    %v9240 = vadd.f32 %v9239, %v9201
    %v9241 = vadd.f32 %v9240, %v9203
    %v9242 = vadd.f32 %v9241, %v9205
    %v9243 = vadd.f32 %v9242, %v9207
    %v9244 = vrot.slane %v9243, 4
    %v9245 = vadd.f32 %v9243, %v9244
    %v9246 = vrot.slane %v9245, 2
    %v9247 = vadd.f32 %v9245, %v9246
    %v9248 = vrot.slane %v9247, 1
    %v9249 = vadd.f32 %v9247, %v9248
    %v9250 = vmul.f32 %v9176, %v9176
    %v9251 = vmul.f32 %v9177, %v9177
    %v9252 = vmul.f32 %v9178, %v9178
    %v9253 = vmul.f32 %v9179, %v9179
    %v9254 = vmul.f32 %v9180, %v9180
    %v9255 = vmul.f32 %v9181, %v9181
    %v9256 = vmul.f32 %v9182, %v9182
    %v9257 = vmul.f32 %v9183, %v9183
    %v9258 = vmul.f32 %v9184, %v9184
    %v9259 = vmul.f32 %v9185, %v9185
    %v9260 = vmul.f32 %v9186, %v9186
    %v9261 = vmul.f32 %v9187, %v9187
    %v9262 = vmul.f32 %v9188, %v9188
    %v9263 = vmul.f32 %v9189, %v9189
    %v9264 = vmul.f32 %v9190, %v9190
    %v9265 = vmul.f32 %v9191, %v9191
    %v9266 = vmul.f32 %v9192, %v9192
    %v9267 = vmul.f32 %v9193, %v9193
    %v9268 = vmul.f32 %v9194, %v9194
    %v9269 = vmul.f32 %v9195, %v9195
    %v9270 = vmul.f32 %v9196, %v9196
    %v9271 = vmul.f32 %v9197, %v9197
    %v9272 = vmul.f32 %v9198, %v9198
    %v9273 = vmul.f32 %v9199, %v9199
    %v9274 = vmul.f32 %v9200, %v9200
    %v9275 = vmul.f32 %v9201, %v9201
    %v9276 = vmul.f32 %v9202, %v9202
    %v9277 = vmul.f32 %v9203, %v9203
    %v9278 = vmul.f32 %v9204, %v9204
    %v9279 = vmul.f32 %v9205, %v9205
    %v9280 = vmul.f32 %v9206, %v9206
    %v9281 = vmul.f32 %v9207, %v9207
    %v9282 = vadd.f32 %v9250, %v9252
    %v9283 = vadd.f32 %v9282, %v9254
    %v9284 = vadd.f32 %v9283, %v9256
    %v9285 = vadd.f32 %v9284, %v9258
    %v9286 = vadd.f32 %v9285, %v9260
    %v9287 = vadd.f32 %v9286, %v9262
    %v9288 = vadd.f32 %v9287, %v9264
    %v9289 = vadd.f32 %v9288, %v9266
    %v9290 = vadd.f32 %v9289, %v9268
    %v9291 = vadd.f32 %v9290, %v9270
    %v9292 = vadd.f32 %v9291, %v9272
    %v9293 = vadd.f32 %v9292, %v9274
    %v9294 = vadd.f32 %v9293, %v9276
    %v9295 = vadd.f32 %v9294, %v9278
    %v9296 = vadd.f32 %v9295, %v9280
    %v9297 = vrot.slane %v9296, 4
    %v9298 = vadd.f32 %v9296, %v9297
    %v9299 = vrot.slane %v9298, 2
    %v9300 = vadd.f32 %v9298, %v9299
    %v9301 = vrot.slane %v9300, 1
    %v9302 = vadd.f32 %v9300, %v9301
    %v9303 = vadd.f32 %v9251, %v9253
    %v9304 = vadd.f32 %v9303, %v9255
    %v9305 = vadd.f32 %v9304, %v9257
    %v9306 = vadd.f32 %v9305, %v9259
    %v9307 = vadd.f32 %v9306, %v9261
    %v9308 = vadd.f32 %v9307, %v9263
    %v9309 = vadd.f32 %v9308, %v9265
    %v9310 = vadd.f32 %v9309, %v9267
    %v9311 = vadd.f32 %v9310, %v9269
    %v9312 = vadd.f32 %v9311, %v9271
    %v9313 = vadd.f32 %v9312, %v9273
    %v9314 = vadd.f32 %v9313, %v9275
    %v9315 = vadd.f32 %v9314, %v9277
    %v9316 = vadd.f32 %v9315, %v9279
    %v9317 = vadd.f32 %v9316, %v9281
    %v9318 = vrot.slane %v9317, 4
    %v9319 = vadd.f32 %v9317, %v9318
    %v9320 = vrot.slane %v9319, 2
    %v9321 = vadd.f32 %v9319, %v9320
    %v9322 = vrot.slane %v9321, 1
    %v9323 = vadd.f32 %v9321, %v9322
    %v9324 = vmul.f32 %v9228, 0.0078125
    %v9325 = vmul.f32 %v9249, 0.0078125
    %v9326 = vmul.f32 %v9302, 0.0078125
    %v9327 = vmul.f32 %v9323, 0.0078125
    %v9328 = vmul.f32 %v9324, %v9324
    %v9329 = vmul.f32 %v9325, %v9325
    %v9330 = vsub.f32 %v9326, %v9328
    %v9331 = vsub.f32 %v9327, %v9329
    %v9332 = vmax.f32 %v9330, 0.0
    %v9333 = vmax.f32 %v9331, 0.0
    %v9334 = vadd.f32 %v9332, 1e-05
    %v9335 = vadd.f32 %v9333, 1e-05
    %v9336 = vrsqrt.pop %v9334
    %v9337 = vrsqrt.pop %v9335
    %v9338 = vld [vmem:[#allocation12] sm:$0x3]
    %v9340 = vlaneseq
    %v9341 = vshrl.u32 %v9340, 7
    %v9342 = vsub.s32 0, %v9341
    %v9343 = vrot.slane %v9338, %v9342
    %v9344 = vlaneseq
    %v9345 = vshrl.u32 %v9344, 7
    %v9346 = vsub.s32 1, %v9345
    %v9347 = vrot.slane %v9338, %v9346
    %v9350 = vmul.f32 %v9336, %v9343
    %v9351 = vmul.f32 %v9337, %v9347
    %v9352 = vld [vmem:[#allocation14] sm:$0x3]
    %v9353 = vmul.f32 %v9324, %v9350
    %v9354 = vmul.f32 %v9325, %v9351
    %v9357 = vcombine.low %v9353, %v9354
    %v9359 = vunpack.c.l.s4 1966171168
    %v9360 = vunpack.c.0.s8 %v9359
    %v9361 = vlaneseq
    %v9362 = vshrl.u32 %v9361, 7
    %v9363 = vsub.s32 %v9360, %v9362
    %v9364 = vrot.slane %v9357, %v9363
    %v9366 = vunpack.c.l.s4 1966171168
    %v9367 = vunpack.c.0.s8 %v9366
    %v9368 = vlaneseq
    %v9369 = vshrl.u32 %v9368, 7
    %v9370 = vsub.s32 %v9367, %v9369
    %v9371 = vrot.slane %v9364, %v9370
    %v9373 = vsub.f32 %v9352, %v9371
    %v9374 = vlaneseq
    %v9375 = vshrl.u32 %v9374, 7
    %v9376 = vsub.s32 0, %v9375
    %v9377 = vrot.slane %v9350, %v9376
    %v9378 = vlaneseq
    %v9379 = vshrl.u32 %v9378, 7
    %v9380 = vsub.s32 0, %v9379
    %v9381 = vrot.slane %v9351, %v9380
    %v9382 = vmul.f32 %v9176, %v9377
    %v9383 = vmul.f32 %v9177, %v9381
    %v9384 = vmul.f32 %v9178, %v9377
    %v9385 = vmul.f32 %v9179, %v9381
    %v9386 = vmul.f32 %v9180, %v9377
    %v9387 = vmul.f32 %v9181, %v9381
    %v9388 = vmul.f32 %v9182, %v9377
    %v9389 = vmul.f32 %v9183, %v9381
    %v9390 = vmul.f32 %v9184, %v9377
    %v9391 = vmul.f32 %v9185, %v9381
    %v9392 = vmul.f32 %v9186, %v9377
    %v9393 = vmul.f32 %v9187, %v9381
    %v9394 = vmul.f32 %v9188, %v9377
    %v9395 = vmul.f32 %v9189, %v9381
    %v9396 = vmul.f32 %v9190, %v9377
    %v9397 = vmul.f32 %v9191, %v9381
    %v9398 = vmul.f32 %v9192, %v9377
    %v9399 = vmul.f32 %v9193, %v9381
    %v9400 = vmul.f32 %v9194, %v9377
    %v9401 = vmul.f32 %v9195, %v9381
    %v9402 = vmul.f32 %v9196, %v9377
    %v9403 = vmul.f32 %v9197, %v9381
    %v9404 = vmul.f32 %v9198, %v9377
    %v9405 = vmul.f32 %v9199, %v9381
    %v9406 = vmul.f32 %v9200, %v9377
    %v9407 = vmul.f32 %v9201, %v9381
    %v9408 = vmul.f32 %v9202, %v9377
    %v9409 = vmul.f32 %v9203, %v9381
    %v9410 = vmul.f32 %v9204, %v9377
    %v9411 = vmul.f32 %v9205, %v9381
    %v9412 = vmul.f32 %v9206, %v9377
    %v9413 = vmul.f32 %v9207, %v9381
    %v9415 = vlaneseq
    %v9416 = vshrl.u32 %v9415, 7
    %v9417 = vsub.s32 0, %v9416
    %v9418 = vrot.slane %v9373, %v9417
    %v9419 = vlaneseq
    %v9420 = vshrl.u32 %v9419, 7
    %v9421 = vsub.s32 1, %v9420
    %v9422 = vrot.slane %v9373, %v9421
    %v9425 = vadd.f32 %v9382, %v9418
    %v9426 = vadd.f32 %v9383, %v9422
    %v9427 = vadd.f32 %v9384, %v9418
    %v9428 = vadd.f32 %v9385, %v9422
    %v9429 = vadd.f32 %v9386, %v9418
    %v9430 = vadd.f32 %v9387, %v9422
    %v9431 = vadd.f32 %v9388, %v9418
    %v9432 = vadd.f32 %v9389, %v9422
    %v9433 = vadd.f32 %v9390, %v9418
    %v9434 = vadd.f32 %v9391, %v9422
    %v9435 = vadd.f32 %v9392, %v9418
    %v9436 = vadd.f32 %v9393, %v9422
    %v9437 = vadd.f32 %v9394, %v9418
    %v9438 = vadd.f32 %v9395, %v9422
    %v9439 = vadd.f32 %v9396, %v9418
    %v9440 = vadd.f32 %v9397, %v9422
    %v9441 = vadd.f32 %v9398, %v9418
    %v9442 = vadd.f32 %v9399, %v9422
    %v9443 = vadd.f32 %v9400, %v9418
    %v9444 = vadd.f32 %v9401, %v9422
    %v9445 = vadd.f32 %v9402, %v9418
    %v9446 = vadd.f32 %v9403, %v9422
    %v9447 = vadd.f32 %v9404, %v9418
    %v9448 = vadd.f32 %v9405, %v9422
    %v9449 = vadd.f32 %v9406, %v9418
    %v9450 = vadd.f32 %v9407, %v9422
    %v9451 = vadd.f32 %v9408, %v9418
    %v9452 = vadd.f32 %v9409, %v9422
    %v9453 = vadd.f32 %v9410, %v9418
    %v9454 = vadd.f32 %v9411, %v9422
    %v9455 = vadd.f32 %v9412, %v9418
    %v9456 = vadd.f32 %v9413, %v9422
    %v9457 = vld [vmem:[#allocation6] sm:$0xff]
    %v9458 = vld [vmem:[#allocation6 + $0x8] sm:$0xff]
    %v9459 = vld [vmem:[#allocation6 + $0x10] sm:$0xff]
    %v9460 = vld [vmem:[#allocation6 + $0x18] sm:$0xff]
    %v9461 = vld [vmem:[#allocation6 + $0x20] sm:$0xff]
    %v9462 = vld [vmem:[#allocation6 + $0x28] sm:$0xff]
    %v9463 = vld [vmem:[#allocation6 + $0x30] sm:$0xff]
    %v9464 = vld [vmem:[#allocation6 + $0x38] sm:$0xff]
    %v9465 = vld [vmem:[#allocation6 + $0x40] sm:$0xff]
    %v9466 = vld [vmem:[#allocation6 + $0x48] sm:$0xff]
    %v9467 = vld [vmem:[#allocation6 + $0x50] sm:$0xff]
    %v9468 = vld [vmem:[#allocation6 + $0x58] sm:$0xff]
    %v9469 = vld [vmem:[#allocation6 + $0x60] sm:$0xff]
    %v9470 = vld [vmem:[#allocation6 + $0x68] sm:$0xff]
    %v9471 = vld [vmem:[#allocation6 + $0x70] sm:$0xff]
    %v9472 = vld [vmem:[#allocation6 + $0x78] sm:$0xff]
    %v9473 = vld [vmem:[#allocation6 + $0x80] sm:$0xff]
    %v9474 = vld [vmem:[#allocation6 + $0x88] sm:$0xff]
    %v9475 = vld [vmem:[#allocation6 + $0x90] sm:$0xff]
    %v9476 = vld [vmem:[#allocation6 + $0x98] sm:$0xff]
    %v9477 = vld [vmem:[#allocation6 + $0xa0] sm:$0xff]
    %v9478 = vld [vmem:[#allocation6 + $0xa8] sm:$0xff]
    %v9479 = vld [vmem:[#allocation6 + $0xb0] sm:$0xff]
    %v9480 = vld [vmem:[#allocation6 + $0xb8] sm:$0xff]
    %v9481 = vld [vmem:[#allocation6 + $0xc0] sm:$0xff]
    %v9482 = vld [vmem:[#allocation6 + $0xc8] sm:$0xff]
    %v9483 = vld [vmem:[#allocation6 + $0xd0] sm:$0xff]
    %v9484 = vld [vmem:[#allocation6 + $0xd8] sm:$0xff]
    %v9485 = vld [vmem:[#allocation6 + $0xe0] sm:$0xff]
    %v9486 = vld [vmem:[#allocation6 + $0xe8] sm:$0xff]
    %v9487 = vld [vmem:[#allocation6 + $0xf0] sm:$0xff]
    %v9488 = vld [vmem:[#allocation6 + $0xf8] sm:$0xff]
    %v9489 = vadd.f32 %v9425, %v9457
    %v9490 = vadd.f32 %v9426, %v9458
    %v9491 = vadd.f32 %v9427, %v9459
    %v9492 = vadd.f32 %v9428, %v9460
    %v9493 = vadd.f32 %v9429, %v9461
    %v9494 = vadd.f32 %v9430, %v9462
    %v9495 = vadd.f32 %v9431, %v9463
    %v9496 = vadd.f32 %v9432, %v9464
    %v9497 = vadd.f32 %v9433, %v9465
    %v9498 = vadd.f32 %v9434, %v9466
    %v9499 = vadd.f32 %v9435, %v9467
    %v9500 = vadd.f32 %v9436, %v9468
    %v9501 = vadd.f32 %v9437, %v9469
    %v9502 = vadd.f32 %v9438, %v9470
    %v9503 = vadd.f32 %v9439, %v9471
    %v9504 = vadd.f32 %v9440, %v9472
    %v9505 = vadd.f32 %v9441, %v9473
    %v9506 = vadd.f32 %v9442, %v9474
    %v9507 = vadd.f32 %v9443, %v9475
    %v9508 = vadd.f32 %v9444, %v9476
    %v9509 = vadd.f32 %v9445, %v9477
    %v9510 = vadd.f32 %v9446, %v9478
    %v9511 = vadd.f32 %v9447, %v9479
    %v9512 = vadd.f32 %v9448, %v9480
    %v9513 = vadd.f32 %v9449, %v9481
    %v9514 = vadd.f32 %v9450, %v9482
    %v9515 = vadd.f32 %v9451, %v9483
    %v9516 = vadd.f32 %v9452, %v9484
    %v9517 = vadd.f32 %v9453, %v9485
    %v9518 = vadd.f32 %v9454, %v9486
    %v9519 = vadd.f32 %v9455, %v9487
    %v9520 = vadd.f32 %v9456, %v9488
    %9521 = vst [vmem:[#allocation15] sm:$0xff] %v9489
    %9522 = vst [vmem:[#allocation15 + $0x8] sm:$0xff] %v9490
    %9523 = vst [vmem:[#allocation15 + $0x10] sm:$0xff] %v9491
    %9524 = vst [vmem:[#allocation15 + $0x18] sm:$0xff] %v9492
    %9525 = vst [vmem:[#allocation15 + $0x20] sm:$0xff] %v9493
    %9526 = vst [vmem:[#allocation15 + $0x28] sm:$0xff] %v9494
    %9527 = vst [vmem:[#allocation15 + $0x30] sm:$0xff] %v9495
    %9528 = vst [vmem:[#allocation15 + $0x38] sm:$0xff] %v9496
    %9529 = vst [vmem:[#allocation15 + $0x40] sm:$0xff] %v9497
    %9530 = vst [vmem:[#allocation15 + $0x48] sm:$0xff] %v9498
    %9531 = vst [vmem:[#allocation15 + $0x50] sm:$0xff] %v9499
    %9532 = vst [vmem:[#allocation15 + $0x58] sm:$0xff] %v9500
    %9533 = vst [vmem:[#allocation15 + $0x60] sm:$0xff] %v9501
    %9534 = vst [vmem:[#allocation15 + $0x68] sm:$0xff] %v9502
    %9535 = vst [vmem:[#allocation15 + $0x70] sm:$0xff] %v9503
    %9536 = vst [vmem:[#allocation15 + $0x78] sm:$0xff] %v9504
    %9537 = vst [vmem:[#allocation15 + $0x80] sm:$0xff] %v9505
    %9538 = vst [vmem:[#allocation15 + $0x88] sm:$0xff] %v9506
    %9539 = vst [vmem:[#allocation15 + $0x90] sm:$0xff] %v9507
    %9540 = vst [vmem:[#allocation15 + $0x98] sm:$0xff] %v9508
    %9541 = vst [vmem:[#allocation15 + $0xa0] sm:$0xff] %v9509
    %9542 = vst [vmem:[#allocation15 + $0xa8] sm:$0xff] %v9510
    %9543 = vst [vmem:[#allocation15 + $0xb0] sm:$0xff] %v9511
    %9544 = vst [vmem:[#allocation15 + $0xb8] sm:$0xff] %v9512
    %9545 = vst [vmem:[#allocation15 + $0xc0] sm:$0xff] %v9513
    %9546 = vst [vmem:[#allocation15 + $0xc8] sm:$0xff] %v9514
    %9547 = vst [vmem:[#allocation15 + $0xd0] sm:$0xff] %v9515
    %9548 = vst [vmem:[#allocation15 + $0xd8] sm:$0xff] %v9516
    %9549 = vst [vmem:[#allocation15 + $0xe0] sm:$0xff] %v9517
    %9550 = vst [vmem:[#allocation15 + $0xe8] sm:$0xff] %v9518
    %9551 = vst [vmem:[#allocation15 + $0xf0] sm:$0xff] %v9519
    %9552 = vst [vmem:[#allocation15 + $0xf8] sm:$0xff] %v9520
    // Predicated region
    $region42: #{residual_block.1} parent=1 // pred_check
      _
    $region43: #{residual_block.1} parent=1 // pred_check_branch
      %9554 = sbr.rel (0) target = $region45
    $region44: #{residual_block.1} parent=1 // pred_region
      %s9556 = ssub.s32 4096, 4096
      %9557 = vsyncadd [#allocation8], %s9556
      %s9558 = sshll.u32 [#allocation15], 4
      %s9559 = int_to_ptr.vmem [resolvable:$true] %s9558
      %9564 = dma.vmem_to_hbm [thread:$0]  %s9559, 4096, %s7, [#allocation8], 256, 256, 16
    $region45: #{residual_block.1} parent=1 // pred_fallthru
      _
    // Predicated region
    $region46: #{residual_block.1} parent=1 // pred_check
      _
    $region47: #{residual_block.1} parent=1 // pred_check_branch
      %9566 = sbr.rel (0) target = $region49
    $region48: #{residual_block.1} parent=1 // pred_region
      %9567 = dma.done [#allocation8], 4096
    $region49: #{residual_block.1} parent=1 // pred_fallthru
      _
    %9568 = vsyncpa [#allocation7], 1
    %9569 = vsyncpa [#allocation10], 1
    %9570 = vsyncpa [#allocation13], 1
    %9571 = vsyncpa [#allocation8], 1
  %9572 = vsyncmov [#allocation5]
  %s9573 = vpop.sfrf %9572
  %p9574 = scmp.eq.s32.totalorder %s9573, 0
  %p9575 = pneg %p9574
  %9577 = shalt.err (%p9575)
  %s9578 = scalar_lea.sflag [#allocation5], 1
  %9579 = vsyncmov %s9578
  %s9580 = vpop.sfrf %9579
  %p9581 = scmp.eq.s32.totalorder %s9580, 0
  %p9582 = pneg %p9581
  %9584 = shalt.err (%p9582)

</llo_original>
